<compile_context>
chip_gen: v7x
topology: tpu7x:2x2x1
jax: 0.10.0
libtpu: 0.0.40
codegen_flags: <defaults>
</compile_context>

<pallas_src>
import functools

import jax
import jax.numpy as jnp
from jax import lax
from jax.experimental import pallas as pl
from jax.experimental.pallas import tpu as pltpu


# ----------------------------------------------------------------------------
# Pallas kernel: fused bidirectional GRU (PyTorch gate order r, z, n) + Linear
# ----------------------------------------------------------------------------
def _bigru_classifier_kernel(x_ref,          # (S, Bp, D)   bf16
                             wih_ref,        # (D, 6H)      bf16  [fwd 3H | bwd 3H]
                             bih_ref,        # (1, 6H)      f32   [b_ih_f | b_ih_b]
                             whh_ref,        # (2H, 6H)     bf16  block-diagonal W_hh
                             bhh_ref,        # (1, 6H)      f32   [b_hh_f | b_hh_b]
                             wct_ref,        # (H, Lp)      bf16  classifier (fwd rows)
                             wcb_ref,        # (H, Lp)      bf16  classifier (bwd rows)
                             bcls_ref,       # (1, Lp)      f32
                             out_ref,        # (S, Bp, Lp)  f32   logits
                             gi_ref,         # VMEM scratch (S, Bp, 6H) f32
                             *, hidden_size, s_chunk, unroll):
    H = hidden_size
    S, Bp, D = x_ref.shape
    Lp = out_ref.shape[-1]

    # ---- Phase 1: hoisted input-to-hidden GEMM (all steps, both directions),
    # chunked over S and stored directly into the single gi scratch so no
    # full-sequence f32 GEMM result ever lives in vregs / spills.
    wih = wih_ref[...]
    bih = jnp.broadcast_to(bih_ref[...], (s_chunk * Bp, 6 * H))   # hoisted bcast

    def gemm_chunk(c, carry):
        s0 = pl.multiple_of(c * s_chunk, s_chunk)
        xs = x_ref[pl.ds(s0, s_chunk)].reshape(s_chunk * Bp, D)   # bf16 operand
        g = jnp.dot(xs, wih, preferred_element_type=jnp.float32) + bih
        gi_ref[pl.ds(s0, s_chunk)] = g.reshape(s_chunk, Bp, 6 * H)
        return carry

    lax.fori_loop(0, S // s_chunk, gemm_chunk, 0)

    # ---- Phase 2: init logits with the classifier bias; both directions then
    # accumulate their classifier halves inside the recurrence.
    out_ref[...] = jnp.broadcast_to(bcls_ref[...].reshape(1, 1, Lp), (S, Bp, Lp))

    # Loop-invariant hoists.
    whh = whh_ref[...]
    wct = wct_ref[...]
    wcb = wcb_ref[...]
    bhh = jnp.broadcast_to(bhh_ref[...], (Bp, 6 * H))             # hoisted bcast

    def gates(gi, gh, h_prev):                # f32 elementwise / EUP math
        r = jax.nn.sigmoid(gi[:, :H] + gh[:, :H])
        z = jax.nn.sigmoid(gi[:, H:2 * H] + gh[:, H:2 * H])
        n = jnp.tanh(gi[:, 2 * H:] + r * gh[:, 2 * H:])
        return (1.0 - z) * n + z * h_prev

    # ---- Phase 3: fused fwd/bwd recurrence — one loop, one block-diagonal
    # hidden-to-hidden matmul per step, classifier folded in.
    def step(i, h_cat):                       # h_cat: (Bp, 2H) f32 = [h_fwd | h_bwd]
        tb = S - 1 - i
        gh = jnp.dot(h_cat.astype(jnp.bfloat16), whh,
                     preferred_element_type=jnp.float32) + bhh
        h_f = gates(gi_ref[i, :, :3 * H], gh[:, :3 * H], h_cat[:, :H])
        h_b = gates(gi_ref[tb, :, 3 * H:], gh[:, 3 * H:], h_cat[:, H:])
        # Folded classifier: off-critical-path accumulation into the output.
        out_ref[i] = out_ref[i] + jnp.dot(h_f.astype(jnp.bfloat16), wct,
                                          preferred_element_type=jnp.float32)
        out_ref[tb] = out_ref[tb] + jnp.dot(h_b.astype(jnp.bfloat16), wcb,
                                            preferred_element_type=jnp.float32)
        return jnp.concatenate([h_f, h_b], axis=-1)

    h0 = jnp.zeros((Bp, 2 * H), jnp.float32)
    lax.fori_loop(0, S, step, h0, unroll=unroll)


# ----------------------------------------------------------------------------
# Parameter repacking for the kernel (fused / padded / bf16 layouts)
# ----------------------------------------------------------------------------
def _prepare_kernel_params(p, H, L, Lp):
    bf16 = jnp.bfloat16
    wih_cat = jnp.concatenate([p["wih_f_T"], p["wih_b_T"]], axis=1)     # (D, 6H)
    bih_cat = jnp.concatenate([p["b_f"][0], p["b_b"][0]])[None, :]      # (1, 6H)
    bhh_cat = jnp.concatenate([p["b_f"][1], p["b_b"][1]])[None, :]      # (1, 6H)
    # NOTE: block-diagonal form wastes half the MACs; fine while latency-bound
    # at Bp=8, revisit (two per-direction matmuls) if H/Bp grow.
    whh_bd = jnp.zeros((2 * H, 6 * H), jnp.float32)
    whh_bd = whh_bd.at[:H, :3 * H].set(p["whh_f_T"])
    whh_bd = whh_bd.at[H:, 3 * H:].set(p["whh_b_T"])                    # (2H, 6H)
    wcls_top = jnp.pad(p["wcls_T"][:H], ((0, 0), (0, Lp - L)))          # (H, Lp)
    wcls_bot = jnp.pad(p["wcls_T"][H:], ((0, 0), (0, Lp - L)))          # (H, Lp)
    bcls_p = jnp.pad(p["bcls"], ((0, 0), (0, Lp - L)))                  # (1, Lp)
    return dict(wih_cat=wih_cat.astype(bf16), bih_cat=bih_cat,
                whh_bd=whh_bd.astype(bf16), bhh_cat=bhh_cat,
                wcls_top=wcls_top.astype(bf16), wcls_bot=wcls_bot.astype(bf16),
                bcls_p=bcls_p)


# ----------------------------------------------------------------------------
# Wrapper
# ----------------------------------------------------------------------------
def gru_with_transformer_head(sequence_output, params, *, hidden_size, num_labels):
    """sequence_output: (B, S, D) float32 — transformer last_hidden_state."""
    B, S, D = sequence_output.shape
    H = hidden_size
    assert H % 128 == 0, "gate lane slices assume H is a multiple of 128"
    Bp = ((B + 7) // 8) * 8                      # sublane-pad batch
    Lp = ((num_labels + 127) // 128) * 128       # lane-pad labels

    x = jnp.transpose(sequence_output, (1, 0, 2))                       # (S, B, D)
    if Bp != B:
        x = jnp.pad(x, ((0, 0), (0, Bp - B), (0, 0)))
    x = x.astype(jnp.bfloat16)       # bf16 MXU operand; halves HBM->VMEM bytes

    kp = _prepare_kernel_params(params, H, num_labels, Lp)

    # GEMM chunk over S: keep each chunk's (chunk*Bp, 6H) f32 result small
    # (well within the 64-vreg file) so the store into gi is direct.
    s_chunk = 1
    for c in (8, 4, 2):
        if S % c == 0 and c * Bp * 6 * H * 4 <= 128 * 1024:
            s_chunk = c
            break

    # Full unroll only for short sequences; partial unroll otherwise.
    unroll = True if S <= 32 else 8

    # Generation-aware VMEM ceiling (v5e/v6e: 128 MiB, v7x: 64 MiB per core).
    needed = (int(x.size) * x.dtype.itemsize
              + S * Bp * 6 * H * 4              # gi scratch (f32)
              + S * Bp * Lp * 4                 # logits output (f32)
              + sum(int(v.size) * v.dtype.itemsize for v in kp.values()))
    try:
        vmem_cap = int(pltpu.get_tpu_info().vmem_capacity_bytes)
    except Exception:
        vmem_cap = 64 * 1024 * 1024             # conservative (v7x per-core)
    vmem_limit = int(min(max(32 * 1024 * 1024, 2 * needed + (8 << 20)),
                         int(0.85 * vmem_cap)))

    kernel = functools.partial(_bigru_classifier_kernel, hidden_size=H,
                               s_chunk=s_chunk, unroll=unroll)
    out = pl.pallas_call(
        kernel,
        out_shape=jax.ShapeDtypeStruct((S, Bp, Lp), jnp.float32),
        in_specs=[pl.BlockSpec(memory_space=pltpu.MemorySpace.VMEM)] * 8,
        out_specs=pl.BlockSpec(memory_space=pltpu.MemorySpace.VMEM),
        scratch_shapes=[pltpu.VMEM((S, Bp, 6 * H), jnp.float32)],
        compiler_params=pltpu.CompilerParams(vmem_limit_bytes=vmem_limit),
    )(x, kp["wih_cat"], kp["bih_cat"], kp["whh_bd"], kp["bhh_cat"],
      kp["wcls_top"], kp["wcls_bot"], kp["bcls_p"])

    logits = out[:, :B, :num_labels]             # drop padded batch rows / lanes
    return jnp.transpose(logits, (1, 0, 2))      # (B, S, num_labels)


# ----------------------------------------------------------------------------
# Deterministic parameter init (PyTorch-style uniform(-1/sqrt(fan), 1/sqrt(fan)))
# ----------------------------------------------------------------------------
def init_params(key, d_model, hidden_size, num_labels):
    H = hidden_size
    ks = jax.random.split(key, 8)
    kg = 1.0 / jnp.sqrt(jnp.float32(H))
    kc = 1.0 / jnp.sqrt(jnp.float32(2 * H))

    def u(k_, shape, bound):
        return jax.random.uniform(k_, shape, jnp.float32, -bound, bound)

    return dict(
        wih_f_T=u(ks[0], (d_model, 3 * H), kg),   # W_ih^T (fwd), cols [r|z|n]
        whh_f_T=u(ks[1], (H, 3 * H), kg),         # W_hh^T (fwd)
        b_f=u(ks[2], (2, 3 * H), kg),             # [b_ih; b_hh] (fwd)
        wih_b_T=u(ks[3], (d_model, 3 * H), kg),   # W_ih^T (bwd)
        whh_b_T=u(ks[4], (H, 3 * H), kg),         # W_hh^T (bwd)
        b_b=u(ks[5], (2, 3 * H), kg),             # [b_ih; b_hh] (bwd)
        wcls_T=u(ks[6], (2 * H, num_labels), kc),
        bcls=u(ks[7], (1, num_labels), kc),
    )


# ----------------------------------------------------------------------------
# Pure-JAX reference (for correctness check, f32 throughout)
# ----------------------------------------------------------------------------
def _gru_dir_ref(x_sbd, wih_T, whh_T, b_ih, b_hh, H, reverse):
    def step(h, x_t):
        gi = x_t @ wih_T + b_ih
        gh = h @ whh_T + b_hh
        r = jax.nn.sigmoid(gi[:, :H] + gh[:, :H])
        z = jax.nn.sigmoid(gi[:, H:2 * H] + gh[:, H:2 * H])
        n = jnp.tanh(gi[:, 2 * H:] + r * gh[:, 2 * H:])
        h_new = (1.0 - z) * n + z * h
        return h_new, h_new

    h0 = jnp.zeros((x_sbd.shape[1], H), jnp.float32)
    _, hs = lax.scan(step, h0, x_sbd, reverse=reverse)
    return hs  # (S, B, H), stored at original time indices


def reference_forward(sequence_output, params, *, hidden_size, num_labels):
    H = hidden_size
    x = jnp.transpose(sequence_output, (1, 0, 2)).astype(jnp.float32)
    hf = _gru_dir_ref(x, params["wih_f_T"], params["whh_f_T"],
                      params["b_f"][0], params["b_f"][1], H, reverse=False)
    hb = _gru_dir_ref(x, params["wih_b_T"], params["whh_b_T"],
                      params["b_b"][0], params["b_b"][1], H, reverse=True)
    gru_out = jnp.concatenate([hf, hb], axis=-1)                 # (S, B, 2H)
    logits = gru_out @ params["wcls_T"] + params["bcls"][0]      # (S, B, L)
    return jnp.transpose(logits, (1, 0, 2))


# ----------------------------------------------------------------------------
# Main
# ----------------------------------------------------------------------------
if __name__ == "__main__":
    B, S = 2, 16          # batch, sequence length
    VOCAB = 32
    D_MODEL = 128         # stand-in transformer hidden size
    HIDDEN = 128          # GRU hidden size (lane-aligned)
    NUM_LABELS = 6        # IOB labels 0..5

    key = jax.random.PRNGKey(0)
    k_emb, k_ids, k_par = jax.random.split(key, 3)

    # TODO(synk): pretrained deberta-v3-large transformer is not reproducible
    # in-script; replaced with a deterministic embedding lookup stand-in.
    input_ids = jax.random.randint(k_ids, (B, S), 0, VOCAB)
    attention_mask = jnp.ones((B, S), dtype=jnp.float32)
    emb_table = jax.random.normal(k_emb, (VOCAB, D_MODEL), jnp.float32) * 0.1
    sequence_output = emb_table[input_ids] * attention_mask[..., None]   # (B, S, D)

    params = init_params(k_par, D_MODEL, HIDDEN, NUM_LABELS)

    logits = gru_with_transformer_head(sequence_output, params,
                                       hidden_size=HIDDEN, num_labels=NUM_LABELS)
    logits = jax.block_until_ready(logits)

    ref = reference_forward(sequence_output, params,
                            hidden_size=HIDDEN, num_labels=NUM_LABELS)
    assert logits.shape == (B, S, NUM_LABELS), logits.shape
    # bf16 MXU operands (f32 accumulation) vs f32 reference -> loosened tolerance.
    assert jnp.allclose(logits, ref, rtol=2e-2, atol=2e-2), "mismatch vs reference"

    print("KERNEL_OK")
</pallas_src>

<mosaic_0001>
module attributes {stable_mosaic.version = 11 : i64} {
  func.func @_bigru_classifier_kernel(%arg0: memref<16x8x128xbf16, #tpu.memory_space<vmem>>, %arg1: memref<128x768xbf16, #tpu.memory_space<vmem>>, %arg2: memref<1x768xf32, #tpu.memory_space<vmem>>, %arg3: memref<256x768xbf16, #tpu.memory_space<vmem>>, %arg4: memref<1x768xf32, #tpu.memory_space<vmem>>, %arg5: memref<128x128xbf16, #tpu.memory_space<vmem>>, %arg6: memref<128x128xbf16, #tpu.memory_space<vmem>>, %arg7: memref<1x128xf32, #tpu.memory_space<vmem>>, %arg8: memref<16x8x128xf32, #tpu.memory_space<vmem>>, %arg9: memref<16x8x768xf32, #tpu.memory_space<vmem>>) attributes {dimension_semantics = [], scalar_prefetch = 0 : i64, scratch_operands = 1 : i64, tpu.core_type = #tpu.core_type<tc>} {
    %c0 = arith.constant 0 : index
    %c0_0 = arith.constant 0 : index
    %0 = vector.load %arg1[%c0, %c0_0] : memref<128x768xbf16, #tpu.memory_space<vmem>>, vector<128x768xbf16>
    %c0_1 = arith.constant 0 : index
    %c0_2 = arith.constant 0 : index
    %1 = vector.load %arg2[%c0_1, %c0_2] : memref<1x768xf32, #tpu.memory_space<vmem>>, vector<1x768xf32>
    %2 = vector.shape_cast %1 : vector<1x768xf32> to vector<1x768xf32>
    %3 = vector.broadcast %2 : vector<1x768xf32> to vector<32x768xf32>
    %c0_i32 = arith.constant 0 : i32
    %c4_i32 = arith.constant 4 : i32
    %4 = arith.addi %c0_i32, %c4_i32 : i32
    %c1_i32 = arith.constant 1 : i32
    scf.for %arg10 = %c0_i32 to %4 step %c1_i32  : i32 {
      %c4_i32_371 = arith.constant 4 : i32
      %1409 = arith.muli %arg10, %c4_i32_371 : i32
      %1410 = tpu.assume_multiple %1409, 4 : i32
      %1411 = arith.index_cast %1410 : i32 to index
      %c0_372 = arith.constant 0 : index
      %c0_373 = arith.constant 0 : index
      %1412 = vector.load %arg0[%1411, %c0_372, %c0_373] : memref<16x8x128xbf16, #tpu.memory_space<vmem>>, vector<4x8x128xbf16>
      %1413 = vector.shape_cast %1412 : vector<4x8x128xbf16> to vector<32x128xbf16>
      %cst_374 = arith.constant dense<0.000000e+00> : vector<32x768xf32>
      %1414 = tpu.matmul %1413, %0, %cst_374 {dimension_numbers = #tpu.dot_dimension_numbers<[1], [0], [0], [1], [0, 0, 1, 1], [], []>} : vector<32x128xbf16>, vector<128x768xbf16>, vector<32x768xf32> -> vector<32x768xf32>
      %1415 = arith.addf %1414, %3 : vector<32x768xf32>
      %1416 = vector.shape_cast %1415 : vector<32x768xf32> to vector<4x8x768xf32>
      %1417 = arith.index_cast %1410 : i32 to index
      %c0_375 = arith.constant 0 : index
      %c0_376 = arith.constant 0 : index
      %1418 = vector.load %arg9[%1417, %c0_375, %c0_376] : memref<16x8x768xf32, #tpu.memory_space<vmem>>, vector<4x8x768xf32>
      tpu.vector_store %arg9[%1417, %c0_375, %c0_376], %1416 {strides = array<i32>} : memref<16x8x768xf32, #tpu.memory_space<vmem>>, vector<4x8x768xf32>,
    }
    %c4_i32_3 = arith.constant 4 : i32
    %c0_4 = arith.constant 0 : index
    %c0_5 = arith.constant 0 : index
    %5 = vector.load %arg7[%c0_4, %c0_5] : memref<1x128xf32, #tpu.memory_space<vmem>>, vector<1x128xf32>
    %6 = vector.shape_cast %5 : vector<1x128xf32> to vector<1x1x128xf32>
    %7 = vector.shape_cast %6 : vector<1x1x128xf32> to vector<1x1x128xf32>
    %8 = vector.broadcast %7 : vector<1x1x128xf32> to vector<16x8x128xf32>
    %c0_6 = arith.constant 0 : index
    %c0_7 = arith.constant 0 : index
    %c0_8 = arith.constant 0 : index
    %9 = vector.load %arg8[%c0_6, %c0_7, %c0_8] : memref<16x8x128xf32, #tpu.memory_space<vmem>>, vector<16x8x128xf32>
    tpu.vector_store %arg8[%c0_6, %c0_7, %c0_8], %8 {strides = array<i32>} : memref<16x8x128xf32, #tpu.memory_space<vmem>>, vector<16x8x128xf32>,
    %c0_9 = arith.constant 0 : index
    %c0_10 = arith.constant 0 : index
    %10 = vector.load %arg3[%c0_9, %c0_10] : memref<256x768xbf16, #tpu.memory_space<vmem>>, vector<256x768xbf16>
    %c0_11 = arith.constant 0 : index
    %c0_12 = arith.constant 0 : index
    %11 = vector.load %arg5[%c0_11, %c0_12] : memref<128x128xbf16, #tpu.memory_space<vmem>>, vector<128x128xbf16>
    %c0_13 = arith.constant 0 : index
    %c0_14 = arith.constant 0 : index
    %12 = vector.load %arg6[%c0_13, %c0_14] : memref<128x128xbf16, #tpu.memory_space<vmem>>, vector<128x128xbf16>
    %c0_15 = arith.constant 0 : index
    %c0_16 = arith.constant 0 : index
    %13 = vector.load %arg4[%c0_15, %c0_16] : memref<1x768xf32, #tpu.memory_space<vmem>>, vector<1x768xf32>
    %14 = vector.shape_cast %13 : vector<1x768xf32> to vector<1x768xf32>
    %15 = vector.broadcast %14 : vector<1x768xf32> to vector<8x768xf32>
    %cst = arith.constant 0.000000e+00 : f32
    %16 = vector.broadcast %cst : f32 to vector<8x256xf32>
    %c0_i32_17 = arith.constant 0 : i32
    %c15_i32 = arith.constant 15 : i32
    %17 = arith.subi %c15_i32, %c0_i32_17 : i32
    %18 = arith.truncf %16 : vector<8x256xf32> to vector<8x256xbf16>
    %cst_18 = arith.constant dense<0.000000e+00> : vector<8x768xf32>
    %19 = tpu.matmul %18, %10, %cst_18 {dimension_numbers = #tpu.dot_dimension_numbers<[1], [0], [0], [1], [0, 0, 1, 1], [], []>} : vector<8x256xbf16>, vector<256x768xbf16>, vector<8x768xf32> -> vector<8x768xf32>
    %20 = arith.addf %19, %15 : vector<8x768xf32>
    %21 = arith.index_cast %c0_i32_17 : i32 to index
    %c0_19 = arith.constant 0 : index
    %c0_20 = arith.constant 0 : index
    %22 = vector.load %arg9[%21, %c0_19, %c0_20] : memref<16x8x768xf32, #tpu.memory_space<vmem>>, vector<1x8x384xf32>
    %23 = vector.shape_cast %22 : vector<1x8x384xf32> to vector<8x384xf32>
    %24 = vector.extract_strided_slice %20 {offsets = [0, 0], sizes = [8, 384], strides = [1, 1]} : vector<8x768xf32> to vector<8x384xf32>
    %25 = vector.extract_strided_slice %16 {offsets = [0, 0], sizes = [8, 128], strides = [1, 1]} : vector<8x256xf32> to vector<8x128xf32>
    %26 = vector.extract_strided_slice %23 {offsets = [0, 0], sizes = [8, 128], strides = [1, 1]} : vector<8x384xf32> to vector<8x128xf32>
    %27 = vector.extract_strided_slice %24 {offsets = [0, 0], sizes = [8, 128], strides = [1, 1]} : vector<8x384xf32> to vector<8x128xf32>
    %28 = arith.addf %26, %27 : vector<8x128xf32>
    %29 = arith.negf %28 : vector<8x128xf32>
    %30 = math.exp %29 : vector<8x128xf32>
    %cst_21 = arith.constant 1.000000e+00 : f32
    %31 = vector.broadcast %cst_21 : f32 to vector<8x128xf32>
    %32 = arith.addf %31, %30 : vector<8x128xf32>
    %33 = arith.divf %31, %32 : vector<8x128xf32>
    %34 = vector.extract_strided_slice %23 {offsets = [0, 128], sizes = [8, 128], strides = [1, 1]} : vector<8x384xf32> to vector<8x128xf32>
    %35 = vector.extract_strided_slice %24 {offsets = [0, 128], sizes = [8, 128], strides = [1, 1]} : vector<8x384xf32> to vector<8x128xf32>
    %36 = arith.addf %34, %35 : vector<8x128xf32>
    %37 = arith.negf %36 : vector<8x128xf32>
    %38 = math.exp %37 : vector<8x128xf32>
    %cst_22 = arith.constant 1.000000e+00 : f32
    %39 = vector.broadcast %cst_22 : f32 to vector<8x128xf32>
    %40 = arith.addf %39, %38 : vector<8x128xf32>
    %41 = arith.divf %39, %40 : vector<8x128xf32>
    %42 = vector.extract_strided_slice %23 {offsets = [0, 256], sizes = [8, 128], strides = [1, 1]} : vector<8x384xf32> to vector<8x128xf32>
    %43 = vector.extract_strided_slice %24 {offsets = [0, 256], sizes = [8, 128], strides = [1, 1]} : vector<8x384xf32> to vector<8x128xf32>
    %44 = arith.mulf %33, %43 : vector<8x128xf32>
    %45 = arith.addf %42, %44 : vector<8x128xf32>
    %46 = math.tanh %45 : vector<8x128xf32>
    %cst_23 = arith.constant 1.000000e+00 : f32
    %47 = vector.broadcast %cst_23 : f32 to vector<8x128xf32>
    %48 = arith.subf %47, %41 : vector<8x128xf32>
    %49 = arith.mulf %48, %46 : vector<8x128xf32>
    %50 = arith.mulf %41, %25 : vector<8x128xf32>
    %51 = arith.addf %49, %50 : vector<8x128xf32>
    %52 = arith.index_cast %17 : i32 to index
    %c0_24 = arith.constant 0 : index
    %c384 = arith.constant 384 : index
    %53 = vector.load %arg9[%52, %c0_24, %c384] : memref<16x8x768xf32, #tpu.memory_space<vmem>>, vector<1x8x384xf32>
    %54 = vector.shape_cast %53 : vector<1x8x384xf32> to vector<8x384xf32>
    %55 = vector.extract_strided_slice %20 {offsets = [0, 384], sizes = [8, 384], strides = [1, 1]} : vector<8x768xf32> to vector<8x384xf32>
    %56 = vector.extract_strided_slice %16 {offsets = [0, 128], sizes = [8, 128], strides = [1, 1]} : vector<8x256xf32> to vector<8x128xf32>
    %57 = vector.extract_strided_slice %54 {offsets = [0, 0], sizes = [8, 128], strides = [1, 1]} : vector<8x384xf32> to vector<8x128xf32>
    %58 = vector.extract_strided_slice %55 {offsets = [0, 0], sizes = [8, 128], strides = [1, 1]} : vector<8x384xf32> to vector<8x128xf32>
    %59 = arith.addf %57, %58 : vector<8x128xf32>
    %60 = arith.negf %59 : vector<8x128xf32>
    %61 = math.exp %60 : vector<8x128xf32>
    %cst_25 = arith.constant 1.000000e+00 : f32
    %62 = vector.broadcast %cst_25 : f32 to vector<8x128xf32>
    %63 = arith.addf %62, %61 : vector<8x128xf32>
    %64 = arith.divf %62, %63 : vector<8x128xf32>
    %65 = vector.extract_strided_slice %54 {offsets = [0, 128], sizes = [8, 128], strides = [1, 1]} : vector<8x384xf32> to vector<8x128xf32>
    %66 = vector.extract_strided_slice %55 {offsets = [0, 128], sizes = [8, 128], strides = [1, 1]} : vector<8x384xf32> to vector<8x128xf32>
    %67 = arith.addf %65, %66 : vector<8x128xf32>
    %68 = arith.negf %67 : vector<8x128xf32>
    %69 = math.exp %68 : vector<8x128xf32>
    %cst_26 = arith.constant 1.000000e+00 : f32
    %70 = vector.broadcast %cst_26 : f32 to vector<8x128xf32>
    %71 = arith.addf %70, %69 : vector<8x128xf32>
    %72 = arith.divf %70, %71 : vector<8x128xf32>
    %73 = vector.extract_strided_slice %54 {offsets = [0, 256], sizes = [8, 128], strides = [1, 1]} : vector<8x384xf32> to vector<8x128xf32>
    %74 = vector.extract_strided_slice %55 {offsets = [0, 256], sizes = [8, 128], strides = [1, 1]} : vector<8x384xf32> to vector<8x128xf32>
    %75 = arith.mulf %64, %74 : vector<8x128xf32>
    %76 = arith.addf %73, %75 : vector<8x128xf32>
    %77 = math.tanh %76 : vector<8x128xf32>
    %cst_27 = arith.constant 1.000000e+00 : f32
    %78 = vector.broadcast %cst_27 : f32 to vector<8x128xf32>
    %79 = arith.subf %78, %72 : vector<8x128xf32>
    %80 = arith.mulf %79, %77 : vector<8x128xf32>
    %81 = arith.mulf %72, %56 : vector<8x128xf32>
    %82 = arith.addf %80, %81 : vector<8x128xf32>
    %83 = arith.index_cast %c0_i32_17 : i32 to index
    %c0_28 = arith.constant 0 : index
    %c0_29 = arith.constant 0 : index
    %84 = vector.load %arg8[%83, %c0_28, %c0_29] : memref<16x8x128xf32, #tpu.memory_space<vmem>>, vector<1x8x128xf32>
    %85 = vector.shape_cast %84 : vector<1x8x128xf32> to vector<8x128xf32>
    %86 = arith.truncf %51 : vector<8x128xf32> to vector<8x128xbf16>
    %cst_30 = arith.constant dense<0.000000e+00> : vector<8x128xf32>
    %87 = tpu.matmul %86, %11, %cst_30 {dimension_numbers = #tpu.dot_dimension_numbers<[1], [0], [0], [1], [0, 0, 1, 1], [], []>} : vector<8x128xbf16>, vector<128x128xbf16>, vector<8x128xf32> -> vector<8x128xf32>
    %88 = arith.addf %85, %87 : vector<8x128xf32>
    %89 = arith.index_cast %c0_i32_17 : i32 to index
    %c0_31 = arith.constant 0 : index
    %c0_32 = arith.constant 0 : index
    %90 = vector.load %arg8[%89, %c0_31, %c0_32] : memref<16x8x128xf32, #tpu.memory_space<vmem>>, vector<1x8x128xf32>
    %91 = vector.shape_cast %90 : vector<1x8x128xf32> to vector<8x128xf32>
    %92 = vector.shape_cast %88 : vector<8x128xf32> to vector<1x8x128xf32>
    tpu.vector_store %arg8[%89, %c0_31, %c0_32], %92 {strides = array<i32>} : memref<16x8x128xf32, #tpu.memory_space<vmem>>, vector<1x8x128xf32>,
    %93 = arith.index_cast %17 : i32 to index
    %c0_33 = arith.constant 0 : index
    %c0_34 = arith.constant 0 : index
    %94 = vector.load %arg8[%93, %c0_33, %c0_34] : memref<16x8x128xf32, #tpu.memory_space<vmem>>, vector<1x8x128xf32>
    %95 = vector.shape_cast %94 : vector<1x8x128xf32> to vector<8x128xf32>
    %96 = arith.truncf %82 : vector<8x128xf32> to vector<8x128xbf16>
    %cst_35 = arith.constant dense<0.000000e+00> : vector<8x128xf32>
    %97 = tpu.matmul %96, %12, %cst_35 {dimension_numbers = #tpu.dot_dimension_numbers<[1], [0], [0], [1], [0, 0, 1, 1], [], []>} : vector<8x128xbf16>, vector<128x128xbf16>, vector<8x128xf32> -> vector<8x128xf32>
    %98 = arith.addf %95, %97 : vector<8x128xf32>
    %99 = arith.index_cast %17 : i32 to index
    %c0_36 = arith.constant 0 : index
    %c0_37 = arith.constant 0 : index
    %100 = vector.load %arg8[%99, %c0_36, %c0_37] : memref<16x8x128xf32, #tpu.memory_space<vmem>>, vector<1x8x128xf32>
    %101 = vector.shape_cast %100 : vector<1x8x128xf32> to vector<8x128xf32>
    %102 = vector.shape_cast %98 : vector<8x128xf32> to vector<1x8x128xf32>
    tpu.vector_store %arg8[%99, %c0_36, %c0_37], %102 {strides = array<i32>} : memref<16x8x128xf32, #tpu.memory_space<vmem>>, vector<1x8x128xf32>,
    %103 = tpu.concatenate %51, %82 in 1 : vector<8x128xf32>, vector<8x128xf32> -> vector<8x256xf32>
    %c1_i32_38 = arith.constant 1 : i32
    %c15_i32_39 = arith.constant 15 : i32
    %104 = arith.subi %c15_i32_39, %c1_i32_38 : i32
    %105 = arith.truncf %103 : vector<8x256xf32> to vector<8x256xbf16>
    %cst_40 = arith.constant dense<0.000000e+00> : vector<8x768xf32>
    %106 = tpu.matmul %105, %10, %cst_40 {dimension_numbers = #tpu.dot_dimension_numbers<[1], [0], [0], [1], [0, 0, 1, 1], [], []>} : vector<8x256xbf16>, vector<256x768xbf16>, vector<8x768xf32> -> vector<8x768xf32>
    %107 = arith.addf %106, %15 : vector<8x768xf32>
    %108 = arith.index_cast %c1_i32_38 : i32 to index
    %c0_41 = arith.constant 0 : index
    %c0_42 = arith.constant 0 : index
    %109 = vector.load %arg9[%108, %c0_41, %c0_42] : memref<16x8x768xf32, #tpu.memory_space<vmem>>, vector<1x8x384xf32>
    %110 = vector.shape_cast %109 : vector<1x8x384xf32> to vector<8x384xf32>
    %111 = vector.extract_strided_slice %107 {offsets = [0, 0], sizes = [8, 384], strides = [1, 1]} : vector<8x768xf32> to vector<8x384xf32>
    %112 = vector.extract_strided_slice %103 {offsets = [0, 0], sizes = [8, 128], strides = [1, 1]} : vector<8x256xf32> to vector<8x128xf32>
    %113 = vector.extract_strided_slice %110 {offsets = [0, 0], sizes = [8, 128], strides = [1, 1]} : vector<8x384xf32> to vector<8x128xf32>
    %114 = vector.extract_strided_slice %111 {offsets = [0, 0], sizes = [8, 128], strides = [1, 1]} : vector<8x384xf32> to vector<8x128xf32>
    %115 = arith.addf %113, %114 : vector<8x128xf32>
    %116 = arith.negf %115 : vector<8x128xf32>
    %117 = math.exp %116 : vector<8x128xf32>
    %cst_43 = arith.constant 1.000000e+00 : f32
    %118 = vector.broadcast %cst_43 : f32 to vector<8x128xf32>
    %119 = arith.addf %118, %117 : vector<8x128xf32>
    %120 = arith.divf %118, %119 : vector<8x128xf32>
    %121 = vector.extract_strided_slice %110 {offsets = [0, 128], sizes = [8, 128], strides = [1, 1]} : vector<8x384xf32> to vector<8x128xf32>
    %122 = vector.extract_strided_slice %111 {offsets = [0, 128], sizes = [8, 128], strides = [1, 1]} : vector<8x384xf32> to vector<8x128xf32>
    %123 = arith.addf %121, %122 : vector<8x128xf32>
    %124 = arith.negf %123 : vector<8x128xf32>
    %125 = math.exp %124 : vector<8x128xf32>
    %cst_44 = arith.constant 1.000000e+00 : f32
    %126 = vector.broadcast %cst_44 : f32 to vector<8x128xf32>
    %127 = arith.addf %126, %125 : vector<8x128xf32>
    %128 = arith.divf %126, %127 : vector<8x128xf32>
    %129 = vector.extract_strided_slice %110 {offsets = [0, 256], sizes = [8, 128], strides = [1, 1]} : vector<8x384xf32> to vector<8x128xf32>
    %130 = vector.extract_strided_slice %111 {offsets = [0, 256], sizes = [8, 128], strides = [1, 1]} : vector<8x384xf32> to vector<8x128xf32>
    %131 = arith.mulf %120, %130 : vector<8x128xf32>
    %132 = arith.addf %129, %131 : vector<8x128xf32>
    %133 = math.tanh %132 : vector<8x128xf32>
    %cst_45 = arith.constant 1.000000e+00 : f32
    %134 = vector.broadcast %cst_45 : f32 to vector<8x128xf32>
    %135 = arith.subf %134, %128 : vector<8x128xf32>
    %136 = arith.mulf %135, %133 : vector<8x128xf32>
    %137 = arith.mulf %128, %112 : vector<8x128xf32>
    %138 = arith.addf %136, %137 : vector<8x128xf32>
    %139 = arith.index_cast %104 : i32 to index
    %c0_46 = arith.constant 0 : index
    %c384_47 = arith.constant 384 : index
    %140 = vector.load %arg9[%139, %c0_46, %c384_47] : memref<16x8x768xf32, #tpu.memory_space<vmem>>, vector<1x8x384xf32>
    %141 = vector.shape_cast %140 : vector<1x8x384xf32> to vector<8x384xf32>
    %142 = vector.extract_strided_slice %107 {offsets = [0, 384], sizes = [8, 384], strides = [1, 1]} : vector<8x768xf32> to vector<8x384xf32>
    %143 = vector.extract_strided_slice %103 {offsets = [0, 128], sizes = [8, 128], strides = [1, 1]} : vector<8x256xf32> to vector<8x128xf32>
    %144 = vector.extract_strided_slice %141 {offsets = [0, 0], sizes = [8, 128], strides = [1, 1]} : vector<8x384xf32> to vector<8x128xf32>
    %145 = vector.extract_strided_slice %142 {offsets = [0, 0], sizes = [8, 128], strides = [1, 1]} : vector<8x384xf32> to vector<8x128xf32>
    %146 = arith.addf %144, %145 : vector<8x128xf32>
    %147 = arith.negf %146 : vector<8x128xf32>
    %148 = math.exp %147 : vector<8x128xf32>
    %cst_48 = arith.constant 1.000000e+00 : f32
    %149 = vector.broadcast %cst_48 : f32 to vector<8x128xf32>
    %150 = arith.addf %149, %148 : vector<8x128xf32>
    %151 = arith.divf %149, %150 : vector<8x128xf32>
    %152 = vector.extract_strided_slice %141 {offsets = [0, 128], sizes = [8, 128], strides = [1, 1]} : vector<8x384xf32> to vector<8x128xf32>
    %153 = vector.extract_strided_slice %142 {offsets = [0, 128], sizes = [8, 128], strides = [1, 1]} : vector<8x384xf32> to vector<8x128xf32>
    %154 = arith.addf %152, %153 : vector<8x128xf32>
    %155 = arith.negf %154 : vector<8x128xf32>
    %156 = math.exp %155 : vector<8x128xf32>
    %cst_49 = arith.constant 1.000000e+00 : f32
    %157 = vector.broadcast %cst_49 : f32 to vector<8x128xf32>
    %158 = arith.addf %157, %156 : vector<8x128xf32>
    %159 = arith.divf %157, %158 : vector<8x128xf32>
    %160 = vector.extract_strided_slice %141 {offsets = [0, 256], sizes = [8, 128], strides = [1, 1]} : vector<8x384xf32> to vector<8x128xf32>
    %161 = vector.extract_strided_slice %142 {offsets = [0, 256], sizes = [8, 128], strides = [1, 1]} : vector<8x384xf32> to vector<8x128xf32>
    %162 = arith.mulf %151, %161 : vector<8x128xf32>
    %163 = arith.addf %160, %162 : vector<8x128xf32>
    %164 = math.tanh %163 : vector<8x128xf32>
    %cst_50 = arith.constant 1.000000e+00 : f32
    %165 = vector.broadcast %cst_50 : f32 to vector<8x128xf32>
    %166 = arith.subf %165, %159 : vector<8x128xf32>
    %167 = arith.mulf %166, %164 : vector<8x128xf32>
    %168 = arith.mulf %159, %143 : vector<8x128xf32>
    %169 = arith.addf %167, %168 : vector<8x128xf32>
    %170 = arith.index_cast %c1_i32_38 : i32 to index
    %c0_51 = arith.constant 0 : index
    %c0_52 = arith.constant 0 : index
    %171 = vector.load %arg8[%170, %c0_51, %c0_52] : memref<16x8x128xf32, #tpu.memory_space<vmem>>, vector<1x8x128xf32>
    %172 = vector.shape_cast %171 : vector<1x8x128xf32> to vector<8x128xf32>
    %173 = arith.truncf %138 : vector<8x128xf32> to vector<8x128xbf16>
    %cst_53 = arith.constant dense<0.000000e+00> : vector<8x128xf32>
    %174 = tpu.matmul %173, %11, %cst_53 {dimension_numbers = #tpu.dot_dimension_numbers<[1], [0], [0], [1], [0, 0, 1, 1], [], []>} : vector<8x128xbf16>, vector<128x128xbf16>, vector<8x128xf32> -> vector<8x128xf32>
    %175 = arith.addf %172, %174 : vector<8x128xf32>
    %176 = arith.index_cast %c1_i32_38 : i32 to index
    %c0_54 = arith.constant 0 : index
    %c0_55 = arith.constant 0 : index
    %177 = vector.load %arg8[%176, %c0_54, %c0_55] : memref<16x8x128xf32, #tpu.memory_space<vmem>>, vector<1x8x128xf32>
    %178 = vector.shape_cast %177 : vector<1x8x128xf32> to vector<8x128xf32>
    %179 = vector.shape_cast %175 : vector<8x128xf32> to vector<1x8x128xf32>
    tpu.vector_store %arg8[%176, %c0_54, %c0_55], %179 {strides = array<i32>} : memref<16x8x128xf32, #tpu.memory_space<vmem>>, vector<1x8x128xf32>,
    %180 = arith.index_cast %104 : i32 to index
    %c0_56 = arith.constant 0 : index
    %c0_57 = arith.constant 0 : index
    %181 = vector.load %arg8[%180, %c0_56, %c0_57] : memref<16x8x128xf32, #tpu.memory_space<vmem>>, vector<1x8x128xf32>
    %182 = vector.shape_cast %181 : vector<1x8x128xf32> to vector<8x128xf32>
    %183 = arith.truncf %169 : vector<8x128xf32> to vector<8x128xbf16>
    %cst_58 = arith.constant dense<0.000000e+00> : vector<8x128xf32>
    %184 = tpu.matmul %183, %12, %cst_58 {dimension_numbers = #tpu.dot_dimension_numbers<[1], [0], [0], [1], [0, 0, 1, 1], [], []>} : vector<8x128xbf16>, vector<128x128xbf16>, vector<8x128xf32> -> vector<8x128xf32>
    %185 = arith.addf %182, %184 : vector<8x128xf32>
    %186 = arith.index_cast %104 : i32 to index
    %c0_59 = arith.constant 0 : index
    %c0_60 = arith.constant 0 : index
    %187 = vector.load %arg8[%186, %c0_59, %c0_60] : memref<16x8x128xf32, #tpu.memory_space<vmem>>, vector<1x8x128xf32>
    %188 = vector.shape_cast %187 : vector<1x8x128xf32> to vector<8x128xf32>
    %189 = vector.shape_cast %185 : vector<8x128xf32> to vector<1x8x128xf32>
    tpu.vector_store %arg8[%186, %c0_59, %c0_60], %189 {strides = array<i32>} : memref<16x8x128xf32, #tpu.memory_space<vmem>>, vector<1x8x128xf32>,
    %190 = tpu.concatenate %138, %169 in 1 : vector<8x128xf32>, vector<8x128xf32> -> vector<8x256xf32>
    %c2_i32 = arith.constant 2 : i32
    %c15_i32_61 = arith.constant 15 : i32
    %191 = arith.subi %c15_i32_61, %c2_i32 : i32
    %192 = arith.truncf %190 : vector<8x256xf32> to vector<8x256xbf16>
    %cst_62 = arith.constant dense<0.000000e+00> : vector<8x768xf32>
    %193 = tpu.matmul %192, %10, %cst_62 {dimension_numbers = #tpu.dot_dimension_numbers<[1], [0], [0], [1], [0, 0, 1, 1], [], []>} : vector<8x256xbf16>, vector<256x768xbf16>, vector<8x768xf32> -> vector<8x768xf32>
    %194 = arith.addf %193, %15 : vector<8x768xf32>
    %195 = arith.index_cast %c2_i32 : i32 to index
    %c0_63 = arith.constant 0 : index
    %c0_64 = arith.constant 0 : index
    %196 = vector.load %arg9[%195, %c0_63, %c0_64] : memref<16x8x768xf32, #tpu.memory_space<vmem>>, vector<1x8x384xf32>
    %197 = vector.shape_cast %196 : vector<1x8x384xf32> to vector<8x384xf32>
    %198 = vector.extract_strided_slice %194 {offsets = [0, 0], sizes = [8, 384], strides = [1, 1]} : vector<8x768xf32> to vector<8x384xf32>
    %199 = vector.extract_strided_slice %190 {offsets = [0, 0], sizes = [8, 128], strides = [1, 1]} : vector<8x256xf32> to vector<8x128xf32>
    %200 = vector.extract_strided_slice %197 {offsets = [0, 0], sizes = [8, 128], strides = [1, 1]} : vector<8x384xf32> to vector<8x128xf32>
    %201 = vector.extract_strided_slice %198 {offsets = [0, 0], sizes = [8, 128], strides = [1, 1]} : vector<8x384xf32> to vector<8x128xf32>
    %202 = arith.addf %200, %201 : vector<8x128xf32>
    %203 = arith.negf %202 : vector<8x128xf32>
    %204 = math.exp %203 : vector<8x128xf32>
    %cst_65 = arith.constant 1.000000e+00 : f32
    %205 = vector.broadcast %cst_65 : f32 to vector<8x128xf32>
    %206 = arith.addf %205, %204 : vector<8x128xf32>
    %207 = arith.divf %205, %206 : vector<8x128xf32>
    %208 = vector.extract_strided_slice %197 {offsets = [0, 128], sizes = [8, 128], strides = [1, 1]} : vector<8x384xf32> to vector<8x128xf32>
    %209 = vector.extract_strided_slice %198 {offsets = [0, 128], sizes = [8, 128], strides = [1, 1]} : vector<8x384xf32> to vector<8x128xf32>
    %210 = arith.addf %208, %209 : vector<8x128xf32>
    %211 = arith.negf %210 : vector<8x128xf32>
    %212 = math.exp %211 : vector<8x128xf32>
    %cst_66 = arith.constant 1.000000e+00 : f32
    %213 = vector.broadcast %cst_66 : f32 to vector<8x128xf32>
    %214 = arith.addf %213, %212 : vector<8x128xf32>
    %215 = arith.divf %213, %214 : vector<8x128xf32>
    %216 = vector.extract_strided_slice %197 {offsets = [0, 256], sizes = [8, 128], strides = [1, 1]} : vector<8x384xf32> to vector<8x128xf32>
    %217 = vector.extract_strided_slice %198 {offsets = [0, 256], sizes = [8, 128], strides = [1, 1]} : vector<8x384xf32> to vector<8x128xf32>
    %218 = arith.mulf %207, %217 : vector<8x128xf32>
    %219 = arith.addf %216, %218 : vector<8x128xf32>
    %220 = math.tanh %219 : vector<8x128xf32>
    %cst_67 = arith.constant 1.000000e+00 : f32
    %221 = vector.broadcast %cst_67 : f32 to vector<8x128xf32>
    %222 = arith.subf %221, %215 : vector<8x128xf32>
    %223 = arith.mulf %222, %220 : vector<8x128xf32>
    %224 = arith.mulf %215, %199 : vector<8x128xf32>
    %225 = arith.addf %223, %224 : vector<8x128xf32>
    %226 = arith.index_cast %191 : i32 to index
    %c0_68 = arith.constant 0 : index
    %c384_69 = arith.constant 384 : index
    %227 = vector.load %arg9[%226, %c0_68, %c384_69] : memref<16x8x768xf32, #tpu.memory_space<vmem>>, vector<1x8x384xf32>
    %228 = vector.shape_cast %227 : vector<1x8x384xf32> to vector<8x384xf32>
    %229 = vector.extract_strided_slice %194 {offsets = [0, 384], sizes = [8, 384], strides = [1, 1]} : vector<8x768xf32> to vector<8x384xf32>
    %230 = vector.extract_strided_slice %190 {offsets = [0, 128], sizes = [8, 128], strides = [1, 1]} : vector<8x256xf32> to vector<8x128xf32>
    %231 = vector.extract_strided_slice %228 {offsets = [0, 0], sizes = [8, 128], strides = [1, 1]} : vector<8x384xf32> to vector<8x128xf32>
    %232 = vector.extract_strided_slice %229 {offsets = [0, 0], sizes = [8, 128], strides = [1, 1]} : vector<8x384xf32> to vector<8x128xf32>
    %233 = arith.addf %231, %232 : vector<8x128xf32>
    %234 = arith.negf %233 : vector<8x128xf32>
    %235 = math.exp %234 : vector<8x128xf32>
    %cst_70 = arith.constant 1.000000e+00 : f32
    %236 = vector.broadcast %cst_70 : f32 to vector<8x128xf32>
    %237 = arith.addf %236, %235 : vector<8x128xf32>
    %238 = arith.divf %236, %237 : vector<8x128xf32>
    %239 = vector.extract_strided_slice %228 {offsets = [0, 128], sizes = [8, 128], strides = [1, 1]} : vector<8x384xf32> to vector<8x128xf32>
    %240 = vector.extract_strided_slice %229 {offsets = [0, 128], sizes = [8, 128], strides = [1, 1]} : vector<8x384xf32> to vector<8x128xf32>
    %241 = arith.addf %239, %240 : vector<8x128xf32>
    %242 = arith.negf %241 : vector<8x128xf32>
    %243 = math.exp %242 : vector<8x128xf32>
    %cst_71 = arith.constant 1.000000e+00 : f32
    %244 = vector.broadcast %cst_71 : f32 to vector<8x128xf32>
    %245 = arith.addf %244, %243 : vector<8x128xf32>
    %246 = arith.divf %244, %245 : vector<8x128xf32>
    %247 = vector.extract_strided_slice %228 {offsets = [0, 256], sizes = [8, 128], strides = [1, 1]} : vector<8x384xf32> to vector<8x128xf32>
    %248 = vector.extract_strided_slice %229 {offsets = [0, 256], sizes = [8, 128], strides = [1, 1]} : vector<8x384xf32> to vector<8x128xf32>
    %249 = arith.mulf %238, %248 : vector<8x128xf32>
    %250 = arith.addf %247, %249 : vector<8x128xf32>
    %251 = math.tanh %250 : vector<8x128xf32>
    %cst_72 = arith.constant 1.000000e+00 : f32
    %252 = vector.broadcast %cst_72 : f32 to vector<8x128xf32>
    %253 = arith.subf %252, %246 : vector<8x128xf32>
    %254 = arith.mulf %253, %251 : vector<8x128xf32>
    %255 = arith.mulf %246, %230 : vector<8x128xf32>
    %256 = arith.addf %254, %255 : vector<8x128xf32>
    %257 = arith.index_cast %c2_i32 : i32 to index
    %c0_73 = arith.constant 0 : index
    %c0_74 = arith.constant 0 : index
    %258 = vector.load %arg8[%257, %c0_73, %c0_74] : memref<16x8x128xf32, #tpu.memory_space<vmem>>, vector<1x8x128xf32>
    %259 = vector.shape_cast %258 : vector<1x8x128xf32> to vector<8x128xf32>
    %260 = arith.truncf %225 : vector<8x128xf32> to vector<8x128xbf16>
    %cst_75 = arith.constant dense<0.000000e+00> : vector<8x128xf32>
    %261 = tpu.matmul %260, %11, %cst_75 {dimension_numbers = #tpu.dot_dimension_numbers<[1], [0], [0], [1], [0, 0, 1, 1], [], []>} : vector<8x128xbf16>, vector<128x128xbf16>, vector<8x128xf32> -> vector<8x128xf32>
    %262 = arith.addf %259, %261 : vector<8x128xf32>
    %263 = arith.index_cast %c2_i32 : i32 to index
    %c0_76 = arith.constant 0 : index
    %c0_77 = arith.constant 0 : index
    %264 = vector.load %arg8[%263, %c0_76, %c0_77] : memref<16x8x128xf32, #tpu.memory_space<vmem>>, vector<1x8x128xf32>
    %265 = vector.shape_cast %264 : vector<1x8x128xf32> to vector<8x128xf32>
    %266 = vector.shape_cast %262 : vector<8x128xf32> to vector<1x8x128xf32>
    tpu.vector_store %arg8[%263, %c0_76, %c0_77], %266 {strides = array<i32>} : memref<16x8x128xf32, #tpu.memory_space<vmem>>, vector<1x8x128xf32>,
    %267 = arith.index_cast %191 : i32 to index
    %c0_78 = arith.constant 0 : index
    %c0_79 = arith.constant 0 : index
    %268 = vector.load %arg8[%267, %c0_78, %c0_79] : memref<16x8x128xf32, #tpu.memory_space<vmem>>, vector<1x8x128xf32>
    %269 = vector.shape_cast %268 : vector<1x8x128xf32> to vector<8x128xf32>
    %270 = arith.truncf %256 : vector<8x128xf32> to vector<8x128xbf16>
    %cst_80 = arith.constant dense<0.000000e+00> : vector<8x128xf32>
    %271 = tpu.matmul %270, %12, %cst_80 {dimension_numbers = #tpu.dot_dimension_numbers<[1], [0], [0], [1], [0, 0, 1, 1], [], []>} : vector<8x128xbf16>, vector<128x128xbf16>, vector<8x128xf32> -> vector<8x128xf32>
    %272 = arith.addf %269, %271 : vector<8x128xf32>
    %273 = arith.index_cast %191 : i32 to index
    %c0_81 = arith.constant 0 : index
    %c0_82 = arith.constant 0 : index
    %274 = vector.load %arg8[%273, %c0_81, %c0_82] : memref<16x8x128xf32, #tpu.memory_space<vmem>>, vector<1x8x128xf32>
    %275 = vector.shape_cast %274 : vector<1x8x128xf32> to vector<8x128xf32>
    %276 = vector.shape_cast %272 : vector<8x128xf32> to vector<1x8x128xf32>
    tpu.vector_store %arg8[%273, %c0_81, %c0_82], %276 {strides = array<i32>} : memref<16x8x128xf32, #tpu.memory_space<vmem>>, vector<1x8x128xf32>,
    %277 = tpu.concatenate %225, %256 in 1 : vector<8x128xf32>, vector<8x128xf32> -> vector<8x256xf32>
    %c3_i32 = arith.constant 3 : i32
    %c15_i32_83 = arith.constant 15 : i32
    %278 = arith.subi %c15_i32_83, %c3_i32 : i32
    %279 = arith.truncf %277 : vector<8x256xf32> to vector<8x256xbf16>
    %cst_84 = arith.constant dense<0.000000e+00> : vector<8x768xf32>
    %280 = tpu.matmul %279, %10, %cst_84 {dimension_numbers = #tpu.dot_dimension_numbers<[1], [0], [0], [1], [0, 0, 1, 1], [], []>} : vector<8x256xbf16>, vector<256x768xbf16>, vector<8x768xf32> -> vector<8x768xf32>
    %281 = arith.addf %280, %15 : vector<8x768xf32>
    %282 = arith.index_cast %c3_i32 : i32 to index
    %c0_85 = arith.constant 0 : index
    %c0_86 = arith.constant 0 : index
    %283 = vector.load %arg9[%282, %c0_85, %c0_86] : memref<16x8x768xf32, #tpu.memory_space<vmem>>, vector<1x8x384xf32>
    %284 = vector.shape_cast %283 : vector<1x8x384xf32> to vector<8x384xf32>
    %285 = vector.extract_strided_slice %281 {offsets = [0, 0], sizes = [8, 384], strides = [1, 1]} : vector<8x768xf32> to vector<8x384xf32>
    %286 = vector.extract_strided_slice %277 {offsets = [0, 0], sizes = [8, 128], strides = [1, 1]} : vector<8x256xf32> to vector<8x128xf32>
    %287 = vector.extract_strided_slice %284 {offsets = [0, 0], sizes = [8, 128], strides = [1, 1]} : vector<8x384xf32> to vector<8x128xf32>
    %288 = vector.extract_strided_slice %285 {offsets = [0, 0], sizes = [8, 128], strides = [1, 1]} : vector<8x384xf32> to vector<8x128xf32>
    %289 = arith.addf %287, %288 : vector<8x128xf32>
    %290 = arith.negf %289 : vector<8x128xf32>
    %291 = math.exp %290 : vector<8x128xf32>
    %cst_87 = arith.constant 1.000000e+00 : f32
    %292 = vector.broadcast %cst_87 : f32 to vector<8x128xf32>
    %293 = arith.addf %292, %291 : vector<8x128xf32>
    %294 = arith.divf %292, %293 : vector<8x128xf32>
    %295 = vector.extract_strided_slice %284 {offsets = [0, 128], sizes = [8, 128], strides = [1, 1]} : vector<8x384xf32> to vector<8x128xf32>
    %296 = vector.extract_strided_slice %285 {offsets = [0, 128], sizes = [8, 128], strides = [1, 1]} : vector<8x384xf32> to vector<8x128xf32>
    %297 = arith.addf %295, %296 : vector<8x128xf32>
    %298 = arith.negf %297 : vector<8x128xf32>
    %299 = math.exp %298 : vector<8x128xf32>
    %cst_88 = arith.constant 1.000000e+00 : f32
    %300 = vector.broadcast %cst_88 : f32 to vector<8x128xf32>
    %301 = arith.addf %300, %299 : vector<8x128xf32>
    %302 = arith.divf %300, %301 : vector<8x128xf32>
    %303 = vector.extract_strided_slice %284 {offsets = [0, 256], sizes = [8, 128], strides = [1, 1]} : vector<8x384xf32> to vector<8x128xf32>
    %304 = vector.extract_strided_slice %285 {offsets = [0, 256], sizes = [8, 128], strides = [1, 1]} : vector<8x384xf32> to vector<8x128xf32>
    %305 = arith.mulf %294, %304 : vector<8x128xf32>
    %306 = arith.addf %303, %305 : vector<8x128xf32>
    %307 = math.tanh %306 : vector<8x128xf32>
    %cst_89 = arith.constant 1.000000e+00 : f32
    %308 = vector.broadcast %cst_89 : f32 to vector<8x128xf32>
    %309 = arith.subf %308, %302 : vector<8x128xf32>
    %310 = arith.mulf %309, %307 : vector<8x128xf32>
    %311 = arith.mulf %302, %286 : vector<8x128xf32>
    %312 = arith.addf %310, %311 : vector<8x128xf32>
    %313 = arith.index_cast %278 : i32 to index
    %c0_90 = arith.constant 0 : index
    %c384_91 = arith.constant 384 : index
    %314 = vector.load %arg9[%313, %c0_90, %c384_91] : memref<16x8x768xf32, #tpu.memory_space<vmem>>, vector<1x8x384xf32>
    %315 = vector.shape_cast %314 : vector<1x8x384xf32> to vector<8x384xf32>
    %316 = vector.extract_strided_slice %281 {offsets = [0, 384], sizes = [8, 384], strides = [1, 1]} : vector<8x768xf32> to vector<8x384xf32>
    %317 = vector.extract_strided_slice %277 {offsets = [0, 128], sizes = [8, 128], strides = [1, 1]} : vector<8x256xf32> to vector<8x128xf32>
    %318 = vector.extract_strided_slice %315 {offsets = [0, 0], sizes = [8, 128], strides = [1, 1]} : vector<8x384xf32> to vector<8x128xf32>
    %319 = vector.extract_strided_slice %316 {offsets = [0, 0], sizes = [8, 128], strides = [1, 1]} : vector<8x384xf32> to vector<8x128xf32>
    %320 = arith.addf %318, %319 : vector<8x128xf32>
    %321 = arith.negf %320 : vector<8x128xf32>
    %322 = math.exp %321 : vector<8x128xf32>
    %cst_92 = arith.constant 1.000000e+00 : f32
    %323 = vector.broadcast %cst_92 : f32 to vector<8x128xf32>
    %324 = arith.addf %323, %322 : vector<8x128xf32>
    %325 = arith.divf %323, %324 : vector<8x128xf32>
    %326 = vector.extract_strided_slice %315 {offsets = [0, 128], sizes = [8, 128], strides = [1, 1]} : vector<8x384xf32> to vector<8x128xf32>
    %327 = vector.extract_strided_slice %316 {offsets = [0, 128], sizes = [8, 128], strides = [1, 1]} : vector<8x384xf32> to vector<8x128xf32>
    %328 = arith.addf %326, %327 : vector<8x128xf32>
    %329 = arith.negf %328 : vector<8x128xf32>
    %330 = math.exp %329 : vector<8x128xf32>
    %cst_93 = arith.constant 1.000000e+00 : f32
    %331 = vector.broadcast %cst_93 : f32 to vector<8x128xf32>
    %332 = arith.addf %331, %330 : vector<8x128xf32>
    %333 = arith.divf %331, %332 : vector<8x128xf32>
    %334 = vector.extract_strided_slice %315 {offsets = [0, 256], sizes = [8, 128], strides = [1, 1]} : vector<8x384xf32> to vector<8x128xf32>
    %335 = vector.extract_strided_slice %316 {offsets = [0, 256], sizes = [8, 128], strides = [1, 1]} : vector<8x384xf32> to vector<8x128xf32>
    %336 = arith.mulf %325, %335 : vector<8x128xf32>
    %337 = arith.addf %334, %336 : vector<8x128xf32>
    %338 = math.tanh %337 : vector<8x128xf32>
    %cst_94 = arith.constant 1.000000e+00 : f32
    %339 = vector.broadcast %cst_94 : f32 to vector<8x128xf32>
    %340 = arith.subf %339, %333 : vector<8x128xf32>
    %341 = arith.mulf %340, %338 : vector<8x128xf32>
    %342 = arith.mulf %333, %317 : vector<8x128xf32>
    %343 = arith.addf %341, %342 : vector<8x128xf32>
    %344 = arith.index_cast %c3_i32 : i32 to index
    %c0_95 = arith.constant 0 : index
    %c0_96 = arith.constant 0 : index
    %345 = vector.load %arg8[%344, %c0_95, %c0_96] : memref<16x8x128xf32, #tpu.memory_space<vmem>>, vector<1x8x128xf32>
    %346 = vector.shape_cast %345 : vector<1x8x128xf32> to vector<8x128xf32>
    %347 = arith.truncf %312 : vector<8x128xf32> to vector<8x128xbf16>
    %cst_97 = arith.constant dense<0.000000e+00> : vector<8x128xf32>
    %348 = tpu.matmul %347, %11, %cst_97 {dimension_numbers = #tpu.dot_dimension_numbers<[1], [0], [0], [1], [0, 0, 1, 1], [], []>} : vector<8x128xbf16>, vector<128x128xbf16>, vector<8x128xf32> -> vector<8x128xf32>
    %349 = arith.addf %346, %348 : vector<8x128xf32>
    %350 = arith.index_cast %c3_i32 : i32 to index
    %c0_98 = arith.constant 0 : index
    %c0_99 = arith.constant 0 : index
    %351 = vector.load %arg8[%350, %c0_98, %c0_99] : memref<16x8x128xf32, #tpu.memory_space<vmem>>, vector<1x8x128xf32>
    %352 = vector.shape_cast %351 : vector<1x8x128xf32> to vector<8x128xf32>
    %353 = vector.shape_cast %349 : vector<8x128xf32> to vector<1x8x128xf32>
    tpu.vector_store %arg8[%350, %c0_98, %c0_99], %353 {strides = array<i32>} : memref<16x8x128xf32, #tpu.memory_space<vmem>>, vector<1x8x128xf32>,
    %354 = arith.index_cast %278 : i32 to index
    %c0_100 = arith.constant 0 : index
    %c0_101 = arith.constant 0 : index
    %355 = vector.load %arg8[%354, %c0_100, %c0_101] : memref<16x8x128xf32, #tpu.memory_space<vmem>>, vector<1x8x128xf32>
    %356 = vector.shape_cast %355 : vector<1x8x128xf32> to vector<8x128xf32>
    %357 = arith.truncf %343 : vector<8x128xf32> to vector<8x128xbf16>
    %cst_102 = arith.constant dense<0.000000e+00> : vector<8x128xf32>
    %358 = tpu.matmul %357, %12, %cst_102 {dimension_numbers = #tpu.dot_dimension_numbers<[1], [0], [0], [1], [0, 0, 1, 1], [], []>} : vector<8x128xbf16>, vector<128x128xbf16>, vector<8x128xf32> -> vector<8x128xf32>
    %359 = arith.addf %356, %358 : vector<8x128xf32>
    %360 = arith.index_cast %278 : i32 to index
    %c0_103 = arith.constant 0 : index
    %c0_104 = arith.constant 0 : index
    %361 = vector.load %arg8[%360, %c0_103, %c0_104] : memref<16x8x128xf32, #tpu.memory_space<vmem>>, vector<1x8x128xf32>
    %362 = vector.shape_cast %361 : vector<1x8x128xf32> to vector<8x128xf32>
    %363 = vector.shape_cast %359 : vector<8x128xf32> to vector<1x8x128xf32>
    tpu.vector_store %arg8[%360, %c0_103, %c0_104], %363 {strides = array<i32>} : memref<16x8x128xf32, #tpu.memory_space<vmem>>, vector<1x8x128xf32>,
    %364 = tpu.concatenate %312, %343 in 1 : vector<8x128xf32>, vector<8x128xf32> -> vector<8x256xf32>
    %c4_i32_105 = arith.constant 4 : i32
    %c15_i32_106 = arith.constant 15 : i32
    %365 = arith.subi %c15_i32_106, %c4_i32_105 : i32
    %366 = arith.truncf %364 : vector<8x256xf32> to vector<8x256xbf16>
    %cst_107 = arith.constant dense<0.000000e+00> : vector<8x768xf32>
    %367 = tpu.matmul %366, %10, %cst_107 {dimension_numbers = #tpu.dot_dimension_numbers<[1], [0], [0], [1], [0, 0, 1, 1], [], []>} : vector<8x256xbf16>, vector<256x768xbf16>, vector<8x768xf32> -> vector<8x768xf32>
    %368 = arith.addf %367, %15 : vector<8x768xf32>
    %369 = arith.index_cast %c4_i32_105 : i32 to index
    %c0_108 = arith.constant 0 : index
    %c0_109 = arith.constant 0 : index
    %370 = vector.load %arg9[%369, %c0_108, %c0_109] : memref<16x8x768xf32, #tpu.memory_space<vmem>>, vector<1x8x384xf32>
    %371 = vector.shape_cast %370 : vector<1x8x384xf32> to vector<8x384xf32>
    %372 = vector.extract_strided_slice %368 {offsets = [0, 0], sizes = [8, 384], strides = [1, 1]} : vector<8x768xf32> to vector<8x384xf32>
    %373 = vector.extract_strided_slice %364 {offsets = [0, 0], sizes = [8, 128], strides = [1, 1]} : vector<8x256xf32> to vector<8x128xf32>
    %374 = vector.extract_strided_slice %371 {offsets = [0, 0], sizes = [8, 128], strides = [1, 1]} : vector<8x384xf32> to vector<8x128xf32>
    %375 = vector.extract_strided_slice %372 {offsets = [0, 0], sizes = [8, 128], strides = [1, 1]} : vector<8x384xf32> to vector<8x128xf32>
    %376 = arith.addf %374, %375 : vector<8x128xf32>
    %377 = arith.negf %376 : vector<8x128xf32>
    %378 = math.exp %377 : vector<8x128xf32>
    %cst_110 = arith.constant 1.000000e+00 : f32
    %379 = vector.broadcast %cst_110 : f32 to vector<8x128xf32>
    %380 = arith.addf %379, %378 : vector<8x128xf32>
    %381 = arith.divf %379, %380 : vector<8x128xf32>
    %382 = vector.extract_strided_slice %371 {offsets = [0, 128], sizes = [8, 128], strides = [1, 1]} : vector<8x384xf32> to vector<8x128xf32>
    %383 = vector.extract_strided_slice %372 {offsets = [0, 128], sizes = [8, 128], strides = [1, 1]} : vector<8x384xf32> to vector<8x128xf32>
    %384 = arith.addf %382, %383 : vector<8x128xf32>
    %385 = arith.negf %384 : vector<8x128xf32>
    %386 = math.exp %385 : vector<8x128xf32>
    %cst_111 = arith.constant 1.000000e+00 : f32
    %387 = vector.broadcast %cst_111 : f32 to vector<8x128xf32>
    %388 = arith.addf %387, %386 : vector<8x128xf32>
    %389 = arith.divf %387, %388 : vector<8x128xf32>
    %390 = vector.extract_strided_slice %371 {offsets = [0, 256], sizes = [8, 128], strides = [1, 1]} : vector<8x384xf32> to vector<8x128xf32>
    %391 = vector.extract_strided_slice %372 {offsets = [0, 256], sizes = [8, 128], strides = [1, 1]} : vector<8x384xf32> to vector<8x128xf32>
    %392 = arith.mulf %381, %391 : vector<8x128xf32>
    %393 = arith.addf %390, %392 : vector<8x128xf32>
    %394 = math.tanh %393 : vector<8x128xf32>
    %cst_112 = arith.constant 1.000000e+00 : f32
    %395 = vector.broadcast %cst_112 : f32 to vector<8x128xf32>
    %396 = arith.subf %395, %389 : vector<8x128xf32>
    %397 = arith.mulf %396, %394 : vector<8x128xf32>
    %398 = arith.mulf %389, %373 : vector<8x128xf32>
    %399 = arith.addf %397, %398 : vector<8x128xf32>
    %400 = arith.index_cast %365 : i32 to index
    %c0_113 = arith.constant 0 : index
    %c384_114 = arith.constant 384 : index
    %401 = vector.load %arg9[%400, %c0_113, %c384_114] : memref<16x8x768xf32, #tpu.memory_space<vmem>>, vector<1x8x384xf32>
    %402 = vector.shape_cast %401 : vector<1x8x384xf32> to vector<8x384xf32>
    %403 = vector.extract_strided_slice %368 {offsets = [0, 384], sizes = [8, 384], strides = [1, 1]} : vector<8x768xf32> to vector<8x384xf32>
    %404 = vector.extract_strided_slice %364 {offsets = [0, 128], sizes = [8, 128], strides = [1, 1]} : vector<8x256xf32> to vector<8x128xf32>
    %405 = vector.extract_strided_slice %402 {offsets = [0, 0], sizes = [8, 128], strides = [1, 1]} : vector<8x384xf32> to vector<8x128xf32>
    %406 = vector.extract_strided_slice %403 {offsets = [0, 0], sizes = [8, 128], strides = [1, 1]} : vector<8x384xf32> to vector<8x128xf32>
    %407 = arith.addf %405, %406 : vector<8x128xf32>
    %408 = arith.negf %407 : vector<8x128xf32>
    %409 = math.exp %408 : vector<8x128xf32>
    %cst_115 = arith.constant 1.000000e+00 : f32
    %410 = vector.broadcast %cst_115 : f32 to vector<8x128xf32>
    %411 = arith.addf %410, %409 : vector<8x128xf32>
    %412 = arith.divf %410, %411 : vector<8x128xf32>
    %413 = vector.extract_strided_slice %402 {offsets = [0, 128], sizes = [8, 128], strides = [1, 1]} : vector<8x384xf32> to vector<8x128xf32>
    %414 = vector.extract_strided_slice %403 {offsets = [0, 128], sizes = [8, 128], strides = [1, 1]} : vector<8x384xf32> to vector<8x128xf32>
    %415 = arith.addf %413, %414 : vector<8x128xf32>
    %416 = arith.negf %415 : vector<8x128xf32>
    %417 = math.exp %416 : vector<8x128xf32>
    %cst_116 = arith.constant 1.000000e+00 : f32
    %418 = vector.broadcast %cst_116 : f32 to vector<8x128xf32>
    %419 = arith.addf %418, %417 : vector<8x128xf32>
    %420 = arith.divf %418, %419 : vector<8x128xf32>
    %421 = vector.extract_strided_slice %402 {offsets = [0, 256], sizes = [8, 128], strides = [1, 1]} : vector<8x384xf32> to vector<8x128xf32>
    %422 = vector.extract_strided_slice %403 {offsets = [0, 256], sizes = [8, 128], strides = [1, 1]} : vector<8x384xf32> to vector<8x128xf32>
    %423 = arith.mulf %412, %422 : vector<8x128xf32>
    %424 = arith.addf %421, %423 : vector<8x128xf32>
    %425 = math.tanh %424 : vector<8x128xf32>
    %cst_117 = arith.constant 1.000000e+00 : f32
    %426 = vector.broadcast %cst_117 : f32 to vector<8x128xf32>
    %427 = arith.subf %426, %420 : vector<8x128xf32>
    %428 = arith.mulf %427, %425 : vector<8x128xf32>
    %429 = arith.mulf %420, %404 : vector<8x128xf32>
    %430 = arith.addf %428, %429 : vector<8x128xf32>
    %431 = arith.index_cast %c4_i32_105 : i32 to index
    %c0_118 = arith.constant 0 : index
    %c0_119 = arith.constant 0 : index
    %432 = vector.load %arg8[%431, %c0_118, %c0_119] : memref<16x8x128xf32, #tpu.memory_space<vmem>>, vector<1x8x128xf32>
    %433 = vector.shape_cast %432 : vector<1x8x128xf32> to vector<8x128xf32>
    %434 = arith.truncf %399 : vector<8x128xf32> to vector<8x128xbf16>
    %cst_120 = arith.constant dense<0.000000e+00> : vector<8x128xf32>
    %435 = tpu.matmul %434, %11, %cst_120 {dimension_numbers = #tpu.dot_dimension_numbers<[1], [0], [0], [1], [0, 0, 1, 1], [], []>} : vector<8x128xbf16>, vector<128x128xbf16>, vector<8x128xf32> -> vector<8x128xf32>
    %436 = arith.addf %433, %435 : vector<8x128xf32>
    %437 = arith.index_cast %c4_i32_105 : i32 to index
    %c0_121 = arith.constant 0 : index
    %c0_122 = arith.constant 0 : index
    %438 = vector.load %arg8[%437, %c0_121, %c0_122] : memref<16x8x128xf32, #tpu.memory_space<vmem>>, vector<1x8x128xf32>
    %439 = vector.shape_cast %438 : vector<1x8x128xf32> to vector<8x128xf32>
    %440 = vector.shape_cast %436 : vector<8x128xf32> to vector<1x8x128xf32>
    tpu.vector_store %arg8[%437, %c0_121, %c0_122], %440 {strides = array<i32>} : memref<16x8x128xf32, #tpu.memory_space<vmem>>, vector<1x8x128xf32>,
    %441 = arith.index_cast %365 : i32 to index
    %c0_123 = arith.constant 0 : index
    %c0_124 = arith.constant 0 : index
    %442 = vector.load %arg8[%441, %c0_123, %c0_124] : memref<16x8x128xf32, #tpu.memory_space<vmem>>, vector<1x8x128xf32>
    %443 = vector.shape_cast %442 : vector<1x8x128xf32> to vector<8x128xf32>
    %444 = arith.truncf %430 : vector<8x128xf32> to vector<8x128xbf16>
    %cst_125 = arith.constant dense<0.000000e+00> : vector<8x128xf32>
    %445 = tpu.matmul %444, %12, %cst_125 {dimension_numbers = #tpu.dot_dimension_numbers<[1], [0], [0], [1], [0, 0, 1, 1], [], []>} : vector<8x128xbf16>, vector<128x128xbf16>, vector<8x128xf32> -> vector<8x128xf32>
    %446 = arith.addf %443, %445 : vector<8x128xf32>
    %447 = arith.index_cast %365 : i32 to index
    %c0_126 = arith.constant 0 : index
    %c0_127 = arith.constant 0 : index
    %448 = vector.load %arg8[%447, %c0_126, %c0_127] : memref<16x8x128xf32, #tpu.memory_space<vmem>>, vector<1x8x128xf32>
    %449 = vector.shape_cast %448 : vector<1x8x128xf32> to vector<8x128xf32>
    %450 = vector.shape_cast %446 : vector<8x128xf32> to vector<1x8x128xf32>
    tpu.vector_store %arg8[%447, %c0_126, %c0_127], %450 {strides = array<i32>} : memref<16x8x128xf32, #tpu.memory_space<vmem>>, vector<1x8x128xf32>,
    %451 = tpu.concatenate %399, %430 in 1 : vector<8x128xf32>, vector<8x128xf32> -> vector<8x256xf32>
    %c5_i32 = arith.constant 5 : i32
    %c15_i32_128 = arith.constant 15 : i32
    %452 = arith.subi %c15_i32_128, %c5_i32 : i32
    %453 = arith.truncf %451 : vector<8x256xf32> to vector<8x256xbf16>
    %cst_129 = arith.constant dense<0.000000e+00> : vector<8x768xf32>
    %454 = tpu.matmul %453, %10, %cst_129 {dimension_numbers = #tpu.dot_dimension_numbers<[1], [0], [0], [1], [0, 0, 1, 1], [], []>} : vector<8x256xbf16>, vector<256x768xbf16>, vector<8x768xf32> -> vector<8x768xf32>
    %455 = arith.addf %454, %15 : vector<8x768xf32>
    %456 = arith.index_cast %c5_i32 : i32 to index
    %c0_130 = arith.constant 0 : index
    %c0_131 = arith.constant 0 : index
    %457 = vector.load %arg9[%456, %c0_130, %c0_131] : memref<16x8x768xf32, #tpu.memory_space<vmem>>, vector<1x8x384xf32>
    %458 = vector.shape_cast %457 : vector<1x8x384xf32> to vector<8x384xf32>
    %459 = vector.extract_strided_slice %455 {offsets = [0, 0], sizes = [8, 384], strides = [1, 1]} : vector<8x768xf32> to vector<8x384xf32>
    %460 = vector.extract_strided_slice %451 {offsets = [0, 0], sizes = [8, 128], strides = [1, 1]} : vector<8x256xf32> to vector<8x128xf32>
    %461 = vector.extract_strided_slice %458 {offsets = [0, 0], sizes = [8, 128], strides = [1, 1]} : vector<8x384xf32> to vector<8x128xf32>
    %462 = vector.extract_strided_slice %459 {offsets = [0, 0], sizes = [8, 128], strides = [1, 1]} : vector<8x384xf32> to vector<8x128xf32>
    %463 = arith.addf %461, %462 : vector<8x128xf32>
    %464 = arith.negf %463 : vector<8x128xf32>
    %465 = math.exp %464 : vector<8x128xf32>
    %cst_132 = arith.constant 1.000000e+00 : f32
    %466 = vector.broadcast %cst_132 : f32 to vector<8x128xf32>
    %467 = arith.addf %466, %465 : vector<8x128xf32>
    %468 = arith.divf %466, %467 : vector<8x128xf32>
    %469 = vector.extract_strided_slice %458 {offsets = [0, 128], sizes = [8, 128], strides = [1, 1]} : vector<8x384xf32> to vector<8x128xf32>
    %470 = vector.extract_strided_slice %459 {offsets = [0, 128], sizes = [8, 128], strides = [1, 1]} : vector<8x384xf32> to vector<8x128xf32>
    %471 = arith.addf %469, %470 : vector<8x128xf32>
    %472 = arith.negf %471 : vector<8x128xf32>
    %473 = math.exp %472 : vector<8x128xf32>
    %cst_133 = arith.constant 1.000000e+00 : f32
    %474 = vector.broadcast %cst_133 : f32 to vector<8x128xf32>
    %475 = arith.addf %474, %473 : vector<8x128xf32>
    %476 = arith.divf %474, %475 : vector<8x128xf32>
    %477 = vector.extract_strided_slice %458 {offsets = [0, 256], sizes = [8, 128], strides = [1, 1]} : vector<8x384xf32> to vector<8x128xf32>
    %478 = vector.extract_strided_slice %459 {offsets = [0, 256], sizes = [8, 128], strides = [1, 1]} : vector<8x384xf32> to vector<8x128xf32>
    %479 = arith.mulf %468, %478 : vector<8x128xf32>
    %480 = arith.addf %477, %479 : vector<8x128xf32>
    %481 = math.tanh %480 : vector<8x128xf32>
    %cst_134 = arith.constant 1.000000e+00 : f32
    %482 = vector.broadcast %cst_134 : f32 to vector<8x128xf32>
    %483 = arith.subf %482, %476 : vector<8x128xf32>
    %484 = arith.mulf %483, %481 : vector<8x128xf32>
    %485 = arith.mulf %476, %460 : vector<8x128xf32>
    %486 = arith.addf %484, %485 : vector<8x128xf32>
    %487 = arith.index_cast %452 : i32 to index
    %c0_135 = arith.constant 0 : index
    %c384_136 = arith.constant 384 : index
    %488 = vector.load %arg9[%487, %c0_135, %c384_136] : memref<16x8x768xf32, #tpu.memory_space<vmem>>, vector<1x8x384xf32>
    %489 = vector.shape_cast %488 : vector<1x8x384xf32> to vector<8x384xf32>
    %490 = vector.extract_strided_slice %455 {offsets = [0, 384], sizes = [8, 384], strides = [1, 1]} : vector<8x768xf32> to vector<8x384xf32>
    %491 = vector.extract_strided_slice %451 {offsets = [0, 128], sizes = [8, 128], strides = [1, 1]} : vector<8x256xf32> to vector<8x128xf32>
    %492 = vector.extract_strided_slice %489 {offsets = [0, 0], sizes = [8, 128], strides = [1, 1]} : vector<8x384xf32> to vector<8x128xf32>
    %493 = vector.extract_strided_slice %490 {offsets = [0, 0], sizes = [8, 128], strides = [1, 1]} : vector<8x384xf32> to vector<8x128xf32>
    %494 = arith.addf %492, %493 : vector<8x128xf32>
    %495 = arith.negf %494 : vector<8x128xf32>
    %496 = math.exp %495 : vector<8x128xf32>
    %cst_137 = arith.constant 1.000000e+00 : f32
    %497 = vector.broadcast %cst_137 : f32 to vector<8x128xf32>
    %498 = arith.addf %497, %496 : vector<8x128xf32>
    %499 = arith.divf %497, %498 : vector<8x128xf32>
    %500 = vector.extract_strided_slice %489 {offsets = [0, 128], sizes = [8, 128], strides = [1, 1]} : vector<8x384xf32> to vector<8x128xf32>
    %501 = vector.extract_strided_slice %490 {offsets = [0, 128], sizes = [8, 128], strides = [1, 1]} : vector<8x384xf32> to vector<8x128xf32>
    %502 = arith.addf %500, %501 : vector<8x128xf32>
    %503 = arith.negf %502 : vector<8x128xf32>
    %504 = math.exp %503 : vector<8x128xf32>
    %cst_138 = arith.constant 1.000000e+00 : f32
    %505 = vector.broadcast %cst_138 : f32 to vector<8x128xf32>
    %506 = arith.addf %505, %504 : vector<8x128xf32>
    %507 = arith.divf %505, %506 : vector<8x128xf32>
    %508 = vector.extract_strided_slice %489 {offsets = [0, 256], sizes = [8, 128], strides = [1, 1]} : vector<8x384xf32> to vector<8x128xf32>
    %509 = vector.extract_strided_slice %490 {offsets = [0, 256], sizes = [8, 128], strides = [1, 1]} : vector<8x384xf32> to vector<8x128xf32>
    %510 = arith.mulf %499, %509 : vector<8x128xf32>
    %511 = arith.addf %508, %510 : vector<8x128xf32>
    %512 = math.tanh %511 : vector<8x128xf32>
    %cst_139 = arith.constant 1.000000e+00 : f32
    %513 = vector.broadcast %cst_139 : f32 to vector<8x128xf32>
    %514 = arith.subf %513, %507 : vector<8x128xf32>
    %515 = arith.mulf %514, %512 : vector<8x128xf32>
    %516 = arith.mulf %507, %491 : vector<8x128xf32>
    %517 = arith.addf %515, %516 : vector<8x128xf32>
    %518 = arith.index_cast %c5_i32 : i32 to index
    %c0_140 = arith.constant 0 : index
    %c0_141 = arith.constant 0 : index
    %519 = vector.load %arg8[%518, %c0_140, %c0_141] : memref<16x8x128xf32, #tpu.memory_space<vmem>>, vector<1x8x128xf32>
    %520 = vector.shape_cast %519 : vector<1x8x128xf32> to vector<8x128xf32>
    %521 = arith.truncf %486 : vector<8x128xf32> to vector<8x128xbf16>
    %cst_142 = arith.constant dense<0.000000e+00> : vector<8x128xf32>
    %522 = tpu.matmul %521, %11, %cst_142 {dimension_numbers = #tpu.dot_dimension_numbers<[1], [0], [0], [1], [0, 0, 1, 1], [], []>} : vector<8x128xbf16>, vector<128x128xbf16>, vector<8x128xf32> -> vector<8x128xf32>
    %523 = arith.addf %520, %522 : vector<8x128xf32>
    %524 = arith.index_cast %c5_i32 : i32 to index
    %c0_143 = arith.constant 0 : index
    %c0_144 = arith.constant 0 : index
    %525 = vector.load %arg8[%524, %c0_143, %c0_144] : memref<16x8x128xf32, #tpu.memory_space<vmem>>, vector<1x8x128xf32>
    %526 = vector.shape_cast %525 : vector<1x8x128xf32> to vector<8x128xf32>
    %527 = vector.shape_cast %523 : vector<8x128xf32> to vector<1x8x128xf32>
    tpu.vector_store %arg8[%524, %c0_143, %c0_144], %527 {strides = array<i32>} : memref<16x8x128xf32, #tpu.memory_space<vmem>>, vector<1x8x128xf32>,
    %528 = arith.index_cast %452 : i32 to index
    %c0_145 = arith.constant 0 : index
    %c0_146 = arith.constant 0 : index
    %529 = vector.load %arg8[%528, %c0_145, %c0_146] : memref<16x8x128xf32, #tpu.memory_space<vmem>>, vector<1x8x128xf32>
    %530 = vector.shape_cast %529 : vector<1x8x128xf32> to vector<8x128xf32>
    %531 = arith.truncf %517 : vector<8x128xf32> to vector<8x128xbf16>
    %cst_147 = arith.constant dense<0.000000e+00> : vector<8x128xf32>
    %532 = tpu.matmul %531, %12, %cst_147 {dimension_numbers = #tpu.dot_dimension_numbers<[1], [0], [0], [1], [0, 0, 1, 1], [], []>} : vector<8x128xbf16>, vector<128x128xbf16>, vector<8x128xf32> -> vector<8x128xf32>
    %533 = arith.addf %530, %532 : vector<8x128xf32>
    %534 = arith.index_cast %452 : i32 to index
    %c0_148 = arith.constant 0 : index
    %c0_149 = arith.constant 0 : index
    %535 = vector.load %arg8[%534, %c0_148, %c0_149] : memref<16x8x128xf32, #tpu.memory_space<vmem>>, vector<1x8x128xf32>
    %536 = vector.shape_cast %535 : vector<1x8x128xf32> to vector<8x128xf32>
    %537 = vector.shape_cast %533 : vector<8x128xf32> to vector<1x8x128xf32>
    tpu.vector_store %arg8[%534, %c0_148, %c0_149], %537 {strides = array<i32>} : memref<16x8x128xf32, #tpu.memory_space<vmem>>, vector<1x8x128xf32>,
    %538 = tpu.concatenate %486, %517 in 1 : vector<8x128xf32>, vector<8x128xf32> -> vector<8x256xf32>
    %c6_i32 = arith.constant 6 : i32
    %c15_i32_150 = arith.constant 15 : i32
    %539 = arith.subi %c15_i32_150, %c6_i32 : i32
    %540 = arith.truncf %538 : vector<8x256xf32> to vector<8x256xbf16>
    %cst_151 = arith.constant dense<0.000000e+00> : vector<8x768xf32>
    %541 = tpu.matmul %540, %10, %cst_151 {dimension_numbers = #tpu.dot_dimension_numbers<[1], [0], [0], [1], [0, 0, 1, 1], [], []>} : vector<8x256xbf16>, vector<256x768xbf16>, vector<8x768xf32> -> vector<8x768xf32>
    %542 = arith.addf %541, %15 : vector<8x768xf32>
    %543 = arith.index_cast %c6_i32 : i32 to index
    %c0_152 = arith.constant 0 : index
    %c0_153 = arith.constant 0 : index
    %544 = vector.load %arg9[%543, %c0_152, %c0_153] : memref<16x8x768xf32, #tpu.memory_space<vmem>>, vector<1x8x384xf32>
    %545 = vector.shape_cast %544 : vector<1x8x384xf32> to vector<8x384xf32>
    %546 = vector.extract_strided_slice %542 {offsets = [0, 0], sizes = [8, 384], strides = [1, 1]} : vector<8x768xf32> to vector<8x384xf32>
    %547 = vector.extract_strided_slice %538 {offsets = [0, 0], sizes = [8, 128], strides = [1, 1]} : vector<8x256xf32> to vector<8x128xf32>
    %548 = vector.extract_strided_slice %545 {offsets = [0, 0], sizes = [8, 128], strides = [1, 1]} : vector<8x384xf32> to vector<8x128xf32>
    %549 = vector.extract_strided_slice %546 {offsets = [0, 0], sizes = [8, 128], strides = [1, 1]} : vector<8x384xf32> to vector<8x128xf32>
    %550 = arith.addf %548, %549 : vector<8x128xf32>
    %551 = arith.negf %550 : vector<8x128xf32>
    %552 = math.exp %551 : vector<8x128xf32>
    %cst_154 = arith.constant 1.000000e+00 : f32
    %553 = vector.broadcast %cst_154 : f32 to vector<8x128xf32>
    %554 = arith.addf %553, %552 : vector<8x128xf32>
    %555 = arith.divf %553, %554 : vector<8x128xf32>
    %556 = vector.extract_strided_slice %545 {offsets = [0, 128], sizes = [8, 128], strides = [1, 1]} : vector<8x384xf32> to vector<8x128xf32>
    %557 = vector.extract_strided_slice %546 {offsets = [0, 128], sizes = [8, 128], strides = [1, 1]} : vector<8x384xf32> to vector<8x128xf32>
    %558 = arith.addf %556, %557 : vector<8x128xf32>
    %559 = arith.negf %558 : vector<8x128xf32>
    %560 = math.exp %559 : vector<8x128xf32>
    %cst_155 = arith.constant 1.000000e+00 : f32
    %561 = vector.broadcast %cst_155 : f32 to vector<8x128xf32>
    %562 = arith.addf %561, %560 : vector<8x128xf32>
    %563 = arith.divf %561, %562 : vector<8x128xf32>
    %564 = vector.extract_strided_slice %545 {offsets = [0, 256], sizes = [8, 128], strides = [1, 1]} : vector<8x384xf32> to vector<8x128xf32>
    %565 = vector.extract_strided_slice %546 {offsets = [0, 256], sizes = [8, 128], strides = [1, 1]} : vector<8x384xf32> to vector<8x128xf32>
    %566 = arith.mulf %555, %565 : vector<8x128xf32>
    %567 = arith.addf %564, %566 : vector<8x128xf32>
    %568 = math.tanh %567 : vector<8x128xf32>
    %cst_156 = arith.constant 1.000000e+00 : f32
    %569 = vector.broadcast %cst_156 : f32 to vector<8x128xf32>
    %570 = arith.subf %569, %563 : vector<8x128xf32>
    %571 = arith.mulf %570, %568 : vector<8x128xf32>
    %572 = arith.mulf %563, %547 : vector<8x128xf32>
    %573 = arith.addf %571, %572 : vector<8x128xf32>
    %574 = arith.index_cast %539 : i32 to index
    %c0_157 = arith.constant 0 : index
    %c384_158 = arith.constant 384 : index
    %575 = vector.load %arg9[%574, %c0_157, %c384_158] : memref<16x8x768xf32, #tpu.memory_space<vmem>>, vector<1x8x384xf32>
    %576 = vector.shape_cast %575 : vector<1x8x384xf32> to vector<8x384xf32>
    %577 = vector.extract_strided_slice %542 {offsets = [0, 384], sizes = [8, 384], strides = [1, 1]} : vector<8x768xf32> to vector<8x384xf32>
    %578 = vector.extract_strided_slice %538 {offsets = [0, 128], sizes = [8, 128], strides = [1, 1]} : vector<8x256xf32> to vector<8x128xf32>
    %579 = vector.extract_strided_slice %576 {offsets = [0, 0], sizes = [8, 128], strides = [1, 1]} : vector<8x384xf32> to vector<8x128xf32>
    %580 = vector.extract_strided_slice %577 {offsets = [0, 0], sizes = [8, 128], strides = [1, 1]} : vector<8x384xf32> to vector<8x128xf32>
    %581 = arith.addf %579, %580 : vector<8x128xf32>
    %582 = arith.negf %581 : vector<8x128xf32>
    %583 = math.exp %582 : vector<8x128xf32>
    %cst_159 = arith.constant 1.000000e+00 : f32
    %584 = vector.broadcast %cst_159 : f32 to vector<8x128xf32>
    %585 = arith.addf %584, %583 : vector<8x128xf32>
    %586 = arith.divf %584, %585 : vector<8x128xf32>
    %587 = vector.extract_strided_slice %576 {offsets = [0, 128], sizes = [8, 128], strides = [1, 1]} : vector<8x384xf32> to vector<8x128xf32>
    %588 = vector.extract_strided_slice %577 {offsets = [0, 128], sizes = [8, 128], strides = [1, 1]} : vector<8x384xf32> to vector<8x128xf32>
    %589 = arith.addf %587, %588 : vector<8x128xf32>
    %590 = arith.negf %589 : vector<8x128xf32>
    %591 = math.exp %590 : vector<8x128xf32>
    %cst_160 = arith.constant 1.000000e+00 : f32
    %592 = vector.broadcast %cst_160 : f32 to vector<8x128xf32>
    %593 = arith.addf %592, %591 : vector<8x128xf32>
    %594 = arith.divf %592, %593 : vector<8x128xf32>
    %595 = vector.extract_strided_slice %576 {offsets = [0, 256], sizes = [8, 128], strides = [1, 1]} : vector<8x384xf32> to vector<8x128xf32>
    %596 = vector.extract_strided_slice %577 {offsets = [0, 256], sizes = [8, 128], strides = [1, 1]} : vector<8x384xf32> to vector<8x128xf32>
    %597 = arith.mulf %586, %596 : vector<8x128xf32>
    %598 = arith.addf %595, %597 : vector<8x128xf32>
    %599 = math.tanh %598 : vector<8x128xf32>
    %cst_161 = arith.constant 1.000000e+00 : f32
    %600 = vector.broadcast %cst_161 : f32 to vector<8x128xf32>
    %601 = arith.subf %600, %594 : vector<8x128xf32>
    %602 = arith.mulf %601, %599 : vector<8x128xf32>
    %603 = arith.mulf %594, %578 : vector<8x128xf32>
    %604 = arith.addf %602, %603 : vector<8x128xf32>
    %605 = arith.index_cast %c6_i32 : i32 to index
    %c0_162 = arith.constant 0 : index
    %c0_163 = arith.constant 0 : index
    %606 = vector.load %arg8[%605, %c0_162, %c0_163] : memref<16x8x128xf32, #tpu.memory_space<vmem>>, vector<1x8x128xf32>
    %607 = vector.shape_cast %606 : vector<1x8x128xf32> to vector<8x128xf32>
    %608 = arith.truncf %573 : vector<8x128xf32> to vector<8x128xbf16>
    %cst_164 = arith.constant dense<0.000000e+00> : vector<8x128xf32>
    %609 = tpu.matmul %608, %11, %cst_164 {dimension_numbers = #tpu.dot_dimension_numbers<[1], [0], [0], [1], [0, 0, 1, 1], [], []>} : vector<8x128xbf16>, vector<128x128xbf16>, vector<8x128xf32> -> vector<8x128xf32>
    %610 = arith.addf %607, %609 : vector<8x128xf32>
    %611 = arith.index_cast %c6_i32 : i32 to index
    %c0_165 = arith.constant 0 : index
    %c0_166 = arith.constant 0 : index
    %612 = vector.load %arg8[%611, %c0_165, %c0_166] : memref<16x8x128xf32, #tpu.memory_space<vmem>>, vector<1x8x128xf32>
    %613 = vector.shape_cast %612 : vector<1x8x128xf32> to vector<8x128xf32>
    %614 = vector.shape_cast %610 : vector<8x128xf32> to vector<1x8x128xf32>
    tpu.vector_store %arg8[%611, %c0_165, %c0_166], %614 {strides = array<i32>} : memref<16x8x128xf32, #tpu.memory_space<vmem>>, vector<1x8x128xf32>,
    %615 = arith.index_cast %539 : i32 to index
    %c0_167 = arith.constant 0 : index
    %c0_168 = arith.constant 0 : index
    %616 = vector.load %arg8[%615, %c0_167, %c0_168] : memref<16x8x128xf32, #tpu.memory_space<vmem>>, vector<1x8x128xf32>
    %617 = vector.shape_cast %616 : vector<1x8x128xf32> to vector<8x128xf32>
    %618 = arith.truncf %604 : vector<8x128xf32> to vector<8x128xbf16>
    %cst_169 = arith.constant dense<0.000000e+00> : vector<8x128xf32>
    %619 = tpu.matmul %618, %12, %cst_169 {dimension_numbers = #tpu.dot_dimension_numbers<[1], [0], [0], [1], [0, 0, 1, 1], [], []>} : vector<8x128xbf16>, vector<128x128xbf16>, vector<8x128xf32> -> vector<8x128xf32>
    %620 = arith.addf %617, %619 : vector<8x128xf32>
    %621 = arith.index_cast %539 : i32 to index
    %c0_170 = arith.constant 0 : index
    %c0_171 = arith.constant 0 : index
    %622 = vector.load %arg8[%621, %c0_170, %c0_171] : memref<16x8x128xf32, #tpu.memory_space<vmem>>, vector<1x8x128xf32>
    %623 = vector.shape_cast %622 : vector<1x8x128xf32> to vector<8x128xf32>
    %624 = vector.shape_cast %620 : vector<8x128xf32> to vector<1x8x128xf32>
    tpu.vector_store %arg8[%621, %c0_170, %c0_171], %624 {strides = array<i32>} : memref<16x8x128xf32, #tpu.memory_space<vmem>>, vector<1x8x128xf32>,
    %625 = tpu.concatenate %573, %604 in 1 : vector<8x128xf32>, vector<8x128xf32> -> vector<8x256xf32>
    %c7_i32 = arith.constant 7 : i32
    %c15_i32_172 = arith.constant 15 : i32
    %626 = arith.subi %c15_i32_172, %c7_i32 : i32
    %627 = arith.truncf %625 : vector<8x256xf32> to vector<8x256xbf16>
    %cst_173 = arith.constant dense<0.000000e+00> : vector<8x768xf32>
    %628 = tpu.matmul %627, %10, %cst_173 {dimension_numbers = #tpu.dot_dimension_numbers<[1], [0], [0], [1], [0, 0, 1, 1], [], []>} : vector<8x256xbf16>, vector<256x768xbf16>, vector<8x768xf32> -> vector<8x768xf32>
    %629 = arith.addf %628, %15 : vector<8x768xf32>
    %630 = arith.index_cast %c7_i32 : i32 to index
    %c0_174 = arith.constant 0 : index
    %c0_175 = arith.constant 0 : index
    %631 = vector.load %arg9[%630, %c0_174, %c0_175] : memref<16x8x768xf32, #tpu.memory_space<vmem>>, vector<1x8x384xf32>
    %632 = vector.shape_cast %631 : vector<1x8x384xf32> to vector<8x384xf32>
    %633 = vector.extract_strided_slice %629 {offsets = [0, 0], sizes = [8, 384], strides = [1, 1]} : vector<8x768xf32> to vector<8x384xf32>
    %634 = vector.extract_strided_slice %625 {offsets = [0, 0], sizes = [8, 128], strides = [1, 1]} : vector<8x256xf32> to vector<8x128xf32>
    %635 = vector.extract_strided_slice %632 {offsets = [0, 0], sizes = [8, 128], strides = [1, 1]} : vector<8x384xf32> to vector<8x128xf32>
    %636 = vector.extract_strided_slice %633 {offsets = [0, 0], sizes = [8, 128], strides = [1, 1]} : vector<8x384xf32> to vector<8x128xf32>
    %637 = arith.addf %635, %636 : vector<8x128xf32>
    %638 = arith.negf %637 : vector<8x128xf32>
    %639 = math.exp %638 : vector<8x128xf32>
    %cst_176 = arith.constant 1.000000e+00 : f32
    %640 = vector.broadcast %cst_176 : f32 to vector<8x128xf32>
    %641 = arith.addf %640, %639 : vector<8x128xf32>
    %642 = arith.divf %640, %641 : vector<8x128xf32>
    %643 = vector.extract_strided_slice %632 {offsets = [0, 128], sizes = [8, 128], strides = [1, 1]} : vector<8x384xf32> to vector<8x128xf32>
    %644 = vector.extract_strided_slice %633 {offsets = [0, 128], sizes = [8, 128], strides = [1, 1]} : vector<8x384xf32> to vector<8x128xf32>
    %645 = arith.addf %643, %644 : vector<8x128xf32>
    %646 = arith.negf %645 : vector<8x128xf32>
    %647 = math.exp %646 : vector<8x128xf32>
    %cst_177 = arith.constant 1.000000e+00 : f32
    %648 = vector.broadcast %cst_177 : f32 to vector<8x128xf32>
    %649 = arith.addf %648, %647 : vector<8x128xf32>
    %650 = arith.divf %648, %649 : vector<8x128xf32>
    %651 = vector.extract_strided_slice %632 {offsets = [0, 256], sizes = [8, 128], strides = [1, 1]} : vector<8x384xf32> to vector<8x128xf32>
    %652 = vector.extract_strided_slice %633 {offsets = [0, 256], sizes = [8, 128], strides = [1, 1]} : vector<8x384xf32> to vector<8x128xf32>
    %653 = arith.mulf %642, %652 : vector<8x128xf32>
    %654 = arith.addf %651, %653 : vector<8x128xf32>
    %655 = math.tanh %654 : vector<8x128xf32>
    %cst_178 = arith.constant 1.000000e+00 : f32
    %656 = vector.broadcast %cst_178 : f32 to vector<8x128xf32>
    %657 = arith.subf %656, %650 : vector<8x128xf32>
    %658 = arith.mulf %657, %655 : vector<8x128xf32>
    %659 = arith.mulf %650, %634 : vector<8x128xf32>
    %660 = arith.addf %658, %659 : vector<8x128xf32>
    %661 = arith.index_cast %626 : i32 to index
    %c0_179 = arith.constant 0 : index
    %c384_180 = arith.constant 384 : index
    %662 = vector.load %arg9[%661, %c0_179, %c384_180] : memref<16x8x768xf32, #tpu.memory_space<vmem>>, vector<1x8x384xf32>
    %663 = vector.shape_cast %662 : vector<1x8x384xf32> to vector<8x384xf32>
    %664 = vector.extract_strided_slice %629 {offsets = [0, 384], sizes = [8, 384], strides = [1, 1]} : vector<8x768xf32> to vector<8x384xf32>
    %665 = vector.extract_strided_slice %625 {offsets = [0, 128], sizes = [8, 128], strides = [1, 1]} : vector<8x256xf32> to vector<8x128xf32>
    %666 = vector.extract_strided_slice %663 {offsets = [0, 0], sizes = [8, 128], strides = [1, 1]} : vector<8x384xf32> to vector<8x128xf32>
    %667 = vector.extract_strided_slice %664 {offsets = [0, 0], sizes = [8, 128], strides = [1, 1]} : vector<8x384xf32> to vector<8x128xf32>
    %668 = arith.addf %666, %667 : vector<8x128xf32>
    %669 = arith.negf %668 : vector<8x128xf32>
    %670 = math.exp %669 : vector<8x128xf32>
    %cst_181 = arith.constant 1.000000e+00 : f32
    %671 = vector.broadcast %cst_181 : f32 to vector<8x128xf32>
    %672 = arith.addf %671, %670 : vector<8x128xf32>
    %673 = arith.divf %671, %672 : vector<8x128xf32>
    %674 = vector.extract_strided_slice %663 {offsets = [0, 128], sizes = [8, 128], strides = [1, 1]} : vector<8x384xf32> to vector<8x128xf32>
    %675 = vector.extract_strided_slice %664 {offsets = [0, 128], sizes = [8, 128], strides = [1, 1]} : vector<8x384xf32> to vector<8x128xf32>
    %676 = arith.addf %674, %675 : vector<8x128xf32>
    %677 = arith.negf %676 : vector<8x128xf32>
    %678 = math.exp %677 : vector<8x128xf32>
    %cst_182 = arith.constant 1.000000e+00 : f32
    %679 = vector.broadcast %cst_182 : f32 to vector<8x128xf32>
    %680 = arith.addf %679, %678 : vector<8x128xf32>
    %681 = arith.divf %679, %680 : vector<8x128xf32>
    %682 = vector.extract_strided_slice %663 {offsets = [0, 256], sizes = [8, 128], strides = [1, 1]} : vector<8x384xf32> to vector<8x128xf32>
    %683 = vector.extract_strided_slice %664 {offsets = [0, 256], sizes = [8, 128], strides = [1, 1]} : vector<8x384xf32> to vector<8x128xf32>
    %684 = arith.mulf %673, %683 : vector<8x128xf32>
    %685 = arith.addf %682, %684 : vector<8x128xf32>
    %686 = math.tanh %685 : vector<8x128xf32>
    %cst_183 = arith.constant 1.000000e+00 : f32
    %687 = vector.broadcast %cst_183 : f32 to vector<8x128xf32>
    %688 = arith.subf %687, %681 : vector<8x128xf32>
    %689 = arith.mulf %688, %686 : vector<8x128xf32>
    %690 = arith.mulf %681, %665 : vector<8x128xf32>
    %691 = arith.addf %689, %690 : vector<8x128xf32>
    %692 = arith.index_cast %c7_i32 : i32 to index
    %c0_184 = arith.constant 0 : index
    %c0_185 = arith.constant 0 : index
    %693 = vector.load %arg8[%692, %c0_184, %c0_185] : memref<16x8x128xf32, #tpu.memory_space<vmem>>, vector<1x8x128xf32>
    %694 = vector.shape_cast %693 : vector<1x8x128xf32> to vector<8x128xf32>
    %695 = arith.truncf %660 : vector<8x128xf32> to vector<8x128xbf16>
    %cst_186 = arith.constant dense<0.000000e+00> : vector<8x128xf32>
    %696 = tpu.matmul %695, %11, %cst_186 {dimension_numbers = #tpu.dot_dimension_numbers<[1], [0], [0], [1], [0, 0, 1, 1], [], []>} : vector<8x128xbf16>, vector<128x128xbf16>, vector<8x128xf32> -> vector<8x128xf32>
    %697 = arith.addf %694, %696 : vector<8x128xf32>
    %698 = arith.index_cast %c7_i32 : i32 to index
    %c0_187 = arith.constant 0 : index
    %c0_188 = arith.constant 0 : index
    %699 = vector.load %arg8[%698, %c0_187, %c0_188] : memref<16x8x128xf32, #tpu.memory_space<vmem>>, vector<1x8x128xf32>
    %700 = vector.shape_cast %699 : vector<1x8x128xf32> to vector<8x128xf32>
    %701 = vector.shape_cast %697 : vector<8x128xf32> to vector<1x8x128xf32>
    tpu.vector_store %arg8[%698, %c0_187, %c0_188], %701 {strides = array<i32>} : memref<16x8x128xf32, #tpu.memory_space<vmem>>, vector<1x8x128xf32>,
    %702 = arith.index_cast %626 : i32 to index
    %c0_189 = arith.constant 0 : index
    %c0_190 = arith.constant 0 : index
    %703 = vector.load %arg8[%702, %c0_189, %c0_190] : memref<16x8x128xf32, #tpu.memory_space<vmem>>, vector<1x8x128xf32>
    %704 = vector.shape_cast %703 : vector<1x8x128xf32> to vector<8x128xf32>
    %705 = arith.truncf %691 : vector<8x128xf32> to vector<8x128xbf16>
    %cst_191 = arith.constant dense<0.000000e+00> : vector<8x128xf32>
    %706 = tpu.matmul %705, %12, %cst_191 {dimension_numbers = #tpu.dot_dimension_numbers<[1], [0], [0], [1], [0, 0, 1, 1], [], []>} : vector<8x128xbf16>, vector<128x128xbf16>, vector<8x128xf32> -> vector<8x128xf32>
    %707 = arith.addf %704, %706 : vector<8x128xf32>
    %708 = arith.index_cast %626 : i32 to index
    %c0_192 = arith.constant 0 : index
    %c0_193 = arith.constant 0 : index
    %709 = vector.load %arg8[%708, %c0_192, %c0_193] : memref<16x8x128xf32, #tpu.memory_space<vmem>>, vector<1x8x128xf32>
    %710 = vector.shape_cast %709 : vector<1x8x128xf32> to vector<8x128xf32>
    %711 = vector.shape_cast %707 : vector<8x128xf32> to vector<1x8x128xf32>
    tpu.vector_store %arg8[%708, %c0_192, %c0_193], %711 {strides = array<i32>} : memref<16x8x128xf32, #tpu.memory_space<vmem>>, vector<1x8x128xf32>,
    %712 = tpu.concatenate %660, %691 in 1 : vector<8x128xf32>, vector<8x128xf32> -> vector<8x256xf32>
    %c8_i32 = arith.constant 8 : i32
    %c15_i32_194 = arith.constant 15 : i32
    %713 = arith.subi %c15_i32_194, %c8_i32 : i32
    %714 = arith.truncf %712 : vector<8x256xf32> to vector<8x256xbf16>
    %cst_195 = arith.constant dense<0.000000e+00> : vector<8x768xf32>
    %715 = tpu.matmul %714, %10, %cst_195 {dimension_numbers = #tpu.dot_dimension_numbers<[1], [0], [0], [1], [0, 0, 1, 1], [], []>} : vector<8x256xbf16>, vector<256x768xbf16>, vector<8x768xf32> -> vector<8x768xf32>
    %716 = arith.addf %715, %15 : vector<8x768xf32>
    %717 = arith.index_cast %c8_i32 : i32 to index
    %c0_196 = arith.constant 0 : index
    %c0_197 = arith.constant 0 : index
    %718 = vector.load %arg9[%717, %c0_196, %c0_197] : memref<16x8x768xf32, #tpu.memory_space<vmem>>, vector<1x8x384xf32>
    %719 = vector.shape_cast %718 : vector<1x8x384xf32> to vector<8x384xf32>
    %720 = vector.extract_strided_slice %716 {offsets = [0, 0], sizes = [8, 384], strides = [1, 1]} : vector<8x768xf32> to vector<8x384xf32>
    %721 = vector.extract_strided_slice %712 {offsets = [0, 0], sizes = [8, 128], strides = [1, 1]} : vector<8x256xf32> to vector<8x128xf32>
    %722 = vector.extract_strided_slice %719 {offsets = [0, 0], sizes = [8, 128], strides = [1, 1]} : vector<8x384xf32> to vector<8x128xf32>
    %723 = vector.extract_strided_slice %720 {offsets = [0, 0], sizes = [8, 128], strides = [1, 1]} : vector<8x384xf32> to vector<8x128xf32>
    %724 = arith.addf %722, %723 : vector<8x128xf32>
    %725 = arith.negf %724 : vector<8x128xf32>
    %726 = math.exp %725 : vector<8x128xf32>
    %cst_198 = arith.constant 1.000000e+00 : f32
    %727 = vector.broadcast %cst_198 : f32 to vector<8x128xf32>
    %728 = arith.addf %727, %726 : vector<8x128xf32>
    %729 = arith.divf %727, %728 : vector<8x128xf32>
    %730 = vector.extract_strided_slice %719 {offsets = [0, 128], sizes = [8, 128], strides = [1, 1]} : vector<8x384xf32> to vector<8x128xf32>
    %731 = vector.extract_strided_slice %720 {offsets = [0, 128], sizes = [8, 128], strides = [1, 1]} : vector<8x384xf32> to vector<8x128xf32>
    %732 = arith.addf %730, %731 : vector<8x128xf32>
    %733 = arith.negf %732 : vector<8x128xf32>
    %734 = math.exp %733 : vector<8x128xf32>
    %cst_199 = arith.constant 1.000000e+00 : f32
    %735 = vector.broadcast %cst_199 : f32 to vector<8x128xf32>
    %736 = arith.addf %735, %734 : vector<8x128xf32>
    %737 = arith.divf %735, %736 : vector<8x128xf32>
    %738 = vector.extract_strided_slice %719 {offsets = [0, 256], sizes = [8, 128], strides = [1, 1]} : vector<8x384xf32> to vector<8x128xf32>
    %739 = vector.extract_strided_slice %720 {offsets = [0, 256], sizes = [8, 128], strides = [1, 1]} : vector<8x384xf32> to vector<8x128xf32>
    %740 = arith.mulf %729, %739 : vector<8x128xf32>
    %741 = arith.addf %738, %740 : vector<8x128xf32>
    %742 = math.tanh %741 : vector<8x128xf32>
    %cst_200 = arith.constant 1.000000e+00 : f32
    %743 = vector.broadcast %cst_200 : f32 to vector<8x128xf32>
    %744 = arith.subf %743, %737 : vector<8x128xf32>
    %745 = arith.mulf %744, %742 : vector<8x128xf32>
    %746 = arith.mulf %737, %721 : vector<8x128xf32>
    %747 = arith.addf %745, %746 : vector<8x128xf32>
    %748 = arith.index_cast %713 : i32 to index
    %c0_201 = arith.constant 0 : index
    %c384_202 = arith.constant 384 : index
    %749 = vector.load %arg9[%748, %c0_201, %c384_202] : memref<16x8x768xf32, #tpu.memory_space<vmem>>, vector<1x8x384xf32>
    %750 = vector.shape_cast %749 : vector<1x8x384xf32> to vector<8x384xf32>
    %751 = vector.extract_strided_slice %716 {offsets = [0, 384], sizes = [8, 384], strides = [1, 1]} : vector<8x768xf32> to vector<8x384xf32>
    %752 = vector.extract_strided_slice %712 {offsets = [0, 128], sizes = [8, 128], strides = [1, 1]} : vector<8x256xf32> to vector<8x128xf32>
    %753 = vector.extract_strided_slice %750 {offsets = [0, 0], sizes = [8, 128], strides = [1, 1]} : vector<8x384xf32> to vector<8x128xf32>
    %754 = vector.extract_strided_slice %751 {offsets = [0, 0], sizes = [8, 128], strides = [1, 1]} : vector<8x384xf32> to vector<8x128xf32>
    %755 = arith.addf %753, %754 : vector<8x128xf32>
    %756 = arith.negf %755 : vector<8x128xf32>
    %757 = math.exp %756 : vector<8x128xf32>
    %cst_203 = arith.constant 1.000000e+00 : f32
    %758 = vector.broadcast %cst_203 : f32 to vector<8x128xf32>
    %759 = arith.addf %758, %757 : vector<8x128xf32>
    %760 = arith.divf %758, %759 : vector<8x128xf32>
    %761 = vector.extract_strided_slice %750 {offsets = [0, 128], sizes = [8, 128], strides = [1, 1]} : vector<8x384xf32> to vector<8x128xf32>
    %762 = vector.extract_strided_slice %751 {offsets = [0, 128], sizes = [8, 128], strides = [1, 1]} : vector<8x384xf32> to vector<8x128xf32>
    %763 = arith.addf %761, %762 : vector<8x128xf32>
    %764 = arith.negf %763 : vector<8x128xf32>
    %765 = math.exp %764 : vector<8x128xf32>
    %cst_204 = arith.constant 1.000000e+00 : f32
    %766 = vector.broadcast %cst_204 : f32 to vector<8x128xf32>
    %767 = arith.addf %766, %765 : vector<8x128xf32>
    %768 = arith.divf %766, %767 : vector<8x128xf32>
    %769 = vector.extract_strided_slice %750 {offsets = [0, 256], sizes = [8, 128], strides = [1, 1]} : vector<8x384xf32> to vector<8x128xf32>
    %770 = vector.extract_strided_slice %751 {offsets = [0, 256], sizes = [8, 128], strides = [1, 1]} : vector<8x384xf32> to vector<8x128xf32>
    %771 = arith.mulf %760, %770 : vector<8x128xf32>
    %772 = arith.addf %769, %771 : vector<8x128xf32>
    %773 = math.tanh %772 : vector<8x128xf32>
    %cst_205 = arith.constant 1.000000e+00 : f32
    %774 = vector.broadcast %cst_205 : f32 to vector<8x128xf32>
    %775 = arith.subf %774, %768 : vector<8x128xf32>
    %776 = arith.mulf %775, %773 : vector<8x128xf32>
    %777 = arith.mulf %768, %752 : vector<8x128xf32>
    %778 = arith.addf %776, %777 : vector<8x128xf32>
    %779 = arith.index_cast %c8_i32 : i32 to index
    %c0_206 = arith.constant 0 : index
    %c0_207 = arith.constant 0 : index
    %780 = vector.load %arg8[%779, %c0_206, %c0_207] : memref<16x8x128xf32, #tpu.memory_space<vmem>>, vector<1x8x128xf32>
    %781 = vector.shape_cast %780 : vector<1x8x128xf32> to vector<8x128xf32>
    %782 = arith.truncf %747 : vector<8x128xf32> to vector<8x128xbf16>
    %cst_208 = arith.constant dense<0.000000e+00> : vector<8x128xf32>
    %783 = tpu.matmul %782, %11, %cst_208 {dimension_numbers = #tpu.dot_dimension_numbers<[1], [0], [0], [1], [0, 0, 1, 1], [], []>} : vector<8x128xbf16>, vector<128x128xbf16>, vector<8x128xf32> -> vector<8x128xf32>
    %784 = arith.addf %781, %783 : vector<8x128xf32>
    %785 = arith.index_cast %c8_i32 : i32 to index
    %c0_209 = arith.constant 0 : index
    %c0_210 = arith.constant 0 : index
    %786 = vector.load %arg8[%785, %c0_209, %c0_210] : memref<16x8x128xf32, #tpu.memory_space<vmem>>, vector<1x8x128xf32>
    %787 = vector.shape_cast %786 : vector<1x8x128xf32> to vector<8x128xf32>
    %788 = vector.shape_cast %784 : vector<8x128xf32> to vector<1x8x128xf32>
    tpu.vector_store %arg8[%785, %c0_209, %c0_210], %788 {strides = array<i32>} : memref<16x8x128xf32, #tpu.memory_space<vmem>>, vector<1x8x128xf32>,
    %789 = arith.index_cast %713 : i32 to index
    %c0_211 = arith.constant 0 : index
    %c0_212 = arith.constant 0 : index
    %790 = vector.load %arg8[%789, %c0_211, %c0_212] : memref<16x8x128xf32, #tpu.memory_space<vmem>>, vector<1x8x128xf32>
    %791 = vector.shape_cast %790 : vector<1x8x128xf32> to vector<8x128xf32>
    %792 = arith.truncf %778 : vector<8x128xf32> to vector<8x128xbf16>
    %cst_213 = arith.constant dense<0.000000e+00> : vector<8x128xf32>
    %793 = tpu.matmul %792, %12, %cst_213 {dimension_numbers = #tpu.dot_dimension_numbers<[1], [0], [0], [1], [0, 0, 1, 1], [], []>} : vector<8x128xbf16>, vector<128x128xbf16>, vector<8x128xf32> -> vector<8x128xf32>
    %794 = arith.addf %791, %793 : vector<8x128xf32>
    %795 = arith.index_cast %713 : i32 to index
    %c0_214 = arith.constant 0 : index
    %c0_215 = arith.constant 0 : index
    %796 = vector.load %arg8[%795, %c0_214, %c0_215] : memref<16x8x128xf32, #tpu.memory_space<vmem>>, vector<1x8x128xf32>
    %797 = vector.shape_cast %796 : vector<1x8x128xf32> to vector<8x128xf32>
    %798 = vector.shape_cast %794 : vector<8x128xf32> to vector<1x8x128xf32>
    tpu.vector_store %arg8[%795, %c0_214, %c0_215], %798 {strides = array<i32>} : memref<16x8x128xf32, #tpu.memory_space<vmem>>, vector<1x8x128xf32>,
    %799 = tpu.concatenate %747, %778 in 1 : vector<8x128xf32>, vector<8x128xf32> -> vector<8x256xf32>
    %c9_i32 = arith.constant 9 : i32
    %c15_i32_216 = arith.constant 15 : i32
    %800 = arith.subi %c15_i32_216, %c9_i32 : i32
    %801 = arith.truncf %799 : vector<8x256xf32> to vector<8x256xbf16>
    %cst_217 = arith.constant dense<0.000000e+00> : vector<8x768xf32>
    %802 = tpu.matmul %801, %10, %cst_217 {dimension_numbers = #tpu.dot_dimension_numbers<[1], [0], [0], [1], [0, 0, 1, 1], [], []>} : vector<8x256xbf16>, vector<256x768xbf16>, vector<8x768xf32> -> vector<8x768xf32>
    %803 = arith.addf %802, %15 : vector<8x768xf32>
    %804 = arith.index_cast %c9_i32 : i32 to index
    %c0_218 = arith.constant 0 : index
    %c0_219 = arith.constant 0 : index
    %805 = vector.load %arg9[%804, %c0_218, %c0_219] : memref<16x8x768xf32, #tpu.memory_space<vmem>>, vector<1x8x384xf32>
    %806 = vector.shape_cast %805 : vector<1x8x384xf32> to vector<8x384xf32>
    %807 = vector.extract_strided_slice %803 {offsets = [0, 0], sizes = [8, 384], strides = [1, 1]} : vector<8x768xf32> to vector<8x384xf32>
    %808 = vector.extract_strided_slice %799 {offsets = [0, 0], sizes = [8, 128], strides = [1, 1]} : vector<8x256xf32> to vector<8x128xf32>
    %809 = vector.extract_strided_slice %806 {offsets = [0, 0], sizes = [8, 128], strides = [1, 1]} : vector<8x384xf32> to vector<8x128xf32>
    %810 = vector.extract_strided_slice %807 {offsets = [0, 0], sizes = [8, 128], strides = [1, 1]} : vector<8x384xf32> to vector<8x128xf32>
    %811 = arith.addf %809, %810 : vector<8x128xf32>
    %812 = arith.negf %811 : vector<8x128xf32>
    %813 = math.exp %812 : vector<8x128xf32>
    %cst_220 = arith.constant 1.000000e+00 : f32
    %814 = vector.broadcast %cst_220 : f32 to vector<8x128xf32>
    %815 = arith.addf %814, %813 : vector<8x128xf32>
    %816 = arith.divf %814, %815 : vector<8x128xf32>
    %817 = vector.extract_strided_slice %806 {offsets = [0, 128], sizes = [8, 128], strides = [1, 1]} : vector<8x384xf32> to vector<8x128xf32>
    %818 = vector.extract_strided_slice %807 {offsets = [0, 128], sizes = [8, 128], strides = [1, 1]} : vector<8x384xf32> to vector<8x128xf32>
    %819 = arith.addf %817, %818 : vector<8x128xf32>
    %820 = arith.negf %819 : vector<8x128xf32>
    %821 = math.exp %820 : vector<8x128xf32>
    %cst_221 = arith.constant 1.000000e+00 : f32
    %822 = vector.broadcast %cst_221 : f32 to vector<8x128xf32>
    %823 = arith.addf %822, %821 : vector<8x128xf32>
    %824 = arith.divf %822, %823 : vector<8x128xf32>
    %825 = vector.extract_strided_slice %806 {offsets = [0, 256], sizes = [8, 128], strides = [1, 1]} : vector<8x384xf32> to vector<8x128xf32>
    %826 = vector.extract_strided_slice %807 {offsets = [0, 256], sizes = [8, 128], strides = [1, 1]} : vector<8x384xf32> to vector<8x128xf32>
    %827 = arith.mulf %816, %826 : vector<8x128xf32>
    %828 = arith.addf %825, %827 : vector<8x128xf32>
    %829 = math.tanh %828 : vector<8x128xf32>
    %cst_222 = arith.constant 1.000000e+00 : f32
    %830 = vector.broadcast %cst_222 : f32 to vector<8x128xf32>
    %831 = arith.subf %830, %824 : vector<8x128xf32>
    %832 = arith.mulf %831, %829 : vector<8x128xf32>
    %833 = arith.mulf %824, %808 : vector<8x128xf32>
    %834 = arith.addf %832, %833 : vector<8x128xf32>
    %835 = arith.index_cast %800 : i32 to index
    %c0_223 = arith.constant 0 : index
    %c384_224 = arith.constant 384 : index
    %836 = vector.load %arg9[%835, %c0_223, %c384_224] : memref<16x8x768xf32, #tpu.memory_space<vmem>>, vector<1x8x384xf32>
    %837 = vector.shape_cast %836 : vector<1x8x384xf32> to vector<8x384xf32>
    %838 = vector.extract_strided_slice %803 {offsets = [0, 384], sizes = [8, 384], strides = [1, 1]} : vector<8x768xf32> to vector<8x384xf32>
    %839 = vector.extract_strided_slice %799 {offsets = [0, 128], sizes = [8, 128], strides = [1, 1]} : vector<8x256xf32> to vector<8x128xf32>
    %840 = vector.extract_strided_slice %837 {offsets = [0, 0], sizes = [8, 128], strides = [1, 1]} : vector<8x384xf32> to vector<8x128xf32>
    %841 = vector.extract_strided_slice %838 {offsets = [0, 0], sizes = [8, 128], strides = [1, 1]} : vector<8x384xf32> to vector<8x128xf32>
    %842 = arith.addf %840, %841 : vector<8x128xf32>
    %843 = arith.negf %842 : vector<8x128xf32>
    %844 = math.exp %843 : vector<8x128xf32>
    %cst_225 = arith.constant 1.000000e+00 : f32
    %845 = vector.broadcast %cst_225 : f32 to vector<8x128xf32>
    %846 = arith.addf %845, %844 : vector<8x128xf32>
    %847 = arith.divf %845, %846 : vector<8x128xf32>
    %848 = vector.extract_strided_slice %837 {offsets = [0, 128], sizes = [8, 128], strides = [1, 1]} : vector<8x384xf32> to vector<8x128xf32>
    %849 = vector.extract_strided_slice %838 {offsets = [0, 128], sizes = [8, 128], strides = [1, 1]} : vector<8x384xf32> to vector<8x128xf32>
    %850 = arith.addf %848, %849 : vector<8x128xf32>
    %851 = arith.negf %850 : vector<8x128xf32>
    %852 = math.exp %851 : vector<8x128xf32>
    %cst_226 = arith.constant 1.000000e+00 : f32
    %853 = vector.broadcast %cst_226 : f32 to vector<8x128xf32>
    %854 = arith.addf %853, %852 : vector<8x128xf32>
    %855 = arith.divf %853, %854 : vector<8x128xf32>
    %856 = vector.extract_strided_slice %837 {offsets = [0, 256], sizes = [8, 128], strides = [1, 1]} : vector<8x384xf32> to vector<8x128xf32>
    %857 = vector.extract_strided_slice %838 {offsets = [0, 256], sizes = [8, 128], strides = [1, 1]} : vector<8x384xf32> to vector<8x128xf32>
    %858 = arith.mulf %847, %857 : vector<8x128xf32>
    %859 = arith.addf %856, %858 : vector<8x128xf32>
    %860 = math.tanh %859 : vector<8x128xf32>
    %cst_227 = arith.constant 1.000000e+00 : f32
    %861 = vector.broadcast %cst_227 : f32 to vector<8x128xf32>
    %862 = arith.subf %861, %855 : vector<8x128xf32>
    %863 = arith.mulf %862, %860 : vector<8x128xf32>
    %864 = arith.mulf %855, %839 : vector<8x128xf32>
    %865 = arith.addf %863, %864 : vector<8x128xf32>
    %866 = arith.index_cast %c9_i32 : i32 to index
    %c0_228 = arith.constant 0 : index
    %c0_229 = arith.constant 0 : index
    %867 = vector.load %arg8[%866, %c0_228, %c0_229] : memref<16x8x128xf32, #tpu.memory_space<vmem>>, vector<1x8x128xf32>
    %868 = vector.shape_cast %867 : vector<1x8x128xf32> to vector<8x128xf32>
    %869 = arith.truncf %834 : vector<8x128xf32> to vector<8x128xbf16>
    %cst_230 = arith.constant dense<0.000000e+00> : vector<8x128xf32>
    %870 = tpu.matmul %869, %11, %cst_230 {dimension_numbers = #tpu.dot_dimension_numbers<[1], [0], [0], [1], [0, 0, 1, 1], [], []>} : vector<8x128xbf16>, vector<128x128xbf16>, vector<8x128xf32> -> vector<8x128xf32>
    %871 = arith.addf %868, %870 : vector<8x128xf32>
    %872 = arith.index_cast %c9_i32 : i32 to index
    %c0_231 = arith.constant 0 : index
    %c0_232 = arith.constant 0 : index
    %873 = vector.load %arg8[%872, %c0_231, %c0_232] : memref<16x8x128xf32, #tpu.memory_space<vmem>>, vector<1x8x128xf32>
    %874 = vector.shape_cast %873 : vector<1x8x128xf32> to vector<8x128xf32>
    %875 = vector.shape_cast %871 : vector<8x128xf32> to vector<1x8x128xf32>
    tpu.vector_store %arg8[%872, %c0_231, %c0_232], %875 {strides = array<i32>} : memref<16x8x128xf32, #tpu.memory_space<vmem>>, vector<1x8x128xf32>,
    %876 = arith.index_cast %800 : i32 to index
    %c0_233 = arith.constant 0 : index
    %c0_234 = arith.constant 0 : index
    %877 = vector.load %arg8[%876, %c0_233, %c0_234] : memref<16x8x128xf32, #tpu.memory_space<vmem>>, vector<1x8x128xf32>
    %878 = vector.shape_cast %877 : vector<1x8x128xf32> to vector<8x128xf32>
    %879 = arith.truncf %865 : vector<8x128xf32> to vector<8x128xbf16>
    %cst_235 = arith.constant dense<0.000000e+00> : vector<8x128xf32>
    %880 = tpu.matmul %879, %12, %cst_235 {dimension_numbers = #tpu.dot_dimension_numbers<[1], [0], [0], [1], [0, 0, 1, 1], [], []>} : vector<8x128xbf16>, vector<128x128xbf16>, vector<8x128xf32> -> vector<8x128xf32>
    %881 = arith.addf %878, %880 : vector<8x128xf32>
    %882 = arith.index_cast %800 : i32 to index
    %c0_236 = arith.constant 0 : index
    %c0_237 = arith.constant 0 : index
    %883 = vector.load %arg8[%882, %c0_236, %c0_237] : memref<16x8x128xf32, #tpu.memory_space<vmem>>, vector<1x8x128xf32>
    %884 = vector.shape_cast %883 : vector<1x8x128xf32> to vector<8x128xf32>
    %885 = vector.shape_cast %881 : vector<8x128xf32> to vector<1x8x128xf32>
    tpu.vector_store %arg8[%882, %c0_236, %c0_237], %885 {strides = array<i32>} : memref<16x8x128xf32, #tpu.memory_space<vmem>>, vector<1x8x128xf32>,
    %886 = tpu.concatenate %834, %865 in 1 : vector<8x128xf32>, vector<8x128xf32> -> vector<8x256xf32>
    %c10_i32 = arith.constant 10 : i32
    %c15_i32_238 = arith.constant 15 : i32
    %887 = arith.subi %c15_i32_238, %c10_i32 : i32
    %888 = arith.truncf %886 : vector<8x256xf32> to vector<8x256xbf16>
    %cst_239 = arith.constant dense<0.000000e+00> : vector<8x768xf32>
    %889 = tpu.matmul %888, %10, %cst_239 {dimension_numbers = #tpu.dot_dimension_numbers<[1], [0], [0], [1], [0, 0, 1, 1], [], []>} : vector<8x256xbf16>, vector<256x768xbf16>, vector<8x768xf32> -> vector<8x768xf32>
    %890 = arith.addf %889, %15 : vector<8x768xf32>
    %891 = arith.index_cast %c10_i32 : i32 to index
    %c0_240 = arith.constant 0 : index
    %c0_241 = arith.constant 0 : index
    %892 = vector.load %arg9[%891, %c0_240, %c0_241] : memref<16x8x768xf32, #tpu.memory_space<vmem>>, vector<1x8x384xf32>
    %893 = vector.shape_cast %892 : vector<1x8x384xf32> to vector<8x384xf32>
    %894 = vector.extract_strided_slice %890 {offsets = [0, 0], sizes = [8, 384], strides = [1, 1]} : vector<8x768xf32> to vector<8x384xf32>
    %895 = vector.extract_strided_slice %886 {offsets = [0, 0], sizes = [8, 128], strides = [1, 1]} : vector<8x256xf32> to vector<8x128xf32>
    %896 = vector.extract_strided_slice %893 {offsets = [0, 0], sizes = [8, 128], strides = [1, 1]} : vector<8x384xf32> to vector<8x128xf32>
    %897 = vector.extract_strided_slice %894 {offsets = [0, 0], sizes = [8, 128], strides = [1, 1]} : vector<8x384xf32> to vector<8x128xf32>
    %898 = arith.addf %896, %897 : vector<8x128xf32>
    %899 = arith.negf %898 : vector<8x128xf32>
    %900 = math.exp %899 : vector<8x128xf32>
    %cst_242 = arith.constant 1.000000e+00 : f32
    %901 = vector.broadcast %cst_242 : f32 to vector<8x128xf32>
    %902 = arith.addf %901, %900 : vector<8x128xf32>
    %903 = arith.divf %901, %902 : vector<8x128xf32>
    %904 = vector.extract_strided_slice %893 {offsets = [0, 128], sizes = [8, 128], strides = [1, 1]} : vector<8x384xf32> to vector<8x128xf32>
    %905 = vector.extract_strided_slice %894 {offsets = [0, 128], sizes = [8, 128], strides = [1, 1]} : vector<8x384xf32> to vector<8x128xf32>
    %906 = arith.addf %904, %905 : vector<8x128xf32>
    %907 = arith.negf %906 : vector<8x128xf32>
    %908 = math.exp %907 : vector<8x128xf32>
    %cst_243 = arith.constant 1.000000e+00 : f32
    %909 = vector.broadcast %cst_243 : f32 to vector<8x128xf32>
    %910 = arith.addf %909, %908 : vector<8x128xf32>
    %911 = arith.divf %909, %910 : vector<8x128xf32>
    %912 = vector.extract_strided_slice %893 {offsets = [0, 256], sizes = [8, 128], strides = [1, 1]} : vector<8x384xf32> to vector<8x128xf32>
    %913 = vector.extract_strided_slice %894 {offsets = [0, 256], sizes = [8, 128], strides = [1, 1]} : vector<8x384xf32> to vector<8x128xf32>
    %914 = arith.mulf %903, %913 : vector<8x128xf32>
    %915 = arith.addf %912, %914 : vector<8x128xf32>
    %916 = math.tanh %915 : vector<8x128xf32>
    %cst_244 = arith.constant 1.000000e+00 : f32
    %917 = vector.broadcast %cst_244 : f32 to vector<8x128xf32>
    %918 = arith.subf %917, %911 : vector<8x128xf32>
    %919 = arith.mulf %918, %916 : vector<8x128xf32>
    %920 = arith.mulf %911, %895 : vector<8x128xf32>
    %921 = arith.addf %919, %920 : vector<8x128xf32>
    %922 = arith.index_cast %887 : i32 to index
    %c0_245 = arith.constant 0 : index
    %c384_246 = arith.constant 384 : index
    %923 = vector.load %arg9[%922, %c0_245, %c384_246] : memref<16x8x768xf32, #tpu.memory_space<vmem>>, vector<1x8x384xf32>
    %924 = vector.shape_cast %923 : vector<1x8x384xf32> to vector<8x384xf32>
    %925 = vector.extract_strided_slice %890 {offsets = [0, 384], sizes = [8, 384], strides = [1, 1]} : vector<8x768xf32> to vector<8x384xf32>
    %926 = vector.extract_strided_slice %886 {offsets = [0, 128], sizes = [8, 128], strides = [1, 1]} : vector<8x256xf32> to vector<8x128xf32>
    %927 = vector.extract_strided_slice %924 {offsets = [0, 0], sizes = [8, 128], strides = [1, 1]} : vector<8x384xf32> to vector<8x128xf32>
    %928 = vector.extract_strided_slice %925 {offsets = [0, 0], sizes = [8, 128], strides = [1, 1]} : vector<8x384xf32> to vector<8x128xf32>
    %929 = arith.addf %927, %928 : vector<8x128xf32>
    %930 = arith.negf %929 : vector<8x128xf32>
    %931 = math.exp %930 : vector<8x128xf32>
    %cst_247 = arith.constant 1.000000e+00 : f32
    %932 = vector.broadcast %cst_247 : f32 to vector<8x128xf32>
    %933 = arith.addf %932, %931 : vector<8x128xf32>
    %934 = arith.divf %932, %933 : vector<8x128xf32>
    %935 = vector.extract_strided_slice %924 {offsets = [0, 128], sizes = [8, 128], strides = [1, 1]} : vector<8x384xf32> to vector<8x128xf32>
    %936 = vector.extract_strided_slice %925 {offsets = [0, 128], sizes = [8, 128], strides = [1, 1]} : vector<8x384xf32> to vector<8x128xf32>
    %937 = arith.addf %935, %936 : vector<8x128xf32>
    %938 = arith.negf %937 : vector<8x128xf32>
    %939 = math.exp %938 : vector<8x128xf32>
    %cst_248 = arith.constant 1.000000e+00 : f32
    %940 = vector.broadcast %cst_248 : f32 to vector<8x128xf32>
    %941 = arith.addf %940, %939 : vector<8x128xf32>
    %942 = arith.divf %940, %941 : vector<8x128xf32>
    %943 = vector.extract_strided_slice %924 {offsets = [0, 256], sizes = [8, 128], strides = [1, 1]} : vector<8x384xf32> to vector<8x128xf32>
    %944 = vector.extract_strided_slice %925 {offsets = [0, 256], sizes = [8, 128], strides = [1, 1]} : vector<8x384xf32> to vector<8x128xf32>
    %945 = arith.mulf %934, %944 : vector<8x128xf32>
    %946 = arith.addf %943, %945 : vector<8x128xf32>
    %947 = math.tanh %946 : vector<8x128xf32>
    %cst_249 = arith.constant 1.000000e+00 : f32
    %948 = vector.broadcast %cst_249 : f32 to vector<8x128xf32>
    %949 = arith.subf %948, %942 : vector<8x128xf32>
    %950 = arith.mulf %949, %947 : vector<8x128xf32>
    %951 = arith.mulf %942, %926 : vector<8x128xf32>
    %952 = arith.addf %950, %951 : vector<8x128xf32>
    %953 = arith.index_cast %c10_i32 : i32 to index
    %c0_250 = arith.constant 0 : index
    %c0_251 = arith.constant 0 : index
    %954 = vector.load %arg8[%953, %c0_250, %c0_251] : memref<16x8x128xf32, #tpu.memory_space<vmem>>, vector<1x8x128xf32>
    %955 = vector.shape_cast %954 : vector<1x8x128xf32> to vector<8x128xf32>
    %956 = arith.truncf %921 : vector<8x128xf32> to vector<8x128xbf16>
    %cst_252 = arith.constant dense<0.000000e+00> : vector<8x128xf32>
    %957 = tpu.matmul %956, %11, %cst_252 {dimension_numbers = #tpu.dot_dimension_numbers<[1], [0], [0], [1], [0, 0, 1, 1], [], []>} : vector<8x128xbf16>, vector<128x128xbf16>, vector<8x128xf32> -> vector<8x128xf32>
    %958 = arith.addf %955, %957 : vector<8x128xf32>
    %959 = arith.index_cast %c10_i32 : i32 to index
    %c0_253 = arith.constant 0 : index
    %c0_254 = arith.constant 0 : index
    %960 = vector.load %arg8[%959, %c0_253, %c0_254] : memref<16x8x128xf32, #tpu.memory_space<vmem>>, vector<1x8x128xf32>
    %961 = vector.shape_cast %960 : vector<1x8x128xf32> to vector<8x128xf32>
    %962 = vector.shape_cast %958 : vector<8x128xf32> to vector<1x8x128xf32>
    tpu.vector_store %arg8[%959, %c0_253, %c0_254], %962 {strides = array<i32>} : memref<16x8x128xf32, #tpu.memory_space<vmem>>, vector<1x8x128xf32>,
    %963 = arith.index_cast %887 : i32 to index
    %c0_255 = arith.constant 0 : index
    %c0_256 = arith.constant 0 : index
    %964 = vector.load %arg8[%963, %c0_255, %c0_256] : memref<16x8x128xf32, #tpu.memory_space<vmem>>, vector<1x8x128xf32>
    %965 = vector.shape_cast %964 : vector<1x8x128xf32> to vector<8x128xf32>
    %966 = arith.truncf %952 : vector<8x128xf32> to vector<8x128xbf16>
    %cst_257 = arith.constant dense<0.000000e+00> : vector<8x128xf32>
    %967 = tpu.matmul %966, %12, %cst_257 {dimension_numbers = #tpu.dot_dimension_numbers<[1], [0], [0], [1], [0, 0, 1, 1], [], []>} : vector<8x128xbf16>, vector<128x128xbf16>, vector<8x128xf32> -> vector<8x128xf32>
    %968 = arith.addf %965, %967 : vector<8x128xf32>
    %969 = arith.index_cast %887 : i32 to index
    %c0_258 = arith.constant 0 : index
    %c0_259 = arith.constant 0 : index
    %970 = vector.load %arg8[%969, %c0_258, %c0_259] : memref<16x8x128xf32, #tpu.memory_space<vmem>>, vector<1x8x128xf32>
    %971 = vector.shape_cast %970 : vector<1x8x128xf32> to vector<8x128xf32>
    %972 = vector.shape_cast %968 : vector<8x128xf32> to vector<1x8x128xf32>
    tpu.vector_store %arg8[%969, %c0_258, %c0_259], %972 {strides = array<i32>} : memref<16x8x128xf32, #tpu.memory_space<vmem>>, vector<1x8x128xf32>,
    %973 = tpu.concatenate %921, %952 in 1 : vector<8x128xf32>, vector<8x128xf32> -> vector<8x256xf32>
    %c11_i32 = arith.constant 11 : i32
    %c15_i32_260 = arith.constant 15 : i32
    %974 = arith.subi %c15_i32_260, %c11_i32 : i32
    %975 = arith.truncf %973 : vector<8x256xf32> to vector<8x256xbf16>
    %cst_261 = arith.constant dense<0.000000e+00> : vector<8x768xf32>
    %976 = tpu.matmul %975, %10, %cst_261 {dimension_numbers = #tpu.dot_dimension_numbers<[1], [0], [0], [1], [0, 0, 1, 1], [], []>} : vector<8x256xbf16>, vector<256x768xbf16>, vector<8x768xf32> -> vector<8x768xf32>
    %977 = arith.addf %976, %15 : vector<8x768xf32>
    %978 = arith.index_cast %c11_i32 : i32 to index
    %c0_262 = arith.constant 0 : index
    %c0_263 = arith.constant 0 : index
    %979 = vector.load %arg9[%978, %c0_262, %c0_263] : memref<16x8x768xf32, #tpu.memory_space<vmem>>, vector<1x8x384xf32>
    %980 = vector.shape_cast %979 : vector<1x8x384xf32> to vector<8x384xf32>
    %981 = vector.extract_strided_slice %977 {offsets = [0, 0], sizes = [8, 384], strides = [1, 1]} : vector<8x768xf32> to vector<8x384xf32>
    %982 = vector.extract_strided_slice %973 {offsets = [0, 0], sizes = [8, 128], strides = [1, 1]} : vector<8x256xf32> to vector<8x128xf32>
    %983 = vector.extract_strided_slice %980 {offsets = [0, 0], sizes = [8, 128], strides = [1, 1]} : vector<8x384xf32> to vector<8x128xf32>
    %984 = vector.extract_strided_slice %981 {offsets = [0, 0], sizes = [8, 128], strides = [1, 1]} : vector<8x384xf32> to vector<8x128xf32>
    %985 = arith.addf %983, %984 : vector<8x128xf32>
    %986 = arith.negf %985 : vector<8x128xf32>
    %987 = math.exp %986 : vector<8x128xf32>
    %cst_264 = arith.constant 1.000000e+00 : f32
    %988 = vector.broadcast %cst_264 : f32 to vector<8x128xf32>
    %989 = arith.addf %988, %987 : vector<8x128xf32>
    %990 = arith.divf %988, %989 : vector<8x128xf32>
    %991 = vector.extract_strided_slice %980 {offsets = [0, 128], sizes = [8, 128], strides = [1, 1]} : vector<8x384xf32> to vector<8x128xf32>
    %992 = vector.extract_strided_slice %981 {offsets = [0, 128], sizes = [8, 128], strides = [1, 1]} : vector<8x384xf32> to vector<8x128xf32>
    %993 = arith.addf %991, %992 : vector<8x128xf32>
    %994 = arith.negf %993 : vector<8x128xf32>
    %995 = math.exp %994 : vector<8x128xf32>
    %cst_265 = arith.constant 1.000000e+00 : f32
    %996 = vector.broadcast %cst_265 : f32 to vector<8x128xf32>
    %997 = arith.addf %996, %995 : vector<8x128xf32>
    %998 = arith.divf %996, %997 : vector<8x128xf32>
    %999 = vector.extract_strided_slice %980 {offsets = [0, 256], sizes = [8, 128], strides = [1, 1]} : vector<8x384xf32> to vector<8x128xf32>
    %1000 = vector.extract_strided_slice %981 {offsets = [0, 256], sizes = [8, 128], strides = [1, 1]} : vector<8x384xf32> to vector<8x128xf32>
    %1001 = arith.mulf %990, %1000 : vector<8x128xf32>
    %1002 = arith.addf %999, %1001 : vector<8x128xf32>
    %1003 = math.tanh %1002 : vector<8x128xf32>
    %cst_266 = arith.constant 1.000000e+00 : f32
    %1004 = vector.broadcast %cst_266 : f32 to vector<8x128xf32>
    %1005 = arith.subf %1004, %998 : vector<8x128xf32>
    %1006 = arith.mulf %1005, %1003 : vector<8x128xf32>
    %1007 = arith.mulf %998, %982 : vector<8x128xf32>
    %1008 = arith.addf %1006, %1007 : vector<8x128xf32>
    %1009 = arith.index_cast %974 : i32 to index
    %c0_267 = arith.constant 0 : index
    %c384_268 = arith.constant 384 : index
    %1010 = vector.load %arg9[%1009, %c0_267, %c384_268] : memref<16x8x768xf32, #tpu.memory_space<vmem>>, vector<1x8x384xf32>
    %1011 = vector.shape_cast %1010 : vector<1x8x384xf32> to vector<8x384xf32>
    %1012 = vector.extract_strided_slice %977 {offsets = [0, 384], sizes = [8, 384], strides = [1, 1]} : vector<8x768xf32> to vector<8x384xf32>
    %1013 = vector.extract_strided_slice %973 {offsets = [0, 128], sizes = [8, 128], strides = [1, 1]} : vector<8x256xf32> to vector<8x128xf32>
    %1014 = vector.extract_strided_slice %1011 {offsets = [0, 0], sizes = [8, 128], strides = [1, 1]} : vector<8x384xf32> to vector<8x128xf32>
    %1015 = vector.extract_strided_slice %1012 {offsets = [0, 0], sizes = [8, 128], strides = [1, 1]} : vector<8x384xf32> to vector<8x128xf32>
    %1016 = arith.addf %1014, %1015 : vector<8x128xf32>
    %1017 = arith.negf %1016 : vector<8x128xf32>
    %1018 = math.exp %1017 : vector<8x128xf32>
    %cst_269 = arith.constant 1.000000e+00 : f32
    %1019 = vector.broadcast %cst_269 : f32 to vector<8x128xf32>
    %1020 = arith.addf %1019, %1018 : vector<8x128xf32>
    %1021 = arith.divf %1019, %1020 : vector<8x128xf32>
    %1022 = vector.extract_strided_slice %1011 {offsets = [0, 128], sizes = [8, 128], strides = [1, 1]} : vector<8x384xf32> to vector<8x128xf32>
    %1023 = vector.extract_strided_slice %1012 {offsets = [0, 128], sizes = [8, 128], strides = [1, 1]} : vector<8x384xf32> to vector<8x128xf32>
    %1024 = arith.addf %1022, %1023 : vector<8x128xf32>
    %1025 = arith.negf %1024 : vector<8x128xf32>
    %1026 = math.exp %1025 : vector<8x128xf32>
    %cst_270 = arith.constant 1.000000e+00 : f32
    %1027 = vector.broadcast %cst_270 : f32 to vector<8x128xf32>
    %1028 = arith.addf %1027, %1026 : vector<8x128xf32>
    %1029 = arith.divf %1027, %1028 : vector<8x128xf32>
    %1030 = vector.extract_strided_slice %1011 {offsets = [0, 256], sizes = [8, 128], strides = [1, 1]} : vector<8x384xf32> to vector<8x128xf32>
    %1031 = vector.extract_strided_slice %1012 {offsets = [0, 256], sizes = [8, 128], strides = [1, 1]} : vector<8x384xf32> to vector<8x128xf32>
    %1032 = arith.mulf %1021, %1031 : vector<8x128xf32>
    %1033 = arith.addf %1030, %1032 : vector<8x128xf32>
    %1034 = math.tanh %1033 : vector<8x128xf32>
    %cst_271 = arith.constant 1.000000e+00 : f32
    %1035 = vector.broadcast %cst_271 : f32 to vector<8x128xf32>
    %1036 = arith.subf %1035, %1029 : vector<8x128xf32>
    %1037 = arith.mulf %1036, %1034 : vector<8x128xf32>
    %1038 = arith.mulf %1029, %1013 : vector<8x128xf32>
    %1039 = arith.addf %1037, %1038 : vector<8x128xf32>
    %1040 = arith.index_cast %c11_i32 : i32 to index
    %c0_272 = arith.constant 0 : index
    %c0_273 = arith.constant 0 : index
    %1041 = vector.load %arg8[%1040, %c0_272, %c0_273] : memref<16x8x128xf32, #tpu.memory_space<vmem>>, vector<1x8x128xf32>
    %1042 = vector.shape_cast %1041 : vector<1x8x128xf32> to vector<8x128xf32>
    %1043 = arith.truncf %1008 : vector<8x128xf32> to vector<8x128xbf16>
    %cst_274 = arith.constant dense<0.000000e+00> : vector<8x128xf32>
    %1044 = tpu.matmul %1043, %11, %cst_274 {dimension_numbers = #tpu.dot_dimension_numbers<[1], [0], [0], [1], [0, 0, 1, 1], [], []>} : vector<8x128xbf16>, vector<128x128xbf16>, vector<8x128xf32> -> vector<8x128xf32>
    %1045 = arith.addf %1042, %1044 : vector<8x128xf32>
    %1046 = arith.index_cast %c11_i32 : i32 to index
    %c0_275 = arith.constant 0 : index
    %c0_276 = arith.constant 0 : index
    %1047 = vector.load %arg8[%1046, %c0_275, %c0_276] : memref<16x8x128xf32, #tpu.memory_space<vmem>>, vector<1x8x128xf32>
    %1048 = vector.shape_cast %1047 : vector<1x8x128xf32> to vector<8x128xf32>
    %1049 = vector.shape_cast %1045 : vector<8x128xf32> to vector<1x8x128xf32>
    tpu.vector_store %arg8[%1046, %c0_275, %c0_276], %1049 {strides = array<i32>} : memref<16x8x128xf32, #tpu.memory_space<vmem>>, vector<1x8x128xf32>,
    %1050 = arith.index_cast %974 : i32 to index
    %c0_277 = arith.constant 0 : index
    %c0_278 = arith.constant 0 : index
    %1051 = vector.load %arg8[%1050, %c0_277, %c0_278] : memref<16x8x128xf32, #tpu.memory_space<vmem>>, vector<1x8x128xf32>
    %1052 = vector.shape_cast %1051 : vector<1x8x128xf32> to vector<8x128xf32>
    %1053 = arith.truncf %1039 : vector<8x128xf32> to vector<8x128xbf16>
    %cst_279 = arith.constant dense<0.000000e+00> : vector<8x128xf32>
    %1054 = tpu.matmul %1053, %12, %cst_279 {dimension_numbers = #tpu.dot_dimension_numbers<[1], [0], [0], [1], [0, 0, 1, 1], [], []>} : vector<8x128xbf16>, vector<128x128xbf16>, vector<8x128xf32> -> vector<8x128xf32>
    %1055 = arith.addf %1052, %1054 : vector<8x128xf32>
    %1056 = arith.index_cast %974 : i32 to index
    %c0_280 = arith.constant 0 : index
    %c0_281 = arith.constant 0 : index
    %1057 = vector.load %arg8[%1056, %c0_280, %c0_281] : memref<16x8x128xf32, #tpu.memory_space<vmem>>, vector<1x8x128xf32>
    %1058 = vector.shape_cast %1057 : vector<1x8x128xf32> to vector<8x128xf32>
    %1059 = vector.shape_cast %1055 : vector<8x128xf32> to vector<1x8x128xf32>
    tpu.vector_store %arg8[%1056, %c0_280, %c0_281], %1059 {strides = array<i32>} : memref<16x8x128xf32, #tpu.memory_space<vmem>>, vector<1x8x128xf32>,
    %1060 = tpu.concatenate %1008, %1039 in 1 : vector<8x128xf32>, vector<8x128xf32> -> vector<8x256xf32>
    %c12_i32 = arith.constant 12 : i32
    %c15_i32_282 = arith.constant 15 : i32
    %1061 = arith.subi %c15_i32_282, %c12_i32 : i32
    %1062 = arith.truncf %1060 : vector<8x256xf32> to vector<8x256xbf16>
    %cst_283 = arith.constant dense<0.000000e+00> : vector<8x768xf32>
    %1063 = tpu.matmul %1062, %10, %cst_283 {dimension_numbers = #tpu.dot_dimension_numbers<[1], [0], [0], [1], [0, 0, 1, 1], [], []>} : vector<8x256xbf16>, vector<256x768xbf16>, vector<8x768xf32> -> vector<8x768xf32>
    %1064 = arith.addf %1063, %15 : vector<8x768xf32>
    %1065 = arith.index_cast %c12_i32 : i32 to index
    %c0_284 = arith.constant 0 : index
    %c0_285 = arith.constant 0 : index
    %1066 = vector.load %arg9[%1065, %c0_284, %c0_285] : memref<16x8x768xf32, #tpu.memory_space<vmem>>, vector<1x8x384xf32>
    %1067 = vector.shape_cast %1066 : vector<1x8x384xf32> to vector<8x384xf32>
    %1068 = vector.extract_strided_slice %1064 {offsets = [0, 0], sizes = [8, 384], strides = [1, 1]} : vector<8x768xf32> to vector<8x384xf32>
    %1069 = vector.extract_strided_slice %1060 {offsets = [0, 0], sizes = [8, 128], strides = [1, 1]} : vector<8x256xf32> to vector<8x128xf32>
    %1070 = vector.extract_strided_slice %1067 {offsets = [0, 0], sizes = [8, 128], strides = [1, 1]} : vector<8x384xf32> to vector<8x128xf32>
    %1071 = vector.extract_strided_slice %1068 {offsets = [0, 0], sizes = [8, 128], strides = [1, 1]} : vector<8x384xf32> to vector<8x128xf32>
    %1072 = arith.addf %1070, %1071 : vector<8x128xf32>
    %1073 = arith.negf %1072 : vector<8x128xf32>
    %1074 = math.exp %1073 : vector<8x128xf32>
    %cst_286 = arith.constant 1.000000e+00 : f32
    %1075 = vector.broadcast %cst_286 : f32 to vector<8x128xf32>
    %1076 = arith.addf %1075, %1074 : vector<8x128xf32>
    %1077 = arith.divf %1075, %1076 : vector<8x128xf32>
    %1078 = vector.extract_strided_slice %1067 {offsets = [0, 128], sizes = [8, 128], strides = [1, 1]} : vector<8x384xf32> to vector<8x128xf32>
    %1079 = vector.extract_strided_slice %1068 {offsets = [0, 128], sizes = [8, 128], strides = [1, 1]} : vector<8x384xf32> to vector<8x128xf32>
    %1080 = arith.addf %1078, %1079 : vector<8x128xf32>
    %1081 = arith.negf %1080 : vector<8x128xf32>
    %1082 = math.exp %1081 : vector<8x128xf32>
    %cst_287 = arith.constant 1.000000e+00 : f32
    %1083 = vector.broadcast %cst_287 : f32 to vector<8x128xf32>
    %1084 = arith.addf %1083, %1082 : vector<8x128xf32>
    %1085 = arith.divf %1083, %1084 : vector<8x128xf32>
    %1086 = vector.extract_strided_slice %1067 {offsets = [0, 256], sizes = [8, 128], strides = [1, 1]} : vector<8x384xf32> to vector<8x128xf32>
    %1087 = vector.extract_strided_slice %1068 {offsets = [0, 256], sizes = [8, 128], strides = [1, 1]} : vector<8x384xf32> to vector<8x128xf32>
    %1088 = arith.mulf %1077, %1087 : vector<8x128xf32>
    %1089 = arith.addf %1086, %1088 : vector<8x128xf32>
    %1090 = math.tanh %1089 : vector<8x128xf32>
    %cst_288 = arith.constant 1.000000e+00 : f32
    %1091 = vector.broadcast %cst_288 : f32 to vector<8x128xf32>
    %1092 = arith.subf %1091, %1085 : vector<8x128xf32>
    %1093 = arith.mulf %1092, %1090 : vector<8x128xf32>
    %1094 = arith.mulf %1085, %1069 : vector<8x128xf32>
    %1095 = arith.addf %1093, %1094 : vector<8x128xf32>
    %1096 = arith.index_cast %1061 : i32 to index
    %c0_289 = arith.constant 0 : index
    %c384_290 = arith.constant 384 : index
    %1097 = vector.load %arg9[%1096, %c0_289, %c384_290] : memref<16x8x768xf32, #tpu.memory_space<vmem>>, vector<1x8x384xf32>
    %1098 = vector.shape_cast %1097 : vector<1x8x384xf32> to vector<8x384xf32>
    %1099 = vector.extract_strided_slice %1064 {offsets = [0, 384], sizes = [8, 384], strides = [1, 1]} : vector<8x768xf32> to vector<8x384xf32>
    %1100 = vector.extract_strided_slice %1060 {offsets = [0, 128], sizes = [8, 128], strides = [1, 1]} : vector<8x256xf32> to vector<8x128xf32>
    %1101 = vector.extract_strided_slice %1098 {offsets = [0, 0], sizes = [8, 128], strides = [1, 1]} : vector<8x384xf32> to vector<8x128xf32>
    %1102 = vector.extract_strided_slice %1099 {offsets = [0, 0], sizes = [8, 128], strides = [1, 1]} : vector<8x384xf32> to vector<8x128xf32>
    %1103 = arith.addf %1101, %1102 : vector<8x128xf32>
    %1104 = arith.negf %1103 : vector<8x128xf32>
    %1105 = math.exp %1104 : vector<8x128xf32>
    %cst_291 = arith.constant 1.000000e+00 : f32
    %1106 = vector.broadcast %cst_291 : f32 to vector<8x128xf32>
    %1107 = arith.addf %1106, %1105 : vector<8x128xf32>
    %1108 = arith.divf %1106, %1107 : vector<8x128xf32>
    %1109 = vector.extract_strided_slice %1098 {offsets = [0, 128], sizes = [8, 128], strides = [1, 1]} : vector<8x384xf32> to vector<8x128xf32>
    %1110 = vector.extract_strided_slice %1099 {offsets = [0, 128], sizes = [8, 128], strides = [1, 1]} : vector<8x384xf32> to vector<8x128xf32>
    %1111 = arith.addf %1109, %1110 : vector<8x128xf32>
    %1112 = arith.negf %1111 : vector<8x128xf32>
    %1113 = math.exp %1112 : vector<8x128xf32>
    %cst_292 = arith.constant 1.000000e+00 : f32
    %1114 = vector.broadcast %cst_292 : f32 to vector<8x128xf32>
    %1115 = arith.addf %1114, %1113 : vector<8x128xf32>
    %1116 = arith.divf %1114, %1115 : vector<8x128xf32>
    %1117 = vector.extract_strided_slice %1098 {offsets = [0, 256], sizes = [8, 128], strides = [1, 1]} : vector<8x384xf32> to vector<8x128xf32>
    %1118 = vector.extract_strided_slice %1099 {offsets = [0, 256], sizes = [8, 128], strides = [1, 1]} : vector<8x384xf32> to vector<8x128xf32>
    %1119 = arith.mulf %1108, %1118 : vector<8x128xf32>
    %1120 = arith.addf %1117, %1119 : vector<8x128xf32>
    %1121 = math.tanh %1120 : vector<8x128xf32>
    %cst_293 = arith.constant 1.000000e+00 : f32
    %1122 = vector.broadcast %cst_293 : f32 to vector<8x128xf32>
    %1123 = arith.subf %1122, %1116 : vector<8x128xf32>
    %1124 = arith.mulf %1123, %1121 : vector<8x128xf32>
    %1125 = arith.mulf %1116, %1100 : vector<8x128xf32>
    %1126 = arith.addf %1124, %1125 : vector<8x128xf32>
    %1127 = arith.index_cast %c12_i32 : i32 to index
    %c0_294 = arith.constant 0 : index
    %c0_295 = arith.constant 0 : index
    %1128 = vector.load %arg8[%1127, %c0_294, %c0_295] : memref<16x8x128xf32, #tpu.memory_space<vmem>>, vector<1x8x128xf32>
    %1129 = vector.shape_cast %1128 : vector<1x8x128xf32> to vector<8x128xf32>
    %1130 = arith.truncf %1095 : vector<8x128xf32> to vector<8x128xbf16>
    %cst_296 = arith.constant dense<0.000000e+00> : vector<8x128xf32>
    %1131 = tpu.matmul %1130, %11, %cst_296 {dimension_numbers = #tpu.dot_dimension_numbers<[1], [0], [0], [1], [0, 0, 1, 1], [], []>} : vector<8x128xbf16>, vector<128x128xbf16>, vector<8x128xf32> -> vector<8x128xf32>
    %1132 = arith.addf %1129, %1131 : vector<8x128xf32>
    %1133 = arith.index_cast %c12_i32 : i32 to index
    %c0_297 = arith.constant 0 : index
    %c0_298 = arith.constant 0 : index
    %1134 = vector.load %arg8[%1133, %c0_297, %c0_298] : memref<16x8x128xf32, #tpu.memory_space<vmem>>, vector<1x8x128xf32>
    %1135 = vector.shape_cast %1134 : vector<1x8x128xf32> to vector<8x128xf32>
    %1136 = vector.shape_cast %1132 : vector<8x128xf32> to vector<1x8x128xf32>
    tpu.vector_store %arg8[%1133, %c0_297, %c0_298], %1136 {strides = array<i32>} : memref<16x8x128xf32, #tpu.memory_space<vmem>>, vector<1x8x128xf32>,
    %1137 = arith.index_cast %1061 : i32 to index
    %c0_299 = arith.constant 0 : index
    %c0_300 = arith.constant 0 : index
    %1138 = vector.load %arg8[%1137, %c0_299, %c0_300] : memref<16x8x128xf32, #tpu.memory_space<vmem>>, vector<1x8x128xf32>
    %1139 = vector.shape_cast %1138 : vector<1x8x128xf32> to vector<8x128xf32>
    %1140 = arith.truncf %1126 : vector<8x128xf32> to vector<8x128xbf16>
    %cst_301 = arith.constant dense<0.000000e+00> : vector<8x128xf32>
    %1141 = tpu.matmul %1140, %12, %cst_301 {dimension_numbers = #tpu.dot_dimension_numbers<[1], [0], [0], [1], [0, 0, 1, 1], [], []>} : vector<8x128xbf16>, vector<128x128xbf16>, vector<8x128xf32> -> vector<8x128xf32>
    %1142 = arith.addf %1139, %1141 : vector<8x128xf32>
    %1143 = arith.index_cast %1061 : i32 to index
    %c0_302 = arith.constant 0 : index
    %c0_303 = arith.constant 0 : index
    %1144 = vector.load %arg8[%1143, %c0_302, %c0_303] : memref<16x8x128xf32, #tpu.memory_space<vmem>>, vector<1x8x128xf32>
    %1145 = vector.shape_cast %1144 : vector<1x8x128xf32> to vector<8x128xf32>
    %1146 = vector.shape_cast %1142 : vector<8x128xf32> to vector<1x8x128xf32>
    tpu.vector_store %arg8[%1143, %c0_302, %c0_303], %1146 {strides = array<i32>} : memref<16x8x128xf32, #tpu.memory_space<vmem>>, vector<1x8x128xf32>,
    %1147 = tpu.concatenate %1095, %1126 in 1 : vector<8x128xf32>, vector<8x128xf32> -> vector<8x256xf32>
    %c13_i32 = arith.constant 13 : i32
    %c15_i32_304 = arith.constant 15 : i32
    %1148 = arith.subi %c15_i32_304, %c13_i32 : i32
    %1149 = arith.truncf %1147 : vector<8x256xf32> to vector<8x256xbf16>
    %cst_305 = arith.constant dense<0.000000e+00> : vector<8x768xf32>
    %1150 = tpu.matmul %1149, %10, %cst_305 {dimension_numbers = #tpu.dot_dimension_numbers<[1], [0], [0], [1], [0, 0, 1, 1], [], []>} : vector<8x256xbf16>, vector<256x768xbf16>, vector<8x768xf32> -> vector<8x768xf32>
    %1151 = arith.addf %1150, %15 : vector<8x768xf32>
    %1152 = arith.index_cast %c13_i32 : i32 to index
    %c0_306 = arith.constant 0 : index
    %c0_307 = arith.constant 0 : index
    %1153 = vector.load %arg9[%1152, %c0_306, %c0_307] : memref<16x8x768xf32, #tpu.memory_space<vmem>>, vector<1x8x384xf32>
    %1154 = vector.shape_cast %1153 : vector<1x8x384xf32> to vector<8x384xf32>
    %1155 = vector.extract_strided_slice %1151 {offsets = [0, 0], sizes = [8, 384], strides = [1, 1]} : vector<8x768xf32> to vector<8x384xf32>
    %1156 = vector.extract_strided_slice %1147 {offsets = [0, 0], sizes = [8, 128], strides = [1, 1]} : vector<8x256xf32> to vector<8x128xf32>
    %1157 = vector.extract_strided_slice %1154 {offsets = [0, 0], sizes = [8, 128], strides = [1, 1]} : vector<8x384xf32> to vector<8x128xf32>
    %1158 = vector.extract_strided_slice %1155 {offsets = [0, 0], sizes = [8, 128], strides = [1, 1]} : vector<8x384xf32> to vector<8x128xf32>
    %1159 = arith.addf %1157, %1158 : vector<8x128xf32>
    %1160 = arith.negf %1159 : vector<8x128xf32>
    %1161 = math.exp %1160 : vector<8x128xf32>
    %cst_308 = arith.constant 1.000000e+00 : f32
    %1162 = vector.broadcast %cst_308 : f32 to vector<8x128xf32>
    %1163 = arith.addf %1162, %1161 : vector<8x128xf32>
    %1164 = arith.divf %1162, %1163 : vector<8x128xf32>
    %1165 = vector.extract_strided_slice %1154 {offsets = [0, 128], sizes = [8, 128], strides = [1, 1]} : vector<8x384xf32> to vector<8x128xf32>
    %1166 = vector.extract_strided_slice %1155 {offsets = [0, 128], sizes = [8, 128], strides = [1, 1]} : vector<8x384xf32> to vector<8x128xf32>
    %1167 = arith.addf %1165, %1166 : vector<8x128xf32>
    %1168 = arith.negf %1167 : vector<8x128xf32>
    %1169 = math.exp %1168 : vector<8x128xf32>
    %cst_309 = arith.constant 1.000000e+00 : f32
    %1170 = vector.broadcast %cst_309 : f32 to vector<8x128xf32>
    %1171 = arith.addf %1170, %1169 : vector<8x128xf32>
    %1172 = arith.divf %1170, %1171 : vector<8x128xf32>
    %1173 = vector.extract_strided_slice %1154 {offsets = [0, 256], sizes = [8, 128], strides = [1, 1]} : vector<8x384xf32> to vector<8x128xf32>
    %1174 = vector.extract_strided_slice %1155 {offsets = [0, 256], sizes = [8, 128], strides = [1, 1]} : vector<8x384xf32> to vector<8x128xf32>
    %1175 = arith.mulf %1164, %1174 : vector<8x128xf32>
    %1176 = arith.addf %1173, %1175 : vector<8x128xf32>
    %1177 = math.tanh %1176 : vector<8x128xf32>
    %cst_310 = arith.constant 1.000000e+00 : f32
    %1178 = vector.broadcast %cst_310 : f32 to vector<8x128xf32>
    %1179 = arith.subf %1178, %1172 : vector<8x128xf32>
    %1180 = arith.mulf %1179, %1177 : vector<8x128xf32>
    %1181 = arith.mulf %1172, %1156 : vector<8x128xf32>
    %1182 = arith.addf %1180, %1181 : vector<8x128xf32>
    %1183 = arith.index_cast %1148 : i32 to index
    %c0_311 = arith.constant 0 : index
    %c384_312 = arith.constant 384 : index
    %1184 = vector.load %arg9[%1183, %c0_311, %c384_312] : memref<16x8x768xf32, #tpu.memory_space<vmem>>, vector<1x8x384xf32>
    %1185 = vector.shape_cast %1184 : vector<1x8x384xf32> to vector<8x384xf32>
    %1186 = vector.extract_strided_slice %1151 {offsets = [0, 384], sizes = [8, 384], strides = [1, 1]} : vector<8x768xf32> to vector<8x384xf32>
    %1187 = vector.extract_strided_slice %1147 {offsets = [0, 128], sizes = [8, 128], strides = [1, 1]} : vector<8x256xf32> to vector<8x128xf32>
    %1188 = vector.extract_strided_slice %1185 {offsets = [0, 0], sizes = [8, 128], strides = [1, 1]} : vector<8x384xf32> to vector<8x128xf32>
    %1189 = vector.extract_strided_slice %1186 {offsets = [0, 0], sizes = [8, 128], strides = [1, 1]} : vector<8x384xf32> to vector<8x128xf32>
    %1190 = arith.addf %1188, %1189 : vector<8x128xf32>
    %1191 = arith.negf %1190 : vector<8x128xf32>
    %1192 = math.exp %1191 : vector<8x128xf32>
    %cst_313 = arith.constant 1.000000e+00 : f32
    %1193 = vector.broadcast %cst_313 : f32 to vector<8x128xf32>
    %1194 = arith.addf %1193, %1192 : vector<8x128xf32>
    %1195 = arith.divf %1193, %1194 : vector<8x128xf32>
    %1196 = vector.extract_strided_slice %1185 {offsets = [0, 128], sizes = [8, 128], strides = [1, 1]} : vector<8x384xf32> to vector<8x128xf32>
    %1197 = vector.extract_strided_slice %1186 {offsets = [0, 128], sizes = [8, 128], strides = [1, 1]} : vector<8x384xf32> to vector<8x128xf32>
    %1198 = arith.addf %1196, %1197 : vector<8x128xf32>
    %1199 = arith.negf %1198 : vector<8x128xf32>
    %1200 = math.exp %1199 : vector<8x128xf32>
    %cst_314 = arith.constant 1.000000e+00 : f32
    %1201 = vector.broadcast %cst_314 : f32 to vector<8x128xf32>
    %1202 = arith.addf %1201, %1200 : vector<8x128xf32>
    %1203 = arith.divf %1201, %1202 : vector<8x128xf32>
    %1204 = vector.extract_strided_slice %1185 {offsets = [0, 256], sizes = [8, 128], strides = [1, 1]} : vector<8x384xf32> to vector<8x128xf32>
    %1205 = vector.extract_strided_slice %1186 {offsets = [0, 256], sizes = [8, 128], strides = [1, 1]} : vector<8x384xf32> to vector<8x128xf32>
    %1206 = arith.mulf %1195, %1205 : vector<8x128xf32>
    %1207 = arith.addf %1204, %1206 : vector<8x128xf32>
    %1208 = math.tanh %1207 : vector<8x128xf32>
    %cst_315 = arith.constant 1.000000e+00 : f32
    %1209 = vector.broadcast %cst_315 : f32 to vector<8x128xf32>
    %1210 = arith.subf %1209, %1203 : vector<8x128xf32>
    %1211 = arith.mulf %1210, %1208 : vector<8x128xf32>
    %1212 = arith.mulf %1203, %1187 : vector<8x128xf32>
    %1213 = arith.addf %1211, %1212 : vector<8x128xf32>
    %1214 = arith.index_cast %c13_i32 : i32 to index
    %c0_316 = arith.constant 0 : index
    %c0_317 = arith.constant 0 : index
    %1215 = vector.load %arg8[%1214, %c0_316, %c0_317] : memref<16x8x128xf32, #tpu.memory_space<vmem>>, vector<1x8x128xf32>
    %1216 = vector.shape_cast %1215 : vector<1x8x128xf32> to vector<8x128xf32>
    %1217 = arith.truncf %1182 : vector<8x128xf32> to vector<8x128xbf16>
    %cst_318 = arith.constant dense<0.000000e+00> : vector<8x128xf32>
    %1218 = tpu.matmul %1217, %11, %cst_318 {dimension_numbers = #tpu.dot_dimension_numbers<[1], [0], [0], [1], [0, 0, 1, 1], [], []>} : vector<8x128xbf16>, vector<128x128xbf16>, vector<8x128xf32> -> vector<8x128xf32>
    %1219 = arith.addf %1216, %1218 : vector<8x128xf32>
    %1220 = arith.index_cast %c13_i32 : i32 to index
    %c0_319 = arith.constant 0 : index
    %c0_320 = arith.constant 0 : index
    %1221 = vector.load %arg8[%1220, %c0_319, %c0_320] : memref<16x8x128xf32, #tpu.memory_space<vmem>>, vector<1x8x128xf32>
    %1222 = vector.shape_cast %1221 : vector<1x8x128xf32> to vector<8x128xf32>
    %1223 = vector.shape_cast %1219 : vector<8x128xf32> to vector<1x8x128xf32>
    tpu.vector_store %arg8[%1220, %c0_319, %c0_320], %1223 {strides = array<i32>} : memref<16x8x128xf32, #tpu.memory_space<vmem>>, vector<1x8x128xf32>,
    %1224 = arith.index_cast %1148 : i32 to index
    %c0_321 = arith.constant 0 : index
    %c0_322 = arith.constant 0 : index
    %1225 = vector.load %arg8[%1224, %c0_321, %c0_322] : memref<16x8x128xf32, #tpu.memory_space<vmem>>, vector<1x8x128xf32>
    %1226 = vector.shape_cast %1225 : vector<1x8x128xf32> to vector<8x128xf32>
    %1227 = arith.truncf %1213 : vector<8x128xf32> to vector<8x128xbf16>
    %cst_323 = arith.constant dense<0.000000e+00> : vector<8x128xf32>
    %1228 = tpu.matmul %1227, %12, %cst_323 {dimension_numbers = #tpu.dot_dimension_numbers<[1], [0], [0], [1], [0, 0, 1, 1], [], []>} : vector<8x128xbf16>, vector<128x128xbf16>, vector<8x128xf32> -> vector<8x128xf32>
    %1229 = arith.addf %1226, %1228 : vector<8x128xf32>
    %1230 = arith.index_cast %1148 : i32 to index
    %c0_324 = arith.constant 0 : index
    %c0_325 = arith.constant 0 : index
    %1231 = vector.load %arg8[%1230, %c0_324, %c0_325] : memref<16x8x128xf32, #tpu.memory_space<vmem>>, vector<1x8x128xf32>
    %1232 = vector.shape_cast %1231 : vector<1x8x128xf32> to vector<8x128xf32>
    %1233 = vector.shape_cast %1229 : vector<8x128xf32> to vector<1x8x128xf32>
    tpu.vector_store %arg8[%1230, %c0_324, %c0_325], %1233 {strides = array<i32>} : memref<16x8x128xf32, #tpu.memory_space<vmem>>, vector<1x8x128xf32>,
    %1234 = tpu.concatenate %1182, %1213 in 1 : vector<8x128xf32>, vector<8x128xf32> -> vector<8x256xf32>
    %c14_i32 = arith.constant 14 : i32
    %c15_i32_326 = arith.constant 15 : i32
    %1235 = arith.subi %c15_i32_326, %c14_i32 : i32
    %1236 = arith.truncf %1234 : vector<8x256xf32> to vector<8x256xbf16>
    %cst_327 = arith.constant dense<0.000000e+00> : vector<8x768xf32>
    %1237 = tpu.matmul %1236, %10, %cst_327 {dimension_numbers = #tpu.dot_dimension_numbers<[1], [0], [0], [1], [0, 0, 1, 1], [], []>} : vector<8x256xbf16>, vector<256x768xbf16>, vector<8x768xf32> -> vector<8x768xf32>
    %1238 = arith.addf %1237, %15 : vector<8x768xf32>
    %1239 = arith.index_cast %c14_i32 : i32 to index
    %c0_328 = arith.constant 0 : index
    %c0_329 = arith.constant 0 : index
    %1240 = vector.load %arg9[%1239, %c0_328, %c0_329] : memref<16x8x768xf32, #tpu.memory_space<vmem>>, vector<1x8x384xf32>
    %1241 = vector.shape_cast %1240 : vector<1x8x384xf32> to vector<8x384xf32>
    %1242 = vector.extract_strided_slice %1238 {offsets = [0, 0], sizes = [8, 384], strides = [1, 1]} : vector<8x768xf32> to vector<8x384xf32>
    %1243 = vector.extract_strided_slice %1234 {offsets = [0, 0], sizes = [8, 128], strides = [1, 1]} : vector<8x256xf32> to vector<8x128xf32>
    %1244 = vector.extract_strided_slice %1241 {offsets = [0, 0], sizes = [8, 128], strides = [1, 1]} : vector<8x384xf32> to vector<8x128xf32>
    %1245 = vector.extract_strided_slice %1242 {offsets = [0, 0], sizes = [8, 128], strides = [1, 1]} : vector<8x384xf32> to vector<8x128xf32>
    %1246 = arith.addf %1244, %1245 : vector<8x128xf32>
    %1247 = arith.negf %1246 : vector<8x128xf32>
    %1248 = math.exp %1247 : vector<8x128xf32>
    %cst_330 = arith.constant 1.000000e+00 : f32
    %1249 = vector.broadcast %cst_330 : f32 to vector<8x128xf32>
    %1250 = arith.addf %1249, %1248 : vector<8x128xf32>
    %1251 = arith.divf %1249, %1250 : vector<8x128xf32>
    %1252 = vector.extract_strided_slice %1241 {offsets = [0, 128], sizes = [8, 128], strides = [1, 1]} : vector<8x384xf32> to vector<8x128xf32>
    %1253 = vector.extract_strided_slice %1242 {offsets = [0, 128], sizes = [8, 128], strides = [1, 1]} : vector<8x384xf32> to vector<8x128xf32>
    %1254 = arith.addf %1252, %1253 : vector<8x128xf32>
    %1255 = arith.negf %1254 : vector<8x128xf32>
    %1256 = math.exp %1255 : vector<8x128xf32>
    %cst_331 = arith.constant 1.000000e+00 : f32
    %1257 = vector.broadcast %cst_331 : f32 to vector<8x128xf32>
    %1258 = arith.addf %1257, %1256 : vector<8x128xf32>
    %1259 = arith.divf %1257, %1258 : vector<8x128xf32>
    %1260 = vector.extract_strided_slice %1241 {offsets = [0, 256], sizes = [8, 128], strides = [1, 1]} : vector<8x384xf32> to vector<8x128xf32>
    %1261 = vector.extract_strided_slice %1242 {offsets = [0, 256], sizes = [8, 128], strides = [1, 1]} : vector<8x384xf32> to vector<8x128xf32>
    %1262 = arith.mulf %1251, %1261 : vector<8x128xf32>
    %1263 = arith.addf %1260, %1262 : vector<8x128xf32>
    %1264 = math.tanh %1263 : vector<8x128xf32>
    %cst_332 = arith.constant 1.000000e+00 : f32
    %1265 = vector.broadcast %cst_332 : f32 to vector<8x128xf32>
    %1266 = arith.subf %1265, %1259 : vector<8x128xf32>
    %1267 = arith.mulf %1266, %1264 : vector<8x128xf32>
    %1268 = arith.mulf %1259, %1243 : vector<8x128xf32>
    %1269 = arith.addf %1267, %1268 : vector<8x128xf32>
    %1270 = arith.index_cast %1235 : i32 to index
    %c0_333 = arith.constant 0 : index
    %c384_334 = arith.constant 384 : index
    %1271 = vector.load %arg9[%1270, %c0_333, %c384_334] : memref<16x8x768xf32, #tpu.memory_space<vmem>>, vector<1x8x384xf32>
    %1272 = vector.shape_cast %1271 : vector<1x8x384xf32> to vector<8x384xf32>
    %1273 = vector.extract_strided_slice %1238 {offsets = [0, 384], sizes = [8, 384], strides = [1, 1]} : vector<8x768xf32> to vector<8x384xf32>
    %1274 = vector.extract_strided_slice %1234 {offsets = [0, 128], sizes = [8, 128], strides = [1, 1]} : vector<8x256xf32> to vector<8x128xf32>
    %1275 = vector.extract_strided_slice %1272 {offsets = [0, 0], sizes = [8, 128], strides = [1, 1]} : vector<8x384xf32> to vector<8x128xf32>
    %1276 = vector.extract_strided_slice %1273 {offsets = [0, 0], sizes = [8, 128], strides = [1, 1]} : vector<8x384xf32> to vector<8x128xf32>
    %1277 = arith.addf %1275, %1276 : vector<8x128xf32>
    %1278 = arith.negf %1277 : vector<8x128xf32>
    %1279 = math.exp %1278 : vector<8x128xf32>
    %cst_335 = arith.constant 1.000000e+00 : f32
    %1280 = vector.broadcast %cst_335 : f32 to vector<8x128xf32>
    %1281 = arith.addf %1280, %1279 : vector<8x128xf32>
    %1282 = arith.divf %1280, %1281 : vector<8x128xf32>
    %1283 = vector.extract_strided_slice %1272 {offsets = [0, 128], sizes = [8, 128], strides = [1, 1]} : vector<8x384xf32> to vector<8x128xf32>
    %1284 = vector.extract_strided_slice %1273 {offsets = [0, 128], sizes = [8, 128], strides = [1, 1]} : vector<8x384xf32> to vector<8x128xf32>
    %1285 = arith.addf %1283, %1284 : vector<8x128xf32>
    %1286 = arith.negf %1285 : vector<8x128xf32>
    %1287 = math.exp %1286 : vector<8x128xf32>
    %cst_336 = arith.constant 1.000000e+00 : f32
    %1288 = vector.broadcast %cst_336 : f32 to vector<8x128xf32>
    %1289 = arith.addf %1288, %1287 : vector<8x128xf32>
    %1290 = arith.divf %1288, %1289 : vector<8x128xf32>
    %1291 = vector.extract_strided_slice %1272 {offsets = [0, 256], sizes = [8, 128], strides = [1, 1]} : vector<8x384xf32> to vector<8x128xf32>
    %1292 = vector.extract_strided_slice %1273 {offsets = [0, 256], sizes = [8, 128], strides = [1, 1]} : vector<8x384xf32> to vector<8x128xf32>
    %1293 = arith.mulf %1282, %1292 : vector<8x128xf32>
    %1294 = arith.addf %1291, %1293 : vector<8x128xf32>
    %1295 = math.tanh %1294 : vector<8x128xf32>
    %cst_337 = arith.constant 1.000000e+00 : f32
    %1296 = vector.broadcast %cst_337 : f32 to vector<8x128xf32>
    %1297 = arith.subf %1296, %1290 : vector<8x128xf32>
    %1298 = arith.mulf %1297, %1295 : vector<8x128xf32>
    %1299 = arith.mulf %1290, %1274 : vector<8x128xf32>
    %1300 = arith.addf %1298, %1299 : vector<8x128xf32>
    %1301 = arith.index_cast %c14_i32 : i32 to index
    %c0_338 = arith.constant 0 : index
    %c0_339 = arith.constant 0 : index
    %1302 = vector.load %arg8[%1301, %c0_338, %c0_339] : memref<16x8x128xf32, #tpu.memory_space<vmem>>, vector<1x8x128xf32>
    %1303 = vector.shape_cast %1302 : vector<1x8x128xf32> to vector<8x128xf32>
    %1304 = arith.truncf %1269 : vector<8x128xf32> to vector<8x128xbf16>
    %cst_340 = arith.constant dense<0.000000e+00> : vector<8x128xf32>
    %1305 = tpu.matmul %1304, %11, %cst_340 {dimension_numbers = #tpu.dot_dimension_numbers<[1], [0], [0], [1], [0, 0, 1, 1], [], []>} : vector<8x128xbf16>, vector<128x128xbf16>, vector<8x128xf32> -> vector<8x128xf32>
    %1306 = arith.addf %1303, %1305 : vector<8x128xf32>
    %1307 = arith.index_cast %c14_i32 : i32 to index
    %c0_341 = arith.constant 0 : index
    %c0_342 = arith.constant 0 : index
    %1308 = vector.load %arg8[%1307, %c0_341, %c0_342] : memref<16x8x128xf32, #tpu.memory_space<vmem>>, vector<1x8x128xf32>
    %1309 = vector.shape_cast %1308 : vector<1x8x128xf32> to vector<8x128xf32>
    %1310 = vector.shape_cast %1306 : vector<8x128xf32> to vector<1x8x128xf32>
    tpu.vector_store %arg8[%1307, %c0_341, %c0_342], %1310 {strides = array<i32>} : memref<16x8x128xf32, #tpu.memory_space<vmem>>, vector<1x8x128xf32>,
    %1311 = arith.index_cast %1235 : i32 to index
    %c0_343 = arith.constant 0 : index
    %c0_344 = arith.constant 0 : index
    %1312 = vector.load %arg8[%1311, %c0_343, %c0_344] : memref<16x8x128xf32, #tpu.memory_space<vmem>>, vector<1x8x128xf32>
    %1313 = vector.shape_cast %1312 : vector<1x8x128xf32> to vector<8x128xf32>
    %1314 = arith.truncf %1300 : vector<8x128xf32> to vector<8x128xbf16>
    %cst_345 = arith.constant dense<0.000000e+00> : vector<8x128xf32>
    %1315 = tpu.matmul %1314, %12, %cst_345 {dimension_numbers = #tpu.dot_dimension_numbers<[1], [0], [0], [1], [0, 0, 1, 1], [], []>} : vector<8x128xbf16>, vector<128x128xbf16>, vector<8x128xf32> -> vector<8x128xf32>
    %1316 = arith.addf %1313, %1315 : vector<8x128xf32>
    %1317 = arith.index_cast %1235 : i32 to index
    %c0_346 = arith.constant 0 : index
    %c0_347 = arith.constant 0 : index
    %1318 = vector.load %arg8[%1317, %c0_346, %c0_347] : memref<16x8x128xf32, #tpu.memory_space<vmem>>, vector<1x8x128xf32>
    %1319 = vector.shape_cast %1318 : vector<1x8x128xf32> to vector<8x128xf32>
    %1320 = vector.shape_cast %1316 : vector<8x128xf32> to vector<1x8x128xf32>
    tpu.vector_store %arg8[%1317, %c0_346, %c0_347], %1320 {strides = array<i32>} : memref<16x8x128xf32, #tpu.memory_space<vmem>>, vector<1x8x128xf32>,
    %1321 = tpu.concatenate %1269, %1300 in 1 : vector<8x128xf32>, vector<8x128xf32> -> vector<8x256xf32>
    %c15_i32_348 = arith.constant 15 : i32
    %c15_i32_349 = arith.constant 15 : i32
    %1322 = arith.subi %c15_i32_349, %c15_i32_348 : i32
    %1323 = arith.truncf %1321 : vector<8x256xf32> to vector<8x256xbf16>
    %cst_350 = arith.constant dense<0.000000e+00> : vector<8x768xf32>
    %1324 = tpu.matmul %1323, %10, %cst_350 {dimension_numbers = #tpu.dot_dimension_numbers<[1], [0], [0], [1], [0, 0, 1, 1], [], []>} : vector<8x256xbf16>, vector<256x768xbf16>, vector<8x768xf32> -> vector<8x768xf32>
    %1325 = arith.addf %1324, %15 : vector<8x768xf32>
    %1326 = arith.index_cast %c15_i32_348 : i32 to index
    %c0_351 = arith.constant 0 : index
    %c0_352 = arith.constant 0 : index
    %1327 = vector.load %arg9[%1326, %c0_351, %c0_352] : memref<16x8x768xf32, #tpu.memory_space<vmem>>, vector<1x8x384xf32>
    %1328 = vector.shape_cast %1327 : vector<1x8x384xf32> to vector<8x384xf32>
    %1329 = vector.extract_strided_slice %1325 {offsets = [0, 0], sizes = [8, 384], strides = [1, 1]} : vector<8x768xf32> to vector<8x384xf32>
    %1330 = vector.extract_strided_slice %1321 {offsets = [0, 0], sizes = [8, 128], strides = [1, 1]} : vector<8x256xf32> to vector<8x128xf32>
    %1331 = vector.extract_strided_slice %1328 {offsets = [0, 0], sizes = [8, 128], strides = [1, 1]} : vector<8x384xf32> to vector<8x128xf32>
    %1332 = vector.extract_strided_slice %1329 {offsets = [0, 0], sizes = [8, 128], strides = [1, 1]} : vector<8x384xf32> to vector<8x128xf32>
    %1333 = arith.addf %1331, %1332 : vector<8x128xf32>
    %1334 = arith.negf %1333 : vector<8x128xf32>
    %1335 = math.exp %1334 : vector<8x128xf32>
    %cst_353 = arith.constant 1.000000e+00 : f32
    %1336 = vector.broadcast %cst_353 : f32 to vector<8x128xf32>
    %1337 = arith.addf %1336, %1335 : vector<8x128xf32>
    %1338 = arith.divf %1336, %1337 : vector<8x128xf32>
    %1339 = vector.extract_strided_slice %1328 {offsets = [0, 128], sizes = [8, 128], strides = [1, 1]} : vector<8x384xf32> to vector<8x128xf32>
    %1340 = vector.extract_strided_slice %1329 {offsets = [0, 128], sizes = [8, 128], strides = [1, 1]} : vector<8x384xf32> to vector<8x128xf32>
    %1341 = arith.addf %1339, %1340 : vector<8x128xf32>
    %1342 = arith.negf %1341 : vector<8x128xf32>
    %1343 = math.exp %1342 : vector<8x128xf32>
    %cst_354 = arith.constant 1.000000e+00 : f32
    %1344 = vector.broadcast %cst_354 : f32 to vector<8x128xf32>
    %1345 = arith.addf %1344, %1343 : vector<8x128xf32>
    %1346 = arith.divf %1344, %1345 : vector<8x128xf32>
    %1347 = vector.extract_strided_slice %1328 {offsets = [0, 256], sizes = [8, 128], strides = [1, 1]} : vector<8x384xf32> to vector<8x128xf32>
    %1348 = vector.extract_strided_slice %1329 {offsets = [0, 256], sizes = [8, 128], strides = [1, 1]} : vector<8x384xf32> to vector<8x128xf32>
    %1349 = arith.mulf %1338, %1348 : vector<8x128xf32>
    %1350 = arith.addf %1347, %1349 : vector<8x128xf32>
    %1351 = math.tanh %1350 : vector<8x128xf32>
    %cst_355 = arith.constant 1.000000e+00 : f32
    %1352 = vector.broadcast %cst_355 : f32 to vector<8x128xf32>
    %1353 = arith.subf %1352, %1346 : vector<8x128xf32>
    %1354 = arith.mulf %1353, %1351 : vector<8x128xf32>
    %1355 = arith.mulf %1346, %1330 : vector<8x128xf32>
    %1356 = arith.addf %1354, %1355 : vector<8x128xf32>
    %1357 = arith.index_cast %1322 : i32 to index
    %c0_356 = arith.constant 0 : index
    %c384_357 = arith.constant 384 : index
    %1358 = vector.load %arg9[%1357, %c0_356, %c384_357] : memref<16x8x768xf32, #tpu.memory_space<vmem>>, vector<1x8x384xf32>
    %1359 = vector.shape_cast %1358 : vector<1x8x384xf32> to vector<8x384xf32>
    %1360 = vector.extract_strided_slice %1325 {offsets = [0, 384], sizes = [8, 384], strides = [1, 1]} : vector<8x768xf32> to vector<8x384xf32>
    %1361 = vector.extract_strided_slice %1321 {offsets = [0, 128], sizes = [8, 128], strides = [1, 1]} : vector<8x256xf32> to vector<8x128xf32>
    %1362 = vector.extract_strided_slice %1359 {offsets = [0, 0], sizes = [8, 128], strides = [1, 1]} : vector<8x384xf32> to vector<8x128xf32>
    %1363 = vector.extract_strided_slice %1360 {offsets = [0, 0], sizes = [8, 128], strides = [1, 1]} : vector<8x384xf32> to vector<8x128xf32>
    %1364 = arith.addf %1362, %1363 : vector<8x128xf32>
    %1365 = arith.negf %1364 : vector<8x128xf32>
    %1366 = math.exp %1365 : vector<8x128xf32>
    %cst_358 = arith.constant 1.000000e+00 : f32
    %1367 = vector.broadcast %cst_358 : f32 to vector<8x128xf32>
    %1368 = arith.addf %1367, %1366 : vector<8x128xf32>
    %1369 = arith.divf %1367, %1368 : vector<8x128xf32>
    %1370 = vector.extract_strided_slice %1359 {offsets = [0, 128], sizes = [8, 128], strides = [1, 1]} : vector<8x384xf32> to vector<8x128xf32>
    %1371 = vector.extract_strided_slice %1360 {offsets = [0, 128], sizes = [8, 128], strides = [1, 1]} : vector<8x384xf32> to vector<8x128xf32>
    %1372 = arith.addf %1370, %1371 : vector<8x128xf32>
    %1373 = arith.negf %1372 : vector<8x128xf32>
    %1374 = math.exp %1373 : vector<8x128xf32>
    %cst_359 = arith.constant 1.000000e+00 : f32
    %1375 = vector.broadcast %cst_359 : f32 to vector<8x128xf32>
    %1376 = arith.addf %1375, %1374 : vector<8x128xf32>
    %1377 = arith.divf %1375, %1376 : vector<8x128xf32>
    %1378 = vector.extract_strided_slice %1359 {offsets = [0, 256], sizes = [8, 128], strides = [1, 1]} : vector<8x384xf32> to vector<8x128xf32>
    %1379 = vector.extract_strided_slice %1360 {offsets = [0, 256], sizes = [8, 128], strides = [1, 1]} : vector<8x384xf32> to vector<8x128xf32>
    %1380 = arith.mulf %1369, %1379 : vector<8x128xf32>
    %1381 = arith.addf %1378, %1380 : vector<8x128xf32>
    %1382 = math.tanh %1381 : vector<8x128xf32>
    %cst_360 = arith.constant 1.000000e+00 : f32
    %1383 = vector.broadcast %cst_360 : f32 to vector<8x128xf32>
    %1384 = arith.subf %1383, %1377 : vector<8x128xf32>
    %1385 = arith.mulf %1384, %1382 : vector<8x128xf32>
    %1386 = arith.mulf %1377, %1361 : vector<8x128xf32>
    %1387 = arith.addf %1385, %1386 : vector<8x128xf32>
    %1388 = arith.index_cast %c15_i32_348 : i32 to index
    %c0_361 = arith.constant 0 : index
    %c0_362 = arith.constant 0 : index
    %1389 = vector.load %arg8[%1388, %c0_361, %c0_362] : memref<16x8x128xf32, #tpu.memory_space<vmem>>, vector<1x8x128xf32>
    %1390 = vector.shape_cast %1389 : vector<1x8x128xf32> to vector<8x128xf32>
    %1391 = arith.truncf %1356 : vector<8x128xf32> to vector<8x128xbf16>
    %cst_363 = arith.constant dense<0.000000e+00> : vector<8x128xf32>
    %1392 = tpu.matmul %1391, %11, %cst_363 {dimension_numbers = #tpu.dot_dimension_numbers<[1], [0], [0], [1], [0, 0, 1, 1], [], []>} : vector<8x128xbf16>, vector<128x128xbf16>, vector<8x128xf32> -> vector<8x128xf32>
    %1393 = arith.addf %1390, %1392 : vector<8x128xf32>
    %1394 = arith.index_cast %c15_i32_348 : i32 to index
    %c0_364 = arith.constant 0 : index
    %c0_365 = arith.constant 0 : index
    %1395 = vector.load %arg8[%1394, %c0_364, %c0_365] : memref<16x8x128xf32, #tpu.memory_space<vmem>>, vector<1x8x128xf32>
    %1396 = vector.shape_cast %1395 : vector<1x8x128xf32> to vector<8x128xf32>
    %1397 = vector.shape_cast %1393 : vector<8x128xf32> to vector<1x8x128xf32>
    tpu.vector_store %arg8[%1394, %c0_364, %c0_365], %1397 {strides = array<i32>} : memref<16x8x128xf32, #tpu.memory_space<vmem>>, vector<1x8x128xf32>,
    %1398 = arith.index_cast %1322 : i32 to index
    %c0_366 = arith.constant 0 : index
    %c0_367 = arith.constant 0 : index
    %1399 = vector.load %arg8[%1398, %c0_366, %c0_367] : memref<16x8x128xf32, #tpu.memory_space<vmem>>, vector<1x8x128xf32>
    %1400 = vector.shape_cast %1399 : vector<1x8x128xf32> to vector<8x128xf32>
    %1401 = arith.truncf %1387 : vector<8x128xf32> to vector<8x128xbf16>
    %cst_368 = arith.constant dense<0.000000e+00> : vector<8x128xf32>
    %1402 = tpu.matmul %1401, %12, %cst_368 {dimension_numbers = #tpu.dot_dimension_numbers<[1], [0], [0], [1], [0, 0, 1, 1], [], []>} : vector<8x128xbf16>, vector<128x128xbf16>, vector<8x128xf32> -> vector<8x128xf32>
    %1403 = arith.addf %1400, %1402 : vector<8x128xf32>
    %1404 = arith.index_cast %1322 : i32 to index
    %c0_369 = arith.constant 0 : index
    %c0_370 = arith.constant 0 : index
    %1405 = vector.load %arg8[%1404, %c0_369, %c0_370] : memref<16x8x128xf32, #tpu.memory_space<vmem>>, vector<1x8x128xf32>
    %1406 = vector.shape_cast %1405 : vector<1x8x128xf32> to vector<8x128xf32>
    %1407 = vector.shape_cast %1403 : vector<8x128xf32> to vector<1x8x128xf32>
    tpu.vector_store %arg8[%1404, %c0_369, %c0_370], %1407 {strides = array<i32>} : memref<16x8x128xf32, #tpu.memory_space<vmem>>, vector<1x8x128xf32>,
    %1408 = tpu.concatenate %1356, %1387 in 1 : vector<8x128xf32>, vector<8x128xf32> -> vector<8x256xf32>
    %c16_i32 = arith.constant 16 : i32
    return
  }
}

</mosaic_0001>

<llo_original>
// kernel: tpu_custom_call.1
$region0: #{tpu_custom_call.1}
  #allocation0 [shape = 'u32[]', space=smem, size = 0x4, offset = 0x4, fixed_abs, tag = 'smem constant byte address 0x4 - core index']
  #allocation1 [shape = 'u32[144,128]{1,0:T(1,128)}', space=vmem, size = 0x12000, scoped, tag = 'internal scratch']
  #allocation2 [shape = 'f32[16,8,768]{2,1,0:T(8,128)}', space=vmem, size = 0x60000, scoped, tag = 'scratch operand']
  %s0 = inlined_call_operand.hbm [shape: bf16[16,8,128], index: 0, kind: input, shape index: {}]
  %s1 = inlined_call_operand.hbm [shape: bf16[128,768], index: 1, kind: input, shape index: {}]
  %s2 = inlined_call_operand.vmem [shape: f32[1,768], index: 2, kind: input, shape index: {}]
  %s3 = inlined_call_operand.hbm [shape: bf16[256,768], index: 3, kind: input, shape index: {}]
  %s4 = inlined_call_operand.vmem [shape: f32[1,768], index: 4, kind: input, shape index: {}]
  %s5 = inlined_call_operand.hbm [shape: bf16[128,128], index: 5, kind: input, shape index: {}]
  %s6 = inlined_call_operand.hbm [shape: bf16[128,128], index: 6, kind: input, shape index: {}]
  %s7 = inlined_call_operand.vmem [shape: f32[1,128], index: 7, kind: input, shape index: {}]
  %s8 = inlined_call_operand.hbm [shape: f32[16,8,128], index: 8, kind: output, shape index: {}]
  %s9 = sld [smem:[#allocation0]]
  $region69: #{tpu_custom_call.1} parent=0
    _
  %s11 = ssub.s32 1, %s9
  %s12 = scalar_select 0, %s11, %s9
  $region1: #{tpu_custom_call.1} parent=0
    #allocation3 [shape = 'u8[32768]{0}', space=vmem, size = 0x8000, scoped, tag = 'input window, operand 0, single buffered']
    #allocation4 [shape = 's32[1]{0}', space=sflag, size = 0x4, scoped, tag = 'scoped memory for tpu_custom_call.1']
    #allocation5 [shape = 's32[1]{0}', space=sflag, size = 0x4, scoped, tag = 'scoped memory for tpu_custom_call.1']
    #allocation6 [shape = 'u8[196608]{0}', space=vmem, size = 0x30000, scoped, tag = 'input window, operand 1, single buffered']
    #allocation7 [shape = 's32[1]{0}', space=sflag, size = 0x4, scoped, tag = 'scoped memory for tpu_custom_call.1']
    #allocation8 [shape = 'u8[393216]{0}', space=vmem, size = 0x60000, scoped, tag = 'input window, operand 3, single buffered']
    #allocation9 [shape = 'u8[32768]{0}', space=vmem, size = 0x8000, scoped, tag = 'input window, operand 5, single buffered']
    #allocation10 [shape = 's32[1]{0}', space=sflag, size = 0x4, scoped, tag = 'scoped memory for tpu_custom_call.1']
    #allocation11 [shape = 'u8[32768]{0}', space=vmem, size = 0x8000, scoped, tag = 'input window, operand 6, single buffered']
    #allocation12 [shape = 'u8[65536]{0}', space=vmem, size = 0x10000, scoped, tag = 'output window, operand 0, single buffered']
    %13 = vsyncpa [#allocation4], 0
    %14 = vsyncpa [#allocation7], 0
    %15 = vsyncpa [#allocation10], 0
    %16 = vsyncpa [#allocation5], 0
    // Predicated region
    $region2: #{tpu_custom_call.1} parent=1 // pred_check
      _
    $region3: #{tpu_custom_call.1} parent=1 // pred_check_branch
      %18 = sbr.rel (0) target = $region5
    $region4: #{tpu_custom_call.1} parent=1 // pred_region
      %s20 = ssub.s32 1024, 1024
      %21 = vsyncadd [#allocation4], %s20
      %s22 = sshll.u32 [#allocation3], 4
      %s23 = int_to_ptr.vmem [resolvable:$true] %s22
      %28 = dma.hbm_to_vmem [thread:$0]  %s0, 1024, %s23, [#allocation4], 64, 64, 4
    $region5: #{tpu_custom_call.1} parent=1 // pred_fallthru
      _
    // Predicated region
    $region6: #{tpu_custom_call.1} parent=1 // pred_check
      _
    $region7: #{tpu_custom_call.1} parent=1 // pred_check_branch
      %30 = sbr.rel (0) target = $region9
    $region8: #{tpu_custom_call.1} parent=1 // pred_region
      %s32 = ssub.s32 6144, 6144
      %33 = vsyncadd [#allocation7], %s32
      %s34 = sshll.u32 [#allocation6], 4
      %s35 = int_to_ptr.vmem [resolvable:$true] %s34
      %40 = dma.hbm_to_vmem [thread:$0]  %s1, 6144, %s35, [#allocation7], 384, 384, 24
    $region9: #{tpu_custom_call.1} parent=1 // pred_fallthru
      _
    // Predicated region
    $region10: #{tpu_custom_call.1} parent=1 // pred_check
      _
    $region11: #{tpu_custom_call.1} parent=1 // pred_check_branch
      %42 = sbr.rel (0) target = $region13
    $region12: #{tpu_custom_call.1} parent=1 // pred_region
      _
    $region13: #{tpu_custom_call.1} parent=1 // pred_fallthru
      _
    // Predicated region
    $region14: #{tpu_custom_call.1} parent=1 // pred_check
      _
    $region15: #{tpu_custom_call.1} parent=1 // pred_check_branch
      %44 = sbr.rel (0) target = $region17
    $region16: #{tpu_custom_call.1} parent=1 // pred_region
      %s46 = ssub.s32 12288, 12288
      %47 = vsyncadd [#allocation7], %s46
      %s48 = sshll.u32 [#allocation8], 4
      %s49 = int_to_ptr.vmem [resolvable:$true] %s48
      %54 = dma.hbm_to_vmem [thread:$0]  %s3, 12288, %s49, [#allocation7], 384, 384, 24
    $region17: #{tpu_custom_call.1} parent=1 // pred_fallthru
      _
    // Predicated region
    $region18: #{tpu_custom_call.1} parent=1 // pred_check
      _
    $region19: #{tpu_custom_call.1} parent=1 // pred_check_branch
      %56 = sbr.rel (0) target = $region21
    $region20: #{tpu_custom_call.1} parent=1 // pred_region
      _
    $region21: #{tpu_custom_call.1} parent=1 // pred_fallthru
      _
    // Predicated region
    $region22: #{tpu_custom_call.1} parent=1 // pred_check
      _
    $region23: #{tpu_custom_call.1} parent=1 // pred_check_branch
      %58 = sbr.rel (0) target = $region25
    $region24: #{tpu_custom_call.1} parent=1 // pred_region
      %s60 = ssub.s32 1024, 1024
      %61 = vsyncadd [#allocation10], %s60
      %s62 = sshll.u32 [#allocation9], 4
      %s63 = int_to_ptr.vmem [resolvable:$true] %s62
      %68 = dma.hbm_to_vmem [thread:$0]  %s5, 1024, %s63, [#allocation10], 64, 64, 4
    $region25: #{tpu_custom_call.1} parent=1 // pred_fallthru
      _
    // Predicated region
    $region26: #{tpu_custom_call.1} parent=1 // pred_check
      _
    $region27: #{tpu_custom_call.1} parent=1 // pred_check_branch
      %70 = sbr.rel (0) target = $region29
    $region28: #{tpu_custom_call.1} parent=1 // pred_region
      %s72 = ssub.s32 1024, 1024
      %73 = vsyncadd [#allocation10], %s72
      %s74 = sshll.u32 [#allocation11], 4
      %s75 = int_to_ptr.vmem [resolvable:$true] %s74
      %80 = dma.hbm_to_vmem [thread:$0]  %s6, 1024, %s75, [#allocation10], 64, 64, 4
    $region29: #{tpu_custom_call.1} parent=1 // pred_fallthru
      _
    // Predicated region
    $region30: #{tpu_custom_call.1} parent=1 // pred_check
      _
    $region31: #{tpu_custom_call.1} parent=1 // pred_check_branch
      %82 = sbr.rel (0) target = $region33
    $region32: #{tpu_custom_call.1} parent=1 // pred_region
      _
    $region33: #{tpu_custom_call.1} parent=1 // pred_fallthru
      _
    // Predicated region
    $region34: #{tpu_custom_call.1} parent=1 // pred_check
      _
    $region35: #{tpu_custom_call.1} parent=1 // pred_check_branch
      %84 = sbr.rel (0) target = $region37
    $region36: #{tpu_custom_call.1} parent=1 // pred_region
      %85 = dma.done [#allocation4], 1024
    $region37: #{tpu_custom_call.1} parent=1 // pred_fallthru
      _
    // Predicated region
    $region38: #{tpu_custom_call.1} parent=1 // pred_check
      _
    $region39: #{tpu_custom_call.1} parent=1 // pred_check_branch
      %87 = sbr.rel (0) target = $region41
    $region40: #{tpu_custom_call.1} parent=1 // pred_region
      %88 = dma.done [#allocation7], 6144
    $region41: #{tpu_custom_call.1} parent=1 // pred_fallthru
      _
    // Predicated region
    $region42: #{tpu_custom_call.1} parent=1 // pred_check
      _
    $region43: #{tpu_custom_call.1} parent=1 // pred_check_branch
      %90 = sbr.rel (0) target = $region45
    $region44: #{tpu_custom_call.1} parent=1 // pred_region
      %91 = dma.done [#allocation7], 12288
    $region45: #{tpu_custom_call.1} parent=1 // pred_fallthru
      _
    // Predicated region
    $region46: #{tpu_custom_call.1} parent=1 // pred_check
      _
    $region47: #{tpu_custom_call.1} parent=1 // pred_check_branch
      %93 = sbr.rel (0) target = $region49
    $region48: #{tpu_custom_call.1} parent=1 // pred_region
      %94 = dma.done [#allocation10], 1024
    $region49: #{tpu_custom_call.1} parent=1 // pred_fallthru
      _
    // Predicated region
    $region50: #{tpu_custom_call.1} parent=1 // pred_check
      _
    $region51: #{tpu_custom_call.1} parent=1 // pred_check_branch
      %96 = sbr.rel (0) target = $region53
    $region52: #{tpu_custom_call.1} parent=1 // pred_region
      %97 = dma.done [#allocation10], 1024
    $region53: #{tpu_custom_call.1} parent=1 // pred_fallthru
      _
    %v99 = vld [vmem:[#allocation6] sm:$0xff]
    %v100 = vld [vmem:[#allocation6 + $0x8] sm:$0xff]
    %v101 = vld [vmem:[#allocation6 + $0x10] sm:$0xff]
    %v102 = vld [vmem:[#allocation6 + $0x18] sm:$0xff]
    %v103 = vld [vmem:[#allocation6 + $0x20] sm:$0xff]
    %v104 = vld [vmem:[#allocation6 + $0x28] sm:$0xff]
    %v105 = vld [vmem:[#allocation6 + $0x30] sm:$0xff]
    %v106 = vld [vmem:[#allocation6 + $0x38] sm:$0xff]
    %v107 = vld [vmem:[#allocation6 + $0x40] sm:$0xff]
    %v108 = vld [vmem:[#allocation6 + $0x48] sm:$0xff]
    %v109 = vld [vmem:[#allocation6 + $0x50] sm:$0xff]
    %v110 = vld [vmem:[#allocation6 + $0x58] sm:$0xff]
    %v111 = vld [vmem:[#allocation6 + $0x60] sm:$0xff]
    %v112 = vld [vmem:[#allocation6 + $0x68] sm:$0xff]
    %v113 = vld [vmem:[#allocation6 + $0x70] sm:$0xff]
    %v114 = vld [vmem:[#allocation6 + $0x78] sm:$0xff]
    %v115 = vld [vmem:[#allocation6 + $0x80] sm:$0xff]
    %v116 = vld [vmem:[#allocation6 + $0x88] sm:$0xff]
    %v117 = vld [vmem:[#allocation6 + $0x90] sm:$0xff]
    %v118 = vld [vmem:[#allocation6 + $0x98] sm:$0xff]
    %v119 = vld [vmem:[#allocation6 + $0xa0] sm:$0xff]
    %v120 = vld [vmem:[#allocation6 + $0xa8] sm:$0xff]
    %v121 = vld [vmem:[#allocation6 + $0xb0] sm:$0xff]
    %v122 = vld [vmem:[#allocation6 + $0xb8] sm:$0xff]
    %v123 = vld [vmem:[#allocation6 + $0xc0] sm:$0xff]
    %v124 = vld [vmem:[#allocation6 + $0xc8] sm:$0xff]
    %v125 = vld [vmem:[#allocation6 + $0xd0] sm:$0xff]
    %v126 = vld [vmem:[#allocation6 + $0xd8] sm:$0xff]
    %v127 = vld [vmem:[#allocation6 + $0xe0] sm:$0xff]
    %v128 = vld [vmem:[#allocation6 + $0xe8] sm:$0xff]
    %v129 = vld [vmem:[#allocation6 + $0xf0] sm:$0xff]
    %v130 = vld [vmem:[#allocation6 + $0xf8] sm:$0xff]
    %v131 = vld [vmem:[#allocation6 + $0x100] sm:$0xff]
    %v132 = vld [vmem:[#allocation6 + $0x108] sm:$0xff]
    %v133 = vld [vmem:[#allocation6 + $0x110] sm:$0xff]
    %v134 = vld [vmem:[#allocation6 + $0x118] sm:$0xff]
    %v135 = vld [vmem:[#allocation6 + $0x120] sm:$0xff]
    %v136 = vld [vmem:[#allocation6 + $0x128] sm:$0xff]
    %v137 = vld [vmem:[#allocation6 + $0x130] sm:$0xff]
    %v138 = vld [vmem:[#allocation6 + $0x138] sm:$0xff]
    %v139 = vld [vmem:[#allocation6 + $0x140] sm:$0xff]
    %v140 = vld [vmem:[#allocation6 + $0x148] sm:$0xff]
    %v141 = vld [vmem:[#allocation6 + $0x150] sm:$0xff]
    %v142 = vld [vmem:[#allocation6 + $0x158] sm:$0xff]
    %v143 = vld [vmem:[#allocation6 + $0x160] sm:$0xff]
    %v144 = vld [vmem:[#allocation6 + $0x168] sm:$0xff]
    %v145 = vld [vmem:[#allocation6 + $0x170] sm:$0xff]
    %v146 = vld [vmem:[#allocation6 + $0x178] sm:$0xff]
    %v147 = vld [vmem:[%s2] sm:$0x3f]
    %v149 = vlaneseq
    %v150 = vshrl.u32 %v149, 7
    %v151 = vsub.s32 0, %v150
    %v152 = vrot.slane %v147, %v151
    %v153 = vlaneseq
    %v154 = vshrl.u32 %v153, 7
    %v155 = vsub.s32 1, %v154
    %v156 = vrot.slane %v147, %v155
    %v157 = vlaneseq
    %v158 = vshrl.u32 %v157, 7
    %v159 = vsub.s32 2, %v158
    %v160 = vrot.slane %v147, %v159
    %v161 = vlaneseq
    %v162 = vshrl.u32 %v161, 7
    %v163 = vsub.s32 3, %v162
    %v164 = vrot.slane %v147, %v163
    %v165 = vlaneseq
    %v166 = vshrl.u32 %v165, 7
    %v167 = vsub.s32 4, %v166
    %v168 = vrot.slane %v147, %v167
    %v169 = vlaneseq
    %v170 = vshrl.u32 %v169, 7
    %v171 = vsub.s32 5, %v170
    %v172 = vrot.slane %v147, %v171
    loop: start=0, step=1, limit=4
    $region54: #{tpu_custom_call.1} parent=1 // loop_pre_header
      _
    $region55: #{tpu_custom_call.1} parent=1 // loop_header
      %s180 = sphi 0, %s184
      %p181 = scmp.ge.s32.totalorder %s180, 4
    $region56: #{tpu_custom_call.1} parent=1 // loop_header_branch
      %183 = sbr.rel (%p181) target = $region60
    $region57: #{tpu_custom_call.1} parent=1 // loop_body
      %s185 = smul.u32 %s180, 4
      %s186 = smul.addr %s185, 4
      %s187 = scalar_lea.vmem [#allocation3], %s186
      %v188 = vld [vmem:[%s187] sm:$0xf]
      %v189 = vld [vmem:[%s187 + $0x4] sm:$0xf]
      %v190 = vld [vmem:[%s187 + $0x8] sm:$0xf]
      %v191 = vld [vmem:[%s187 + $0xc] sm:$0xf]
      %v196 = vunpack.c.l.b16 %v188
      %v197 = vunpack.c.l.b16 %v189
      %v198 = vunpack.c.l.b16 %v190
      %v199 = vunpack.c.l.b16 %v191
      %v200 = vpack.c.b16 %v197, %v196
      %v201 = vpack.c.b16 %v199, %v198
      %v252 = vunpack.c.l.b16 %v99
      %v253 = vunpack.c.h.b16 %v99
      %v254 = vunpack.c.l.b16 %v100
      %v255 = vunpack.c.h.b16 %v100
      %v256 = vunpack.c.l.b16 %v101
      %v257 = vunpack.c.h.b16 %v101
      %v258 = vunpack.c.l.b16 %v102
      %v259 = vunpack.c.h.b16 %v102
      %v260 = vunpack.c.l.b16 %v103
      %v261 = vunpack.c.h.b16 %v103
      %v262 = vunpack.c.l.b16 %v104
      %v263 = vunpack.c.h.b16 %v104
      %v264 = vunpack.c.l.b16 %v105
      %v265 = vunpack.c.h.b16 %v105
      %v266 = vunpack.c.l.b16 %v106
      %v267 = vunpack.c.h.b16 %v106
      %v268 = vunpack.c.l.b16 %v107
      %v269 = vunpack.c.h.b16 %v107
      %v270 = vunpack.c.l.b16 %v108
      %v271 = vunpack.c.h.b16 %v108
      %v272 = vunpack.c.l.b16 %v109
      %v273 = vunpack.c.h.b16 %v109
      %v274 = vunpack.c.l.b16 %v110
      %v275 = vunpack.c.h.b16 %v110
      %v276 = vunpack.c.l.b16 %v111
      %v277 = vunpack.c.h.b16 %v111
      %v278 = vunpack.c.l.b16 %v112
      %v279 = vunpack.c.h.b16 %v112
      %v280 = vunpack.c.l.b16 %v113
      %v281 = vunpack.c.h.b16 %v113
      %v282 = vunpack.c.l.b16 %v114
      %v283 = vunpack.c.h.b16 %v114
      %v284 = vunpack.c.l.b16 %v115
      %v285 = vunpack.c.h.b16 %v115
      %v286 = vunpack.c.l.b16 %v116
      %v287 = vunpack.c.h.b16 %v116
      %v288 = vunpack.c.l.b16 %v117
      %v289 = vunpack.c.h.b16 %v117
      %v290 = vunpack.c.l.b16 %v118
      %v291 = vunpack.c.h.b16 %v118
      %v292 = vunpack.c.l.b16 %v119
      %v293 = vunpack.c.h.b16 %v119
      %v294 = vunpack.c.l.b16 %v120
      %v295 = vunpack.c.h.b16 %v120
      %v296 = vunpack.c.l.b16 %v121
      %v297 = vunpack.c.h.b16 %v121
      %v298 = vunpack.c.l.b16 %v122
      %v299 = vunpack.c.h.b16 %v122
      %v300 = vunpack.c.l.b16 %v123
      %v301 = vunpack.c.h.b16 %v123
      %v302 = vunpack.c.l.b16 %v124
      %v303 = vunpack.c.h.b16 %v124
      %v304 = vunpack.c.l.b16 %v125
      %v305 = vunpack.c.h.b16 %v125
      %v306 = vunpack.c.l.b16 %v126
      %v307 = vunpack.c.h.b16 %v126
      %v308 = vunpack.c.l.b16 %v127
      %v309 = vunpack.c.h.b16 %v127
      %v310 = vunpack.c.l.b16 %v128
      %v311 = vunpack.c.h.b16 %v128
      %v312 = vunpack.c.l.b16 %v129
      %v313 = vunpack.c.h.b16 %v129
      %v314 = vunpack.c.l.b16 %v130
      %v315 = vunpack.c.h.b16 %v130
      %v316 = vunpack.c.l.b16 %v131
      %v317 = vunpack.c.h.b16 %v131
      %v318 = vunpack.c.l.b16 %v132
      %v319 = vunpack.c.h.b16 %v132
      %v320 = vunpack.c.l.b16 %v133
      %v321 = vunpack.c.h.b16 %v133
      %v322 = vunpack.c.l.b16 %v134
      %v323 = vunpack.c.h.b16 %v134
      %v324 = vunpack.c.l.b16 %v135
      %v325 = vunpack.c.h.b16 %v135
      %v326 = vunpack.c.l.b16 %v136
      %v327 = vunpack.c.h.b16 %v136
      %v328 = vunpack.c.l.b16 %v137
      %v329 = vunpack.c.h.b16 %v137
      %v330 = vunpack.c.l.b16 %v138
      %v331 = vunpack.c.h.b16 %v138
      %v332 = vunpack.c.l.b16 %v139
      %v333 = vunpack.c.h.b16 %v139
      %v334 = vunpack.c.l.b16 %v140
      %v335 = vunpack.c.h.b16 %v140
      %v336 = vunpack.c.l.b16 %v141
      %v337 = vunpack.c.h.b16 %v141
      %v338 = vunpack.c.l.b16 %v142
      %v339 = vunpack.c.h.b16 %v142
      %v340 = vunpack.c.l.b16 %v143
      %v341 = vunpack.c.h.b16 %v143
      %v342 = vunpack.c.l.b16 %v144
      %v343 = vunpack.c.h.b16 %v144
      %v344 = vunpack.c.l.b16 %v145
      %v345 = vunpack.c.h.b16 %v145
      %v346 = vunpack.c.l.b16 %v146
      %v347 = vunpack.c.h.b16 %v146
      %v348 = vpack.c.b16 %v258, %v252
      %v349 = vpack.c.b16 %v259, %v253
      %v350 = vpack.c.b16 %v260, %v254
      %v351 = vpack.c.b16 %v261, %v255
      %v352 = vpack.c.b16 %v262, %v256
      %v353 = vpack.c.b16 %v263, %v257
      %v354 = vpack.c.b16 %v270, %v264
      %v355 = vpack.c.b16 %v271, %v265
      %v356 = vpack.c.b16 %v272, %v266
      %v357 = vpack.c.b16 %v273, %v267
      %v358 = vpack.c.b16 %v274, %v268
      %v359 = vpack.c.b16 %v275, %v269
      %v360 = vpack.c.b16 %v282, %v276
      %v361 = vpack.c.b16 %v283, %v277
      %v362 = vpack.c.b16 %v284, %v278
      %v363 = vpack.c.b16 %v285, %v279
      %v364 = vpack.c.b16 %v286, %v280
      %v365 = vpack.c.b16 %v287, %v281
      %v366 = vpack.c.b16 %v294, %v288
      %v367 = vpack.c.b16 %v295, %v289
      %v368 = vpack.c.b16 %v296, %v290
      %v369 = vpack.c.b16 %v297, %v291
      %v370 = vpack.c.b16 %v298, %v292
      %v371 = vpack.c.b16 %v299, %v293
      %v372 = vpack.c.b16 %v306, %v300
      %v373 = vpack.c.b16 %v307, %v301
      %v374 = vpack.c.b16 %v308, %v302
      %v375 = vpack.c.b16 %v309, %v303
      %v376 = vpack.c.b16 %v310, %v304
      %v377 = vpack.c.b16 %v311, %v305
      %v378 = vpack.c.b16 %v318, %v312
      %v379 = vpack.c.b16 %v319, %v313
      %v380 = vpack.c.b16 %v320, %v314
      %v381 = vpack.c.b16 %v321, %v315
      %v382 = vpack.c.b16 %v322, %v316
      %v383 = vpack.c.b16 %v323, %v317
      %v384 = vpack.c.b16 %v330, %v324
      %v385 = vpack.c.b16 %v331, %v325
      %v386 = vpack.c.b16 %v332, %v326
      %v387 = vpack.c.b16 %v333, %v327
      %v388 = vpack.c.b16 %v334, %v328
      %v389 = vpack.c.b16 %v335, %v329
      %v390 = vpack.c.b16 %v342, %v336
      %v391 = vpack.c.b16 %v343, %v337
      %v392 = vpack.c.b16 %v344, %v338
      %v393 = vpack.c.b16 %v345, %v339
      %v394 = vpack.c.b16 %v346, %v340
      %v395 = vpack.c.b16 %v347, %v341
      %444 = vmatprep.subr.bf16.mxu0 %v349
      %445 = vmatpush1.bf16.msra.mxu0 %v348
      %446 = vmatprep.subr.bf16.mxu0 %v355
      %447 = vmatpush1.bf16.msra.mxu0 %v354
      %448 = vmatprep.subr.bf16.mxu0 %v361
      %449 = vmatpush1.bf16.msra.mxu0 %v360
      %450 = vmatprep.subr.bf16.mxu0 %v367
      %451 = vmatpush1.bf16.msra.mxu0 %v366
      %452 = vmatprep.subr.bf16.mxu0 %v373
      %453 = vmatpush1.bf16.msra.mxu0 %v372
      %454 = vmatprep.subr.bf16.mxu0 %v379
      %455 = vmatpush1.bf16.msra.mxu0 %v378
      %456 = vmatprep.subr.bf16.mxu0 %v385
      %457 = vmatpush1.bf16.msra.mxu0 %v384
      %458 = vmatprep.subr.bf16.mxu0 %v391
      %459 = vmatpush1.bf16.msra.mxu0 %v390
      %460 = vmatprep.subr.bf16.mxu0 0
      %461 = vmatpush1.bf16.msra.mxu0 0
      %462 = vmatprep.subr.bf16.mxu0 0
      %463 = vmatpush1.bf16.msra.mxu0 0
      %464 = vmatprep.subr.bf16.mxu0 0
      %465 = vmatpush1.bf16.msra.mxu0 0
      %466 = vmatprep.subr.bf16.mxu0 0
      %467 = vmatpush1.bf16.msra.mxu0 0
      %468 = vmatprep.subr.bf16.mxu0 0
      %469 = vmatpush1.bf16.msra.mxu0 0
      %470 = vmatprep.subr.bf16.mxu0 0
      %471 = vmatpush1.bf16.msra.mxu0 0
      %472 = vmatprep.subr.bf16.mxu0 0
      %473 = vmatpush1.bf16.msra.mxu0 0
      %474 = vmatprep.subr.bf16.mxu0 0
      %475 = vmatpush1.bf16.msra.mxu0 0
      %476 = vmatprep.mubr.bf16.mxu0 0
      %477 = vmatmul.mubr.bf16.gmra.mrb[0].mxu0 %v200
      %v478 = vpop.f32.mrb[0].mxu0
      %v479 = vadd.f32 %v152, %v478
      %v480 = vpop.f32.mrb[0].mxu0
      %v481 = vadd.f32 %v156, %v480
      %v482 = vpop.f32.mrb[0].mxu0
      %v483 = vadd.f32 %v152, %v482
      %v484 = vpop.f32.mrb[0].mxu0
      %v485 = vadd.f32 %v156, %v484
      %486 = vmatprep.mubr.bf16.mxu0 0
      %487 = vmatmul.mubr.bf16.gmra.mrb[0].mxu0 %v201
      %v488 = vpop.f32.mrb[0].mxu0
      %v489 = vadd.f32 %v152, %v488
      %v490 = vpop.f32.mrb[0].mxu0
      %v491 = vadd.f32 %v156, %v490
      %v492 = vpop.f32.mrb[0].mxu0
      %v493 = vadd.f32 %v152, %v492
      %v494 = vpop.f32.mrb[0].mxu0
      %v495 = vadd.f32 %v156, %v494
      %496 = vdwg.mxu0
      %497 = vmatprep.subr.bf16.mxu0 %v351
      %498 = vmatpush1.bf16.msra.mxu0 %v350
      %499 = vmatprep.subr.bf16.mxu0 %v357
      %500 = vmatpush1.bf16.msra.mxu0 %v356
      %501 = vmatprep.subr.bf16.mxu0 %v363
      %502 = vmatpush1.bf16.msra.mxu0 %v362
      %503 = vmatprep.subr.bf16.mxu0 %v369
      %504 = vmatpush1.bf16.msra.mxu0 %v368
      %505 = vmatprep.subr.bf16.mxu0 %v375
      %506 = vmatpush1.bf16.msra.mxu0 %v374
      %507 = vmatprep.subr.bf16.mxu0 %v381
      %508 = vmatpush1.bf16.msra.mxu0 %v380
      %509 = vmatprep.subr.bf16.mxu0 %v387
      %510 = vmatpush1.bf16.msra.mxu0 %v386
      %511 = vmatprep.subr.bf16.mxu0 %v393
      %512 = vmatpush1.bf16.msra.mxu0 %v392
      %513 = vmatprep.subr.bf16.mxu0 0
      %514 = vmatpush1.bf16.msra.mxu0 0
      %515 = vmatprep.subr.bf16.mxu0 0
      %516 = vmatpush1.bf16.msra.mxu0 0
      %517 = vmatprep.subr.bf16.mxu0 0
      %518 = vmatpush1.bf16.msra.mxu0 0
      %519 = vmatprep.subr.bf16.mxu0 0
      %520 = vmatpush1.bf16.msra.mxu0 0
      %521 = vmatprep.subr.bf16.mxu0 0
      %522 = vmatpush1.bf16.msra.mxu0 0
      %523 = vmatprep.subr.bf16.mxu0 0
      %524 = vmatpush1.bf16.msra.mxu0 0
      %525 = vmatprep.subr.bf16.mxu0 0
      %526 = vmatpush1.bf16.msra.mxu0 0
      %527 = vmatprep.subr.bf16.mxu0 0
      %528 = vmatpush1.bf16.msra.mxu0 0
      %529 = vmatprep.mubr.bf16.mxu0 0
      %530 = vmatmul.mubr.bf16.gmra.mrb[0].mxu0 %v200
      %v531 = vpop.f32.mrb[0].mxu0
      %v532 = vadd.f32 %v160, %v531
      %v533 = vpop.f32.mrb[0].mxu0
      %v534 = vadd.f32 %v164, %v533
      %v535 = vpop.f32.mrb[0].mxu0
      %v536 = vadd.f32 %v160, %v535
      %v537 = vpop.f32.mrb[0].mxu0
      %v538 = vadd.f32 %v164, %v537
      %539 = vmatprep.mubr.bf16.mxu0 0
      %540 = vmatmul.mubr.bf16.gmra.mrb[0].mxu0 %v201
      %v541 = vpop.f32.mrb[0].mxu0
      %v542 = vadd.f32 %v160, %v541
      %v543 = vpop.f32.mrb[0].mxu0
      %v544 = vadd.f32 %v164, %v543
      %v545 = vpop.f32.mrb[0].mxu0
      %v546 = vadd.f32 %v160, %v545
      %v547 = vpop.f32.mrb[0].mxu0
      %v548 = vadd.f32 %v164, %v547
      %549 = vdwg.mxu0
      %550 = vmatprep.subr.bf16.mxu0 %v353
      %551 = vmatpush1.bf16.msra.mxu0 %v352
      %552 = vmatprep.subr.bf16.mxu0 %v359
      %553 = vmatpush1.bf16.msra.mxu0 %v358
      %554 = vmatprep.subr.bf16.mxu0 %v365
      %555 = vmatpush1.bf16.msra.mxu0 %v364
      %556 = vmatprep.subr.bf16.mxu0 %v371
      %557 = vmatpush1.bf16.msra.mxu0 %v370
      %558 = vmatprep.subr.bf16.mxu0 %v377
      %559 = vmatpush1.bf16.msra.mxu0 %v376
      %560 = vmatprep.subr.bf16.mxu0 %v383
      %561 = vmatpush1.bf16.msra.mxu0 %v382
      %562 = vmatprep.subr.bf16.mxu0 %v389
      %563 = vmatpush1.bf16.msra.mxu0 %v388
      %564 = vmatprep.subr.bf16.mxu0 %v395
      %565 = vmatpush1.bf16.msra.mxu0 %v394
      %566 = vmatprep.subr.bf16.mxu0 0
      %567 = vmatpush1.bf16.msra.mxu0 0
      %568 = vmatprep.subr.bf16.mxu0 0
      %569 = vmatpush1.bf16.msra.mxu0 0
      %570 = vmatprep.subr.bf16.mxu0 0
      %571 = vmatpush1.bf16.msra.mxu0 0
      %572 = vmatprep.subr.bf16.mxu0 0
      %573 = vmatpush1.bf16.msra.mxu0 0
      %574 = vmatprep.subr.bf16.mxu0 0
      %575 = vmatpush1.bf16.msra.mxu0 0
      %576 = vmatprep.subr.bf16.mxu0 0
      %577 = vmatpush1.bf16.msra.mxu0 0
      %578 = vmatprep.subr.bf16.mxu0 0
      %579 = vmatpush1.bf16.msra.mxu0 0
      %580 = vmatprep.subr.bf16.mxu0 0
      %581 = vmatpush1.bf16.msra.mxu0 0
      %582 = vmatprep.mubr.bf16.mxu0 0
      %583 = vmatmul.mubr.bf16.gmra.mrb[0].mxu0 %v200
      %v584 = vpop.f32.mrb[0].mxu0
      %v585 = vadd.f32 %v168, %v584
      %v586 = vpop.f32.mrb[0].mxu0
      %v587 = vadd.f32 %v172, %v586
      %v588 = vpop.f32.mrb[0].mxu0
      %v589 = vadd.f32 %v168, %v588
      %v590 = vpop.f32.mrb[0].mxu0
      %v591 = vadd.f32 %v172, %v590
      %592 = vmatprep.mubr.bf16.mxu0 0
      %593 = vmatmul.mubr.bf16.gmra.mrb[0].mxu0 %v201
      %v594 = vpop.f32.mrb[0].mxu0
      %v595 = vadd.f32 %v168, %v594
      %v596 = vpop.f32.mrb[0].mxu0
      %v597 = vadd.f32 %v172, %v596
      %v598 = vpop.f32.mrb[0].mxu0
      %v599 = vadd.f32 %v168, %v598
      %v600 = vpop.f32.mrb[0].mxu0
      %v601 = vadd.f32 %v172, %v600
      %602 = vdwg.mxu0
      %s603 = smul.u32 %s185, 6
      %s604 = smul.addr %s603, 8
      %s605 = scalar_lea.vmem [#allocation2], %s604
      %606 = vst [vmem:[%s605] sm:$0xff] %v479
      %607 = vst [vmem:[%s605 + $0x8] sm:$0xff] %v481
      %608 = vst [vmem:[%s605 + $0x10] sm:$0xff] %v532
      %609 = vst [vmem:[%s605 + $0x18] sm:$0xff] %v534
      %610 = vst [vmem:[%s605 + $0x20] sm:$0xff] %v585
      %611 = vst [vmem:[%s605 + $0x28] sm:$0xff] %v587
      %612 = vst [vmem:[%s605 + $0x30] sm:$0xff] %v483
      %613 = vst [vmem:[%s605 + $0x38] sm:$0xff] %v485
      %614 = vst [vmem:[%s605 + $0x40] sm:$0xff] %v536
      %615 = vst [vmem:[%s605 + $0x48] sm:$0xff] %v538
      %616 = vst [vmem:[%s605 + $0x50] sm:$0xff] %v589
      %617 = vst [vmem:[%s605 + $0x58] sm:$0xff] %v591
      %618 = vst [vmem:[%s605 + $0x60] sm:$0xff] %v489
      %619 = vst [vmem:[%s605 + $0x68] sm:$0xff] %v491
      %620 = vst [vmem:[%s605 + $0x70] sm:$0xff] %v542
      %621 = vst [vmem:[%s605 + $0x78] sm:$0xff] %v544
      %622 = vst [vmem:[%s605 + $0x80] sm:$0xff] %v595
      %623 = vst [vmem:[%s605 + $0x88] sm:$0xff] %v597
      %624 = vst [vmem:[%s605 + $0x90] sm:$0xff] %v493
      %625 = vst [vmem:[%s605 + $0x98] sm:$0xff] %v495
      %626 = vst [vmem:[%s605 + $0xa0] sm:$0xff] %v546
      %627 = vst [vmem:[%s605 + $0xa8] sm:$0xff] %v548
      %628 = vst [vmem:[%s605 + $0xb0] sm:$0xff] %v599
      %629 = vst [vmem:[%s605 + $0xb8] sm:$0xff] %v601
    $region58: #{tpu_custom_call.1} parent=1 // loop_footer
      %s184 = sadd.s32 1, %s180
    $region59: #{tpu_custom_call.1} parent=1 // loop_footer_branch
      %179 = sbr.rel target = $region55
    $region60: #{tpu_custom_call.1} parent=1 // loop_exit
      _
    %v630 = vld [vmem:[%s7] sm:$0x1]
    %v632 = vlaneseq
    %v633 = vshrl.u32 %v632, 7
    %v634 = vsub.s32 0, %v633
    %v635 = vrot.slane %v630, %v634
    %637 = vst [vmem:[#allocation12] sm:$0xff] %v635
    %638 = vst [vmem:[#allocation12 + $0x8] sm:$0xff] %v635
    %639 = vst [vmem:[#allocation12 + $0x10] sm:$0xff] %v635
    %640 = vst [vmem:[#allocation12 + $0x18] sm:$0xff] %v635
    %641 = vst [vmem:[#allocation12 + $0x20] sm:$0xff] %v635
    %642 = vst [vmem:[#allocation12 + $0x28] sm:$0xff] %v635
    %643 = vst [vmem:[#allocation12 + $0x30] sm:$0xff] %v635
    %644 = vst [vmem:[#allocation12 + $0x38] sm:$0xff] %v635
    %645 = vst [vmem:[#allocation12 + $0x40] sm:$0xff] %v635
    %646 = vst [vmem:[#allocation12 + $0x48] sm:$0xff] %v635
    %647 = vst [vmem:[#allocation12 + $0x50] sm:$0xff] %v635
    %648 = vst [vmem:[#allocation12 + $0x58] sm:$0xff] %v635
    %649 = vst [vmem:[#allocation12 + $0x60] sm:$0xff] %v635
    %650 = vst [vmem:[#allocation12 + $0x68] sm:$0xff] %v635
    %651 = vst [vmem:[#allocation12 + $0x70] sm:$0xff] %v635
    %652 = vst [vmem:[#allocation12 + $0x78] sm:$0xff] %v635
    %v653 = vld [vmem:[#allocation8] sm:$0xff]
    %v654 = vld [vmem:[#allocation8 + $0x8] sm:$0xff]
    %v655 = vld [vmem:[#allocation8 + $0x10] sm:$0xff]
    %v656 = vld [vmem:[#allocation8 + $0x18] sm:$0xff]
    %v657 = vld [vmem:[#allocation8 + $0x20] sm:$0xff]
    %v658 = vld [vmem:[#allocation8 + $0x28] sm:$0xff]
    %v659 = vld [vmem:[#allocation8 + $0x30] sm:$0xff]
    %v660 = vld [vmem:[#allocation8 + $0x38] sm:$0xff]
    %v661 = vld [vmem:[#allocation8 + $0x40] sm:$0xff]
    %v662 = vld [vmem:[#allocation8 + $0x48] sm:$0xff]
    %v663 = vld [vmem:[#allocation8 + $0x50] sm:$0xff]
    %v664 = vld [vmem:[#allocation8 + $0x58] sm:$0xff]
    %v665 = vld [vmem:[#allocation8 + $0x60] sm:$0xff]
    %v666 = vld [vmem:[#allocation8 + $0x68] sm:$0xff]
    %v667 = vld [vmem:[#allocation8 + $0x70] sm:$0xff]
    %v668 = vld [vmem:[#allocation8 + $0x78] sm:$0xff]
    %v669 = vld [vmem:[#allocation8 + $0x80] sm:$0xff]
    %v670 = vld [vmem:[#allocation8 + $0x88] sm:$0xff]
    %v671 = vld [vmem:[#allocation8 + $0x90] sm:$0xff]
    %v672 = vld [vmem:[#allocation8 + $0x98] sm:$0xff]
    %v673 = vld [vmem:[#allocation8 + $0xa0] sm:$0xff]
    %v674 = vld [vmem:[#allocation8 + $0xa8] sm:$0xff]
    %v675 = vld [vmem:[#allocation8 + $0xb0] sm:$0xff]
    %v676 = vld [vmem:[#allocation8 + $0xb8] sm:$0xff]
    %v677 = vld [vmem:[#allocation8 + $0xc0] sm:$0xff]
    %v678 = vld [vmem:[#allocation8 + $0xc8] sm:$0xff]
    %v679 = vld [vmem:[#allocation8 + $0xd0] sm:$0xff]
    %v680 = vld [vmem:[#allocation8 + $0xd8] sm:$0xff]
    %v681 = vld [vmem:[#allocation8 + $0xe0] sm:$0xff]
    %v682 = vld [vmem:[#allocation8 + $0xe8] sm:$0xff]
    %v683 = vld [vmem:[#allocation8 + $0xf0] sm:$0xff]
    %v684 = vld [vmem:[#allocation8 + $0xf8] sm:$0xff]
    %v685 = vld [vmem:[#allocation8 + $0x100] sm:$0xff]
    %v686 = vld [vmem:[#allocation8 + $0x108] sm:$0xff]
    %v687 = vld [vmem:[#allocation8 + $0x110] sm:$0xff]
    %v688 = vld [vmem:[#allocation8 + $0x118] sm:$0xff]
    %v689 = vld [vmem:[#allocation8 + $0x120] sm:$0xff]
    %v690 = vld [vmem:[#allocation8 + $0x128] sm:$0xff]
    %v691 = vld [vmem:[#allocation8 + $0x130] sm:$0xff]
    %v692 = vld [vmem:[#allocation8 + $0x138] sm:$0xff]
    %v693 = vld [vmem:[#allocation8 + $0x140] sm:$0xff]
    %v694 = vld [vmem:[#allocation8 + $0x148] sm:$0xff]
    %v695 = vld [vmem:[#allocation8 + $0x150] sm:$0xff]
    %v696 = vld [vmem:[#allocation8 + $0x158] sm:$0xff]
    %v697 = vld [vmem:[#allocation8 + $0x160] sm:$0xff]
    %v698 = vld [vmem:[#allocation8 + $0x168] sm:$0xff]
    %v699 = vld [vmem:[#allocation8 + $0x170] sm:$0xff]
    %v700 = vld [vmem:[#allocation8 + $0x178] sm:$0xff]
    %v701 = vld [vmem:[#allocation8 + $0x180] sm:$0xff]
    %v702 = vld [vmem:[#allocation8 + $0x188] sm:$0xff]
    %v703 = vld [vmem:[#allocation8 + $0x190] sm:$0xff]
    %v704 = vld [vmem:[#allocation8 + $0x198] sm:$0xff]
    %v705 = vld [vmem:[#allocation8 + $0x1a0] sm:$0xff]
    %v706 = vld [vmem:[#allocation8 + $0x1a8] sm:$0xff]
    %v707 = vld [vmem:[#allocation8 + $0x1b0] sm:$0xff]
    %v708 = vld [vmem:[#allocation8 + $0x1b8] sm:$0xff]
    %v709 = vld [vmem:[#allocation8 + $0x1c0] sm:$0xff]
    %v710 = vld [vmem:[#allocation8 + $0x1c8] sm:$0xff]
    %v711 = vld [vmem:[#allocation8 + $0x1d0] sm:$0xff]
    %v712 = vld [vmem:[#allocation8 + $0x1d8] sm:$0xff]
    %v713 = vld [vmem:[#allocation8 + $0x1e0] sm:$0xff]
    %v714 = vld [vmem:[#allocation8 + $0x1e8] sm:$0xff]
    %v715 = vld [vmem:[#allocation8 + $0x1f0] sm:$0xff]
    %v716 = vld [vmem:[#allocation8 + $0x1f8] sm:$0xff]
    %v717 = vld [vmem:[#allocation8 + $0x200] sm:$0xff]
    %v718 = vld [vmem:[#allocation8 + $0x208] sm:$0xff]
    %v719 = vld [vmem:[#allocation8 + $0x210] sm:$0xff]
    %v720 = vld [vmem:[#allocation8 + $0x218] sm:$0xff]
    %v721 = vld [vmem:[#allocation8 + $0x220] sm:$0xff]
    %v722 = vld [vmem:[#allocation8 + $0x228] sm:$0xff]
    %v723 = vld [vmem:[#allocation8 + $0x230] sm:$0xff]
    %v724 = vld [vmem:[#allocation8 + $0x238] sm:$0xff]
    %v725 = vld [vmem:[#allocation8 + $0x240] sm:$0xff]
    %v726 = vld [vmem:[#allocation8 + $0x248] sm:$0xff]
    %v727 = vld [vmem:[#allocation8 + $0x250] sm:$0xff]
    %v728 = vld [vmem:[#allocation8 + $0x258] sm:$0xff]
    %v729 = vld [vmem:[#allocation8 + $0x260] sm:$0xff]
    %v730 = vld [vmem:[#allocation8 + $0x268] sm:$0xff]
    %v731 = vld [vmem:[#allocation8 + $0x270] sm:$0xff]
    %v732 = vld [vmem:[#allocation8 + $0x278] sm:$0xff]
    %v733 = vld [vmem:[#allocation8 + $0x280] sm:$0xff]
    %v734 = vld [vmem:[#allocation8 + $0x288] sm:$0xff]
    %v735 = vld [vmem:[#allocation8 + $0x290] sm:$0xff]
    %v736 = vld [vmem:[#allocation8 + $0x298] sm:$0xff]
    %v737 = vld [vmem:[#allocation8 + $0x2a0] sm:$0xff]
    %v738 = vld [vmem:[#allocation8 + $0x2a8] sm:$0xff]
    %v739 = vld [vmem:[#allocation8 + $0x2b0] sm:$0xff]
    %v740 = vld [vmem:[#allocation8 + $0x2b8] sm:$0xff]
    %v741 = vld [vmem:[#allocation8 + $0x2c0] sm:$0xff]
    %v742 = vld [vmem:[#allocation8 + $0x2c8] sm:$0xff]
    %v743 = vld [vmem:[#allocation8 + $0x2d0] sm:$0xff]
    %v744 = vld [vmem:[#allocation8 + $0x2d8] sm:$0xff]
    %v745 = vld [vmem:[#allocation8 + $0x2e0] sm:$0xff]
    %v746 = vld [vmem:[#allocation8 + $0x2e8] sm:$0xff]
    %v747 = vld [vmem:[#allocation8 + $0x2f0] sm:$0xff]
    %v748 = vld [vmem:[#allocation8 + $0x2f8] sm:$0xff]
    %v749 = vld [vmem:[#allocation9] sm:$0xf]
    %v750 = vld [vmem:[#allocation9 + $0x4] sm:$0xf]
    %v751 = vld [vmem:[#allocation9 + $0x8] sm:$0xf]
    %v752 = vld [vmem:[#allocation9 + $0xc] sm:$0xf]
    %v753 = vld [vmem:[#allocation9 + $0x10] sm:$0xf]
    %v754 = vld [vmem:[#allocation9 + $0x14] sm:$0xf]
    %v755 = vld [vmem:[#allocation9 + $0x18] sm:$0xf]
    %v756 = vld [vmem:[#allocation9 + $0x1c] sm:$0xf]
    %v757 = vld [vmem:[#allocation9 + $0x20] sm:$0xf]
    %v758 = vld [vmem:[#allocation9 + $0x24] sm:$0xf]
    %v759 = vld [vmem:[#allocation9 + $0x28] sm:$0xf]
    %v760 = vld [vmem:[#allocation9 + $0x2c] sm:$0xf]
    %v761 = vld [vmem:[#allocation9 + $0x30] sm:$0xf]
    %v762 = vld [vmem:[#allocation9 + $0x34] sm:$0xf]
    %v763 = vld [vmem:[#allocation9 + $0x38] sm:$0xf]
    %v764 = vld [vmem:[#allocation9 + $0x3c] sm:$0xf]
    %v765 = vld [vmem:[#allocation11] sm:$0xf]
    %v766 = vld [vmem:[#allocation11 + $0x4] sm:$0xf]
    %v767 = vld [vmem:[#allocation11 + $0x8] sm:$0xf]
    %v768 = vld [vmem:[#allocation11 + $0xc] sm:$0xf]
    %v769 = vld [vmem:[#allocation11 + $0x10] sm:$0xf]
    %v770 = vld [vmem:[#allocation11 + $0x14] sm:$0xf]
    %v771 = vld [vmem:[#allocation11 + $0x18] sm:$0xf]
    %v772 = vld [vmem:[#allocation11 + $0x1c] sm:$0xf]
    %v773 = vld [vmem:[#allocation11 + $0x20] sm:$0xf]
    %v774 = vld [vmem:[#allocation11 + $0x24] sm:$0xf]
    %v775 = vld [vmem:[#allocation11 + $0x28] sm:$0xf]
    %v776 = vld [vmem:[#allocation11 + $0x2c] sm:$0xf]
    %v777 = vld [vmem:[#allocation11 + $0x30] sm:$0xf]
    %v778 = vld [vmem:[#allocation11 + $0x34] sm:$0xf]
    %v779 = vld [vmem:[#allocation11 + $0x38] sm:$0xf]
    %v780 = vld [vmem:[#allocation11 + $0x3c] sm:$0xf]
    %v781 = vld [vmem:[%s4] sm:$0x3f]
    %v783 = vlaneseq
    %v784 = vshrl.u32 %v783, 7
    %v785 = vsub.s32 0, %v784
    %v786 = vrot.slane %v781, %v785
    %v787 = vlaneseq
    %v788 = vshrl.u32 %v787, 7
    %v789 = vsub.s32 1, %v788
    %v790 = vrot.slane %v781, %v789
    %v791 = vlaneseq
    %v792 = vshrl.u32 %v791, 7
    %v793 = vsub.s32 2, %v792
    %v794 = vrot.slane %v781, %v793
    %v795 = vlaneseq
    %v796 = vshrl.u32 %v795, 7
    %v797 = vsub.s32 3, %v796
    %v798 = vrot.slane %v781, %v797
    %v799 = vlaneseq
    %v800 = vshrl.u32 %v799, 7
    %v801 = vsub.s32 4, %v800
    %v802 = vrot.slane %v781, %v801
    %v803 = vlaneseq
    %v804 = vshrl.u32 %v803, 7
    %v805 = vsub.s32 5, %v804
    %v806 = vrot.slane %v781, %v805
    %v909 = vunpack.c.l.b16 %v653
    %v910 = vunpack.c.h.b16 %v653
    %v911 = vunpack.c.l.b16 %v654
    %v912 = vunpack.c.h.b16 %v654
    %v913 = vunpack.c.l.b16 %v655
    %v914 = vunpack.c.h.b16 %v655
    %v915 = vunpack.c.l.b16 %v656
    %v916 = vunpack.c.h.b16 %v656
    %v917 = vunpack.c.l.b16 %v657
    %v918 = vunpack.c.h.b16 %v657
    %v919 = vunpack.c.l.b16 %v658
    %v920 = vunpack.c.h.b16 %v658
    %v921 = vunpack.c.l.b16 %v659
    %v922 = vunpack.c.h.b16 %v659
    %v923 = vunpack.c.l.b16 %v660
    %v924 = vunpack.c.h.b16 %v660
    %v925 = vunpack.c.l.b16 %v661
    %v926 = vunpack.c.h.b16 %v661
    %v927 = vunpack.c.l.b16 %v662
    %v928 = vunpack.c.h.b16 %v662
    %v929 = vunpack.c.l.b16 %v663
    %v930 = vunpack.c.h.b16 %v663
    %v931 = vunpack.c.l.b16 %v664
    %v932 = vunpack.c.h.b16 %v664
    %v933 = vunpack.c.l.b16 %v665
    %v934 = vunpack.c.h.b16 %v665
    %v935 = vunpack.c.l.b16 %v666
    %v936 = vunpack.c.h.b16 %v666
    %v937 = vunpack.c.l.b16 %v667
    %v938 = vunpack.c.h.b16 %v667
    %v939 = vunpack.c.l.b16 %v668
    %v940 = vunpack.c.h.b16 %v668
    %v941 = vunpack.c.l.b16 %v669
    %v942 = vunpack.c.h.b16 %v669
    %v943 = vunpack.c.l.b16 %v670
    %v944 = vunpack.c.h.b16 %v670
    %v945 = vunpack.c.l.b16 %v671
    %v946 = vunpack.c.h.b16 %v671
    %v947 = vunpack.c.l.b16 %v672
    %v948 = vunpack.c.h.b16 %v672
    %v949 = vunpack.c.l.b16 %v673
    %v950 = vunpack.c.h.b16 %v673
    %v951 = vunpack.c.l.b16 %v674
    %v952 = vunpack.c.h.b16 %v674
    %v953 = vunpack.c.l.b16 %v675
    %v954 = vunpack.c.h.b16 %v675
    %v955 = vunpack.c.l.b16 %v676
    %v956 = vunpack.c.h.b16 %v676
    %v957 = vunpack.c.l.b16 %v677
    %v958 = vunpack.c.h.b16 %v677
    %v959 = vunpack.c.l.b16 %v678
    %v960 = vunpack.c.h.b16 %v678
    %v961 = vunpack.c.l.b16 %v679
    %v962 = vunpack.c.h.b16 %v679
    %v963 = vunpack.c.l.b16 %v680
    %v964 = vunpack.c.h.b16 %v680
    %v965 = vunpack.c.l.b16 %v681
    %v966 = vunpack.c.h.b16 %v681
    %v967 = vunpack.c.l.b16 %v682
    %v968 = vunpack.c.h.b16 %v682
    %v969 = vunpack.c.l.b16 %v683
    %v970 = vunpack.c.h.b16 %v683
    %v971 = vunpack.c.l.b16 %v684
    %v972 = vunpack.c.h.b16 %v684
    %v973 = vunpack.c.l.b16 %v685
    %v974 = vunpack.c.h.b16 %v685
    %v975 = vunpack.c.l.b16 %v686
    %v976 = vunpack.c.h.b16 %v686
    %v977 = vunpack.c.l.b16 %v687
    %v978 = vunpack.c.h.b16 %v687
    %v979 = vunpack.c.l.b16 %v688
    %v980 = vunpack.c.h.b16 %v688
    %v981 = vunpack.c.l.b16 %v689
    %v982 = vunpack.c.h.b16 %v689
    %v983 = vunpack.c.l.b16 %v690
    %v984 = vunpack.c.h.b16 %v690
    %v985 = vunpack.c.l.b16 %v691
    %v986 = vunpack.c.h.b16 %v691
    %v987 = vunpack.c.l.b16 %v692
    %v988 = vunpack.c.h.b16 %v692
    %v989 = vunpack.c.l.b16 %v693
    %v990 = vunpack.c.h.b16 %v693
    %v991 = vunpack.c.l.b16 %v694
    %v992 = vunpack.c.h.b16 %v694
    %v993 = vunpack.c.l.b16 %v695
    %v994 = vunpack.c.h.b16 %v695
    %v995 = vunpack.c.l.b16 %v696
    %v996 = vunpack.c.h.b16 %v696
    %v997 = vunpack.c.l.b16 %v697
    %v998 = vunpack.c.h.b16 %v697
    %v999 = vunpack.c.l.b16 %v698
    %v1000 = vunpack.c.h.b16 %v698
    %v1001 = vunpack.c.l.b16 %v699
    %v1002 = vunpack.c.h.b16 %v699
    %v1003 = vunpack.c.l.b16 %v700
    %v1004 = vunpack.c.h.b16 %v700
    %v1005 = vunpack.c.l.b16 %v701
    %v1006 = vunpack.c.h.b16 %v701
    %v1007 = vunpack.c.l.b16 %v702
    %v1008 = vunpack.c.h.b16 %v702
    %v1009 = vunpack.c.l.b16 %v703
    %v1010 = vunpack.c.h.b16 %v703
    %v1011 = vunpack.c.l.b16 %v704
    %v1012 = vunpack.c.h.b16 %v704
    %v1013 = vunpack.c.l.b16 %v705
    %v1014 = vunpack.c.h.b16 %v705
    %v1015 = vunpack.c.l.b16 %v706
    %v1016 = vunpack.c.h.b16 %v706
    %v1017 = vunpack.c.l.b16 %v707
    %v1018 = vunpack.c.h.b16 %v707
    %v1019 = vunpack.c.l.b16 %v708
    %v1020 = vunpack.c.h.b16 %v708
    %v1021 = vunpack.c.l.b16 %v709
    %v1022 = vunpack.c.h.b16 %v709
    %v1023 = vunpack.c.l.b16 %v710
    %v1024 = vunpack.c.h.b16 %v710
    %v1025 = vunpack.c.l.b16 %v711
    %v1026 = vunpack.c.h.b16 %v711
    %v1027 = vunpack.c.l.b16 %v712
    %v1028 = vunpack.c.h.b16 %v712
    %v1029 = vunpack.c.l.b16 %v713
    %v1030 = vunpack.c.h.b16 %v713
    %v1031 = vunpack.c.l.b16 %v714
    %v1032 = vunpack.c.h.b16 %v714
    %v1033 = vunpack.c.l.b16 %v715
    %v1034 = vunpack.c.h.b16 %v715
    %v1035 = vunpack.c.l.b16 %v716
    %v1036 = vunpack.c.h.b16 %v716
    %v1037 = vunpack.c.l.b16 %v717
    %v1038 = vunpack.c.h.b16 %v717
    %v1039 = vunpack.c.l.b16 %v718
    %v1040 = vunpack.c.h.b16 %v718
    %v1041 = vunpack.c.l.b16 %v719
    %v1042 = vunpack.c.h.b16 %v719
    %v1043 = vunpack.c.l.b16 %v720
    %v1044 = vunpack.c.h.b16 %v720
    %v1045 = vunpack.c.l.b16 %v721
    %v1046 = vunpack.c.h.b16 %v721
    %v1047 = vunpack.c.l.b16 %v722
    %v1048 = vunpack.c.h.b16 %v722
    %v1049 = vunpack.c.l.b16 %v723
    %v1050 = vunpack.c.h.b16 %v723
    %v1051 = vunpack.c.l.b16 %v724
    %v1052 = vunpack.c.h.b16 %v724
    %v1053 = vunpack.c.l.b16 %v725
    %v1054 = vunpack.c.h.b16 %v725
    %v1055 = vunpack.c.l.b16 %v726
    %v1056 = vunpack.c.h.b16 %v726
    %v1057 = vunpack.c.l.b16 %v727
    %v1058 = vunpack.c.h.b16 %v727
    %v1059 = vunpack.c.l.b16 %v728
    %v1060 = vunpack.c.h.b16 %v728
    %v1061 = vunpack.c.l.b16 %v729
    %v1062 = vunpack.c.h.b16 %v729
    %v1063 = vunpack.c.l.b16 %v730
    %v1064 = vunpack.c.h.b16 %v730
    %v1065 = vunpack.c.l.b16 %v731
    %v1066 = vunpack.c.h.b16 %v731
    %v1067 = vunpack.c.l.b16 %v732
    %v1068 = vunpack.c.h.b16 %v732
    %v1069 = vunpack.c.l.b16 %v733
    %v1070 = vunpack.c.h.b16 %v733
    %v1071 = vunpack.c.l.b16 %v734
    %v1072 = vunpack.c.h.b16 %v734
    %v1073 = vunpack.c.l.b16 %v735
    %v1074 = vunpack.c.h.b16 %v735
    %v1075 = vunpack.c.l.b16 %v736
    %v1076 = vunpack.c.h.b16 %v736
    %v1077 = vunpack.c.l.b16 %v737
    %v1078 = vunpack.c.h.b16 %v737
    %v1079 = vunpack.c.l.b16 %v738
    %v1080 = vunpack.c.h.b16 %v738
    %v1081 = vunpack.c.l.b16 %v739
    %v1082 = vunpack.c.h.b16 %v739
    %v1083 = vunpack.c.l.b16 %v740
    %v1084 = vunpack.c.h.b16 %v740
    %v1085 = vunpack.c.l.b16 %v741
    %v1086 = vunpack.c.h.b16 %v741
    %v1087 = vunpack.c.l.b16 %v742
    %v1088 = vunpack.c.h.b16 %v742
    %v1089 = vunpack.c.l.b16 %v743
    %v1090 = vunpack.c.h.b16 %v743
    %v1091 = vunpack.c.l.b16 %v744
    %v1092 = vunpack.c.h.b16 %v744
    %v1093 = vunpack.c.l.b16 %v745
    %v1094 = vunpack.c.h.b16 %v745
    %v1095 = vunpack.c.l.b16 %v746
    %v1096 = vunpack.c.h.b16 %v746
    %v1097 = vunpack.c.l.b16 %v747
    %v1098 = vunpack.c.h.b16 %v747
    %v1099 = vunpack.c.l.b16 %v748
    %v1100 = vunpack.c.h.b16 %v748
    %v1101 = vpack.c.b16 %v915, %v909
    %v1102 = vpack.c.b16 %v916, %v910
    %v1103 = vpack.c.b16 %v917, %v911
    %v1104 = vpack.c.b16 %v918, %v912
    %v1105 = vpack.c.b16 %v919, %v913
    %v1106 = vpack.c.b16 %v920, %v914
    %v1107 = vpack.c.b16 %v927, %v921
    %v1108 = vpack.c.b16 %v928, %v922
    %v1109 = vpack.c.b16 %v929, %v923
    %v1110 = vpack.c.b16 %v930, %v924
    %v1111 = vpack.c.b16 %v931, %v925
    %v1112 = vpack.c.b16 %v932, %v926
    %v1113 = vpack.c.b16 %v939, %v933
    %v1114 = vpack.c.b16 %v940, %v934
    %v1115 = vpack.c.b16 %v941, %v935
    %v1116 = vpack.c.b16 %v942, %v936
    %v1117 = vpack.c.b16 %v943, %v937
    %v1118 = vpack.c.b16 %v944, %v938
    %v1119 = vpack.c.b16 %v951, %v945
    %v1120 = vpack.c.b16 %v952, %v946
    %v1121 = vpack.c.b16 %v953, %v947
    %v1122 = vpack.c.b16 %v954, %v948
    %v1123 = vpack.c.b16 %v955, %v949
    %v1124 = vpack.c.b16 %v956, %v950
    %v1125 = vpack.c.b16 %v963, %v957
    %v1126 = vpack.c.b16 %v964, %v958
    %v1127 = vpack.c.b16 %v965, %v959
    %v1128 = vpack.c.b16 %v966, %v960
    %v1129 = vpack.c.b16 %v967, %v961
    %v1130 = vpack.c.b16 %v968, %v962
    %v1131 = vpack.c.b16 %v975, %v969
    %v1132 = vpack.c.b16 %v976, %v970
    %v1133 = vpack.c.b16 %v977, %v971
    %v1134 = vpack.c.b16 %v978, %v972
    %v1135 = vpack.c.b16 %v979, %v973
    %v1136 = vpack.c.b16 %v980, %v974
    %v1137 = vpack.c.b16 %v987, %v981
    %v1138 = vpack.c.b16 %v988, %v982
    %v1139 = vpack.c.b16 %v989, %v983
    %v1140 = vpack.c.b16 %v990, %v984
    %v1141 = vpack.c.b16 %v991, %v985
    %v1142 = vpack.c.b16 %v992, %v986
    %v1143 = vpack.c.b16 %v999, %v993
    %v1144 = vpack.c.b16 %v1000, %v994
    %v1145 = vpack.c.b16 %v1001, %v995
    %v1146 = vpack.c.b16 %v1002, %v996
    %v1147 = vpack.c.b16 %v1003, %v997
    %v1148 = vpack.c.b16 %v1004, %v998
    %v1149 = vpack.c.b16 %v1011, %v1005
    %v1150 = vpack.c.b16 %v1012, %v1006
    %v1151 = vpack.c.b16 %v1013, %v1007
    %v1152 = vpack.c.b16 %v1014, %v1008
    %v1153 = vpack.c.b16 %v1015, %v1009
    %v1154 = vpack.c.b16 %v1016, %v1010
    %v1155 = vpack.c.b16 %v1023, %v1017
    %v1156 = vpack.c.b16 %v1024, %v1018
    %v1157 = vpack.c.b16 %v1025, %v1019
    %v1158 = vpack.c.b16 %v1026, %v1020
    %v1159 = vpack.c.b16 %v1027, %v1021
    %v1160 = vpack.c.b16 %v1028, %v1022
    %v1161 = vpack.c.b16 %v1035, %v1029
    %v1162 = vpack.c.b16 %v1036, %v1030
    %v1163 = vpack.c.b16 %v1037, %v1031
    %v1164 = vpack.c.b16 %v1038, %v1032
    %v1165 = vpack.c.b16 %v1039, %v1033
    %v1166 = vpack.c.b16 %v1040, %v1034
    %v1167 = vpack.c.b16 %v1047, %v1041
    %v1168 = vpack.c.b16 %v1048, %v1042
    %v1169 = vpack.c.b16 %v1049, %v1043
    %v1170 = vpack.c.b16 %v1050, %v1044
    %v1171 = vpack.c.b16 %v1051, %v1045
    %v1172 = vpack.c.b16 %v1052, %v1046
    %v1173 = vpack.c.b16 %v1059, %v1053
    %v1174 = vpack.c.b16 %v1060, %v1054
    %v1175 = vpack.c.b16 %v1061, %v1055
    %v1176 = vpack.c.b16 %v1062, %v1056
    %v1177 = vpack.c.b16 %v1063, %v1057
    %v1178 = vpack.c.b16 %v1064, %v1058
    %v1179 = vpack.c.b16 %v1071, %v1065
    %v1180 = vpack.c.b16 %v1072, %v1066
    %v1181 = vpack.c.b16 %v1073, %v1067
    %v1182 = vpack.c.b16 %v1074, %v1068
    %v1183 = vpack.c.b16 %v1075, %v1069
    %v1184 = vpack.c.b16 %v1076, %v1070
    %v1185 = vpack.c.b16 %v1083, %v1077
    %v1186 = vpack.c.b16 %v1084, %v1078
    %v1187 = vpack.c.b16 %v1085, %v1079
    %v1188 = vpack.c.b16 %v1086, %v1080
    %v1189 = vpack.c.b16 %v1087, %v1081
    %v1190 = vpack.c.b16 %v1088, %v1082
    %v1191 = vpack.c.b16 %v1095, %v1089
    %v1192 = vpack.c.b16 %v1096, %v1090
    %v1193 = vpack.c.b16 %v1097, %v1091
    %v1194 = vpack.c.b16 %v1098, %v1092
    %v1195 = vpack.c.b16 %v1099, %v1093
    %v1196 = vpack.c.b16 %v1100, %v1094
    %1293 = vmatprep.subr.bf16.mxu0 %v1102
    %1294 = vmatpush1.bf16.msra.mxu0 %v1101
    %1295 = vmatprep.subr.bf16.mxu0 %v1108
    %1296 = vmatpush1.bf16.msra.mxu0 %v1107
    %1297 = vmatprep.subr.bf16.mxu0 %v1114
    %1298 = vmatpush1.bf16.msra.mxu0 %v1113
    %1299 = vmatprep.subr.bf16.mxu0 %v1120
    %1300 = vmatpush1.bf16.msra.mxu0 %v1119
    %1301 = vmatprep.subr.bf16.mxu0 %v1126
    %1302 = vmatpush1.bf16.msra.mxu0 %v1125
    %1303 = vmatprep.subr.bf16.mxu0 %v1132
    %1304 = vmatpush1.bf16.msra.mxu0 %v1131
    %1305 = vmatprep.subr.bf16.mxu0 %v1138
    %1306 = vmatpush1.bf16.msra.mxu0 %v1137
    %1307 = vmatprep.subr.bf16.mxu0 %v1144
    %1308 = vmatpush1.bf16.msra.mxu0 %v1143
    %1309 = vmatprep.subr.bf16.mxu0 %v1150
    %1310 = vmatpush1.bf16.msra.mxu0 %v1149
    %1311 = vmatprep.subr.bf16.mxu0 %v1156
    %1312 = vmatpush1.bf16.msra.mxu0 %v1155
    %1313 = vmatprep.subr.bf16.mxu0 %v1162
    %1314 = vmatpush1.bf16.msra.mxu0 %v1161
    %1315 = vmatprep.subr.bf16.mxu0 %v1168
    %1316 = vmatpush1.bf16.msra.mxu0 %v1167
    %1317 = vmatprep.subr.bf16.mxu0 %v1174
    %1318 = vmatpush1.bf16.msra.mxu0 %v1173
    %1319 = vmatprep.subr.bf16.mxu0 %v1180
    %1320 = vmatpush1.bf16.msra.mxu0 %v1179
    %1321 = vmatprep.subr.bf16.mxu0 %v1186
    %1322 = vmatpush1.bf16.msra.mxu0 %v1185
    %1323 = vmatprep.subr.bf16.mxu0 %v1192
    %1324 = vmatpush1.bf16.msra.mxu0 %v1191
    %1325 = vmatprep.mubr.bf16.mxu0 0
    %1326 = vmatmul.mubr.bf16.gmra.mrb[0].mxu0 0
    %v1327 = vpop.f32.mrb[0].mxu0
    %v1328 = vadd.f32 %v786, %v1327
    %v1329 = vpop.f32.mrb[0].mxu0
    %v1330 = vadd.f32 %v790, %v1329
    %v1331 = vpop.f32.mrb[0].mxu0
    %v1332 = vpop.f32.mrb[0].mxu0
    %1333 = vdwg.mxu0
    %1334 = vmatprep.subr.bf16.mxu0 %v1104
    %1335 = vmatpush1.bf16.msra.mxu0 %v1103
    %1336 = vmatprep.subr.bf16.mxu0 %v1110
    %1337 = vmatpush1.bf16.msra.mxu0 %v1109
    %1338 = vmatprep.subr.bf16.mxu0 %v1116
    %1339 = vmatpush1.bf16.msra.mxu0 %v1115
    %1340 = vmatprep.subr.bf16.mxu0 %v1122
    %1341 = vmatpush1.bf16.msra.mxu0 %v1121
    %1342 = vmatprep.subr.bf16.mxu0 %v1128
    %1343 = vmatpush1.bf16.msra.mxu0 %v1127
    %1344 = vmatprep.subr.bf16.mxu0 %v1134
    %1345 = vmatpush1.bf16.msra.mxu0 %v1133
    %1346 = vmatprep.subr.bf16.mxu0 %v1140
    %1347 = vmatpush1.bf16.msra.mxu0 %v1139
    %1348 = vmatprep.subr.bf16.mxu0 %v1146
    %1349 = vmatpush1.bf16.msra.mxu0 %v1145
    %1350 = vmatprep.subr.bf16.mxu0 %v1152
    %1351 = vmatpush1.bf16.msra.mxu0 %v1151
    %1352 = vmatprep.subr.bf16.mxu0 %v1158
    %1353 = vmatpush1.bf16.msra.mxu0 %v1157
    %1354 = vmatprep.subr.bf16.mxu0 %v1164
    %1355 = vmatpush1.bf16.msra.mxu0 %v1163
    %1356 = vmatprep.subr.bf16.mxu0 %v1170
    %1357 = vmatpush1.bf16.msra.mxu0 %v1169
    %1358 = vmatprep.subr.bf16.mxu0 %v1176
    %1359 = vmatpush1.bf16.msra.mxu0 %v1175
    %1360 = vmatprep.subr.bf16.mxu0 %v1182
    %1361 = vmatpush1.bf16.msra.mxu0 %v1181
    %1362 = vmatprep.subr.bf16.mxu0 %v1188
    %1363 = vmatpush1.bf16.msra.mxu0 %v1187
    %1364 = vmatprep.subr.bf16.mxu0 %v1194
    %1365 = vmatpush1.bf16.msra.mxu0 %v1193
    %1366 = vmatprep.mubr.bf16.mxu0 0
    %1367 = vmatmul.mubr.bf16.gmra.mrb[0].mxu0 0
    %v1368 = vpop.f32.mrb[0].mxu0
    %v1369 = vadd.f32 %v794, %v1368
    %v1370 = vpop.f32.mrb[0].mxu0
    %v1371 = vadd.f32 %v798, %v1370
    %v1372 = vpop.f32.mrb[0].mxu0
    %v1373 = vpop.f32.mrb[0].mxu0
    %1374 = vdwg.mxu0
    %1375 = vmatprep.subr.bf16.mxu0 %v1106
    %1376 = vmatpush1.bf16.msra.mxu0 %v1105
    %1377 = vmatprep.subr.bf16.mxu0 %v1112
    %1378 = vmatpush1.bf16.msra.mxu0 %v1111
    %1379 = vmatprep.subr.bf16.mxu0 %v1118
    %1380 = vmatpush1.bf16.msra.mxu0 %v1117
    %1381 = vmatprep.subr.bf16.mxu0 %v1124
    %1382 = vmatpush1.bf16.msra.mxu0 %v1123
    %1383 = vmatprep.subr.bf16.mxu0 %v1130
    %1384 = vmatpush1.bf16.msra.mxu0 %v1129
    %1385 = vmatprep.subr.bf16.mxu0 %v1136
    %1386 = vmatpush1.bf16.msra.mxu0 %v1135
    %1387 = vmatprep.subr.bf16.mxu0 %v1142
    %1388 = vmatpush1.bf16.msra.mxu0 %v1141
    %1389 = vmatprep.subr.bf16.mxu0 %v1148
    %1390 = vmatpush1.bf16.msra.mxu0 %v1147
    %1391 = vmatprep.subr.bf16.mxu0 %v1154
    %1392 = vmatpush1.bf16.msra.mxu0 %v1153
    %1393 = vmatprep.subr.bf16.mxu0 %v1160
    %1394 = vmatpush1.bf16.msra.mxu0 %v1159
    %1395 = vmatprep.subr.bf16.mxu0 %v1166
    %1396 = vmatpush1.bf16.msra.mxu0 %v1165
    %1397 = vmatprep.subr.bf16.mxu0 %v1172
    %1398 = vmatpush1.bf16.msra.mxu0 %v1171
    %1399 = vmatprep.subr.bf16.mxu0 %v1178
    %1400 = vmatpush1.bf16.msra.mxu0 %v1177
    %1401 = vmatprep.subr.bf16.mxu0 %v1184
    %1402 = vmatpush1.bf16.msra.mxu0 %v1183
    %1403 = vmatprep.subr.bf16.mxu0 %v1190
    %1404 = vmatpush1.bf16.msra.mxu0 %v1189
    %1405 = vmatprep.subr.bf16.mxu0 %v1196
    %1406 = vmatpush1.bf16.msra.mxu0 %v1195
    %1407 = vmatprep.mubr.bf16.mxu0 0
    %1408 = vmatmul.mubr.bf16.gmra.mrb[0].mxu0 0
    %v1409 = vpop.f32.mrb[0].mxu0
    %v1410 = vadd.f32 %v802, %v1409
    %v1411 = vpop.f32.mrb[0].mxu0
    %v1412 = vadd.f32 %v806, %v1411
    %v1413 = vpop.f32.mrb[0].mxu0
    %v1414 = vpop.f32.mrb[0].mxu0
    %1415 = vdwg.mxu0
    %v1416 = vld [vmem:[#allocation2] sm:$0xff]
    %v1417 = vld [vmem:[#allocation2 + $0x8] sm:$0xff]
    %v1418 = vld [vmem:[#allocation2 + $0x10] sm:$0xff]
    %v1419 = vadd.f32 %v1416, %v1328
    %v1420 = vxor.u32 %v1419, 2147483648
    %v1421 = vmul.f32 %v1420, 1.442695
    %v1422 = vpow.pop %v1421
    %v1423 = vadd.f32 %v1422, 1.0
    %v1424 = vrcp.pop %v1423
    %v1425 = vmul.f32 1.0, %v1424
    %v1426 = vadd.f32 %v1417, %v1330
    %v1427 = vxor.u32 %v1426, 2147483648
    %v1428 = vmul.f32 %v1427, 1.442695
    %v1429 = vpow.pop %v1428
    %v1430 = vadd.f32 %v1429, 1.0
    %v1431 = vrcp.pop %v1430
    %v1432 = vmul.f32 1.0, %v1431
    %v1433 = vmul.f32 %v1425, %v1369
    %v1434 = vadd.f32 %v1418, %v1433
    %v1435 = vtanh.pop %v1434
    %v1436 = vsub.f32 1.0, %v1432
    %v1437 = vmul.f32 %v1436, %v1435
    %v1438 = vmul.f32 %v1432, 0.0
    %v1439 = vadd.f32 %v1437, %v1438
    %s1440 = scalar_lea.vmem [#allocation2], 720
    %v1441 = vld [vmem:[%s1440 + $0x18] sm:$0xff]
    %v1442 = vld [vmem:[%s1440 + $0x20] sm:$0xff]
    %v1443 = vld [vmem:[%s1440 + $0x28] sm:$0xff]
    %v1444 = vadd.f32 %v1441, %v1371
    %v1445 = vxor.u32 %v1444, 2147483648
    %v1446 = vmul.f32 %v1445, 1.442695
    %v1447 = vpow.pop %v1446
    %v1448 = vadd.f32 %v1447, 1.0
    %v1449 = vrcp.pop %v1448
    %v1450 = vmul.f32 1.0, %v1449
    %v1451 = vadd.f32 %v1442, %v1410
    %v1452 = vxor.u32 %v1451, 2147483648
    %v1453 = vmul.f32 %v1452, 1.442695
    %v1454 = vpow.pop %v1453
    %v1455 = vadd.f32 %v1454, 1.0
    %v1456 = vrcp.pop %v1455
    %v1457 = vmul.f32 1.0, %v1456
    %v1458 = vmul.f32 %v1450, %v1412
    %v1459 = vadd.f32 %v1443, %v1458
    %v1460 = vtanh.pop %v1459
    %v1461 = vsub.f32 1.0, %v1457
    %v1462 = vmul.f32 %v1461, %v1460
    %v1463 = vmul.f32 %v1457, 0.0
    %v1464 = vadd.f32 %v1462, %v1463
    %v1465 = vld [vmem:[#allocation12] sm:$0xff]
    %v1466 = vpack.c.bf16 %v1439, %v1439
    %v1483 = vunpack.c.l.b16 %v749
    %v1484 = vunpack.c.l.b16 %v750
    %v1485 = vunpack.c.l.b16 %v751
    %v1486 = vunpack.c.l.b16 %v752
    %v1487 = vunpack.c.l.b16 %v753
    %v1488 = vunpack.c.l.b16 %v754
    %v1489 = vunpack.c.l.b16 %v755
    %v1490 = vunpack.c.l.b16 %v756
    %v1491 = vunpack.c.l.b16 %v757
    %v1492 = vunpack.c.l.b16 %v758
    %v1493 = vunpack.c.l.b16 %v759
    %v1494 = vunpack.c.l.b16 %v760
    %v1495 = vunpack.c.l.b16 %v761
    %v1496 = vunpack.c.l.b16 %v762
    %v1497 = vunpack.c.l.b16 %v763
    %v1498 = vunpack.c.l.b16 %v764
    %v1499 = vpack.c.b16 %v1484, %v1483
    %v1500 = vpack.c.b16 %v1486, %v1485
    %v1501 = vpack.c.b16 %v1488, %v1487
    %v1502 = vpack.c.b16 %v1490, %v1489
    %v1503 = vpack.c.b16 %v1492, %v1491
    %v1504 = vpack.c.b16 %v1494, %v1493
    %v1505 = vpack.c.b16 %v1496, %v1495
    %v1506 = vpack.c.b16 %v1498, %v1497
    %1515 = vmatprep.subr.bf16.mxu0 0
    %1516 = vmatpush1.bf16.msra.mxu0 %v1499
    %1517 = vmatprep.subr.bf16.mxu0 0
    %1518 = vmatpush1.bf16.msra.mxu0 %v1500
    %1519 = vmatprep.subr.bf16.mxu0 0
    %1520 = vmatpush1.bf16.msra.mxu0 %v1501
    %1521 = vmatprep.subr.bf16.mxu0 0
    %1522 = vmatpush1.bf16.msra.mxu0 %v1502
    %1523 = vmatprep.subr.bf16.mxu0 0
    %1524 = vmatpush1.bf16.msra.mxu0 %v1503
    %1525 = vmatprep.subr.bf16.mxu0 0
    %1526 = vmatpush1.bf16.msra.mxu0 %v1504
    %1527 = vmatprep.subr.bf16.mxu0 0
    %1528 = vmatpush1.bf16.msra.mxu0 %v1505
    %1529 = vmatprep.subr.bf16.mxu0 0
    %1530 = vmatpush1.bf16.msra.mxu0 %v1506
    %1531 = vmatprep.subr.bf16.mxu0 0
    %1532 = vmatpush1.bf16.msra.mxu0 0
    %1533 = vmatprep.subr.bf16.mxu0 0
    %1534 = vmatpush1.bf16.msra.mxu0 0
    %1535 = vmatprep.subr.bf16.mxu0 0
    %1536 = vmatpush1.bf16.msra.mxu0 0
    %1537 = vmatprep.subr.bf16.mxu0 0
    %1538 = vmatpush1.bf16.msra.mxu0 0
    %1539 = vmatprep.subr.bf16.mxu0 0
    %1540 = vmatpush1.bf16.msra.mxu0 0
    %1541 = vmatprep.subr.bf16.mxu0 0
    %1542 = vmatpush1.bf16.msra.mxu0 0
    %1543 = vmatprep.subr.bf16.mxu0 0
    %1544 = vmatpush1.bf16.msra.mxu0 0
    %1545 = vmatprep.subr.bf16.mxu0 0
    %1546 = vmatpush1.bf16.msra.mxu0 0
    %1547 = vmatprep.mubr.bf16.mxu0 0
    %1548 = vmatmul.mubr.bf16.gmra.mrb[0].mxu0 %v1466
    %v1549 = vpop.f32.mrb[0].mxu0
    %v1550 = vadd.f32 0.0, %v1549
    %v1551 = vpop.f32.mrb[0].mxu0
    %v1552 = vpop.f32.mrb[0].mxu0
    %v1553 = vpop.f32.mrb[0].mxu0
    %1554 = vdwg.mxu0
    %v1555 = vadd.f32 %v1465, %v1550
    %1556 = vst [vmem:[#allocation12] sm:$0xff] %v1555
    %s1557 = scalar_lea.vmem [#allocation12], 120
    %v1558 = vld [vmem:[%s1557] sm:$0xff]
    %v1559 = vpack.c.bf16 %v1464, %v1464
    %v1576 = vunpack.c.l.b16 %v765
    %v1577 = vunpack.c.l.b16 %v766
    %v1578 = vunpack.c.l.b16 %v767
    %v1579 = vunpack.c.l.b16 %v768
    %v1580 = vunpack.c.l.b16 %v769
    %v1581 = vunpack.c.l.b16 %v770
    %v1582 = vunpack.c.l.b16 %v771
    %v1583 = vunpack.c.l.b16 %v772
    %v1584 = vunpack.c.l.b16 %v773
    %v1585 = vunpack.c.l.b16 %v774
    %v1586 = vunpack.c.l.b16 %v775
    %v1587 = vunpack.c.l.b16 %v776
    %v1588 = vunpack.c.l.b16 %v777
    %v1589 = vunpack.c.l.b16 %v778
    %v1590 = vunpack.c.l.b16 %v779
    %v1591 = vunpack.c.l.b16 %v780
    %v1592 = vpack.c.b16 %v1577, %v1576
    %v1593 = vpack.c.b16 %v1579, %v1578
    %v1594 = vpack.c.b16 %v1581, %v1580
    %v1595 = vpack.c.b16 %v1583, %v1582
    %v1596 = vpack.c.b16 %v1585, %v1584
    %v1597 = vpack.c.b16 %v1587, %v1586
    %v1598 = vpack.c.b16 %v1589, %v1588
    %v1599 = vpack.c.b16 %v1591, %v1590
    %1608 = vmatprep.subr.bf16.mxu0 0
    %1609 = vmatpush1.bf16.msra.mxu0 %v1592
    %1610 = vmatprep.subr.bf16.mxu0 0
    %1611 = vmatpush1.bf16.msra.mxu0 %v1593
    %1612 = vmatprep.subr.bf16.mxu0 0
    %1613 = vmatpush1.bf16.msra.mxu0 %v1594
    %1614 = vmatprep.subr.bf16.mxu0 0
    %1615 = vmatpush1.bf16.msra.mxu0 %v1595
    %1616 = vmatprep.subr.bf16.mxu0 0
    %1617 = vmatpush1.bf16.msra.mxu0 %v1596
    %1618 = vmatprep.subr.bf16.mxu0 0
    %1619 = vmatpush1.bf16.msra.mxu0 %v1597
    %1620 = vmatprep.subr.bf16.mxu0 0
    %1621 = vmatpush1.bf16.msra.mxu0 %v1598
    %1622 = vmatprep.subr.bf16.mxu0 0
    %1623 = vmatpush1.bf16.msra.mxu0 %v1599
    %1624 = vmatprep.subr.bf16.mxu0 0
    %1625 = vmatpush1.bf16.msra.mxu0 0
    %1626 = vmatprep.subr.bf16.mxu0 0
    %1627 = vmatpush1.bf16.msra.mxu0 0
    %1628 = vmatprep.subr.bf16.mxu0 0
    %1629 = vmatpush1.bf16.msra.mxu0 0
    %1630 = vmatprep.subr.bf16.mxu0 0
    %1631 = vmatpush1.bf16.msra.mxu0 0
    %1632 = vmatprep.subr.bf16.mxu0 0
    %1633 = vmatpush1.bf16.msra.mxu0 0
    %1634 = vmatprep.subr.bf16.mxu0 0
    %1635 = vmatpush1.bf16.msra.mxu0 0
    %1636 = vmatprep.subr.bf16.mxu0 0
    %1637 = vmatpush1.bf16.msra.mxu0 0
    %1638 = vmatprep.subr.bf16.mxu0 0
    %1639 = vmatpush1.bf16.msra.mxu0 0
    %1640 = vmatprep.mubr.bf16.mxu0 0
    %1641 = vmatmul.mubr.bf16.gmra.mrb[0].mxu0 %v1559
    %v1642 = vpop.f32.mrb[0].mxu0
    %v1643 = vadd.f32 0.0, %v1642
    %v1644 = vpop.f32.mrb[0].mxu0
    %v1645 = vpop.f32.mrb[0].mxu0
    %v1646 = vpop.f32.mrb[0].mxu0
    %1647 = vdwg.mxu0
    %v1648 = vadd.f32 %v1558, %v1643
    %1649 = vst [vmem:[%s1557] sm:$0xff] %v1648
    %1650 = vmatprep.subr.bf16.mxu0 %v1102
    %1651 = vmatpush1.bf16.msra.mxu0 %v1101
    %1652 = vmatprep.subr.bf16.mxu0 %v1108
    %1653 = vmatpush1.bf16.msra.mxu0 %v1107
    %1654 = vmatprep.subr.bf16.mxu0 %v1114
    %1655 = vmatpush1.bf16.msra.mxu0 %v1113
    %1656 = vmatprep.subr.bf16.mxu0 %v1120
    %1657 = vmatpush1.bf16.msra.mxu0 %v1119
    %1658 = vmatprep.subr.bf16.mxu0 %v1126
    %1659 = vmatpush1.bf16.msra.mxu0 %v1125
    %1660 = vmatprep.subr.bf16.mxu0 %v1132
    %1661 = vmatpush1.bf16.msra.mxu0 %v1131
    %1662 = vmatprep.subr.bf16.mxu0 %v1138
    %1663 = vmatpush1.bf16.msra.mxu0 %v1137
    %1664 = vmatprep.subr.bf16.mxu0 %v1144
    %1665 = vmatpush1.bf16.msra.mxu0 %v1143
    %1666 = vmatprep.subr.bf16.mxu0 %v1150
    %1667 = vmatpush1.bf16.msra.mxu0 %v1149
    %1668 = vmatprep.subr.bf16.mxu0 %v1156
    %1669 = vmatpush1.bf16.msra.mxu0 %v1155
    %1670 = vmatprep.subr.bf16.mxu0 %v1162
    %1671 = vmatpush1.bf16.msra.mxu0 %v1161
    %1672 = vmatprep.subr.bf16.mxu0 %v1168
    %1673 = vmatpush1.bf16.msra.mxu0 %v1167
    %1674 = vmatprep.subr.bf16.mxu0 %v1174
    %1675 = vmatpush1.bf16.msra.mxu0 %v1173
    %1676 = vmatprep.subr.bf16.mxu0 %v1180
    %1677 = vmatpush1.bf16.msra.mxu0 %v1179
    %1678 = vmatprep.subr.bf16.mxu0 %v1186
    %1679 = vmatpush1.bf16.msra.mxu0 %v1185
    %1680 = vmatprep.subr.bf16.mxu0 %v1192
    %1681 = vmatpush1.bf16.msra.mxu0 %v1191
    %1682 = vmatprep.mubr.bf16.mxu0 %v1559
    %1683 = vmatmul.mubr.bf16.gmra.mrb[0].mxu0 %v1466
    %v1684 = vpop.f32.mrb[0].mxu0
    %v1685 = vadd.f32 %v786, %v1684
    %v1686 = vpop.f32.mrb[0].mxu0
    %v1687 = vadd.f32 %v790, %v1686
    %v1688 = vpop.f32.mrb[0].mxu0
    %v1689 = vpop.f32.mrb[0].mxu0
    %1690 = vdwg.mxu0
    %1691 = vmatprep.subr.bf16.mxu0 %v1104
    %1692 = vmatpush1.bf16.msra.mxu0 %v1103
    %1693 = vmatprep.subr.bf16.mxu0 %v1110
    %1694 = vmatpush1.bf16.msra.mxu0 %v1109
    %1695 = vmatprep.subr.bf16.mxu0 %v1116
    %1696 = vmatpush1.bf16.msra.mxu0 %v1115
    %1697 = vmatprep.subr.bf16.mxu0 %v1122
    %1698 = vmatpush1.bf16.msra.mxu0 %v1121
    %1699 = vmatprep.subr.bf16.mxu0 %v1128
    %1700 = vmatpush1.bf16.msra.mxu0 %v1127
    %1701 = vmatprep.subr.bf16.mxu0 %v1134
    %1702 = vmatpush1.bf16.msra.mxu0 %v1133
    %1703 = vmatprep.subr.bf16.mxu0 %v1140
    %1704 = vmatpush1.bf16.msra.mxu0 %v1139
    %1705 = vmatprep.subr.bf16.mxu0 %v1146
    %1706 = vmatpush1.bf16.msra.mxu0 %v1145
    %1707 = vmatprep.subr.bf16.mxu0 %v1152
    %1708 = vmatpush1.bf16.msra.mxu0 %v1151
    %1709 = vmatprep.subr.bf16.mxu0 %v1158
    %1710 = vmatpush1.bf16.msra.mxu0 %v1157
    %1711 = vmatprep.subr.bf16.mxu0 %v1164
    %1712 = vmatpush1.bf16.msra.mxu0 %v1163
    %1713 = vmatprep.subr.bf16.mxu0 %v1170
    %1714 = vmatpush1.bf16.msra.mxu0 %v1169
    %1715 = vmatprep.subr.bf16.mxu0 %v1176
    %1716 = vmatpush1.bf16.msra.mxu0 %v1175
    %1717 = vmatprep.subr.bf16.mxu0 %v1182
    %1718 = vmatpush1.bf16.msra.mxu0 %v1181
    %1719 = vmatprep.subr.bf16.mxu0 %v1188
    %1720 = vmatpush1.bf16.msra.mxu0 %v1187
    %1721 = vmatprep.subr.bf16.mxu0 %v1194
    %1722 = vmatpush1.bf16.msra.mxu0 %v1193
    %1723 = vmatprep.mubr.bf16.mxu0 %v1559
    %1724 = vmatmul.mubr.bf16.gmra.mrb[0].mxu0 %v1466
    %v1725 = vpop.f32.mrb[0].mxu0
    %v1726 = vadd.f32 %v794, %v1725
    %v1727 = vpop.f32.mrb[0].mxu0
    %v1728 = vadd.f32 %v798, %v1727
    %v1729 = vpop.f32.mrb[0].mxu0
    %v1730 = vpop.f32.mrb[0].mxu0
    %1731 = vdwg.mxu0
    %1732 = vmatprep.subr.bf16.mxu0 %v1106
    %1733 = vmatpush1.bf16.msra.mxu0 %v1105
    %1734 = vmatprep.subr.bf16.mxu0 %v1112
    %1735 = vmatpush1.bf16.msra.mxu0 %v1111
    %1736 = vmatprep.subr.bf16.mxu0 %v1118
    %1737 = vmatpush1.bf16.msra.mxu0 %v1117
    %1738 = vmatprep.subr.bf16.mxu0 %v1124
    %1739 = vmatpush1.bf16.msra.mxu0 %v1123
    %1740 = vmatprep.subr.bf16.mxu0 %v1130
    %1741 = vmatpush1.bf16.msra.mxu0 %v1129
    %1742 = vmatprep.subr.bf16.mxu0 %v1136
    %1743 = vmatpush1.bf16.msra.mxu0 %v1135
    %1744 = vmatprep.subr.bf16.mxu0 %v1142
    %1745 = vmatpush1.bf16.msra.mxu0 %v1141
    %1746 = vmatprep.subr.bf16.mxu0 %v1148
    %1747 = vmatpush1.bf16.msra.mxu0 %v1147
    %1748 = vmatprep.subr.bf16.mxu0 %v1154
    %1749 = vmatpush1.bf16.msra.mxu0 %v1153
    %1750 = vmatprep.subr.bf16.mxu0 %v1160
    %1751 = vmatpush1.bf16.msra.mxu0 %v1159
    %1752 = vmatprep.subr.bf16.mxu0 %v1166
    %1753 = vmatpush1.bf16.msra.mxu0 %v1165
    %1754 = vmatprep.subr.bf16.mxu0 %v1172
    %1755 = vmatpush1.bf16.msra.mxu0 %v1171
    %1756 = vmatprep.subr.bf16.mxu0 %v1178
    %1757 = vmatpush1.bf16.msra.mxu0 %v1177
    %1758 = vmatprep.subr.bf16.mxu0 %v1184
    %1759 = vmatpush1.bf16.msra.mxu0 %v1183
    %1760 = vmatprep.subr.bf16.mxu0 %v1190
    %1761 = vmatpush1.bf16.msra.mxu0 %v1189
    %1762 = vmatprep.subr.bf16.mxu0 %v1196
    %1763 = vmatpush1.bf16.msra.mxu0 %v1195
    %1764 = vmatprep.mubr.bf16.mxu0 %v1559
    %1765 = vmatmul.mubr.bf16.gmra.mrb[0].mxu0 %v1466
    %v1766 = vpop.f32.mrb[0].mxu0
    %v1767 = vadd.f32 %v802, %v1766
    %v1768 = vpop.f32.mrb[0].mxu0
    %v1769 = vadd.f32 %v806, %v1768
    %v1770 = vpop.f32.mrb[0].mxu0
    %v1771 = vpop.f32.mrb[0].mxu0
    %1772 = vdwg.mxu0
    %s1773 = scalar_lea.vmem [#allocation2], 48
    %v1774 = vld [vmem:[%s1773] sm:$0xff]
    %v1775 = vld [vmem:[%s1773 + $0x8] sm:$0xff]
    %v1776 = vld [vmem:[%s1773 + $0x10] sm:$0xff]
    %v1777 = vadd.f32 %v1774, %v1685
    %v1778 = vxor.u32 %v1777, 2147483648
    %v1779 = vmul.f32 %v1778, 1.442695
    %v1780 = vpow.pop %v1779
    %v1781 = vadd.f32 %v1780, 1.0
    %v1782 = vrcp.pop %v1781
    %v1783 = vmul.f32 1.0, %v1782
    %v1784 = vadd.f32 %v1775, %v1687
    %v1785 = vxor.u32 %v1784, 2147483648
    %v1786 = vmul.f32 %v1785, 1.442695
    %v1787 = vpow.pop %v1786
    %v1788 = vadd.f32 %v1787, 1.0
    %v1789 = vrcp.pop %v1788
    %v1790 = vmul.f32 1.0, %v1789
    %v1791 = vmul.f32 %v1783, %v1726
    %v1792 = vadd.f32 %v1776, %v1791
    %v1793 = vtanh.pop %v1792
    %v1794 = vsub.f32 1.0, %v1790
    %v1795 = vmul.f32 %v1794, %v1793
    %v1796 = vmul.f32 %v1790, %v1439
    %v1797 = vadd.f32 %v1795, %v1796
    %s1798 = scalar_lea.vmem [#allocation2], 672
    %v1799 = vld [vmem:[%s1798 + $0x18] sm:$0xff]
    %v1800 = vld [vmem:[%s1798 + $0x20] sm:$0xff]
    %v1801 = vld [vmem:[%s1798 + $0x28] sm:$0xff]
    %v1802 = vadd.f32 %v1799, %v1728
    %v1803 = vxor.u32 %v1802, 2147483648
    %v1804 = vmul.f32 %v1803, 1.442695
    %v1805 = vpow.pop %v1804
    %v1806 = vadd.f32 %v1805, 1.0
    %v1807 = vrcp.pop %v1806
    %v1808 = vmul.f32 1.0, %v1807
    %v1809 = vadd.f32 %v1800, %v1767
    %v1810 = vxor.u32 %v1809, 2147483648
    %v1811 = vmul.f32 %v1810, 1.442695
    %v1812 = vpow.pop %v1811
    %v1813 = vadd.f32 %v1812, 1.0
    %v1814 = vrcp.pop %v1813
    %v1815 = vmul.f32 1.0, %v1814
    %v1816 = vmul.f32 %v1808, %v1769
    %v1817 = vadd.f32 %v1801, %v1816
    %v1818 = vtanh.pop %v1817
    %v1819 = vsub.f32 1.0, %v1815
    %v1820 = vmul.f32 %v1819, %v1818
    %v1821 = vmul.f32 %v1815, %v1464
    %v1822 = vadd.f32 %v1820, %v1821
    %s1823 = scalar_lea.vmem [#allocation12], 8
    %v1824 = vld [vmem:[%s1823] sm:$0xff]
    %v1825 = vpack.c.bf16 %v1797, %v1797
    %1826 = vmatprep.subr.bf16.mxu0 0
    %1827 = vmatpush1.bf16.msra.mxu0 %v1499
    %1828 = vmatprep.subr.bf16.mxu0 0
    %1829 = vmatpush1.bf16.msra.mxu0 %v1500
    %1830 = vmatprep.subr.bf16.mxu0 0
    %1831 = vmatpush1.bf16.msra.mxu0 %v1501
    %1832 = vmatprep.subr.bf16.mxu0 0
    %1833 = vmatpush1.bf16.msra.mxu0 %v1502
    %1834 = vmatprep.subr.bf16.mxu0 0
    %1835 = vmatpush1.bf16.msra.mxu0 %v1503
    %1836 = vmatprep.subr.bf16.mxu0 0
    %1837 = vmatpush1.bf16.msra.mxu0 %v1504
    %1838 = vmatprep.subr.bf16.mxu0 0
    %1839 = vmatpush1.bf16.msra.mxu0 %v1505
    %1840 = vmatprep.subr.bf16.mxu0 0
    %1841 = vmatpush1.bf16.msra.mxu0 %v1506
    %1842 = vmatprep.subr.bf16.mxu0 0
    %1843 = vmatpush1.bf16.msra.mxu0 0
    %1844 = vmatprep.subr.bf16.mxu0 0
    %1845 = vmatpush1.bf16.msra.mxu0 0
    %1846 = vmatprep.subr.bf16.mxu0 0
    %1847 = vmatpush1.bf16.msra.mxu0 0
    %1848 = vmatprep.subr.bf16.mxu0 0
    %1849 = vmatpush1.bf16.msra.mxu0 0
    %1850 = vmatprep.subr.bf16.mxu0 0
    %1851 = vmatpush1.bf16.msra.mxu0 0
    %1852 = vmatprep.subr.bf16.mxu0 0
    %1853 = vmatpush1.bf16.msra.mxu0 0
    %1854 = vmatprep.subr.bf16.mxu0 0
    %1855 = vmatpush1.bf16.msra.mxu0 0
    %1856 = vmatprep.subr.bf16.mxu0 0
    %1857 = vmatpush1.bf16.msra.mxu0 0
    %1858 = vmatprep.mubr.bf16.mxu0 0
    %1859 = vmatmul.mubr.bf16.gmra.mrb[0].mxu0 %v1825
    %v1860 = vpop.f32.mrb[0].mxu0
    %v1861 = vadd.f32 0.0, %v1860
    %v1862 = vpop.f32.mrb[0].mxu0
    %v1863 = vpop.f32.mrb[0].mxu0
    %v1864 = vpop.f32.mrb[0].mxu0
    %1865 = vdwg.mxu0
    %v1866 = vadd.f32 %v1824, %v1861
    %1867 = vst [vmem:[%s1823] sm:$0xff] %v1866
    %s1868 = scalar_lea.vmem [#allocation12], 112
    %v1869 = vld [vmem:[%s1868] sm:$0xff]
    %v1870 = vpack.c.bf16 %v1822, %v1822
    %1871 = vmatprep.subr.bf16.mxu0 0
    %1872 = vmatpush1.bf16.msra.mxu0 %v1592
    %1873 = vmatprep.subr.bf16.mxu0 0
    %1874 = vmatpush1.bf16.msra.mxu0 %v1593
    %1875 = vmatprep.subr.bf16.mxu0 0
    %1876 = vmatpush1.bf16.msra.mxu0 %v1594
    %1877 = vmatprep.subr.bf16.mxu0 0
    %1878 = vmatpush1.bf16.msra.mxu0 %v1595
    %1879 = vmatprep.subr.bf16.mxu0 0
    %1880 = vmatpush1.bf16.msra.mxu0 %v1596
    %1881 = vmatprep.subr.bf16.mxu0 0
    %1882 = vmatpush1.bf16.msra.mxu0 %v1597
    %1883 = vmatprep.subr.bf16.mxu0 0
    %1884 = vmatpush1.bf16.msra.mxu0 %v1598
    %1885 = vmatprep.subr.bf16.mxu0 0
    %1886 = vmatpush1.bf16.msra.mxu0 %v1599
    %1887 = vmatprep.subr.bf16.mxu0 0
    %1888 = vmatpush1.bf16.msra.mxu0 0
    %1889 = vmatprep.subr.bf16.mxu0 0
    %1890 = vmatpush1.bf16.msra.mxu0 0
    %1891 = vmatprep.subr.bf16.mxu0 0
    %1892 = vmatpush1.bf16.msra.mxu0 0
    %1893 = vmatprep.subr.bf16.mxu0 0
    %1894 = vmatpush1.bf16.msra.mxu0 0
    %1895 = vmatprep.subr.bf16.mxu0 0
    %1896 = vmatpush1.bf16.msra.mxu0 0
    %1897 = vmatprep.subr.bf16.mxu0 0
    %1898 = vmatpush1.bf16.msra.mxu0 0
    %1899 = vmatprep.subr.bf16.mxu0 0
    %1900 = vmatpush1.bf16.msra.mxu0 0
    %1901 = vmatprep.subr.bf16.mxu0 0
    %1902 = vmatpush1.bf16.msra.mxu0 0
    %1903 = vmatprep.mubr.bf16.mxu0 0
    %1904 = vmatmul.mubr.bf16.gmra.mrb[0].mxu0 %v1870
    %v1905 = vpop.f32.mrb[0].mxu0
    %v1906 = vadd.f32 0.0, %v1905
    %v1907 = vpop.f32.mrb[0].mxu0
    %v1908 = vpop.f32.mrb[0].mxu0
    %v1909 = vpop.f32.mrb[0].mxu0
    %1910 = vdwg.mxu0
    %v1911 = vadd.f32 %v1869, %v1906
    %1912 = vst [vmem:[%s1868] sm:$0xff] %v1911
    %1913 = vmatprep.subr.bf16.mxu0 %v1102
    %1914 = vmatpush1.bf16.msra.mxu0 %v1101
    %1915 = vmatprep.subr.bf16.mxu0 %v1108
    %1916 = vmatpush1.bf16.msra.mxu0 %v1107
    %1917 = vmatprep.subr.bf16.mxu0 %v1114
    %1918 = vmatpush1.bf16.msra.mxu0 %v1113
    %1919 = vmatprep.subr.bf16.mxu0 %v1120
    %1920 = vmatpush1.bf16.msra.mxu0 %v1119
    %1921 = vmatprep.subr.bf16.mxu0 %v1126
    %1922 = vmatpush1.bf16.msra.mxu0 %v1125
    %1923 = vmatprep.subr.bf16.mxu0 %v1132
    %1924 = vmatpush1.bf16.msra.mxu0 %v1131
    %1925 = vmatprep.subr.bf16.mxu0 %v1138
    %1926 = vmatpush1.bf16.msra.mxu0 %v1137
    %1927 = vmatprep.subr.bf16.mxu0 %v1144
    %1928 = vmatpush1.bf16.msra.mxu0 %v1143
    %1929 = vmatprep.subr.bf16.mxu0 %v1150
    %1930 = vmatpush1.bf16.msra.mxu0 %v1149
    %1931 = vmatprep.subr.bf16.mxu0 %v1156
    %1932 = vmatpush1.bf16.msra.mxu0 %v1155
    %1933 = vmatprep.subr.bf16.mxu0 %v1162
    %1934 = vmatpush1.bf16.msra.mxu0 %v1161
    %1935 = vmatprep.subr.bf16.mxu0 %v1168
    %1936 = vmatpush1.bf16.msra.mxu0 %v1167
    %1937 = vmatprep.subr.bf16.mxu0 %v1174
    %1938 = vmatpush1.bf16.msra.mxu0 %v1173
    %1939 = vmatprep.subr.bf16.mxu0 %v1180
    %1940 = vmatpush1.bf16.msra.mxu0 %v1179
    %1941 = vmatprep.subr.bf16.mxu0 %v1186
    %1942 = vmatpush1.bf16.msra.mxu0 %v1185
    %1943 = vmatprep.subr.bf16.mxu0 %v1192
    %1944 = vmatpush1.bf16.msra.mxu0 %v1191
    %1945 = vmatprep.mubr.bf16.mxu0 %v1870
    %1946 = vmatmul.mubr.bf16.gmra.mrb[0].mxu0 %v1825
    %v1947 = vpop.f32.mrb[0].mxu0
    %v1948 = vadd.f32 %v786, %v1947
    %v1949 = vpop.f32.mrb[0].mxu0
    %v1950 = vadd.f32 %v790, %v1949
    %v1951 = vpop.f32.mrb[0].mxu0
    %v1952 = vpop.f32.mrb[0].mxu0
    %1953 = vdwg.mxu0
    %1954 = vmatprep.subr.bf16.mxu0 %v1104
    %1955 = vmatpush1.bf16.msra.mxu0 %v1103
    %1956 = vmatprep.subr.bf16.mxu0 %v1110
    %1957 = vmatpush1.bf16.msra.mxu0 %v1109
    %1958 = vmatprep.subr.bf16.mxu0 %v1116
    %1959 = vmatpush1.bf16.msra.mxu0 %v1115
    %1960 = vmatprep.subr.bf16.mxu0 %v1122
    %1961 = vmatpush1.bf16.msra.mxu0 %v1121
    %1962 = vmatprep.subr.bf16.mxu0 %v1128
    %1963 = vmatpush1.bf16.msra.mxu0 %v1127
    %1964 = vmatprep.subr.bf16.mxu0 %v1134
    %1965 = vmatpush1.bf16.msra.mxu0 %v1133
    %1966 = vmatprep.subr.bf16.mxu0 %v1140
    %1967 = vmatpush1.bf16.msra.mxu0 %v1139
    %1968 = vmatprep.subr.bf16.mxu0 %v1146
    %1969 = vmatpush1.bf16.msra.mxu0 %v1145
    %1970 = vmatprep.subr.bf16.mxu0 %v1152
    %1971 = vmatpush1.bf16.msra.mxu0 %v1151
    %1972 = vmatprep.subr.bf16.mxu0 %v1158
    %1973 = vmatpush1.bf16.msra.mxu0 %v1157
    %1974 = vmatprep.subr.bf16.mxu0 %v1164
    %1975 = vmatpush1.bf16.msra.mxu0 %v1163
    %1976 = vmatprep.subr.bf16.mxu0 %v1170
    %1977 = vmatpush1.bf16.msra.mxu0 %v1169
    %1978 = vmatprep.subr.bf16.mxu0 %v1176
    %1979 = vmatpush1.bf16.msra.mxu0 %v1175
    %1980 = vmatprep.subr.bf16.mxu0 %v1182
    %1981 = vmatpush1.bf16.msra.mxu0 %v1181
    %1982 = vmatprep.subr.bf16.mxu0 %v1188
    %1983 = vmatpush1.bf16.msra.mxu0 %v1187
    %1984 = vmatprep.subr.bf16.mxu0 %v1194
    %1985 = vmatpush1.bf16.msra.mxu0 %v1193
    %1986 = vmatprep.mubr.bf16.mxu0 %v1870
    %1987 = vmatmul.mubr.bf16.gmra.mrb[0].mxu0 %v1825
    %v1988 = vpop.f32.mrb[0].mxu0
    %v1989 = vadd.f32 %v794, %v1988
    %v1990 = vpop.f32.mrb[0].mxu0
    %v1991 = vadd.f32 %v798, %v1990
    %v1992 = vpop.f32.mrb[0].mxu0
    %v1993 = vpop.f32.mrb[0].mxu0
    %1994 = vdwg.mxu0
    %1995 = vmatprep.subr.bf16.mxu0 %v1106
    %1996 = vmatpush1.bf16.msra.mxu0 %v1105
    %1997 = vmatprep.subr.bf16.mxu0 %v1112
    %1998 = vmatpush1.bf16.msra.mxu0 %v1111
    %1999 = vmatprep.subr.bf16.mxu0 %v1118
    %2000 = vmatpush1.bf16.msra.mxu0 %v1117
    %2001 = vmatprep.subr.bf16.mxu0 %v1124
    %2002 = vmatpush1.bf16.msra.mxu0 %v1123
    %2003 = vmatprep.subr.bf16.mxu0 %v1130
    %2004 = vmatpush1.bf16.msra.mxu0 %v1129
    %2005 = vmatprep.subr.bf16.mxu0 %v1136
    %2006 = vmatpush1.bf16.msra.mxu0 %v1135
    %2007 = vmatprep.subr.bf16.mxu0 %v1142
    %2008 = vmatpush1.bf16.msra.mxu0 %v1141
    %2009 = vmatprep.subr.bf16.mxu0 %v1148
    %2010 = vmatpush1.bf16.msra.mxu0 %v1147
    %2011 = vmatprep.subr.bf16.mxu0 %v1154
    %2012 = vmatpush1.bf16.msra.mxu0 %v1153
    %2013 = vmatprep.subr.bf16.mxu0 %v1160
    %2014 = vmatpush1.bf16.msra.mxu0 %v1159
    %2015 = vmatprep.subr.bf16.mxu0 %v1166
    %2016 = vmatpush1.bf16.msra.mxu0 %v1165
    %2017 = vmatprep.subr.bf16.mxu0 %v1172
    %2018 = vmatpush1.bf16.msra.mxu0 %v1171
    %2019 = vmatprep.subr.bf16.mxu0 %v1178
    %2020 = vmatpush1.bf16.msra.mxu0 %v1177
    %2021 = vmatprep.subr.bf16.mxu0 %v1184
    %2022 = vmatpush1.bf16.msra.mxu0 %v1183
    %2023 = vmatprep.subr.bf16.mxu0 %v1190
    %2024 = vmatpush1.bf16.msra.mxu0 %v1189
    %2025 = vmatprep.subr.bf16.mxu0 %v1196
    %2026 = vmatpush1.bf16.msra.mxu0 %v1195
    %2027 = vmatprep.mubr.bf16.mxu0 %v1870
    %2028 = vmatmul.mubr.bf16.gmra.mrb[0].mxu0 %v1825
    %v2029 = vpop.f32.mrb[0].mxu0
    %v2030 = vadd.f32 %v802, %v2029
    %v2031 = vpop.f32.mrb[0].mxu0
    %v2032 = vadd.f32 %v806, %v2031
    %v2033 = vpop.f32.mrb[0].mxu0
    %v2034 = vpop.f32.mrb[0].mxu0
    %2035 = vdwg.mxu0
    %s2036 = scalar_lea.vmem [#allocation2], 96
    %v2037 = vld [vmem:[%s2036] sm:$0xff]
    %v2038 = vld [vmem:[%s2036 + $0x8] sm:$0xff]
    %v2039 = vld [vmem:[%s2036 + $0x10] sm:$0xff]
    %v2040 = vadd.f32 %v2037, %v1948
    %v2041 = vxor.u32 %v2040, 2147483648
    %v2042 = vmul.f32 %v2041, 1.442695
    %v2043 = vpow.pop %v2042
    %v2044 = vadd.f32 %v2043, 1.0
    %v2045 = vrcp.pop %v2044
    %v2046 = vmul.f32 1.0, %v2045
    %v2047 = vadd.f32 %v2038, %v1950
    %v2048 = vxor.u32 %v2047, 2147483648
    %v2049 = vmul.f32 %v2048, 1.442695
    %v2050 = vpow.pop %v2049
    %v2051 = vadd.f32 %v2050, 1.0
    %v2052 = vrcp.pop %v2051
    %v2053 = vmul.f32 1.0, %v2052
    %v2054 = vmul.f32 %v2046, %v1989
    %v2055 = vadd.f32 %v2039, %v2054
    %v2056 = vtanh.pop %v2055
    %v2057 = vsub.f32 1.0, %v2053
    %v2058 = vmul.f32 %v2057, %v2056
    %v2059 = vmul.f32 %v2053, %v1797
    %v2060 = vadd.f32 %v2058, %v2059
    %s2061 = scalar_lea.vmem [#allocation2], 624
    %v2062 = vld [vmem:[%s2061 + $0x18] sm:$0xff]
    %v2063 = vld [vmem:[%s2061 + $0x20] sm:$0xff]
    %v2064 = vld [vmem:[%s2061 + $0x28] sm:$0xff]
    %v2065 = vadd.f32 %v2062, %v1991
    %v2066 = vxor.u32 %v2065, 2147483648
    %v2067 = vmul.f32 %v2066, 1.442695
    %v2068 = vpow.pop %v2067
    %v2069 = vadd.f32 %v2068, 1.0
    %v2070 = vrcp.pop %v2069
    %v2071 = vmul.f32 1.0, %v2070
    %v2072 = vadd.f32 %v2063, %v2030
    %v2073 = vxor.u32 %v2072, 2147483648
    %v2074 = vmul.f32 %v2073, 1.442695
    %v2075 = vpow.pop %v2074
    %v2076 = vadd.f32 %v2075, 1.0
    %v2077 = vrcp.pop %v2076
    %v2078 = vmul.f32 1.0, %v2077
    %v2079 = vmul.f32 %v2071, %v2032
    %v2080 = vadd.f32 %v2064, %v2079
    %v2081 = vtanh.pop %v2080
    %v2082 = vsub.f32 1.0, %v2078
    %v2083 = vmul.f32 %v2082, %v2081
    %v2084 = vmul.f32 %v2078, %v1822
    %v2085 = vadd.f32 %v2083, %v2084
    %s2086 = scalar_lea.vmem [#allocation12], 16
    %v2087 = vld [vmem:[%s2086] sm:$0xff]
    %v2088 = vpack.c.bf16 %v2060, %v2060
    %2089 = vmatprep.subr.bf16.mxu0 0
    %2090 = vmatpush1.bf16.msra.mxu0 %v1499
    %2091 = vmatprep.subr.bf16.mxu0 0
    %2092 = vmatpush1.bf16.msra.mxu0 %v1500
    %2093 = vmatprep.subr.bf16.mxu0 0
    %2094 = vmatpush1.bf16.msra.mxu0 %v1501
    %2095 = vmatprep.subr.bf16.mxu0 0
    %2096 = vmatpush1.bf16.msra.mxu0 %v1502
    %2097 = vmatprep.subr.bf16.mxu0 0
    %2098 = vmatpush1.bf16.msra.mxu0 %v1503
    %2099 = vmatprep.subr.bf16.mxu0 0
    %2100 = vmatpush1.bf16.msra.mxu0 %v1504
    %2101 = vmatprep.subr.bf16.mxu0 0
    %2102 = vmatpush1.bf16.msra.mxu0 %v1505
    %2103 = vmatprep.subr.bf16.mxu0 0
    %2104 = vmatpush1.bf16.msra.mxu0 %v1506
    %2105 = vmatprep.subr.bf16.mxu0 0
    %2106 = vmatpush1.bf16.msra.mxu0 0
    %2107 = vmatprep.subr.bf16.mxu0 0
    %2108 = vmatpush1.bf16.msra.mxu0 0
    %2109 = vmatprep.subr.bf16.mxu0 0
    %2110 = vmatpush1.bf16.msra.mxu0 0
    %2111 = vmatprep.subr.bf16.mxu0 0
    %2112 = vmatpush1.bf16.msra.mxu0 0
    %2113 = vmatprep.subr.bf16.mxu0 0
    %2114 = vmatpush1.bf16.msra.mxu0 0
    %2115 = vmatprep.subr.bf16.mxu0 0
    %2116 = vmatpush1.bf16.msra.mxu0 0
    %2117 = vmatprep.subr.bf16.mxu0 0
    %2118 = vmatpush1.bf16.msra.mxu0 0
    %2119 = vmatprep.subr.bf16.mxu0 0
    %2120 = vmatpush1.bf16.msra.mxu0 0
    %2121 = vmatprep.mubr.bf16.mxu0 0
    %2122 = vmatmul.mubr.bf16.gmra.mrb[0].mxu0 %v2088
    %v2123 = vpop.f32.mrb[0].mxu0
    %v2124 = vadd.f32 0.0, %v2123
    %v2125 = vpop.f32.mrb[0].mxu0
    %v2126 = vpop.f32.mrb[0].mxu0
    %v2127 = vpop.f32.mrb[0].mxu0
    %2128 = vdwg.mxu0
    %v2129 = vadd.f32 %v2087, %v2124
    %2130 = vst [vmem:[%s2086] sm:$0xff] %v2129
    %s2131 = scalar_lea.vmem [#allocation12], 104
    %v2132 = vld [vmem:[%s2131] sm:$0xff]
    %v2133 = vpack.c.bf16 %v2085, %v2085
    %2134 = vmatprep.subr.bf16.mxu0 0
    %2135 = vmatpush1.bf16.msra.mxu0 %v1592
    %2136 = vmatprep.subr.bf16.mxu0 0
    %2137 = vmatpush1.bf16.msra.mxu0 %v1593
    %2138 = vmatprep.subr.bf16.mxu0 0
    %2139 = vmatpush1.bf16.msra.mxu0 %v1594
    %2140 = vmatprep.subr.bf16.mxu0 0
    %2141 = vmatpush1.bf16.msra.mxu0 %v1595
    %2142 = vmatprep.subr.bf16.mxu0 0
    %2143 = vmatpush1.bf16.msra.mxu0 %v1596
    %2144 = vmatprep.subr.bf16.mxu0 0
    %2145 = vmatpush1.bf16.msra.mxu0 %v1597
    %2146 = vmatprep.subr.bf16.mxu0 0
    %2147 = vmatpush1.bf16.msra.mxu0 %v1598
    %2148 = vmatprep.subr.bf16.mxu0 0
    %2149 = vmatpush1.bf16.msra.mxu0 %v1599
    %2150 = vmatprep.subr.bf16.mxu0 0
    %2151 = vmatpush1.bf16.msra.mxu0 0
    %2152 = vmatprep.subr.bf16.mxu0 0
    %2153 = vmatpush1.bf16.msra.mxu0 0
    %2154 = vmatprep.subr.bf16.mxu0 0
    %2155 = vmatpush1.bf16.msra.mxu0 0
    %2156 = vmatprep.subr.bf16.mxu0 0
    %2157 = vmatpush1.bf16.msra.mxu0 0
    %2158 = vmatprep.subr.bf16.mxu0 0
    %2159 = vmatpush1.bf16.msra.mxu0 0
    %2160 = vmatprep.subr.bf16.mxu0 0
    %2161 = vmatpush1.bf16.msra.mxu0 0
    %2162 = vmatprep.subr.bf16.mxu0 0
    %2163 = vmatpush1.bf16.msra.mxu0 0
    %2164 = vmatprep.subr.bf16.mxu0 0
    %2165 = vmatpush1.bf16.msra.mxu0 0
    %2166 = vmatprep.mubr.bf16.mxu0 0
    %2167 = vmatmul.mubr.bf16.gmra.mrb[0].mxu0 %v2133
    %v2168 = vpop.f32.mrb[0].mxu0
    %v2169 = vadd.f32 0.0, %v2168
    %v2170 = vpop.f32.mrb[0].mxu0
    %v2171 = vpop.f32.mrb[0].mxu0
    %v2172 = vpop.f32.mrb[0].mxu0
    %2173 = vdwg.mxu0
    %v2174 = vadd.f32 %v2132, %v2169
    %2175 = vst [vmem:[%s2131] sm:$0xff] %v2174
    %2176 = vmatprep.subr.bf16.mxu0 %v1102
    %2177 = vmatpush1.bf16.msra.mxu0 %v1101
    %2178 = vmatprep.subr.bf16.mxu0 %v1108
    %2179 = vmatpush1.bf16.msra.mxu0 %v1107
    %2180 = vmatprep.subr.bf16.mxu0 %v1114
    %2181 = vmatpush1.bf16.msra.mxu0 %v1113
    %2182 = vmatprep.subr.bf16.mxu0 %v1120
    %2183 = vmatpush1.bf16.msra.mxu0 %v1119
    %2184 = vmatprep.subr.bf16.mxu0 %v1126
    %2185 = vmatpush1.bf16.msra.mxu0 %v1125
    %2186 = vmatprep.subr.bf16.mxu0 %v1132
    %2187 = vmatpush1.bf16.msra.mxu0 %v1131
    %2188 = vmatprep.subr.bf16.mxu0 %v1138
    %2189 = vmatpush1.bf16.msra.mxu0 %v1137
    %2190 = vmatprep.subr.bf16.mxu0 %v1144
    %2191 = vmatpush1.bf16.msra.mxu0 %v1143
    %2192 = vmatprep.subr.bf16.mxu0 %v1150
    %2193 = vmatpush1.bf16.msra.mxu0 %v1149
    %2194 = vmatprep.subr.bf16.mxu0 %v1156
    %2195 = vmatpush1.bf16.msra.mxu0 %v1155
    %2196 = vmatprep.subr.bf16.mxu0 %v1162
    %2197 = vmatpush1.bf16.msra.mxu0 %v1161
    %2198 = vmatprep.subr.bf16.mxu0 %v1168
    %2199 = vmatpush1.bf16.msra.mxu0 %v1167
    %2200 = vmatprep.subr.bf16.mxu0 %v1174
    %2201 = vmatpush1.bf16.msra.mxu0 %v1173
    %2202 = vmatprep.subr.bf16.mxu0 %v1180
    %2203 = vmatpush1.bf16.msra.mxu0 %v1179
    %2204 = vmatprep.subr.bf16.mxu0 %v1186
    %2205 = vmatpush1.bf16.msra.mxu0 %v1185
    %2206 = vmatprep.subr.bf16.mxu0 %v1192
    %2207 = vmatpush1.bf16.msra.mxu0 %v1191
    %2208 = vmatprep.mubr.bf16.mxu0 %v2133
    %2209 = vmatmul.mubr.bf16.gmra.mrb[0].mxu0 %v2088
    %v2210 = vpop.f32.mrb[0].mxu0
    %v2211 = vadd.f32 %v786, %v2210
    %v2212 = vpop.f32.mrb[0].mxu0
    %v2213 = vadd.f32 %v790, %v2212
    %v2214 = vpop.f32.mrb[0].mxu0
    %v2215 = vpop.f32.mrb[0].mxu0
    %2216 = vdwg.mxu0
    %2217 = vmatprep.subr.bf16.mxu0 %v1104
    %2218 = vmatpush1.bf16.msra.mxu0 %v1103
    %2219 = vmatprep.subr.bf16.mxu0 %v1110
    %2220 = vmatpush1.bf16.msra.mxu0 %v1109
    %2221 = vmatprep.subr.bf16.mxu0 %v1116
    %2222 = vmatpush1.bf16.msra.mxu0 %v1115
    %2223 = vmatprep.subr.bf16.mxu0 %v1122
    %2224 = vmatpush1.bf16.msra.mxu0 %v1121
    %2225 = vmatprep.subr.bf16.mxu0 %v1128
    %2226 = vmatpush1.bf16.msra.mxu0 %v1127
    %2227 = vmatprep.subr.bf16.mxu0 %v1134
    %2228 = vmatpush1.bf16.msra.mxu0 %v1133
    %2229 = vmatprep.subr.bf16.mxu0 %v1140
    %2230 = vmatpush1.bf16.msra.mxu0 %v1139
    %2231 = vmatprep.subr.bf16.mxu0 %v1146
    %2232 = vmatpush1.bf16.msra.mxu0 %v1145
    %2233 = vmatprep.subr.bf16.mxu0 %v1152
    %2234 = vmatpush1.bf16.msra.mxu0 %v1151
    %2235 = vmatprep.subr.bf16.mxu0 %v1158
    %2236 = vmatpush1.bf16.msra.mxu0 %v1157
    %2237 = vmatprep.subr.bf16.mxu0 %v1164
    %2238 = vmatpush1.bf16.msra.mxu0 %v1163
    %2239 = vmatprep.subr.bf16.mxu0 %v1170
    %2240 = vmatpush1.bf16.msra.mxu0 %v1169
    %2241 = vmatprep.subr.bf16.mxu0 %v1176
    %2242 = vmatpush1.bf16.msra.mxu0 %v1175
    %2243 = vmatprep.subr.bf16.mxu0 %v1182
    %2244 = vmatpush1.bf16.msra.mxu0 %v1181
    %2245 = vmatprep.subr.bf16.mxu0 %v1188
    %2246 = vmatpush1.bf16.msra.mxu0 %v1187
    %2247 = vmatprep.subr.bf16.mxu0 %v1194
    %2248 = vmatpush1.bf16.msra.mxu0 %v1193
    %2249 = vmatprep.mubr.bf16.mxu0 %v2133
    %2250 = vmatmul.mubr.bf16.gmra.mrb[0].mxu0 %v2088
    %v2251 = vpop.f32.mrb[0].mxu0
    %v2252 = vadd.f32 %v794, %v2251
    %v2253 = vpop.f32.mrb[0].mxu0
    %v2254 = vadd.f32 %v798, %v2253
    %v2255 = vpop.f32.mrb[0].mxu0
    %v2256 = vpop.f32.mrb[0].mxu0
    %2257 = vdwg.mxu0
    %2258 = vmatprep.subr.bf16.mxu0 %v1106
    %2259 = vmatpush1.bf16.msra.mxu0 %v1105
    %2260 = vmatprep.subr.bf16.mxu0 %v1112
    %2261 = vmatpush1.bf16.msra.mxu0 %v1111
    %2262 = vmatprep.subr.bf16.mxu0 %v1118
    %2263 = vmatpush1.bf16.msra.mxu0 %v1117
    %2264 = vmatprep.subr.bf16.mxu0 %v1124
    %2265 = vmatpush1.bf16.msra.mxu0 %v1123
    %2266 = vmatprep.subr.bf16.mxu0 %v1130
    %2267 = vmatpush1.bf16.msra.mxu0 %v1129
    %2268 = vmatprep.subr.bf16.mxu0 %v1136
    %2269 = vmatpush1.bf16.msra.mxu0 %v1135
    %2270 = vmatprep.subr.bf16.mxu0 %v1142
    %2271 = vmatpush1.bf16.msra.mxu0 %v1141
    %2272 = vmatprep.subr.bf16.mxu0 %v1148
    %2273 = vmatpush1.bf16.msra.mxu0 %v1147
    %2274 = vmatprep.subr.bf16.mxu0 %v1154
    %2275 = vmatpush1.bf16.msra.mxu0 %v1153
    %2276 = vmatprep.subr.bf16.mxu0 %v1160
    %2277 = vmatpush1.bf16.msra.mxu0 %v1159
    %2278 = vmatprep.subr.bf16.mxu0 %v1166
    %2279 = vmatpush1.bf16.msra.mxu0 %v1165
    %2280 = vmatprep.subr.bf16.mxu0 %v1172
    %2281 = vmatpush1.bf16.msra.mxu0 %v1171
    %2282 = vmatprep.subr.bf16.mxu0 %v1178
    %2283 = vmatpush1.bf16.msra.mxu0 %v1177
    %2284 = vmatprep.subr.bf16.mxu0 %v1184
    %2285 = vmatpush1.bf16.msra.mxu0 %v1183
    %2286 = vmatprep.subr.bf16.mxu0 %v1190
    %2287 = vmatpush1.bf16.msra.mxu0 %v1189
    %2288 = vmatprep.subr.bf16.mxu0 %v1196
    %2289 = vmatpush1.bf16.msra.mxu0 %v1195
    %2290 = vmatprep.mubr.bf16.mxu0 %v2133
    %2291 = vmatmul.mubr.bf16.gmra.mrb[0].mxu0 %v2088
    %v2292 = vpop.f32.mrb[0].mxu0
    %v2293 = vadd.f32 %v802, %v2292
    %v2294 = vpop.f32.mrb[0].mxu0
    %v2295 = vadd.f32 %v806, %v2294
    %v2296 = vpop.f32.mrb[0].mxu0
    %v2297 = vpop.f32.mrb[0].mxu0
    %2298 = vdwg.mxu0
    %s2299 = scalar_lea.vmem [#allocation2], 144
    %v2300 = vld [vmem:[%s2299] sm:$0xff]
    %v2301 = vld [vmem:[%s2299 + $0x8] sm:$0xff]
    %v2302 = vld [vmem:[%s2299 + $0x10] sm:$0xff]
    %v2303 = vadd.f32 %v2300, %v2211
    %v2304 = vxor.u32 %v2303, 2147483648
    %v2305 = vmul.f32 %v2304, 1.442695
    %v2306 = vpow.pop %v2305
    %v2307 = vadd.f32 %v2306, 1.0
    %v2308 = vrcp.pop %v2307
    %v2309 = vmul.f32 1.0, %v2308
    %v2310 = vadd.f32 %v2301, %v2213
    %v2311 = vxor.u32 %v2310, 2147483648
    %v2312 = vmul.f32 %v2311, 1.442695
    %v2313 = vpow.pop %v2312
    %v2314 = vadd.f32 %v2313, 1.0
    %v2315 = vrcp.pop %v2314
    %v2316 = vmul.f32 1.0, %v2315
    %v2317 = vmul.f32 %v2309, %v2252
    %v2318 = vadd.f32 %v2302, %v2317
    %v2319 = vtanh.pop %v2318
    %v2320 = vsub.f32 1.0, %v2316
    %v2321 = vmul.f32 %v2320, %v2319
    %v2322 = vmul.f32 %v2316, %v2060
    %v2323 = vadd.f32 %v2321, %v2322
    %s2324 = scalar_lea.vmem [#allocation2], 576
    %v2325 = vld [vmem:[%s2324 + $0x18] sm:$0xff]
    %v2326 = vld [vmem:[%s2324 + $0x20] sm:$0xff]
    %v2327 = vld [vmem:[%s2324 + $0x28] sm:$0xff]
    %v2328 = vadd.f32 %v2325, %v2254
    %v2329 = vxor.u32 %v2328, 2147483648
    %v2330 = vmul.f32 %v2329, 1.442695
    %v2331 = vpow.pop %v2330
    %v2332 = vadd.f32 %v2331, 1.0
    %v2333 = vrcp.pop %v2332
    %v2334 = vmul.f32 1.0, %v2333
    %v2335 = vadd.f32 %v2326, %v2293
    %v2336 = vxor.u32 %v2335, 2147483648
    %v2337 = vmul.f32 %v2336, 1.442695
    %v2338 = vpow.pop %v2337
    %v2339 = vadd.f32 %v2338, 1.0
    %v2340 = vrcp.pop %v2339
    %v2341 = vmul.f32 1.0, %v2340
    %v2342 = vmul.f32 %v2334, %v2295
    %v2343 = vadd.f32 %v2327, %v2342
    %v2344 = vtanh.pop %v2343
    %v2345 = vsub.f32 1.0, %v2341
    %v2346 = vmul.f32 %v2345, %v2344
    %v2347 = vmul.f32 %v2341, %v2085
    %v2348 = vadd.f32 %v2346, %v2347
    %s2349 = scalar_lea.vmem [#allocation12], 24
    %v2350 = vld [vmem:[%s2349] sm:$0xff]
    %v2351 = vpack.c.bf16 %v2323, %v2323
    %2352 = vmatprep.subr.bf16.mxu0 0
    %2353 = vmatpush1.bf16.msra.mxu0 %v1499
    %2354 = vmatprep.subr.bf16.mxu0 0
    %2355 = vmatpush1.bf16.msra.mxu0 %v1500
    %2356 = vmatprep.subr.bf16.mxu0 0
    %2357 = vmatpush1.bf16.msra.mxu0 %v1501
    %2358 = vmatprep.subr.bf16.mxu0 0
    %2359 = vmatpush1.bf16.msra.mxu0 %v1502
    %2360 = vmatprep.subr.bf16.mxu0 0
    %2361 = vmatpush1.bf16.msra.mxu0 %v1503
    %2362 = vmatprep.subr.bf16.mxu0 0
    %2363 = vmatpush1.bf16.msra.mxu0 %v1504
    %2364 = vmatprep.subr.bf16.mxu0 0
    %2365 = vmatpush1.bf16.msra.mxu0 %v1505
    %2366 = vmatprep.subr.bf16.mxu0 0
    %2367 = vmatpush1.bf16.msra.mxu0 %v1506
    %2368 = vmatprep.subr.bf16.mxu0 0
    %2369 = vmatpush1.bf16.msra.mxu0 0
    %2370 = vmatprep.subr.bf16.mxu0 0
    %2371 = vmatpush1.bf16.msra.mxu0 0
    %2372 = vmatprep.subr.bf16.mxu0 0
    %2373 = vmatpush1.bf16.msra.mxu0 0
    %2374 = vmatprep.subr.bf16.mxu0 0
    %2375 = vmatpush1.bf16.msra.mxu0 0
    %2376 = vmatprep.subr.bf16.mxu0 0
    %2377 = vmatpush1.bf16.msra.mxu0 0
    %2378 = vmatprep.subr.bf16.mxu0 0
    %2379 = vmatpush1.bf16.msra.mxu0 0
    %2380 = vmatprep.subr.bf16.mxu0 0
    %2381 = vmatpush1.bf16.msra.mxu0 0
    %2382 = vmatprep.subr.bf16.mxu0 0
    %2383 = vmatpush1.bf16.msra.mxu0 0
    %2384 = vmatprep.mubr.bf16.mxu0 0
    %2385 = vmatmul.mubr.bf16.gmra.mrb[0].mxu0 %v2351
    %v2386 = vpop.f32.mrb[0].mxu0
    %v2387 = vadd.f32 0.0, %v2386
    %v2388 = vpop.f32.mrb[0].mxu0
    %v2389 = vpop.f32.mrb[0].mxu0
    %v2390 = vpop.f32.mrb[0].mxu0
    %2391 = vdwg.mxu0
    %v2392 = vadd.f32 %v2350, %v2387
    %2393 = vst [vmem:[%s2349] sm:$0xff] %v2392
    %s2394 = scalar_lea.vmem [#allocation12], 96
    %v2395 = vld [vmem:[%s2394] sm:$0xff]
    %v2396 = vpack.c.bf16 %v2348, %v2348
    %2397 = vmatprep.subr.bf16.mxu0 0
    %2398 = vmatpush1.bf16.msra.mxu0 %v1592
    %2399 = vmatprep.subr.bf16.mxu0 0
    %2400 = vmatpush1.bf16.msra.mxu0 %v1593
    %2401 = vmatprep.subr.bf16.mxu0 0
    %2402 = vmatpush1.bf16.msra.mxu0 %v1594
    %2403 = vmatprep.subr.bf16.mxu0 0
    %2404 = vmatpush1.bf16.msra.mxu0 %v1595
    %2405 = vmatprep.subr.bf16.mxu0 0
    %2406 = vmatpush1.bf16.msra.mxu0 %v1596
    %2407 = vmatprep.subr.bf16.mxu0 0
    %2408 = vmatpush1.bf16.msra.mxu0 %v1597
    %2409 = vmatprep.subr.bf16.mxu0 0
    %2410 = vmatpush1.bf16.msra.mxu0 %v1598
    %2411 = vmatprep.subr.bf16.mxu0 0
    %2412 = vmatpush1.bf16.msra.mxu0 %v1599
    %2413 = vmatprep.subr.bf16.mxu0 0
    %2414 = vmatpush1.bf16.msra.mxu0 0
    %2415 = vmatprep.subr.bf16.mxu0 0
    %2416 = vmatpush1.bf16.msra.mxu0 0
    %2417 = vmatprep.subr.bf16.mxu0 0
    %2418 = vmatpush1.bf16.msra.mxu0 0
    %2419 = vmatprep.subr.bf16.mxu0 0
    %2420 = vmatpush1.bf16.msra.mxu0 0
    %2421 = vmatprep.subr.bf16.mxu0 0
    %2422 = vmatpush1.bf16.msra.mxu0 0
    %2423 = vmatprep.subr.bf16.mxu0 0
    %2424 = vmatpush1.bf16.msra.mxu0 0
    %2425 = vmatprep.subr.bf16.mxu0 0
    %2426 = vmatpush1.bf16.msra.mxu0 0
    %2427 = vmatprep.subr.bf16.mxu0 0
    %2428 = vmatpush1.bf16.msra.mxu0 0
    %2429 = vmatprep.mubr.bf16.mxu0 0
    %2430 = vmatmul.mubr.bf16.gmra.mrb[0].mxu0 %v2396
    %v2431 = vpop.f32.mrb[0].mxu0
    %v2432 = vadd.f32 0.0, %v2431
    %v2433 = vpop.f32.mrb[0].mxu0
    %v2434 = vpop.f32.mrb[0].mxu0
    %v2435 = vpop.f32.mrb[0].mxu0
    %2436 = vdwg.mxu0
    %v2437 = vadd.f32 %v2395, %v2432
    %2438 = vst [vmem:[%s2394] sm:$0xff] %v2437
    %2439 = vmatprep.subr.bf16.mxu0 %v1102
    %2440 = vmatpush1.bf16.msra.mxu0 %v1101
    %2441 = vmatprep.subr.bf16.mxu0 %v1108
    %2442 = vmatpush1.bf16.msra.mxu0 %v1107
    %2443 = vmatprep.subr.bf16.mxu0 %v1114
    %2444 = vmatpush1.bf16.msra.mxu0 %v1113
    %2445 = vmatprep.subr.bf16.mxu0 %v1120
    %2446 = vmatpush1.bf16.msra.mxu0 %v1119
    %2447 = vmatprep.subr.bf16.mxu0 %v1126
    %2448 = vmatpush1.bf16.msra.mxu0 %v1125
    %2449 = vmatprep.subr.bf16.mxu0 %v1132
    %2450 = vmatpush1.bf16.msra.mxu0 %v1131
    %2451 = vmatprep.subr.bf16.mxu0 %v1138
    %2452 = vmatpush1.bf16.msra.mxu0 %v1137
    %2453 = vmatprep.subr.bf16.mxu0 %v1144
    %2454 = vmatpush1.bf16.msra.mxu0 %v1143
    %2455 = vmatprep.subr.bf16.mxu0 %v1150
    %2456 = vmatpush1.bf16.msra.mxu0 %v1149
    %2457 = vmatprep.subr.bf16.mxu0 %v1156
    %2458 = vmatpush1.bf16.msra.mxu0 %v1155
    %2459 = vmatprep.subr.bf16.mxu0 %v1162
    %2460 = vmatpush1.bf16.msra.mxu0 %v1161
    %2461 = vmatprep.subr.bf16.mxu0 %v1168
    %2462 = vmatpush1.bf16.msra.mxu0 %v1167
    %2463 = vmatprep.subr.bf16.mxu0 %v1174
    %2464 = vmatpush1.bf16.msra.mxu0 %v1173
    %2465 = vmatprep.subr.bf16.mxu0 %v1180
    %2466 = vmatpush1.bf16.msra.mxu0 %v1179
    %2467 = vmatprep.subr.bf16.mxu0 %v1186
    %2468 = vmatpush1.bf16.msra.mxu0 %v1185
    %2469 = vmatprep.subr.bf16.mxu0 %v1192
    %2470 = vmatpush1.bf16.msra.mxu0 %v1191
    %2471 = vmatprep.mubr.bf16.mxu0 %v2396
    %2472 = vmatmul.mubr.bf16.gmra.mrb[0].mxu0 %v2351
    %v2473 = vpop.f32.mrb[0].mxu0
    %v2474 = vadd.f32 %v786, %v2473
    %v2475 = vpop.f32.mrb[0].mxu0
    %v2476 = vadd.f32 %v790, %v2475
    %v2477 = vpop.f32.mrb[0].mxu0
    %v2478 = vpop.f32.mrb[0].mxu0
    %2479 = vdwg.mxu0
    %2480 = vmatprep.subr.bf16.mxu0 %v1104
    %2481 = vmatpush1.bf16.msra.mxu0 %v1103
    %2482 = vmatprep.subr.bf16.mxu0 %v1110
    %2483 = vmatpush1.bf16.msra.mxu0 %v1109
    %2484 = vmatprep.subr.bf16.mxu0 %v1116
    %2485 = vmatpush1.bf16.msra.mxu0 %v1115
    %2486 = vmatprep.subr.bf16.mxu0 %v1122
    %2487 = vmatpush1.bf16.msra.mxu0 %v1121
    %2488 = vmatprep.subr.bf16.mxu0 %v1128
    %2489 = vmatpush1.bf16.msra.mxu0 %v1127
    %2490 = vmatprep.subr.bf16.mxu0 %v1134
    %2491 = vmatpush1.bf16.msra.mxu0 %v1133
    %2492 = vmatprep.subr.bf16.mxu0 %v1140
    %2493 = vmatpush1.bf16.msra.mxu0 %v1139
    %2494 = vmatprep.subr.bf16.mxu0 %v1146
    %2495 = vmatpush1.bf16.msra.mxu0 %v1145
    %2496 = vmatprep.subr.bf16.mxu0 %v1152
    %2497 = vmatpush1.bf16.msra.mxu0 %v1151
    %2498 = vmatprep.subr.bf16.mxu0 %v1158
    %2499 = vmatpush1.bf16.msra.mxu0 %v1157
    %2500 = vmatprep.subr.bf16.mxu0 %v1164
    %2501 = vmatpush1.bf16.msra.mxu0 %v1163
    %2502 = vmatprep.subr.bf16.mxu0 %v1170
    %2503 = vmatpush1.bf16.msra.mxu0 %v1169
    %2504 = vmatprep.subr.bf16.mxu0 %v1176
    %2505 = vmatpush1.bf16.msra.mxu0 %v1175
    %2506 = vmatprep.subr.bf16.mxu0 %v1182
    %2507 = vmatpush1.bf16.msra.mxu0 %v1181
    %2508 = vmatprep.subr.bf16.mxu0 %v1188
    %2509 = vmatpush1.bf16.msra.mxu0 %v1187
    %2510 = vmatprep.subr.bf16.mxu0 %v1194
    %2511 = vmatpush1.bf16.msra.mxu0 %v1193
    %2512 = vmatprep.mubr.bf16.mxu0 %v2396
    %2513 = vmatmul.mubr.bf16.gmra.mrb[0].mxu0 %v2351
    %v2514 = vpop.f32.mrb[0].mxu0
    %v2515 = vadd.f32 %v794, %v2514
    %v2516 = vpop.f32.mrb[0].mxu0
    %v2517 = vadd.f32 %v798, %v2516
    %v2518 = vpop.f32.mrb[0].mxu0
    %v2519 = vpop.f32.mrb[0].mxu0
    %2520 = vdwg.mxu0
    %2521 = vmatprep.subr.bf16.mxu0 %v1106
    %2522 = vmatpush1.bf16.msra.mxu0 %v1105
    %2523 = vmatprep.subr.bf16.mxu0 %v1112
    %2524 = vmatpush1.bf16.msra.mxu0 %v1111
    %2525 = vmatprep.subr.bf16.mxu0 %v1118
    %2526 = vmatpush1.bf16.msra.mxu0 %v1117
    %2527 = vmatprep.subr.bf16.mxu0 %v1124
    %2528 = vmatpush1.bf16.msra.mxu0 %v1123
    %2529 = vmatprep.subr.bf16.mxu0 %v1130
    %2530 = vmatpush1.bf16.msra.mxu0 %v1129
    %2531 = vmatprep.subr.bf16.mxu0 %v1136
    %2532 = vmatpush1.bf16.msra.mxu0 %v1135
    %2533 = vmatprep.subr.bf16.mxu0 %v1142
    %2534 = vmatpush1.bf16.msra.mxu0 %v1141
    %2535 = vmatprep.subr.bf16.mxu0 %v1148
    %2536 = vmatpush1.bf16.msra.mxu0 %v1147
    %2537 = vmatprep.subr.bf16.mxu0 %v1154
    %2538 = vmatpush1.bf16.msra.mxu0 %v1153
    %2539 = vmatprep.subr.bf16.mxu0 %v1160
    %2540 = vmatpush1.bf16.msra.mxu0 %v1159
    %2541 = vmatprep.subr.bf16.mxu0 %v1166
    %2542 = vmatpush1.bf16.msra.mxu0 %v1165
    %2543 = vmatprep.subr.bf16.mxu0 %v1172
    %2544 = vmatpush1.bf16.msra.mxu0 %v1171
    %2545 = vmatprep.subr.bf16.mxu0 %v1178
    %2546 = vmatpush1.bf16.msra.mxu0 %v1177
    %2547 = vmatprep.subr.bf16.mxu0 %v1184
    %2548 = vmatpush1.bf16.msra.mxu0 %v1183
    %2549 = vmatprep.subr.bf16.mxu0 %v1190
    %2550 = vmatpush1.bf16.msra.mxu0 %v1189
    %2551 = vmatprep.subr.bf16.mxu0 %v1196
    %2552 = vmatpush1.bf16.msra.mxu0 %v1195
    %2553 = vmatprep.mubr.bf16.mxu0 %v2396
    %2554 = vmatmul.mubr.bf16.gmra.mrb[0].mxu0 %v2351
    %v2555 = vpop.f32.mrb[0].mxu0
    %v2556 = vadd.f32 %v802, %v2555
    %v2557 = vpop.f32.mrb[0].mxu0
    %v2558 = vadd.f32 %v806, %v2557
    %v2559 = vpop.f32.mrb[0].mxu0
    %v2560 = vpop.f32.mrb[0].mxu0
    %2561 = vdwg.mxu0
    %s2562 = scalar_lea.vmem [#allocation2], 192
    %v2563 = vld [vmem:[%s2562] sm:$0xff]
    %v2564 = vld [vmem:[%s2562 + $0x8] sm:$0xff]
    %v2565 = vld [vmem:[%s2562 + $0x10] sm:$0xff]
    %v2566 = vadd.f32 %v2563, %v2474
    %v2567 = vxor.u32 %v2566, 2147483648
    %v2568 = vmul.f32 %v2567, 1.442695
    %v2569 = vpow.pop %v2568
    %v2570 = vadd.f32 %v2569, 1.0
    %v2571 = vrcp.pop %v2570
    %v2572 = vmul.f32 1.0, %v2571
    %v2573 = vadd.f32 %v2564, %v2476
    %v2574 = vxor.u32 %v2573, 2147483648
    %v2575 = vmul.f32 %v2574, 1.442695
    %v2576 = vpow.pop %v2575
    %v2577 = vadd.f32 %v2576, 1.0
    %v2578 = vrcp.pop %v2577
    %v2579 = vmul.f32 1.0, %v2578
    %v2580 = vmul.f32 %v2572, %v2515
    %v2581 = vadd.f32 %v2565, %v2580
    %v2582 = vtanh.pop %v2581
    %v2583 = vsub.f32 1.0, %v2579
    %v2584 = vmul.f32 %v2583, %v2582
    %v2585 = vmul.f32 %v2579, %v2323
    %v2586 = vadd.f32 %v2584, %v2585
    %s2587 = scalar_lea.vmem [#allocation2], 528
    %v2588 = vld [vmem:[%s2587 + $0x18] sm:$0xff]
    %v2589 = vld [vmem:[%s2587 + $0x20] sm:$0xff]
    %v2590 = vld [vmem:[%s2587 + $0x28] sm:$0xff]
    %v2591 = vadd.f32 %v2588, %v2517
    %v2592 = vxor.u32 %v2591, 2147483648
    %v2593 = vmul.f32 %v2592, 1.442695
    %v2594 = vpow.pop %v2593
    %v2595 = vadd.f32 %v2594, 1.0
    %v2596 = vrcp.pop %v2595
    %v2597 = vmul.f32 1.0, %v2596
    %v2598 = vadd.f32 %v2589, %v2556
    %v2599 = vxor.u32 %v2598, 2147483648
    %v2600 = vmul.f32 %v2599, 1.442695
    %v2601 = vpow.pop %v2600
    %v2602 = vadd.f32 %v2601, 1.0
    %v2603 = vrcp.pop %v2602
    %v2604 = vmul.f32 1.0, %v2603
    %v2605 = vmul.f32 %v2597, %v2558
    %v2606 = vadd.f32 %v2590, %v2605
    %v2607 = vtanh.pop %v2606
    %v2608 = vsub.f32 1.0, %v2604
    %v2609 = vmul.f32 %v2608, %v2607
    %v2610 = vmul.f32 %v2604, %v2348
    %v2611 = vadd.f32 %v2609, %v2610
    %s2612 = scalar_lea.vmem [#allocation12], 32
    %v2613 = vld [vmem:[%s2612] sm:$0xff]
    %v2614 = vpack.c.bf16 %v2586, %v2586
    %2615 = vmatprep.subr.bf16.mxu0 0
    %2616 = vmatpush1.bf16.msra.mxu0 %v1499
    %2617 = vmatprep.subr.bf16.mxu0 0
    %2618 = vmatpush1.bf16.msra.mxu0 %v1500
    %2619 = vmatprep.subr.bf16.mxu0 0
    %2620 = vmatpush1.bf16.msra.mxu0 %v1501
    %2621 = vmatprep.subr.bf16.mxu0 0
    %2622 = vmatpush1.bf16.msra.mxu0 %v1502
    %2623 = vmatprep.subr.bf16.mxu0 0
    %2624 = vmatpush1.bf16.msra.mxu0 %v1503
    %2625 = vmatprep.subr.bf16.mxu0 0
    %2626 = vmatpush1.bf16.msra.mxu0 %v1504
    %2627 = vmatprep.subr.bf16.mxu0 0
    %2628 = vmatpush1.bf16.msra.mxu0 %v1505
    %2629 = vmatprep.subr.bf16.mxu0 0
    %2630 = vmatpush1.bf16.msra.mxu0 %v1506
    %2631 = vmatprep.subr.bf16.mxu0 0
    %2632 = vmatpush1.bf16.msra.mxu0 0
    %2633 = vmatprep.subr.bf16.mxu0 0
    %2634 = vmatpush1.bf16.msra.mxu0 0
    %2635 = vmatprep.subr.bf16.mxu0 0
    %2636 = vmatpush1.bf16.msra.mxu0 0
    %2637 = vmatprep.subr.bf16.mxu0 0
    %2638 = vmatpush1.bf16.msra.mxu0 0
    %2639 = vmatprep.subr.bf16.mxu0 0
    %2640 = vmatpush1.bf16.msra.mxu0 0
    %2641 = vmatprep.subr.bf16.mxu0 0
    %2642 = vmatpush1.bf16.msra.mxu0 0
    %2643 = vmatprep.subr.bf16.mxu0 0
    %2644 = vmatpush1.bf16.msra.mxu0 0
    %2645 = vmatprep.subr.bf16.mxu0 0
    %2646 = vmatpush1.bf16.msra.mxu0 0
    %2647 = vmatprep.mubr.bf16.mxu0 0
    %2648 = vmatmul.mubr.bf16.gmra.mrb[0].mxu0 %v2614
    %v2649 = vpop.f32.mrb[0].mxu0
    %v2650 = vadd.f32 0.0, %v2649
    %v2651 = vpop.f32.mrb[0].mxu0
    %v2652 = vpop.f32.mrb[0].mxu0
    %v2653 = vpop.f32.mrb[0].mxu0
    %2654 = vdwg.mxu0
    %v2655 = vadd.f32 %v2613, %v2650
    %2656 = vst [vmem:[%s2612] sm:$0xff] %v2655
    %s2657 = scalar_lea.vmem [#allocation12], 88
    %v2658 = vld [vmem:[%s2657] sm:$0xff]
    %v2659 = vpack.c.bf16 %v2611, %v2611
    %2660 = vmatprep.subr.bf16.mxu0 0
    %2661 = vmatpush1.bf16.msra.mxu0 %v1592
    %2662 = vmatprep.subr.bf16.mxu0 0
    %2663 = vmatpush1.bf16.msra.mxu0 %v1593
    %2664 = vmatprep.subr.bf16.mxu0 0
    %2665 = vmatpush1.bf16.msra.mxu0 %v1594
    %2666 = vmatprep.subr.bf16.mxu0 0
    %2667 = vmatpush1.bf16.msra.mxu0 %v1595
    %2668 = vmatprep.subr.bf16.mxu0 0
    %2669 = vmatpush1.bf16.msra.mxu0 %v1596
    %2670 = vmatprep.subr.bf16.mxu0 0
    %2671 = vmatpush1.bf16.msra.mxu0 %v1597
    %2672 = vmatprep.subr.bf16.mxu0 0
    %2673 = vmatpush1.bf16.msra.mxu0 %v1598
    %2674 = vmatprep.subr.bf16.mxu0 0
    %2675 = vmatpush1.bf16.msra.mxu0 %v1599
    %2676 = vmatprep.subr.bf16.mxu0 0
    %2677 = vmatpush1.bf16.msra.mxu0 0
    %2678 = vmatprep.subr.bf16.mxu0 0
    %2679 = vmatpush1.bf16.msra.mxu0 0
    %2680 = vmatprep.subr.bf16.mxu0 0
    %2681 = vmatpush1.bf16.msra.mxu0 0
    %2682 = vmatprep.subr.bf16.mxu0 0
    %2683 = vmatpush1.bf16.msra.mxu0 0
    %2684 = vmatprep.subr.bf16.mxu0 0
    %2685 = vmatpush1.bf16.msra.mxu0 0
    %2686 = vmatprep.subr.bf16.mxu0 0
    %2687 = vmatpush1.bf16.msra.mxu0 0
    %2688 = vmatprep.subr.bf16.mxu0 0
    %2689 = vmatpush1.bf16.msra.mxu0 0
    %2690 = vmatprep.subr.bf16.mxu0 0
    %2691 = vmatpush1.bf16.msra.mxu0 0
    %2692 = vmatprep.mubr.bf16.mxu0 0
    %2693 = vmatmul.mubr.bf16.gmra.mrb[0].mxu0 %v2659
    %v2694 = vpop.f32.mrb[0].mxu0
    %v2695 = vadd.f32 0.0, %v2694
    %v2696 = vpop.f32.mrb[0].mxu0
    %v2697 = vpop.f32.mrb[0].mxu0
    %v2698 = vpop.f32.mrb[0].mxu0
    %2699 = vdwg.mxu0
    %v2700 = vadd.f32 %v2658, %v2695
    %2701 = vst [vmem:[%s2657] sm:$0xff] %v2700
    %2702 = vmatprep.subr.bf16.mxu0 %v1102
    %2703 = vmatpush1.bf16.msra.mxu0 %v1101
    %2704 = vmatprep.subr.bf16.mxu0 %v1108
    %2705 = vmatpush1.bf16.msra.mxu0 %v1107
    %2706 = vmatprep.subr.bf16.mxu0 %v1114
    %2707 = vmatpush1.bf16.msra.mxu0 %v1113
    %2708 = vmatprep.subr.bf16.mxu0 %v1120
    %2709 = vmatpush1.bf16.msra.mxu0 %v1119
    %2710 = vmatprep.subr.bf16.mxu0 %v1126
    %2711 = vmatpush1.bf16.msra.mxu0 %v1125
    %2712 = vmatprep.subr.bf16.mxu0 %v1132
    %2713 = vmatpush1.bf16.msra.mxu0 %v1131
    %2714 = vmatprep.subr.bf16.mxu0 %v1138
    %2715 = vmatpush1.bf16.msra.mxu0 %v1137
    %2716 = vmatprep.subr.bf16.mxu0 %v1144
    %2717 = vmatpush1.bf16.msra.mxu0 %v1143
    %2718 = vmatprep.subr.bf16.mxu0 %v1150
    %2719 = vmatpush1.bf16.msra.mxu0 %v1149
    %2720 = vmatprep.subr.bf16.mxu0 %v1156
    %2721 = vmatpush1.bf16.msra.mxu0 %v1155
    %2722 = vmatprep.subr.bf16.mxu0 %v1162
    %2723 = vmatpush1.bf16.msra.mxu0 %v1161
    %2724 = vmatprep.subr.bf16.mxu0 %v1168
    %2725 = vmatpush1.bf16.msra.mxu0 %v1167
    %2726 = vmatprep.subr.bf16.mxu0 %v1174
    %2727 = vmatpush1.bf16.msra.mxu0 %v1173
    %2728 = vmatprep.subr.bf16.mxu0 %v1180
    %2729 = vmatpush1.bf16.msra.mxu0 %v1179
    %2730 = vmatprep.subr.bf16.mxu0 %v1186
    %2731 = vmatpush1.bf16.msra.mxu0 %v1185
    %2732 = vmatprep.subr.bf16.mxu0 %v1192
    %2733 = vmatpush1.bf16.msra.mxu0 %v1191
    %2734 = vmatprep.mubr.bf16.mxu0 %v2659
    %2735 = vmatmul.mubr.bf16.gmra.mrb[0].mxu0 %v2614
    %v2736 = vpop.f32.mrb[0].mxu0
    %v2737 = vadd.f32 %v786, %v2736
    %v2738 = vpop.f32.mrb[0].mxu0
    %v2739 = vadd.f32 %v790, %v2738
    %v2740 = vpop.f32.mrb[0].mxu0
    %v2741 = vpop.f32.mrb[0].mxu0
    %2742 = vdwg.mxu0
    %2743 = vmatprep.subr.bf16.mxu0 %v1104
    %2744 = vmatpush1.bf16.msra.mxu0 %v1103
    %2745 = vmatprep.subr.bf16.mxu0 %v1110
    %2746 = vmatpush1.bf16.msra.mxu0 %v1109
    %2747 = vmatprep.subr.bf16.mxu0 %v1116
    %2748 = vmatpush1.bf16.msra.mxu0 %v1115
    %2749 = vmatprep.subr.bf16.mxu0 %v1122
    %2750 = vmatpush1.bf16.msra.mxu0 %v1121
    %2751 = vmatprep.subr.bf16.mxu0 %v1128
    %2752 = vmatpush1.bf16.msra.mxu0 %v1127
    %2753 = vmatprep.subr.bf16.mxu0 %v1134
    %2754 = vmatpush1.bf16.msra.mxu0 %v1133
    %2755 = vmatprep.subr.bf16.mxu0 %v1140
    %2756 = vmatpush1.bf16.msra.mxu0 %v1139
    %2757 = vmatprep.subr.bf16.mxu0 %v1146
    %2758 = vmatpush1.bf16.msra.mxu0 %v1145
    %2759 = vmatprep.subr.bf16.mxu0 %v1152
    %2760 = vmatpush1.bf16.msra.mxu0 %v1151
    %2761 = vmatprep.subr.bf16.mxu0 %v1158
    %2762 = vmatpush1.bf16.msra.mxu0 %v1157
    %2763 = vmatprep.subr.bf16.mxu0 %v1164
    %2764 = vmatpush1.bf16.msra.mxu0 %v1163
    %2765 = vmatprep.subr.bf16.mxu0 %v1170
    %2766 = vmatpush1.bf16.msra.mxu0 %v1169
    %2767 = vmatprep.subr.bf16.mxu0 %v1176
    %2768 = vmatpush1.bf16.msra.mxu0 %v1175
    %2769 = vmatprep.subr.bf16.mxu0 %v1182
    %2770 = vmatpush1.bf16.msra.mxu0 %v1181
    %2771 = vmatprep.subr.bf16.mxu0 %v1188
    %2772 = vmatpush1.bf16.msra.mxu0 %v1187
    %2773 = vmatprep.subr.bf16.mxu0 %v1194
    %2774 = vmatpush1.bf16.msra.mxu0 %v1193
    %2775 = vmatprep.mubr.bf16.mxu0 %v2659
    %2776 = vmatmul.mubr.bf16.gmra.mrb[0].mxu0 %v2614
    %v2777 = vpop.f32.mrb[0].mxu0
    %v2778 = vadd.f32 %v794, %v2777
    %v2779 = vpop.f32.mrb[0].mxu0
    %v2780 = vadd.f32 %v798, %v2779
    %v2781 = vpop.f32.mrb[0].mxu0
    %v2782 = vpop.f32.mrb[0].mxu0
    %2783 = vdwg.mxu0
    %2784 = vmatprep.subr.bf16.mxu0 %v1106
    %2785 = vmatpush1.bf16.msra.mxu0 %v1105
    %2786 = vmatprep.subr.bf16.mxu0 %v1112
    %2787 = vmatpush1.bf16.msra.mxu0 %v1111
    %2788 = vmatprep.subr.bf16.mxu0 %v1118
    %2789 = vmatpush1.bf16.msra.mxu0 %v1117
    %2790 = vmatprep.subr.bf16.mxu0 %v1124
    %2791 = vmatpush1.bf16.msra.mxu0 %v1123
    %2792 = vmatprep.subr.bf16.mxu0 %v1130
    %2793 = vmatpush1.bf16.msra.mxu0 %v1129
    %2794 = vmatprep.subr.bf16.mxu0 %v1136
    %2795 = vmatpush1.bf16.msra.mxu0 %v1135
    %2796 = vmatprep.subr.bf16.mxu0 %v1142
    %2797 = vmatpush1.bf16.msra.mxu0 %v1141
    %2798 = vmatprep.subr.bf16.mxu0 %v1148
    %2799 = vmatpush1.bf16.msra.mxu0 %v1147
    %2800 = vmatprep.subr.bf16.mxu0 %v1154
    %2801 = vmatpush1.bf16.msra.mxu0 %v1153
    %2802 = vmatprep.subr.bf16.mxu0 %v1160
    %2803 = vmatpush1.bf16.msra.mxu0 %v1159
    %2804 = vmatprep.subr.bf16.mxu0 %v1166
    %2805 = vmatpush1.bf16.msra.mxu0 %v1165
    %2806 = vmatprep.subr.bf16.mxu0 %v1172
    %2807 = vmatpush1.bf16.msra.mxu0 %v1171
    %2808 = vmatprep.subr.bf16.mxu0 %v1178
    %2809 = vmatpush1.bf16.msra.mxu0 %v1177
    %2810 = vmatprep.subr.bf16.mxu0 %v1184
    %2811 = vmatpush1.bf16.msra.mxu0 %v1183
    %2812 = vmatprep.subr.bf16.mxu0 %v1190
    %2813 = vmatpush1.bf16.msra.mxu0 %v1189
    %2814 = vmatprep.subr.bf16.mxu0 %v1196
    %2815 = vmatpush1.bf16.msra.mxu0 %v1195
    %2816 = vmatprep.mubr.bf16.mxu0 %v2659
    %2817 = vmatmul.mubr.bf16.gmra.mrb[0].mxu0 %v2614
    %v2818 = vpop.f32.mrb[0].mxu0
    %v2819 = vadd.f32 %v802, %v2818
    %v2820 = vpop.f32.mrb[0].mxu0
    %v2821 = vadd.f32 %v806, %v2820
    %v2822 = vpop.f32.mrb[0].mxu0
    %v2823 = vpop.f32.mrb[0].mxu0
    %2824 = vdwg.mxu0
    %s2825 = scalar_lea.vmem [#allocation2], 240
    %v2826 = vld [vmem:[%s2825] sm:$0xff]
    %v2827 = vld [vmem:[%s2825 + $0x8] sm:$0xff]
    %v2828 = vld [vmem:[%s2825 + $0x10] sm:$0xff]
    %v2829 = vadd.f32 %v2826, %v2737
    %v2830 = vxor.u32 %v2829, 2147483648
    %v2831 = vmul.f32 %v2830, 1.442695
    %v2832 = vpow.pop %v2831
    %v2833 = vadd.f32 %v2832, 1.0
    %v2834 = vrcp.pop %v2833
    %v2835 = vmul.f32 1.0, %v2834
    %v2836 = vadd.f32 %v2827, %v2739
    %v2837 = vxor.u32 %v2836, 2147483648
    %v2838 = vmul.f32 %v2837, 1.442695
    %v2839 = vpow.pop %v2838
    %v2840 = vadd.f32 %v2839, 1.0
    %v2841 = vrcp.pop %v2840
    %v2842 = vmul.f32 1.0, %v2841
    %v2843 = vmul.f32 %v2835, %v2778
    %v2844 = vadd.f32 %v2828, %v2843
    %v2845 = vtanh.pop %v2844
    %v2846 = vsub.f32 1.0, %v2842
    %v2847 = vmul.f32 %v2846, %v2845
    %v2848 = vmul.f32 %v2842, %v2586
    %v2849 = vadd.f32 %v2847, %v2848
    %s2850 = scalar_lea.vmem [#allocation2], 480
    %v2851 = vld [vmem:[%s2850 + $0x18] sm:$0xff]
    %v2852 = vld [vmem:[%s2850 + $0x20] sm:$0xff]
    %v2853 = vld [vmem:[%s2850 + $0x28] sm:$0xff]
    %v2854 = vadd.f32 %v2851, %v2780
    %v2855 = vxor.u32 %v2854, 2147483648
    %v2856 = vmul.f32 %v2855, 1.442695
    %v2857 = vpow.pop %v2856
    %v2858 = vadd.f32 %v2857, 1.0
    %v2859 = vrcp.pop %v2858
    %v2860 = vmul.f32 1.0, %v2859
    %v2861 = vadd.f32 %v2852, %v2819
    %v2862 = vxor.u32 %v2861, 2147483648
    %v2863 = vmul.f32 %v2862, 1.442695
    %v2864 = vpow.pop %v2863
    %v2865 = vadd.f32 %v2864, 1.0
    %v2866 = vrcp.pop %v2865
    %v2867 = vmul.f32 1.0, %v2866
    %v2868 = vmul.f32 %v2860, %v2821
    %v2869 = vadd.f32 %v2853, %v2868
    %v2870 = vtanh.pop %v2869
    %v2871 = vsub.f32 1.0, %v2867
    %v2872 = vmul.f32 %v2871, %v2870
    %v2873 = vmul.f32 %v2867, %v2611
    %v2874 = vadd.f32 %v2872, %v2873
    %s2875 = scalar_lea.vmem [#allocation12], 40
    %v2876 = vld [vmem:[%s2875] sm:$0xff]
    %v2877 = vpack.c.bf16 %v2849, %v2849
    %2878 = vmatprep.subr.bf16.mxu0 0
    %2879 = vmatpush1.bf16.msra.mxu0 %v1499
    %2880 = vmatprep.subr.bf16.mxu0 0
    %2881 = vmatpush1.bf16.msra.mxu0 %v1500
    %2882 = vmatprep.subr.bf16.mxu0 0
    %2883 = vmatpush1.bf16.msra.mxu0 %v1501
    %2884 = vmatprep.subr.bf16.mxu0 0
    %2885 = vmatpush1.bf16.msra.mxu0 %v1502
    %2886 = vmatprep.subr.bf16.mxu0 0
    %2887 = vmatpush1.bf16.msra.mxu0 %v1503
    %2888 = vmatprep.subr.bf16.mxu0 0
    %2889 = vmatpush1.bf16.msra.mxu0 %v1504
    %2890 = vmatprep.subr.bf16.mxu0 0
    %2891 = vmatpush1.bf16.msra.mxu0 %v1505
    %2892 = vmatprep.subr.bf16.mxu0 0
    %2893 = vmatpush1.bf16.msra.mxu0 %v1506
    %2894 = vmatprep.subr.bf16.mxu0 0
    %2895 = vmatpush1.bf16.msra.mxu0 0
    %2896 = vmatprep.subr.bf16.mxu0 0
    %2897 = vmatpush1.bf16.msra.mxu0 0
    %2898 = vmatprep.subr.bf16.mxu0 0
    %2899 = vmatpush1.bf16.msra.mxu0 0
    %2900 = vmatprep.subr.bf16.mxu0 0
    %2901 = vmatpush1.bf16.msra.mxu0 0
    %2902 = vmatprep.subr.bf16.mxu0 0
    %2903 = vmatpush1.bf16.msra.mxu0 0
    %2904 = vmatprep.subr.bf16.mxu0 0
    %2905 = vmatpush1.bf16.msra.mxu0 0
    %2906 = vmatprep.subr.bf16.mxu0 0
    %2907 = vmatpush1.bf16.msra.mxu0 0
    %2908 = vmatprep.subr.bf16.mxu0 0
    %2909 = vmatpush1.bf16.msra.mxu0 0
    %2910 = vmatprep.mubr.bf16.mxu0 0
    %2911 = vmatmul.mubr.bf16.gmra.mrb[0].mxu0 %v2877
    %v2912 = vpop.f32.mrb[0].mxu0
    %v2913 = vadd.f32 0.0, %v2912
    %v2914 = vpop.f32.mrb[0].mxu0
    %v2915 = vpop.f32.mrb[0].mxu0
    %v2916 = vpop.f32.mrb[0].mxu0
    %2917 = vdwg.mxu0
    %v2918 = vadd.f32 %v2876, %v2913
    %2919 = vst [vmem:[%s2875] sm:$0xff] %v2918
    %s2920 = scalar_lea.vmem [#allocation12], 80
    %v2921 = vld [vmem:[%s2920] sm:$0xff]
    %v2922 = vpack.c.bf16 %v2874, %v2874
    %2923 = vmatprep.subr.bf16.mxu0 0
    %2924 = vmatpush1.bf16.msra.mxu0 %v1592
    %2925 = vmatprep.subr.bf16.mxu0 0
    %2926 = vmatpush1.bf16.msra.mxu0 %v1593
    %2927 = vmatprep.subr.bf16.mxu0 0
    %2928 = vmatpush1.bf16.msra.mxu0 %v1594
    %2929 = vmatprep.subr.bf16.mxu0 0
    %2930 = vmatpush1.bf16.msra.mxu0 %v1595
    %2931 = vmatprep.subr.bf16.mxu0 0
    %2932 = vmatpush1.bf16.msra.mxu0 %v1596
    %2933 = vmatprep.subr.bf16.mxu0 0
    %2934 = vmatpush1.bf16.msra.mxu0 %v1597
    %2935 = vmatprep.subr.bf16.mxu0 0
    %2936 = vmatpush1.bf16.msra.mxu0 %v1598
    %2937 = vmatprep.subr.bf16.mxu0 0
    %2938 = vmatpush1.bf16.msra.mxu0 %v1599
    %2939 = vmatprep.subr.bf16.mxu0 0
    %2940 = vmatpush1.bf16.msra.mxu0 0
    %2941 = vmatprep.subr.bf16.mxu0 0
    %2942 = vmatpush1.bf16.msra.mxu0 0
    %2943 = vmatprep.subr.bf16.mxu0 0
    %2944 = vmatpush1.bf16.msra.mxu0 0
    %2945 = vmatprep.subr.bf16.mxu0 0
    %2946 = vmatpush1.bf16.msra.mxu0 0
    %2947 = vmatprep.subr.bf16.mxu0 0
    %2948 = vmatpush1.bf16.msra.mxu0 0
    %2949 = vmatprep.subr.bf16.mxu0 0
    %2950 = vmatpush1.bf16.msra.mxu0 0
    %2951 = vmatprep.subr.bf16.mxu0 0
    %2952 = vmatpush1.bf16.msra.mxu0 0
    %2953 = vmatprep.subr.bf16.mxu0 0
    %2954 = vmatpush1.bf16.msra.mxu0 0
    %2955 = vmatprep.mubr.bf16.mxu0 0
    %2956 = vmatmul.mubr.bf16.gmra.mrb[0].mxu0 %v2922
    %v2957 = vpop.f32.mrb[0].mxu0
    %v2958 = vadd.f32 0.0, %v2957
    %v2959 = vpop.f32.mrb[0].mxu0
    %v2960 = vpop.f32.mrb[0].mxu0
    %v2961 = vpop.f32.mrb[0].mxu0
    %2962 = vdwg.mxu0
    %v2963 = vadd.f32 %v2921, %v2958
    %2964 = vst [vmem:[%s2920] sm:$0xff] %v2963
    %2965 = vmatprep.subr.bf16.mxu0 %v1102
    %2966 = vmatpush1.bf16.msra.mxu0 %v1101
    %2967 = vmatprep.subr.bf16.mxu0 %v1108
    %2968 = vmatpush1.bf16.msra.mxu0 %v1107
    %2969 = vmatprep.subr.bf16.mxu0 %v1114
    %2970 = vmatpush1.bf16.msra.mxu0 %v1113
    %2971 = vmatprep.subr.bf16.mxu0 %v1120
    %2972 = vmatpush1.bf16.msra.mxu0 %v1119
    %2973 = vmatprep.subr.bf16.mxu0 %v1126
    %2974 = vmatpush1.bf16.msra.mxu0 %v1125
    %2975 = vmatprep.subr.bf16.mxu0 %v1132
    %2976 = vmatpush1.bf16.msra.mxu0 %v1131
    %2977 = vmatprep.subr.bf16.mxu0 %v1138
    %2978 = vmatpush1.bf16.msra.mxu0 %v1137
    %2979 = vmatprep.subr.bf16.mxu0 %v1144
    %2980 = vmatpush1.bf16.msra.mxu0 %v1143
    %2981 = vmatprep.subr.bf16.mxu0 %v1150
    %2982 = vmatpush1.bf16.msra.mxu0 %v1149
    %2983 = vmatprep.subr.bf16.mxu0 %v1156
    %2984 = vmatpush1.bf16.msra.mxu0 %v1155
    %2985 = vmatprep.subr.bf16.mxu0 %v1162
    %2986 = vmatpush1.bf16.msra.mxu0 %v1161
    %2987 = vmatprep.subr.bf16.mxu0 %v1168
    %2988 = vmatpush1.bf16.msra.mxu0 %v1167
    %2989 = vmatprep.subr.bf16.mxu0 %v1174
    %2990 = vmatpush1.bf16.msra.mxu0 %v1173
    %2991 = vmatprep.subr.bf16.mxu0 %v1180
    %2992 = vmatpush1.bf16.msra.mxu0 %v1179
    %2993 = vmatprep.subr.bf16.mxu0 %v1186
    %2994 = vmatpush1.bf16.msra.mxu0 %v1185
    %2995 = vmatprep.subr.bf16.mxu0 %v1192
    %2996 = vmatpush1.bf16.msra.mxu0 %v1191
    %2997 = vmatprep.mubr.bf16.mxu0 %v2922
    %2998 = vmatmul.mubr.bf16.gmra.mrb[0].mxu0 %v2877
    %v2999 = vpop.f32.mrb[0].mxu0
    %v3000 = vadd.f32 %v786, %v2999
    %v3001 = vpop.f32.mrb[0].mxu0
    %v3002 = vadd.f32 %v790, %v3001
    %v3003 = vpop.f32.mrb[0].mxu0
    %v3004 = vpop.f32.mrb[0].mxu0
    %3005 = vdwg.mxu0
    %3006 = vmatprep.subr.bf16.mxu0 %v1104
    %3007 = vmatpush1.bf16.msra.mxu0 %v1103
    %3008 = vmatprep.subr.bf16.mxu0 %v1110
    %3009 = vmatpush1.bf16.msra.mxu0 %v1109
    %3010 = vmatprep.subr.bf16.mxu0 %v1116
    %3011 = vmatpush1.bf16.msra.mxu0 %v1115
    %3012 = vmatprep.subr.bf16.mxu0 %v1122
    %3013 = vmatpush1.bf16.msra.mxu0 %v1121
    %3014 = vmatprep.subr.bf16.mxu0 %v1128
    %3015 = vmatpush1.bf16.msra.mxu0 %v1127
    %3016 = vmatprep.subr.bf16.mxu0 %v1134
    %3017 = vmatpush1.bf16.msra.mxu0 %v1133
    %3018 = vmatprep.subr.bf16.mxu0 %v1140
    %3019 = vmatpush1.bf16.msra.mxu0 %v1139
    %3020 = vmatprep.subr.bf16.mxu0 %v1146
    %3021 = vmatpush1.bf16.msra.mxu0 %v1145
    %3022 = vmatprep.subr.bf16.mxu0 %v1152
    %3023 = vmatpush1.bf16.msra.mxu0 %v1151
    %3024 = vmatprep.subr.bf16.mxu0 %v1158
    %3025 = vmatpush1.bf16.msra.mxu0 %v1157
    %3026 = vmatprep.subr.bf16.mxu0 %v1164
    %3027 = vmatpush1.bf16.msra.mxu0 %v1163
    %3028 = vmatprep.subr.bf16.mxu0 %v1170
    %3029 = vmatpush1.bf16.msra.mxu0 %v1169
    %3030 = vmatprep.subr.bf16.mxu0 %v1176
    %3031 = vmatpush1.bf16.msra.mxu0 %v1175
    %3032 = vmatprep.subr.bf16.mxu0 %v1182
    %3033 = vmatpush1.bf16.msra.mxu0 %v1181
    %3034 = vmatprep.subr.bf16.mxu0 %v1188
    %3035 = vmatpush1.bf16.msra.mxu0 %v1187
    %3036 = vmatprep.subr.bf16.mxu0 %v1194
    %3037 = vmatpush1.bf16.msra.mxu0 %v1193
    %3038 = vmatprep.mubr.bf16.mxu0 %v2922
    %3039 = vmatmul.mubr.bf16.gmra.mrb[0].mxu0 %v2877
    %v3040 = vpop.f32.mrb[0].mxu0
    %v3041 = vadd.f32 %v794, %v3040
    %v3042 = vpop.f32.mrb[0].mxu0
    %v3043 = vadd.f32 %v798, %v3042
    %v3044 = vpop.f32.mrb[0].mxu0
    %v3045 = vpop.f32.mrb[0].mxu0
    %3046 = vdwg.mxu0
    %3047 = vmatprep.subr.bf16.mxu0 %v1106
    %3048 = vmatpush1.bf16.msra.mxu0 %v1105
    %3049 = vmatprep.subr.bf16.mxu0 %v1112
    %3050 = vmatpush1.bf16.msra.mxu0 %v1111
    %3051 = vmatprep.subr.bf16.mxu0 %v1118
    %3052 = vmatpush1.bf16.msra.mxu0 %v1117
    %3053 = vmatprep.subr.bf16.mxu0 %v1124
    %3054 = vmatpush1.bf16.msra.mxu0 %v1123
    %3055 = vmatprep.subr.bf16.mxu0 %v1130
    %3056 = vmatpush1.bf16.msra.mxu0 %v1129
    %3057 = vmatprep.subr.bf16.mxu0 %v1136
    %3058 = vmatpush1.bf16.msra.mxu0 %v1135
    %3059 = vmatprep.subr.bf16.mxu0 %v1142
    %3060 = vmatpush1.bf16.msra.mxu0 %v1141
    %3061 = vmatprep.subr.bf16.mxu0 %v1148
    %3062 = vmatpush1.bf16.msra.mxu0 %v1147
    %3063 = vmatprep.subr.bf16.mxu0 %v1154
    %3064 = vmatpush1.bf16.msra.mxu0 %v1153
    %3065 = vmatprep.subr.bf16.mxu0 %v1160
    %3066 = vmatpush1.bf16.msra.mxu0 %v1159
    %3067 = vmatprep.subr.bf16.mxu0 %v1166
    %3068 = vmatpush1.bf16.msra.mxu0 %v1165
    %3069 = vmatprep.subr.bf16.mxu0 %v1172
    %3070 = vmatpush1.bf16.msra.mxu0 %v1171
    %3071 = vmatprep.subr.bf16.mxu0 %v1178
    %3072 = vmatpush1.bf16.msra.mxu0 %v1177
    %3073 = vmatprep.subr.bf16.mxu0 %v1184
    %3074 = vmatpush1.bf16.msra.mxu0 %v1183
    %3075 = vmatprep.subr.bf16.mxu0 %v1190
    %3076 = vmatpush1.bf16.msra.mxu0 %v1189
    %3077 = vmatprep.subr.bf16.mxu0 %v1196
    %3078 = vmatpush1.bf16.msra.mxu0 %v1195
    %3079 = vmatprep.mubr.bf16.mxu0 %v2922
    %3080 = vmatmul.mubr.bf16.gmra.mrb[0].mxu0 %v2877
    %v3081 = vpop.f32.mrb[0].mxu0
    %v3082 = vadd.f32 %v802, %v3081
    %v3083 = vpop.f32.mrb[0].mxu0
    %v3084 = vadd.f32 %v806, %v3083
    %v3085 = vpop.f32.mrb[0].mxu0
    %v3086 = vpop.f32.mrb[0].mxu0
    %3087 = vdwg.mxu0
    %s3088 = scalar_lea.vmem [#allocation2], 288
    %v3089 = vld [vmem:[%s3088] sm:$0xff]
    %v3090 = vld [vmem:[%s3088 + $0x8] sm:$0xff]
    %v3091 = vld [vmem:[%s3088 + $0x10] sm:$0xff]
    %v3092 = vadd.f32 %v3089, %v3000
    %v3093 = vxor.u32 %v3092, 2147483648
    %v3094 = vmul.f32 %v3093, 1.442695
    %v3095 = vpow.pop %v3094
    %v3096 = vadd.f32 %v3095, 1.0
    %v3097 = vrcp.pop %v3096
    %v3098 = vmul.f32 1.0, %v3097
    %v3099 = vadd.f32 %v3090, %v3002
    %v3100 = vxor.u32 %v3099, 2147483648
    %v3101 = vmul.f32 %v3100, 1.442695
    %v3102 = vpow.pop %v3101
    %v3103 = vadd.f32 %v3102, 1.0
    %v3104 = vrcp.pop %v3103
    %v3105 = vmul.f32 1.0, %v3104
    %v3106 = vmul.f32 %v3098, %v3041
    %v3107 = vadd.f32 %v3091, %v3106
    %v3108 = vtanh.pop %v3107
    %v3109 = vsub.f32 1.0, %v3105
    %v3110 = vmul.f32 %v3109, %v3108
    %v3111 = vmul.f32 %v3105, %v2849
    %v3112 = vadd.f32 %v3110, %v3111
    %s3113 = scalar_lea.vmem [#allocation2], 432
    %v3114 = vld [vmem:[%s3113 + $0x18] sm:$0xff]
    %v3115 = vld [vmem:[%s3113 + $0x20] sm:$0xff]
    %v3116 = vld [vmem:[%s3113 + $0x28] sm:$0xff]
    %v3117 = vadd.f32 %v3114, %v3043
    %v3118 = vxor.u32 %v3117, 2147483648
    %v3119 = vmul.f32 %v3118, 1.442695
    %v3120 = vpow.pop %v3119
    %v3121 = vadd.f32 %v3120, 1.0
    %v3122 = vrcp.pop %v3121
    %v3123 = vmul.f32 1.0, %v3122
    %v3124 = vadd.f32 %v3115, %v3082
    %v3125 = vxor.u32 %v3124, 2147483648
    %v3126 = vmul.f32 %v3125, 1.442695
    %v3127 = vpow.pop %v3126
    %v3128 = vadd.f32 %v3127, 1.0
    %v3129 = vrcp.pop %v3128
    %v3130 = vmul.f32 1.0, %v3129
    %v3131 = vmul.f32 %v3123, %v3084
    %v3132 = vadd.f32 %v3116, %v3131
    %v3133 = vtanh.pop %v3132
    %v3134 = vsub.f32 1.0, %v3130
    %v3135 = vmul.f32 %v3134, %v3133
    %v3136 = vmul.f32 %v3130, %v2874
    %v3137 = vadd.f32 %v3135, %v3136
    %s3138 = scalar_lea.vmem [#allocation12], 48
    %v3139 = vld [vmem:[%s3138] sm:$0xff]
    %v3140 = vpack.c.bf16 %v3112, %v3112
    %3141 = vmatprep.subr.bf16.mxu0 0
    %3142 = vmatpush1.bf16.msra.mxu0 %v1499
    %3143 = vmatprep.subr.bf16.mxu0 0
    %3144 = vmatpush1.bf16.msra.mxu0 %v1500
    %3145 = vmatprep.subr.bf16.mxu0 0
    %3146 = vmatpush1.bf16.msra.mxu0 %v1501
    %3147 = vmatprep.subr.bf16.mxu0 0
    %3148 = vmatpush1.bf16.msra.mxu0 %v1502
    %3149 = vmatprep.subr.bf16.mxu0 0
    %3150 = vmatpush1.bf16.msra.mxu0 %v1503
    %3151 = vmatprep.subr.bf16.mxu0 0
    %3152 = vmatpush1.bf16.msra.mxu0 %v1504
    %3153 = vmatprep.subr.bf16.mxu0 0
    %3154 = vmatpush1.bf16.msra.mxu0 %v1505
    %3155 = vmatprep.subr.bf16.mxu0 0
    %3156 = vmatpush1.bf16.msra.mxu0 %v1506
    %3157 = vmatprep.subr.bf16.mxu0 0
    %3158 = vmatpush1.bf16.msra.mxu0 0
    %3159 = vmatprep.subr.bf16.mxu0 0
    %3160 = vmatpush1.bf16.msra.mxu0 0
    %3161 = vmatprep.subr.bf16.mxu0 0
    %3162 = vmatpush1.bf16.msra.mxu0 0
    %3163 = vmatprep.subr.bf16.mxu0 0
    %3164 = vmatpush1.bf16.msra.mxu0 0
    %3165 = vmatprep.subr.bf16.mxu0 0
    %3166 = vmatpush1.bf16.msra.mxu0 0
    %3167 = vmatprep.subr.bf16.mxu0 0
    %3168 = vmatpush1.bf16.msra.mxu0 0
    %3169 = vmatprep.subr.bf16.mxu0 0
    %3170 = vmatpush1.bf16.msra.mxu0 0
    %3171 = vmatprep.subr.bf16.mxu0 0
    %3172 = vmatpush1.bf16.msra.mxu0 0
    %3173 = vmatprep.mubr.bf16.mxu0 0
    %3174 = vmatmul.mubr.bf16.gmra.mrb[0].mxu0 %v3140
    %v3175 = vpop.f32.mrb[0].mxu0
    %v3176 = vadd.f32 0.0, %v3175
    %v3177 = vpop.f32.mrb[0].mxu0
    %v3178 = vpop.f32.mrb[0].mxu0
    %v3179 = vpop.f32.mrb[0].mxu0
    %3180 = vdwg.mxu0
    %v3181 = vadd.f32 %v3139, %v3176
    %3182 = vst [vmem:[%s3138] sm:$0xff] %v3181
    %s3183 = scalar_lea.vmem [#allocation12], 72
    %v3184 = vld [vmem:[%s3183] sm:$0xff]
    %v3185 = vpack.c.bf16 %v3137, %v3137
    %3186 = vmatprep.subr.bf16.mxu0 0
    %3187 = vmatpush1.bf16.msra.mxu0 %v1592
    %3188 = vmatprep.subr.bf16.mxu0 0
    %3189 = vmatpush1.bf16.msra.mxu0 %v1593
    %3190 = vmatprep.subr.bf16.mxu0 0
    %3191 = vmatpush1.bf16.msra.mxu0 %v1594
    %3192 = vmatprep.subr.bf16.mxu0 0
    %3193 = vmatpush1.bf16.msra.mxu0 %v1595
    %3194 = vmatprep.subr.bf16.mxu0 0
    %3195 = vmatpush1.bf16.msra.mxu0 %v1596
    %3196 = vmatprep.subr.bf16.mxu0 0
    %3197 = vmatpush1.bf16.msra.mxu0 %v1597
    %3198 = vmatprep.subr.bf16.mxu0 0
    %3199 = vmatpush1.bf16.msra.mxu0 %v1598
    %3200 = vmatprep.subr.bf16.mxu0 0
    %3201 = vmatpush1.bf16.msra.mxu0 %v1599
    %3202 = vmatprep.subr.bf16.mxu0 0
    %3203 = vmatpush1.bf16.msra.mxu0 0
    %3204 = vmatprep.subr.bf16.mxu0 0
    %3205 = vmatpush1.bf16.msra.mxu0 0
    %3206 = vmatprep.subr.bf16.mxu0 0
    %3207 = vmatpush1.bf16.msra.mxu0 0
    %3208 = vmatprep.subr.bf16.mxu0 0
    %3209 = vmatpush1.bf16.msra.mxu0 0
    %3210 = vmatprep.subr.bf16.mxu0 0
    %3211 = vmatpush1.bf16.msra.mxu0 0
    %3212 = vmatprep.subr.bf16.mxu0 0
    %3213 = vmatpush1.bf16.msra.mxu0 0
    %3214 = vmatprep.subr.bf16.mxu0 0
    %3215 = vmatpush1.bf16.msra.mxu0 0
    %3216 = vmatprep.subr.bf16.mxu0 0
    %3217 = vmatpush1.bf16.msra.mxu0 0
    %3218 = vmatprep.mubr.bf16.mxu0 0
    %3219 = vmatmul.mubr.bf16.gmra.mrb[0].mxu0 %v3185
    %v3220 = vpop.f32.mrb[0].mxu0
    %v3221 = vadd.f32 0.0, %v3220
    %v3222 = vpop.f32.mrb[0].mxu0
    %v3223 = vpop.f32.mrb[0].mxu0
    %v3224 = vpop.f32.mrb[0].mxu0
    %3225 = vdwg.mxu0
    %v3226 = vadd.f32 %v3184, %v3221
    %3227 = vst [vmem:[%s3183] sm:$0xff] %v3226
    %3228 = vmatprep.subr.bf16.mxu0 %v1102
    %3229 = vmatpush1.bf16.msra.mxu0 %v1101
    %3230 = vmatprep.subr.bf16.mxu0 %v1108
    %3231 = vmatpush1.bf16.msra.mxu0 %v1107
    %3232 = vmatprep.subr.bf16.mxu0 %v1114
    %3233 = vmatpush1.bf16.msra.mxu0 %v1113
    %3234 = vmatprep.subr.bf16.mxu0 %v1120
    %3235 = vmatpush1.bf16.msra.mxu0 %v1119
    %3236 = vmatprep.subr.bf16.mxu0 %v1126
    %3237 = vmatpush1.bf16.msra.mxu0 %v1125
    %3238 = vmatprep.subr.bf16.mxu0 %v1132
    %3239 = vmatpush1.bf16.msra.mxu0 %v1131
    %3240 = vmatprep.subr.bf16.mxu0 %v1138
    %3241 = vmatpush1.bf16.msra.mxu0 %v1137
    %3242 = vmatprep.subr.bf16.mxu0 %v1144
    %3243 = vmatpush1.bf16.msra.mxu0 %v1143
    %3244 = vmatprep.subr.bf16.mxu0 %v1150
    %3245 = vmatpush1.bf16.msra.mxu0 %v1149
    %3246 = vmatprep.subr.bf16.mxu0 %v1156
    %3247 = vmatpush1.bf16.msra.mxu0 %v1155
    %3248 = vmatprep.subr.bf16.mxu0 %v1162
    %3249 = vmatpush1.bf16.msra.mxu0 %v1161
    %3250 = vmatprep.subr.bf16.mxu0 %v1168
    %3251 = vmatpush1.bf16.msra.mxu0 %v1167
    %3252 = vmatprep.subr.bf16.mxu0 %v1174
    %3253 = vmatpush1.bf16.msra.mxu0 %v1173
    %3254 = vmatprep.subr.bf16.mxu0 %v1180
    %3255 = vmatpush1.bf16.msra.mxu0 %v1179
    %3256 = vmatprep.subr.bf16.mxu0 %v1186
    %3257 = vmatpush1.bf16.msra.mxu0 %v1185
    %3258 = vmatprep.subr.bf16.mxu0 %v1192
    %3259 = vmatpush1.bf16.msra.mxu0 %v1191
    %3260 = vmatprep.mubr.bf16.mxu0 %v3185
    %3261 = vmatmul.mubr.bf16.gmra.mrb[0].mxu0 %v3140
    %v3262 = vpop.f32.mrb[0].mxu0
    %v3263 = vadd.f32 %v786, %v3262
    %v3264 = vpop.f32.mrb[0].mxu0
    %v3265 = vadd.f32 %v790, %v3264
    %v3266 = vpop.f32.mrb[0].mxu0
    %v3267 = vpop.f32.mrb[0].mxu0
    %3268 = vdwg.mxu0
    %3269 = vmatprep.subr.bf16.mxu0 %v1104
    %3270 = vmatpush1.bf16.msra.mxu0 %v1103
    %3271 = vmatprep.subr.bf16.mxu0 %v1110
    %3272 = vmatpush1.bf16.msra.mxu0 %v1109
    %3273 = vmatprep.subr.bf16.mxu0 %v1116
    %3274 = vmatpush1.bf16.msra.mxu0 %v1115
    %3275 = vmatprep.subr.bf16.mxu0 %v1122
    %3276 = vmatpush1.bf16.msra.mxu0 %v1121
    %3277 = vmatprep.subr.bf16.mxu0 %v1128
    %3278 = vmatpush1.bf16.msra.mxu0 %v1127
    %3279 = vmatprep.subr.bf16.mxu0 %v1134
    %3280 = vmatpush1.bf16.msra.mxu0 %v1133
    %3281 = vmatprep.subr.bf16.mxu0 %v1140
    %3282 = vmatpush1.bf16.msra.mxu0 %v1139
    %3283 = vmatprep.subr.bf16.mxu0 %v1146
    %3284 = vmatpush1.bf16.msra.mxu0 %v1145
    %3285 = vmatprep.subr.bf16.mxu0 %v1152
    %3286 = vmatpush1.bf16.msra.mxu0 %v1151
    %3287 = vmatprep.subr.bf16.mxu0 %v1158
    %3288 = vmatpush1.bf16.msra.mxu0 %v1157
    %3289 = vmatprep.subr.bf16.mxu0 %v1164
    %3290 = vmatpush1.bf16.msra.mxu0 %v1163
    %3291 = vmatprep.subr.bf16.mxu0 %v1170
    %3292 = vmatpush1.bf16.msra.mxu0 %v1169
    %3293 = vmatprep.subr.bf16.mxu0 %v1176
    %3294 = vmatpush1.bf16.msra.mxu0 %v1175
    %3295 = vmatprep.subr.bf16.mxu0 %v1182
    %3296 = vmatpush1.bf16.msra.mxu0 %v1181
    %3297 = vmatprep.subr.bf16.mxu0 %v1188
    %3298 = vmatpush1.bf16.msra.mxu0 %v1187
    %3299 = vmatprep.subr.bf16.mxu0 %v1194
    %3300 = vmatpush1.bf16.msra.mxu0 %v1193
    %3301 = vmatprep.mubr.bf16.mxu0 %v3185
    %3302 = vmatmul.mubr.bf16.gmra.mrb[0].mxu0 %v3140
    %v3303 = vpop.f32.mrb[0].mxu0
    %v3304 = vadd.f32 %v794, %v3303
    %v3305 = vpop.f32.mrb[0].mxu0
    %v3306 = vadd.f32 %v798, %v3305
    %v3307 = vpop.f32.mrb[0].mxu0
    %v3308 = vpop.f32.mrb[0].mxu0
    %3309 = vdwg.mxu0
    %3310 = vmatprep.subr.bf16.mxu0 %v1106
    %3311 = vmatpush1.bf16.msra.mxu0 %v1105
    %3312 = vmatprep.subr.bf16.mxu0 %v1112
    %3313 = vmatpush1.bf16.msra.mxu0 %v1111
    %3314 = vmatprep.subr.bf16.mxu0 %v1118
    %3315 = vmatpush1.bf16.msra.mxu0 %v1117
    %3316 = vmatprep.subr.bf16.mxu0 %v1124
    %3317 = vmatpush1.bf16.msra.mxu0 %v1123
    %3318 = vmatprep.subr.bf16.mxu0 %v1130
    %3319 = vmatpush1.bf16.msra.mxu0 %v1129
    %3320 = vmatprep.subr.bf16.mxu0 %v1136
    %3321 = vmatpush1.bf16.msra.mxu0 %v1135
    %3322 = vmatprep.subr.bf16.mxu0 %v1142
    %3323 = vmatpush1.bf16.msra.mxu0 %v1141
    %3324 = vmatprep.subr.bf16.mxu0 %v1148
    %3325 = vmatpush1.bf16.msra.mxu0 %v1147
    %3326 = vmatprep.subr.bf16.mxu0 %v1154
    %3327 = vmatpush1.bf16.msra.mxu0 %v1153
    %3328 = vmatprep.subr.bf16.mxu0 %v1160
    %3329 = vmatpush1.bf16.msra.mxu0 %v1159
    %3330 = vmatprep.subr.bf16.mxu0 %v1166
    %3331 = vmatpush1.bf16.msra.mxu0 %v1165
    %3332 = vmatprep.subr.bf16.mxu0 %v1172
    %3333 = vmatpush1.bf16.msra.mxu0 %v1171
    %3334 = vmatprep.subr.bf16.mxu0 %v1178
    %3335 = vmatpush1.bf16.msra.mxu0 %v1177
    %3336 = vmatprep.subr.bf16.mxu0 %v1184
    %3337 = vmatpush1.bf16.msra.mxu0 %v1183
    %3338 = vmatprep.subr.bf16.mxu0 %v1190
    %3339 = vmatpush1.bf16.msra.mxu0 %v1189
    %3340 = vmatprep.subr.bf16.mxu0 %v1196
    %3341 = vmatpush1.bf16.msra.mxu0 %v1195
    %3342 = vmatprep.mubr.bf16.mxu0 %v3185
    %3343 = vmatmul.mubr.bf16.gmra.mrb[0].mxu0 %v3140
    %v3344 = vpop.f32.mrb[0].mxu0
    %v3345 = vadd.f32 %v802, %v3344
    %v3346 = vpop.f32.mrb[0].mxu0
    %v3347 = vadd.f32 %v806, %v3346
    %v3348 = vpop.f32.mrb[0].mxu0
    %v3349 = vpop.f32.mrb[0].mxu0
    %3350 = vdwg.mxu0
    %s3351 = scalar_lea.vmem [#allocation2], 336
    %v3352 = vld [vmem:[%s3351] sm:$0xff]
    %v3353 = vld [vmem:[%s3351 + $0x8] sm:$0xff]
    %v3354 = vld [vmem:[%s3351 + $0x10] sm:$0xff]
    %v3355 = vadd.f32 %v3352, %v3263
    %v3356 = vxor.u32 %v3355, 2147483648
    %v3357 = vmul.f32 %v3356, 1.442695
    %v3358 = vpow.pop %v3357
    %v3359 = vadd.f32 %v3358, 1.0
    %v3360 = vrcp.pop %v3359
    %v3361 = vmul.f32 1.0, %v3360
    %v3362 = vadd.f32 %v3353, %v3265
    %v3363 = vxor.u32 %v3362, 2147483648
    %v3364 = vmul.f32 %v3363, 1.442695
    %v3365 = vpow.pop %v3364
    %v3366 = vadd.f32 %v3365, 1.0
    %v3367 = vrcp.pop %v3366
    %v3368 = vmul.f32 1.0, %v3367
    %v3369 = vmul.f32 %v3361, %v3304
    %v3370 = vadd.f32 %v3354, %v3369
    %v3371 = vtanh.pop %v3370
    %v3372 = vsub.f32 1.0, %v3368
    %v3373 = vmul.f32 %v3372, %v3371
    %v3374 = vmul.f32 %v3368, %v3112
    %v3375 = vadd.f32 %v3373, %v3374
    %s3376 = scalar_lea.vmem [#allocation2], 384
    %v3377 = vld [vmem:[%s3376 + $0x18] sm:$0xff]
    %v3378 = vld [vmem:[%s3376 + $0x20] sm:$0xff]
    %v3379 = vld [vmem:[%s3376 + $0x28] sm:$0xff]
    %v3380 = vadd.f32 %v3377, %v3306
    %v3381 = vxor.u32 %v3380, 2147483648
    %v3382 = vmul.f32 %v3381, 1.442695
    %v3383 = vpow.pop %v3382
    %v3384 = vadd.f32 %v3383, 1.0
    %v3385 = vrcp.pop %v3384
    %v3386 = vmul.f32 1.0, %v3385
    %v3387 = vadd.f32 %v3378, %v3345
    %v3388 = vxor.u32 %v3387, 2147483648
    %v3389 = vmul.f32 %v3388, 1.442695
    %v3390 = vpow.pop %v3389
    %v3391 = vadd.f32 %v3390, 1.0
    %v3392 = vrcp.pop %v3391
    %v3393 = vmul.f32 1.0, %v3392
    %v3394 = vmul.f32 %v3386, %v3347
    %v3395 = vadd.f32 %v3379, %v3394
    %v3396 = vtanh.pop %v3395
    %v3397 = vsub.f32 1.0, %v3393
    %v3398 = vmul.f32 %v3397, %v3396
    %v3399 = vmul.f32 %v3393, %v3137
    %v3400 = vadd.f32 %v3398, %v3399
    %s3401 = scalar_lea.vmem [#allocation12], 56
    %v3402 = vld [vmem:[%s3401] sm:$0xff]
    %v3403 = vpack.c.bf16 %v3375, %v3375
    %3404 = vmatprep.subr.bf16.mxu0 0
    %3405 = vmatpush1.bf16.msra.mxu0 %v1499
    %3406 = vmatprep.subr.bf16.mxu0 0
    %3407 = vmatpush1.bf16.msra.mxu0 %v1500
    %3408 = vmatprep.subr.bf16.mxu0 0
    %3409 = vmatpush1.bf16.msra.mxu0 %v1501
    %3410 = vmatprep.subr.bf16.mxu0 0
    %3411 = vmatpush1.bf16.msra.mxu0 %v1502
    %3412 = vmatprep.subr.bf16.mxu0 0
    %3413 = vmatpush1.bf16.msra.mxu0 %v1503
    %3414 = vmatprep.subr.bf16.mxu0 0
    %3415 = vmatpush1.bf16.msra.mxu0 %v1504
    %3416 = vmatprep.subr.bf16.mxu0 0
    %3417 = vmatpush1.bf16.msra.mxu0 %v1505
    %3418 = vmatprep.subr.bf16.mxu0 0
    %3419 = vmatpush1.bf16.msra.mxu0 %v1506
    %3420 = vmatprep.subr.bf16.mxu0 0
    %3421 = vmatpush1.bf16.msra.mxu0 0
    %3422 = vmatprep.subr.bf16.mxu0 0
    %3423 = vmatpush1.bf16.msra.mxu0 0
    %3424 = vmatprep.subr.bf16.mxu0 0
    %3425 = vmatpush1.bf16.msra.mxu0 0
    %3426 = vmatprep.subr.bf16.mxu0 0
    %3427 = vmatpush1.bf16.msra.mxu0 0
    %3428 = vmatprep.subr.bf16.mxu0 0
    %3429 = vmatpush1.bf16.msra.mxu0 0
    %3430 = vmatprep.subr.bf16.mxu0 0
    %3431 = vmatpush1.bf16.msra.mxu0 0
    %3432 = vmatprep.subr.bf16.mxu0 0
    %3433 = vmatpush1.bf16.msra.mxu0 0
    %3434 = vmatprep.subr.bf16.mxu0 0
    %3435 = vmatpush1.bf16.msra.mxu0 0
    %3436 = vmatprep.mubr.bf16.mxu0 0
    %3437 = vmatmul.mubr.bf16.gmra.mrb[0].mxu0 %v3403
    %v3438 = vpop.f32.mrb[0].mxu0
    %v3439 = vadd.f32 0.0, %v3438
    %v3440 = vpop.f32.mrb[0].mxu0
    %v3441 = vpop.f32.mrb[0].mxu0
    %v3442 = vpop.f32.mrb[0].mxu0
    %3443 = vdwg.mxu0
    %v3444 = vadd.f32 %v3402, %v3439
    %3445 = vst [vmem:[%s3401] sm:$0xff] %v3444
    %s3446 = scalar_lea.vmem [#allocation12], 64
    %v3447 = vld [vmem:[%s3446] sm:$0xff]
    %v3448 = vpack.c.bf16 %v3400, %v3400
    %3449 = vmatprep.subr.bf16.mxu0 0
    %3450 = vmatpush1.bf16.msra.mxu0 %v1592
    %3451 = vmatprep.subr.bf16.mxu0 0
    %3452 = vmatpush1.bf16.msra.mxu0 %v1593
    %3453 = vmatprep.subr.bf16.mxu0 0
    %3454 = vmatpush1.bf16.msra.mxu0 %v1594
    %3455 = vmatprep.subr.bf16.mxu0 0
    %3456 = vmatpush1.bf16.msra.mxu0 %v1595
    %3457 = vmatprep.subr.bf16.mxu0 0
    %3458 = vmatpush1.bf16.msra.mxu0 %v1596
    %3459 = vmatprep.subr.bf16.mxu0 0
    %3460 = vmatpush1.bf16.msra.mxu0 %v1597
    %3461 = vmatprep.subr.bf16.mxu0 0
    %3462 = vmatpush1.bf16.msra.mxu0 %v1598
    %3463 = vmatprep.subr.bf16.mxu0 0
    %3464 = vmatpush1.bf16.msra.mxu0 %v1599
    %3465 = vmatprep.subr.bf16.mxu0 0
    %3466 = vmatpush1.bf16.msra.mxu0 0
    %3467 = vmatprep.subr.bf16.mxu0 0
    %3468 = vmatpush1.bf16.msra.mxu0 0
    %3469 = vmatprep.subr.bf16.mxu0 0
    %3470 = vmatpush1.bf16.msra.mxu0 0
    %3471 = vmatprep.subr.bf16.mxu0 0
    %3472 = vmatpush1.bf16.msra.mxu0 0
    %3473 = vmatprep.subr.bf16.mxu0 0
    %3474 = vmatpush1.bf16.msra.mxu0 0
    %3475 = vmatprep.subr.bf16.mxu0 0
    %3476 = vmatpush1.bf16.msra.mxu0 0
    %3477 = vmatprep.subr.bf16.mxu0 0
    %3478 = vmatpush1.bf16.msra.mxu0 0
    %3479 = vmatprep.subr.bf16.mxu0 0
    %3480 = vmatpush1.bf16.msra.mxu0 0
    %3481 = vmatprep.mubr.bf16.mxu0 0
    %3482 = vmatmul.mubr.bf16.gmra.mrb[0].mxu0 %v3448
    %v3483 = vpop.f32.mrb[0].mxu0
    %v3484 = vadd.f32 0.0, %v3483
    %v3485 = vpop.f32.mrb[0].mxu0
    %v3486 = vpop.f32.mrb[0].mxu0
    %v3487 = vpop.f32.mrb[0].mxu0
    %3488 = vdwg.mxu0
    %v3489 = vadd.f32 %v3447, %v3484
    %3490 = vst [vmem:[%s3446] sm:$0xff] %v3489
    %3491 = vmatprep.subr.bf16.mxu0 %v1102
    %3492 = vmatpush1.bf16.msra.mxu0 %v1101
    %3493 = vmatprep.subr.bf16.mxu0 %v1108
    %3494 = vmatpush1.bf16.msra.mxu0 %v1107
    %3495 = vmatprep.subr.bf16.mxu0 %v1114
    %3496 = vmatpush1.bf16.msra.mxu0 %v1113
    %3497 = vmatprep.subr.bf16.mxu0 %v1120
    %3498 = vmatpush1.bf16.msra.mxu0 %v1119
    %3499 = vmatprep.subr.bf16.mxu0 %v1126
    %3500 = vmatpush1.bf16.msra.mxu0 %v1125
    %3501 = vmatprep.subr.bf16.mxu0 %v1132
    %3502 = vmatpush1.bf16.msra.mxu0 %v1131
    %3503 = vmatprep.subr.bf16.mxu0 %v1138
    %3504 = vmatpush1.bf16.msra.mxu0 %v1137
    %3505 = vmatprep.subr.bf16.mxu0 %v1144
    %3506 = vmatpush1.bf16.msra.mxu0 %v1143
    %3507 = vmatprep.subr.bf16.mxu0 %v1150
    %3508 = vmatpush1.bf16.msra.mxu0 %v1149
    %3509 = vmatprep.subr.bf16.mxu0 %v1156
    %3510 = vmatpush1.bf16.msra.mxu0 %v1155
    %3511 = vmatprep.subr.bf16.mxu0 %v1162
    %3512 = vmatpush1.bf16.msra.mxu0 %v1161
    %3513 = vmatprep.subr.bf16.mxu0 %v1168
    %3514 = vmatpush1.bf16.msra.mxu0 %v1167
    %3515 = vmatprep.subr.bf16.mxu0 %v1174
    %3516 = vmatpush1.bf16.msra.mxu0 %v1173
    %3517 = vmatprep.subr.bf16.mxu0 %v1180
    %3518 = vmatpush1.bf16.msra.mxu0 %v1179
    %3519 = vmatprep.subr.bf16.mxu0 %v1186
    %3520 = vmatpush1.bf16.msra.mxu0 %v1185
    %3521 = vmatprep.subr.bf16.mxu0 %v1192
    %3522 = vmatpush1.bf16.msra.mxu0 %v1191
    %3523 = vmatprep.mubr.bf16.mxu0 %v3448
    %3524 = vmatmul.mubr.bf16.gmra.mrb[0].mxu0 %v3403
    %v3525 = vpop.f32.mrb[0].mxu0
    %v3526 = vadd.f32 %v786, %v3525
    %v3527 = vpop.f32.mrb[0].mxu0
    %v3528 = vadd.f32 %v790, %v3527
    %v3529 = vpop.f32.mrb[0].mxu0
    %v3530 = vpop.f32.mrb[0].mxu0
    %3531 = vdwg.mxu0
    %3532 = vmatprep.subr.bf16.mxu0 %v1104
    %3533 = vmatpush1.bf16.msra.mxu0 %v1103
    %3534 = vmatprep.subr.bf16.mxu0 %v1110
    %3535 = vmatpush1.bf16.msra.mxu0 %v1109
    %3536 = vmatprep.subr.bf16.mxu0 %v1116
    %3537 = vmatpush1.bf16.msra.mxu0 %v1115
    %3538 = vmatprep.subr.bf16.mxu0 %v1122
    %3539 = vmatpush1.bf16.msra.mxu0 %v1121
    %3540 = vmatprep.subr.bf16.mxu0 %v1128
    %3541 = vmatpush1.bf16.msra.mxu0 %v1127
    %3542 = vmatprep.subr.bf16.mxu0 %v1134
    %3543 = vmatpush1.bf16.msra.mxu0 %v1133
    %3544 = vmatprep.subr.bf16.mxu0 %v1140
    %3545 = vmatpush1.bf16.msra.mxu0 %v1139
    %3546 = vmatprep.subr.bf16.mxu0 %v1146
    %3547 = vmatpush1.bf16.msra.mxu0 %v1145
    %3548 = vmatprep.subr.bf16.mxu0 %v1152
    %3549 = vmatpush1.bf16.msra.mxu0 %v1151
    %3550 = vmatprep.subr.bf16.mxu0 %v1158
    %3551 = vmatpush1.bf16.msra.mxu0 %v1157
    %3552 = vmatprep.subr.bf16.mxu0 %v1164
    %3553 = vmatpush1.bf16.msra.mxu0 %v1163
    %3554 = vmatprep.subr.bf16.mxu0 %v1170
    %3555 = vmatpush1.bf16.msra.mxu0 %v1169
    %3556 = vmatprep.subr.bf16.mxu0 %v1176
    %3557 = vmatpush1.bf16.msra.mxu0 %v1175
    %3558 = vmatprep.subr.bf16.mxu0 %v1182
    %3559 = vmatpush1.bf16.msra.mxu0 %v1181
    %3560 = vmatprep.subr.bf16.mxu0 %v1188
    %3561 = vmatpush1.bf16.msra.mxu0 %v1187
    %3562 = vmatprep.subr.bf16.mxu0 %v1194
    %3563 = vmatpush1.bf16.msra.mxu0 %v1193
    %3564 = vmatprep.mubr.bf16.mxu0 %v3448
    %3565 = vmatmul.mubr.bf16.gmra.mrb[0].mxu0 %v3403
    %v3566 = vpop.f32.mrb[0].mxu0
    %v3567 = vadd.f32 %v794, %v3566
    %v3568 = vpop.f32.mrb[0].mxu0
    %v3569 = vadd.f32 %v798, %v3568
    %v3570 = vpop.f32.mrb[0].mxu0
    %v3571 = vpop.f32.mrb[0].mxu0
    %3572 = vdwg.mxu0
    %3573 = vmatprep.subr.bf16.mxu0 %v1106
    %3574 = vmatpush1.bf16.msra.mxu0 %v1105
    %3575 = vmatprep.subr.bf16.mxu0 %v1112
    %3576 = vmatpush1.bf16.msra.mxu0 %v1111
    %3577 = vmatprep.subr.bf16.mxu0 %v1118
    %3578 = vmatpush1.bf16.msra.mxu0 %v1117
    %3579 = vmatprep.subr.bf16.mxu0 %v1124
    %3580 = vmatpush1.bf16.msra.mxu0 %v1123
    %3581 = vmatprep.subr.bf16.mxu0 %v1130
    %3582 = vmatpush1.bf16.msra.mxu0 %v1129
    %3583 = vmatprep.subr.bf16.mxu0 %v1136
    %3584 = vmatpush1.bf16.msra.mxu0 %v1135
    %3585 = vmatprep.subr.bf16.mxu0 %v1142
    %3586 = vmatpush1.bf16.msra.mxu0 %v1141
    %3587 = vmatprep.subr.bf16.mxu0 %v1148
    %3588 = vmatpush1.bf16.msra.mxu0 %v1147
    %3589 = vmatprep.subr.bf16.mxu0 %v1154
    %3590 = vmatpush1.bf16.msra.mxu0 %v1153
    %3591 = vmatprep.subr.bf16.mxu0 %v1160
    %3592 = vmatpush1.bf16.msra.mxu0 %v1159
    %3593 = vmatprep.subr.bf16.mxu0 %v1166
    %3594 = vmatpush1.bf16.msra.mxu0 %v1165
    %3595 = vmatprep.subr.bf16.mxu0 %v1172
    %3596 = vmatpush1.bf16.msra.mxu0 %v1171
    %3597 = vmatprep.subr.bf16.mxu0 %v1178
    %3598 = vmatpush1.bf16.msra.mxu0 %v1177
    %3599 = vmatprep.subr.bf16.mxu0 %v1184
    %3600 = vmatpush1.bf16.msra.mxu0 %v1183
    %3601 = vmatprep.subr.bf16.mxu0 %v1190
    %3602 = vmatpush1.bf16.msra.mxu0 %v1189
    %3603 = vmatprep.subr.bf16.mxu0 %v1196
    %3604 = vmatpush1.bf16.msra.mxu0 %v1195
    %3605 = vmatprep.mubr.bf16.mxu0 %v3448
    %3606 = vmatmul.mubr.bf16.gmra.mrb[0].mxu0 %v3403
    %v3607 = vpop.f32.mrb[0].mxu0
    %v3608 = vadd.f32 %v802, %v3607
    %v3609 = vpop.f32.mrb[0].mxu0
    %v3610 = vadd.f32 %v806, %v3609
    %v3611 = vpop.f32.mrb[0].mxu0
    %v3612 = vpop.f32.mrb[0].mxu0
    %3613 = vdwg.mxu0
    %v3614 = vld [vmem:[%s3376] sm:$0xff]
    %v3615 = vld [vmem:[%s3376 + $0x8] sm:$0xff]
    %v3616 = vld [vmem:[%s3376 + $0x10] sm:$0xff]
    %v3617 = vadd.f32 %v3614, %v3526
    %v3618 = vxor.u32 %v3617, 2147483648
    %v3619 = vmul.f32 %v3618, 1.442695
    %v3620 = vpow.pop %v3619
    %v3621 = vadd.f32 %v3620, 1.0
    %v3622 = vrcp.pop %v3621
    %v3623 = vmul.f32 1.0, %v3622
    %v3624 = vadd.f32 %v3615, %v3528
    %v3625 = vxor.u32 %v3624, 2147483648
    %v3626 = vmul.f32 %v3625, 1.442695
    %v3627 = vpow.pop %v3626
    %v3628 = vadd.f32 %v3627, 1.0
    %v3629 = vrcp.pop %v3628
    %v3630 = vmul.f32 1.0, %v3629
    %v3631 = vmul.f32 %v3623, %v3567
    %v3632 = vadd.f32 %v3616, %v3631
    %v3633 = vtanh.pop %v3632
    %v3634 = vsub.f32 1.0, %v3630
    %v3635 = vmul.f32 %v3634, %v3633
    %v3636 = vmul.f32 %v3630, %v3375
    %v3637 = vadd.f32 %v3635, %v3636
    %v3638 = vld [vmem:[%s3351 + $0x18] sm:$0xff]
    %v3639 = vld [vmem:[%s3351 + $0x20] sm:$0xff]
    %v3640 = vld [vmem:[%s3351 + $0x28] sm:$0xff]
    %v3641 = vadd.f32 %v3638, %v3569
    %v3642 = vxor.u32 %v3641, 2147483648
    %v3643 = vmul.f32 %v3642, 1.442695
    %v3644 = vpow.pop %v3643
    %v3645 = vadd.f32 %v3644, 1.0
    %v3646 = vrcp.pop %v3645
    %v3647 = vmul.f32 1.0, %v3646
    %v3648 = vadd.f32 %v3639, %v3608
    %v3649 = vxor.u32 %v3648, 2147483648
    %v3650 = vmul.f32 %v3649, 1.442695
    %v3651 = vpow.pop %v3650
    %v3652 = vadd.f32 %v3651, 1.0
    %v3653 = vrcp.pop %v3652
    %v3654 = vmul.f32 1.0, %v3653
    %v3655 = vmul.f32 %v3647, %v3610
    %v3656 = vadd.f32 %v3640, %v3655
    %v3657 = vtanh.pop %v3656
    %v3658 = vsub.f32 1.0, %v3654
    %v3659 = vmul.f32 %v3658, %v3657
    %v3660 = vmul.f32 %v3654, %v3400
    %v3661 = vadd.f32 %v3659, %v3660
    %v3662 = vld [vmem:[%s3446] sm:$0xff]
    %v3663 = vpack.c.bf16 %v3637, %v3637
    %3664 = vmatprep.subr.bf16.mxu0 0
    %3665 = vmatpush1.bf16.msra.mxu0 %v1499
    %3666 = vmatprep.subr.bf16.mxu0 0
    %3667 = vmatpush1.bf16.msra.mxu0 %v1500
    %3668 = vmatprep.subr.bf16.mxu0 0
    %3669 = vmatpush1.bf16.msra.mxu0 %v1501
    %3670 = vmatprep.subr.bf16.mxu0 0
    %3671 = vmatpush1.bf16.msra.mxu0 %v1502
    %3672 = vmatprep.subr.bf16.mxu0 0
    %3673 = vmatpush1.bf16.msra.mxu0 %v1503
    %3674 = vmatprep.subr.bf16.mxu0 0
    %3675 = vmatpush1.bf16.msra.mxu0 %v1504
    %3676 = vmatprep.subr.bf16.mxu0 0
    %3677 = vmatpush1.bf16.msra.mxu0 %v1505
    %3678 = vmatprep.subr.bf16.mxu0 0
    %3679 = vmatpush1.bf16.msra.mxu0 %v1506
    %3680 = vmatprep.subr.bf16.mxu0 0
    %3681 = vmatpush1.bf16.msra.mxu0 0
    %3682 = vmatprep.subr.bf16.mxu0 0
    %3683 = vmatpush1.bf16.msra.mxu0 0
    %3684 = vmatprep.subr.bf16.mxu0 0
    %3685 = vmatpush1.bf16.msra.mxu0 0
    %3686 = vmatprep.subr.bf16.mxu0 0
    %3687 = vmatpush1.bf16.msra.mxu0 0
    %3688 = vmatprep.subr.bf16.mxu0 0
    %3689 = vmatpush1.bf16.msra.mxu0 0
    %3690 = vmatprep.subr.bf16.mxu0 0
    %3691 = vmatpush1.bf16.msra.mxu0 0
    %3692 = vmatprep.subr.bf16.mxu0 0
    %3693 = vmatpush1.bf16.msra.mxu0 0
    %3694 = vmatprep.subr.bf16.mxu0 0
    %3695 = vmatpush1.bf16.msra.mxu0 0
    %3696 = vmatprep.mubr.bf16.mxu0 0
    %3697 = vmatmul.mubr.bf16.gmra.mrb[0].mxu0 %v3663
    %v3698 = vpop.f32.mrb[0].mxu0
    %v3699 = vadd.f32 0.0, %v3698
    %v3700 = vpop.f32.mrb[0].mxu0
    %v3701 = vpop.f32.mrb[0].mxu0
    %v3702 = vpop.f32.mrb[0].mxu0
    %3703 = vdwg.mxu0
    %v3704 = vadd.f32 %v3662, %v3699
    %3705 = vst [vmem:[%s3446] sm:$0xff] %v3704
    %v3706 = vld [vmem:[%s3401] sm:$0xff]
    %v3707 = vpack.c.bf16 %v3661, %v3661
    %3708 = vmatprep.subr.bf16.mxu0 0
    %3709 = vmatpush1.bf16.msra.mxu0 %v1592
    %3710 = vmatprep.subr.bf16.mxu0 0
    %3711 = vmatpush1.bf16.msra.mxu0 %v1593
    %3712 = vmatprep.subr.bf16.mxu0 0
    %3713 = vmatpush1.bf16.msra.mxu0 %v1594
    %3714 = vmatprep.subr.bf16.mxu0 0
    %3715 = vmatpush1.bf16.msra.mxu0 %v1595
    %3716 = vmatprep.subr.bf16.mxu0 0
    %3717 = vmatpush1.bf16.msra.mxu0 %v1596
    %3718 = vmatprep.subr.bf16.mxu0 0
    %3719 = vmatpush1.bf16.msra.mxu0 %v1597
    %3720 = vmatprep.subr.bf16.mxu0 0
    %3721 = vmatpush1.bf16.msra.mxu0 %v1598
    %3722 = vmatprep.subr.bf16.mxu0 0
    %3723 = vmatpush1.bf16.msra.mxu0 %v1599
    %3724 = vmatprep.subr.bf16.mxu0 0
    %3725 = vmatpush1.bf16.msra.mxu0 0
    %3726 = vmatprep.subr.bf16.mxu0 0
    %3727 = vmatpush1.bf16.msra.mxu0 0
    %3728 = vmatprep.subr.bf16.mxu0 0
    %3729 = vmatpush1.bf16.msra.mxu0 0
    %3730 = vmatprep.subr.bf16.mxu0 0
    %3731 = vmatpush1.bf16.msra.mxu0 0
    %3732 = vmatprep.subr.bf16.mxu0 0
    %3733 = vmatpush1.bf16.msra.mxu0 0
    %3734 = vmatprep.subr.bf16.mxu0 0
    %3735 = vmatpush1.bf16.msra.mxu0 0
    %3736 = vmatprep.subr.bf16.mxu0 0
    %3737 = vmatpush1.bf16.msra.mxu0 0
    %3738 = vmatprep.subr.bf16.mxu0 0
    %3739 = vmatpush1.bf16.msra.mxu0 0
    %3740 = vmatprep.mubr.bf16.mxu0 0
    %3741 = vmatmul.mubr.bf16.gmra.mrb[0].mxu0 %v3707
    %v3742 = vpop.f32.mrb[0].mxu0
    %v3743 = vadd.f32 0.0, %v3742
    %v3744 = vpop.f32.mrb[0].mxu0
    %v3745 = vpop.f32.mrb[0].mxu0
    %v3746 = vpop.f32.mrb[0].mxu0
    %3747 = vdwg.mxu0
    %v3748 = vadd.f32 %v3706, %v3743
    %3749 = vst [vmem:[%s3401] sm:$0xff] %v3748
    %3750 = vmatprep.subr.bf16.mxu0 %v1102
    %3751 = vmatpush1.bf16.msra.mxu0 %v1101
    %3752 = vmatprep.subr.bf16.mxu0 %v1108
    %3753 = vmatpush1.bf16.msra.mxu0 %v1107
    %3754 = vmatprep.subr.bf16.mxu0 %v1114
    %3755 = vmatpush1.bf16.msra.mxu0 %v1113
    %3756 = vmatprep.subr.bf16.mxu0 %v1120
    %3757 = vmatpush1.bf16.msra.mxu0 %v1119
    %3758 = vmatprep.subr.bf16.mxu0 %v1126
    %3759 = vmatpush1.bf16.msra.mxu0 %v1125
    %3760 = vmatprep.subr.bf16.mxu0 %v1132
    %3761 = vmatpush1.bf16.msra.mxu0 %v1131
    %3762 = vmatprep.subr.bf16.mxu0 %v1138
    %3763 = vmatpush1.bf16.msra.mxu0 %v1137
    %3764 = vmatprep.subr.bf16.mxu0 %v1144
    %3765 = vmatpush1.bf16.msra.mxu0 %v1143
    %3766 = vmatprep.subr.bf16.mxu0 %v1150
    %3767 = vmatpush1.bf16.msra.mxu0 %v1149
    %3768 = vmatprep.subr.bf16.mxu0 %v1156
    %3769 = vmatpush1.bf16.msra.mxu0 %v1155
    %3770 = vmatprep.subr.bf16.mxu0 %v1162
    %3771 = vmatpush1.bf16.msra.mxu0 %v1161
    %3772 = vmatprep.subr.bf16.mxu0 %v1168
    %3773 = vmatpush1.bf16.msra.mxu0 %v1167
    %3774 = vmatprep.subr.bf16.mxu0 %v1174
    %3775 = vmatpush1.bf16.msra.mxu0 %v1173
    %3776 = vmatprep.subr.bf16.mxu0 %v1180
    %3777 = vmatpush1.bf16.msra.mxu0 %v1179
    %3778 = vmatprep.subr.bf16.mxu0 %v1186
    %3779 = vmatpush1.bf16.msra.mxu0 %v1185
    %3780 = vmatprep.subr.bf16.mxu0 %v1192
    %3781 = vmatpush1.bf16.msra.mxu0 %v1191
    %3782 = vmatprep.mubr.bf16.mxu0 %v3707
    %3783 = vmatmul.mubr.bf16.gmra.mrb[0].mxu0 %v3663
    %v3784 = vpop.f32.mrb[0].mxu0
    %v3785 = vadd.f32 %v786, %v3784
    %v3786 = vpop.f32.mrb[0].mxu0
    %v3787 = vadd.f32 %v790, %v3786
    %v3788 = vpop.f32.mrb[0].mxu0
    %v3789 = vpop.f32.mrb[0].mxu0
    %3790 = vdwg.mxu0
    %3791 = vmatprep.subr.bf16.mxu0 %v1104
    %3792 = vmatpush1.bf16.msra.mxu0 %v1103
    %3793 = vmatprep.subr.bf16.mxu0 %v1110
    %3794 = vmatpush1.bf16.msra.mxu0 %v1109
    %3795 = vmatprep.subr.bf16.mxu0 %v1116
    %3796 = vmatpush1.bf16.msra.mxu0 %v1115
    %3797 = vmatprep.subr.bf16.mxu0 %v1122
    %3798 = vmatpush1.bf16.msra.mxu0 %v1121
    %3799 = vmatprep.subr.bf16.mxu0 %v1128
    %3800 = vmatpush1.bf16.msra.mxu0 %v1127
    %3801 = vmatprep.subr.bf16.mxu0 %v1134
    %3802 = vmatpush1.bf16.msra.mxu0 %v1133
    %3803 = vmatprep.subr.bf16.mxu0 %v1140
    %3804 = vmatpush1.bf16.msra.mxu0 %v1139
    %3805 = vmatprep.subr.bf16.mxu0 %v1146
    %3806 = vmatpush1.bf16.msra.mxu0 %v1145
    %3807 = vmatprep.subr.bf16.mxu0 %v1152
    %3808 = vmatpush1.bf16.msra.mxu0 %v1151
    %3809 = vmatprep.subr.bf16.mxu0 %v1158
    %3810 = vmatpush1.bf16.msra.mxu0 %v1157
    %3811 = vmatprep.subr.bf16.mxu0 %v1164
    %3812 = vmatpush1.bf16.msra.mxu0 %v1163
    %3813 = vmatprep.subr.bf16.mxu0 %v1170
    %3814 = vmatpush1.bf16.msra.mxu0 %v1169
    %3815 = vmatprep.subr.bf16.mxu0 %v1176
    %3816 = vmatpush1.bf16.msra.mxu0 %v1175
    %3817 = vmatprep.subr.bf16.mxu0 %v1182
    %3818 = vmatpush1.bf16.msra.mxu0 %v1181
    %3819 = vmatprep.subr.bf16.mxu0 %v1188
    %3820 = vmatpush1.bf16.msra.mxu0 %v1187
    %3821 = vmatprep.subr.bf16.mxu0 %v1194
    %3822 = vmatpush1.bf16.msra.mxu0 %v1193
    %3823 = vmatprep.mubr.bf16.mxu0 %v3707
    %3824 = vmatmul.mubr.bf16.gmra.mrb[0].mxu0 %v3663
    %v3825 = vpop.f32.mrb[0].mxu0
    %v3826 = vadd.f32 %v794, %v3825
    %v3827 = vpop.f32.mrb[0].mxu0
    %v3828 = vadd.f32 %v798, %v3827
    %v3829 = vpop.f32.mrb[0].mxu0
    %v3830 = vpop.f32.mrb[0].mxu0
    %3831 = vdwg.mxu0
    %3832 = vmatprep.subr.bf16.mxu0 %v1106
    %3833 = vmatpush1.bf16.msra.mxu0 %v1105
    %3834 = vmatprep.subr.bf16.mxu0 %v1112
    %3835 = vmatpush1.bf16.msra.mxu0 %v1111
    %3836 = vmatprep.subr.bf16.mxu0 %v1118
    %3837 = vmatpush1.bf16.msra.mxu0 %v1117
    %3838 = vmatprep.subr.bf16.mxu0 %v1124
    %3839 = vmatpush1.bf16.msra.mxu0 %v1123
    %3840 = vmatprep.subr.bf16.mxu0 %v1130
    %3841 = vmatpush1.bf16.msra.mxu0 %v1129
    %3842 = vmatprep.subr.bf16.mxu0 %v1136
    %3843 = vmatpush1.bf16.msra.mxu0 %v1135
    %3844 = vmatprep.subr.bf16.mxu0 %v1142
    %3845 = vmatpush1.bf16.msra.mxu0 %v1141
    %3846 = vmatprep.subr.bf16.mxu0 %v1148
    %3847 = vmatpush1.bf16.msra.mxu0 %v1147
    %3848 = vmatprep.subr.bf16.mxu0 %v1154
    %3849 = vmatpush1.bf16.msra.mxu0 %v1153
    %3850 = vmatprep.subr.bf16.mxu0 %v1160
    %3851 = vmatpush1.bf16.msra.mxu0 %v1159
    %3852 = vmatprep.subr.bf16.mxu0 %v1166
    %3853 = vmatpush1.bf16.msra.mxu0 %v1165
    %3854 = vmatprep.subr.bf16.mxu0 %v1172
    %3855 = vmatpush1.bf16.msra.mxu0 %v1171
    %3856 = vmatprep.subr.bf16.mxu0 %v1178
    %3857 = vmatpush1.bf16.msra.mxu0 %v1177
    %3858 = vmatprep.subr.bf16.mxu0 %v1184
    %3859 = vmatpush1.bf16.msra.mxu0 %v1183
    %3860 = vmatprep.subr.bf16.mxu0 %v1190
    %3861 = vmatpush1.bf16.msra.mxu0 %v1189
    %3862 = vmatprep.subr.bf16.mxu0 %v1196
    %3863 = vmatpush1.bf16.msra.mxu0 %v1195
    %3864 = vmatprep.mubr.bf16.mxu0 %v3707
    %3865 = vmatmul.mubr.bf16.gmra.mrb[0].mxu0 %v3663
    %v3866 = vpop.f32.mrb[0].mxu0
    %v3867 = vadd.f32 %v802, %v3866
    %v3868 = vpop.f32.mrb[0].mxu0
    %v3869 = vadd.f32 %v806, %v3868
    %v3870 = vpop.f32.mrb[0].mxu0
    %v3871 = vpop.f32.mrb[0].mxu0
    %3872 = vdwg.mxu0
    %v3873 = vld [vmem:[%s3113] sm:$0xff]
    %v3874 = vld [vmem:[%s3113 + $0x8] sm:$0xff]
    %v3875 = vld [vmem:[%s3113 + $0x10] sm:$0xff]
    %v3876 = vadd.f32 %v3873, %v3785
    %v3877 = vxor.u32 %v3876, 2147483648
    %v3878 = vmul.f32 %v3877, 1.442695
    %v3879 = vpow.pop %v3878
    %v3880 = vadd.f32 %v3879, 1.0
    %v3881 = vrcp.pop %v3880
    %v3882 = vmul.f32 1.0, %v3881
    %v3883 = vadd.f32 %v3874, %v3787
    %v3884 = vxor.u32 %v3883, 2147483648
    %v3885 = vmul.f32 %v3884, 1.442695
    %v3886 = vpow.pop %v3885
    %v3887 = vadd.f32 %v3886, 1.0
    %v3888 = vrcp.pop %v3887
    %v3889 = vmul.f32 1.0, %v3888
    %v3890 = vmul.f32 %v3882, %v3826
    %v3891 = vadd.f32 %v3875, %v3890
    %v3892 = vtanh.pop %v3891
    %v3893 = vsub.f32 1.0, %v3889
    %v3894 = vmul.f32 %v3893, %v3892
    %v3895 = vmul.f32 %v3889, %v3637
    %v3896 = vadd.f32 %v3894, %v3895
    %v3897 = vld [vmem:[%s3088 + $0x18] sm:$0xff]
    %v3898 = vld [vmem:[%s3088 + $0x20] sm:$0xff]
    %v3899 = vld [vmem:[%s3088 + $0x28] sm:$0xff]
    %v3900 = vadd.f32 %v3897, %v3828
    %v3901 = vxor.u32 %v3900, 2147483648
    %v3902 = vmul.f32 %v3901, 1.442695
    %v3903 = vpow.pop %v3902
    %v3904 = vadd.f32 %v3903, 1.0
    %v3905 = vrcp.pop %v3904
    %v3906 = vmul.f32 1.0, %v3905
    %v3907 = vadd.f32 %v3898, %v3867
    %v3908 = vxor.u32 %v3907, 2147483648
    %v3909 = vmul.f32 %v3908, 1.442695
    %v3910 = vpow.pop %v3909
    %v3911 = vadd.f32 %v3910, 1.0
    %v3912 = vrcp.pop %v3911
    %v3913 = vmul.f32 1.0, %v3912
    %v3914 = vmul.f32 %v3906, %v3869
    %v3915 = vadd.f32 %v3899, %v3914
    %v3916 = vtanh.pop %v3915
    %v3917 = vsub.f32 1.0, %v3913
    %v3918 = vmul.f32 %v3917, %v3916
    %v3919 = vmul.f32 %v3913, %v3661
    %v3920 = vadd.f32 %v3918, %v3919
    %v3921 = vld [vmem:[%s3183] sm:$0xff]
    %v3922 = vpack.c.bf16 %v3896, %v3896
    %3923 = vmatprep.subr.bf16.mxu0 0
    %3924 = vmatpush1.bf16.msra.mxu0 %v1499
    %3925 = vmatprep.subr.bf16.mxu0 0
    %3926 = vmatpush1.bf16.msra.mxu0 %v1500
    %3927 = vmatprep.subr.bf16.mxu0 0
    %3928 = vmatpush1.bf16.msra.mxu0 %v1501
    %3929 = vmatprep.subr.bf16.mxu0 0
    %3930 = vmatpush1.bf16.msra.mxu0 %v1502
    %3931 = vmatprep.subr.bf16.mxu0 0
    %3932 = vmatpush1.bf16.msra.mxu0 %v1503
    %3933 = vmatprep.subr.bf16.mxu0 0
    %3934 = vmatpush1.bf16.msra.mxu0 %v1504
    %3935 = vmatprep.subr.bf16.mxu0 0
    %3936 = vmatpush1.bf16.msra.mxu0 %v1505
    %3937 = vmatprep.subr.bf16.mxu0 0
    %3938 = vmatpush1.bf16.msra.mxu0 %v1506
    %3939 = vmatprep.subr.bf16.mxu0 0
    %3940 = vmatpush1.bf16.msra.mxu0 0
    %3941 = vmatprep.subr.bf16.mxu0 0
    %3942 = vmatpush1.bf16.msra.mxu0 0
    %3943 = vmatprep.subr.bf16.mxu0 0
    %3944 = vmatpush1.bf16.msra.mxu0 0
    %3945 = vmatprep.subr.bf16.mxu0 0
    %3946 = vmatpush1.bf16.msra.mxu0 0
    %3947 = vmatprep.subr.bf16.mxu0 0
    %3948 = vmatpush1.bf16.msra.mxu0 0
    %3949 = vmatprep.subr.bf16.mxu0 0
    %3950 = vmatpush1.bf16.msra.mxu0 0
    %3951 = vmatprep.subr.bf16.mxu0 0
    %3952 = vmatpush1.bf16.msra.mxu0 0
    %3953 = vmatprep.subr.bf16.mxu0 0
    %3954 = vmatpush1.bf16.msra.mxu0 0
    %3955 = vmatprep.mubr.bf16.mxu0 0
    %3956 = vmatmul.mubr.bf16.gmra.mrb[0].mxu0 %v3922
    %v3957 = vpop.f32.mrb[0].mxu0
    %v3958 = vadd.f32 0.0, %v3957
    %v3959 = vpop.f32.mrb[0].mxu0
    %v3960 = vpop.f32.mrb[0].mxu0
    %v3961 = vpop.f32.mrb[0].mxu0
    %3962 = vdwg.mxu0
    %v3963 = vadd.f32 %v3921, %v3958
    %3964 = vst [vmem:[%s3183] sm:$0xff] %v3963
    %v3965 = vld [vmem:[%s3138] sm:$0xff]
    %v3966 = vpack.c.bf16 %v3920, %v3920
    %3967 = vmatprep.subr.bf16.mxu0 0
    %3968 = vmatpush1.bf16.msra.mxu0 %v1592
    %3969 = vmatprep.subr.bf16.mxu0 0
    %3970 = vmatpush1.bf16.msra.mxu0 %v1593
    %3971 = vmatprep.subr.bf16.mxu0 0
    %3972 = vmatpush1.bf16.msra.mxu0 %v1594
    %3973 = vmatprep.subr.bf16.mxu0 0
    %3974 = vmatpush1.bf16.msra.mxu0 %v1595
    %3975 = vmatprep.subr.bf16.mxu0 0
    %3976 = vmatpush1.bf16.msra.mxu0 %v1596
    %3977 = vmatprep.subr.bf16.mxu0 0
    %3978 = vmatpush1.bf16.msra.mxu0 %v1597
    %3979 = vmatprep.subr.bf16.mxu0 0
    %3980 = vmatpush1.bf16.msra.mxu0 %v1598
    %3981 = vmatprep.subr.bf16.mxu0 0
    %3982 = vmatpush1.bf16.msra.mxu0 %v1599
    %3983 = vmatprep.subr.bf16.mxu0 0
    %3984 = vmatpush1.bf16.msra.mxu0 0
    %3985 = vmatprep.subr.bf16.mxu0 0
    %3986 = vmatpush1.bf16.msra.mxu0 0
    %3987 = vmatprep.subr.bf16.mxu0 0
    %3988 = vmatpush1.bf16.msra.mxu0 0
    %3989 = vmatprep.subr.bf16.mxu0 0
    %3990 = vmatpush1.bf16.msra.mxu0 0
    %3991 = vmatprep.subr.bf16.mxu0 0
    %3992 = vmatpush1.bf16.msra.mxu0 0
    %3993 = vmatprep.subr.bf16.mxu0 0
    %3994 = vmatpush1.bf16.msra.mxu0 0
    %3995 = vmatprep.subr.bf16.mxu0 0
    %3996 = vmatpush1.bf16.msra.mxu0 0
    %3997 = vmatprep.subr.bf16.mxu0 0
    %3998 = vmatpush1.bf16.msra.mxu0 0
    %3999 = vmatprep.mubr.bf16.mxu0 0
    %4000 = vmatmul.mubr.bf16.gmra.mrb[0].mxu0 %v3966
    %v4001 = vpop.f32.mrb[0].mxu0
    %v4002 = vadd.f32 0.0, %v4001
    %v4003 = vpop.f32.mrb[0].mxu0
    %v4004 = vpop.f32.mrb[0].mxu0
    %v4005 = vpop.f32.mrb[0].mxu0
    %4006 = vdwg.mxu0
    %v4007 = vadd.f32 %v3965, %v4002
    %4008 = vst [vmem:[%s3138] sm:$0xff] %v4007
    %4009 = vmatprep.subr.bf16.mxu0 %v1102
    %4010 = vmatpush1.bf16.msra.mxu0 %v1101
    %4011 = vmatprep.subr.bf16.mxu0 %v1108
    %4012 = vmatpush1.bf16.msra.mxu0 %v1107
    %4013 = vmatprep.subr.bf16.mxu0 %v1114
    %4014 = vmatpush1.bf16.msra.mxu0 %v1113
    %4015 = vmatprep.subr.bf16.mxu0 %v1120
    %4016 = vmatpush1.bf16.msra.mxu0 %v1119
    %4017 = vmatprep.subr.bf16.mxu0 %v1126
    %4018 = vmatpush1.bf16.msra.mxu0 %v1125
    %4019 = vmatprep.subr.bf16.mxu0 %v1132
    %4020 = vmatpush1.bf16.msra.mxu0 %v1131
    %4021 = vmatprep.subr.bf16.mxu0 %v1138
    %4022 = vmatpush1.bf16.msra.mxu0 %v1137
    %4023 = vmatprep.subr.bf16.mxu0 %v1144
    %4024 = vmatpush1.bf16.msra.mxu0 %v1143
    %4025 = vmatprep.subr.bf16.mxu0 %v1150
    %4026 = vmatpush1.bf16.msra.mxu0 %v1149
    %4027 = vmatprep.subr.bf16.mxu0 %v1156
    %4028 = vmatpush1.bf16.msra.mxu0 %v1155
    %4029 = vmatprep.subr.bf16.mxu0 %v1162
    %4030 = vmatpush1.bf16.msra.mxu0 %v1161
    %4031 = vmatprep.subr.bf16.mxu0 %v1168
    %4032 = vmatpush1.bf16.msra.mxu0 %v1167
    %4033 = vmatprep.subr.bf16.mxu0 %v1174
    %4034 = vmatpush1.bf16.msra.mxu0 %v1173
    %4035 = vmatprep.subr.bf16.mxu0 %v1180
    %4036 = vmatpush1.bf16.msra.mxu0 %v1179
    %4037 = vmatprep.subr.bf16.mxu0 %v1186
    %4038 = vmatpush1.bf16.msra.mxu0 %v1185
    %4039 = vmatprep.subr.bf16.mxu0 %v1192
    %4040 = vmatpush1.bf16.msra.mxu0 %v1191
    %4041 = vmatprep.mubr.bf16.mxu0 %v3966
    %4042 = vmatmul.mubr.bf16.gmra.mrb[0].mxu0 %v3922
    %v4043 = vpop.f32.mrb[0].mxu0
    %v4044 = vadd.f32 %v786, %v4043
    %v4045 = vpop.f32.mrb[0].mxu0
    %v4046 = vadd.f32 %v790, %v4045
    %v4047 = vpop.f32.mrb[0].mxu0
    %v4048 = vpop.f32.mrb[0].mxu0
    %4049 = vdwg.mxu0
    %4050 = vmatprep.subr.bf16.mxu0 %v1104
    %4051 = vmatpush1.bf16.msra.mxu0 %v1103
    %4052 = vmatprep.subr.bf16.mxu0 %v1110
    %4053 = vmatpush1.bf16.msra.mxu0 %v1109
    %4054 = vmatprep.subr.bf16.mxu0 %v1116
    %4055 = vmatpush1.bf16.msra.mxu0 %v1115
    %4056 = vmatprep.subr.bf16.mxu0 %v1122
    %4057 = vmatpush1.bf16.msra.mxu0 %v1121
    %4058 = vmatprep.subr.bf16.mxu0 %v1128
    %4059 = vmatpush1.bf16.msra.mxu0 %v1127
    %4060 = vmatprep.subr.bf16.mxu0 %v1134
    %4061 = vmatpush1.bf16.msra.mxu0 %v1133
    %4062 = vmatprep.subr.bf16.mxu0 %v1140
    %4063 = vmatpush1.bf16.msra.mxu0 %v1139
    %4064 = vmatprep.subr.bf16.mxu0 %v1146
    %4065 = vmatpush1.bf16.msra.mxu0 %v1145
    %4066 = vmatprep.subr.bf16.mxu0 %v1152
    %4067 = vmatpush1.bf16.msra.mxu0 %v1151
    %4068 = vmatprep.subr.bf16.mxu0 %v1158
    %4069 = vmatpush1.bf16.msra.mxu0 %v1157
    %4070 = vmatprep.subr.bf16.mxu0 %v1164
    %4071 = vmatpush1.bf16.msra.mxu0 %v1163
    %4072 = vmatprep.subr.bf16.mxu0 %v1170
    %4073 = vmatpush1.bf16.msra.mxu0 %v1169
    %4074 = vmatprep.subr.bf16.mxu0 %v1176
    %4075 = vmatpush1.bf16.msra.mxu0 %v1175
    %4076 = vmatprep.subr.bf16.mxu0 %v1182
    %4077 = vmatpush1.bf16.msra.mxu0 %v1181
    %4078 = vmatprep.subr.bf16.mxu0 %v1188
    %4079 = vmatpush1.bf16.msra.mxu0 %v1187
    %4080 = vmatprep.subr.bf16.mxu0 %v1194
    %4081 = vmatpush1.bf16.msra.mxu0 %v1193
    %4082 = vmatprep.mubr.bf16.mxu0 %v3966
    %4083 = vmatmul.mubr.bf16.gmra.mrb[0].mxu0 %v3922
    %v4084 = vpop.f32.mrb[0].mxu0
    %v4085 = vadd.f32 %v794, %v4084
    %v4086 = vpop.f32.mrb[0].mxu0
    %v4087 = vadd.f32 %v798, %v4086
    %v4088 = vpop.f32.mrb[0].mxu0
    %v4089 = vpop.f32.mrb[0].mxu0
    %4090 = vdwg.mxu0
    %4091 = vmatprep.subr.bf16.mxu0 %v1106
    %4092 = vmatpush1.bf16.msra.mxu0 %v1105
    %4093 = vmatprep.subr.bf16.mxu0 %v1112
    %4094 = vmatpush1.bf16.msra.mxu0 %v1111
    %4095 = vmatprep.subr.bf16.mxu0 %v1118
    %4096 = vmatpush1.bf16.msra.mxu0 %v1117
    %4097 = vmatprep.subr.bf16.mxu0 %v1124
    %4098 = vmatpush1.bf16.msra.mxu0 %v1123
    %4099 = vmatprep.subr.bf16.mxu0 %v1130
    %4100 = vmatpush1.bf16.msra.mxu0 %v1129
    %4101 = vmatprep.subr.bf16.mxu0 %v1136
    %4102 = vmatpush1.bf16.msra.mxu0 %v1135
    %4103 = vmatprep.subr.bf16.mxu0 %v1142
    %4104 = vmatpush1.bf16.msra.mxu0 %v1141
    %4105 = vmatprep.subr.bf16.mxu0 %v1148
    %4106 = vmatpush1.bf16.msra.mxu0 %v1147
    %4107 = vmatprep.subr.bf16.mxu0 %v1154
    %4108 = vmatpush1.bf16.msra.mxu0 %v1153
    %4109 = vmatprep.subr.bf16.mxu0 %v1160
    %4110 = vmatpush1.bf16.msra.mxu0 %v1159
    %4111 = vmatprep.subr.bf16.mxu0 %v1166
    %4112 = vmatpush1.bf16.msra.mxu0 %v1165
    %4113 = vmatprep.subr.bf16.mxu0 %v1172
    %4114 = vmatpush1.bf16.msra.mxu0 %v1171
    %4115 = vmatprep.subr.bf16.mxu0 %v1178
    %4116 = vmatpush1.bf16.msra.mxu0 %v1177
    %4117 = vmatprep.subr.bf16.mxu0 %v1184
    %4118 = vmatpush1.bf16.msra.mxu0 %v1183
    %4119 = vmatprep.subr.bf16.mxu0 %v1190
    %4120 = vmatpush1.bf16.msra.mxu0 %v1189
    %4121 = vmatprep.subr.bf16.mxu0 %v1196
    %4122 = vmatpush1.bf16.msra.mxu0 %v1195
    %4123 = vmatprep.mubr.bf16.mxu0 %v3966
    %4124 = vmatmul.mubr.bf16.gmra.mrb[0].mxu0 %v3922
    %v4125 = vpop.f32.mrb[0].mxu0
    %v4126 = vadd.f32 %v802, %v4125
    %v4127 = vpop.f32.mrb[0].mxu0
    %v4128 = vadd.f32 %v806, %v4127
    %v4129 = vpop.f32.mrb[0].mxu0
    %v4130 = vpop.f32.mrb[0].mxu0
    %4131 = vdwg.mxu0
    %v4132 = vld [vmem:[%s2850] sm:$0xff]
    %v4133 = vld [vmem:[%s2850 + $0x8] sm:$0xff]
    %v4134 = vld [vmem:[%s2850 + $0x10] sm:$0xff]
    %v4135 = vadd.f32 %v4132, %v4044
    %v4136 = vxor.u32 %v4135, 2147483648
    %v4137 = vmul.f32 %v4136, 1.442695
    %v4138 = vpow.pop %v4137
    %v4139 = vadd.f32 %v4138, 1.0
    %v4140 = vrcp.pop %v4139
    %v4141 = vmul.f32 1.0, %v4140
    %v4142 = vadd.f32 %v4133, %v4046
    %v4143 = vxor.u32 %v4142, 2147483648
    %v4144 = vmul.f32 %v4143, 1.442695
    %v4145 = vpow.pop %v4144
    %v4146 = vadd.f32 %v4145, 1.0
    %v4147 = vrcp.pop %v4146
    %v4148 = vmul.f32 1.0, %v4147
    %v4149 = vmul.f32 %v4141, %v4085
    %v4150 = vadd.f32 %v4134, %v4149
    %v4151 = vtanh.pop %v4150
    %v4152 = vsub.f32 1.0, %v4148
    %v4153 = vmul.f32 %v4152, %v4151
    %v4154 = vmul.f32 %v4148, %v3896
    %v4155 = vadd.f32 %v4153, %v4154
    %v4156 = vld [vmem:[%s2825 + $0x18] sm:$0xff]
    %v4157 = vld [vmem:[%s2825 + $0x20] sm:$0xff]
    %v4158 = vld [vmem:[%s2825 + $0x28] sm:$0xff]
    %v4159 = vadd.f32 %v4156, %v4087
    %v4160 = vxor.u32 %v4159, 2147483648
    %v4161 = vmul.f32 %v4160, 1.442695
    %v4162 = vpow.pop %v4161
    %v4163 = vadd.f32 %v4162, 1.0
    %v4164 = vrcp.pop %v4163
    %v4165 = vmul.f32 1.0, %v4164
    %v4166 = vadd.f32 %v4157, %v4126
    %v4167 = vxor.u32 %v4166, 2147483648
    %v4168 = vmul.f32 %v4167, 1.442695
    %v4169 = vpow.pop %v4168
    %v4170 = vadd.f32 %v4169, 1.0
    %v4171 = vrcp.pop %v4170
    %v4172 = vmul.f32 1.0, %v4171
    %v4173 = vmul.f32 %v4165, %v4128
    %v4174 = vadd.f32 %v4158, %v4173
    %v4175 = vtanh.pop %v4174
    %v4176 = vsub.f32 1.0, %v4172
    %v4177 = vmul.f32 %v4176, %v4175
    %v4178 = vmul.f32 %v4172, %v3920
    %v4179 = vadd.f32 %v4177, %v4178
    %v4180 = vld [vmem:[%s2920] sm:$0xff]
    %v4181 = vpack.c.bf16 %v4155, %v4155
    %4182 = vmatprep.subr.bf16.mxu0 0
    %4183 = vmatpush1.bf16.msra.mxu0 %v1499
    %4184 = vmatprep.subr.bf16.mxu0 0
    %4185 = vmatpush1.bf16.msra.mxu0 %v1500
    %4186 = vmatprep.subr.bf16.mxu0 0
    %4187 = vmatpush1.bf16.msra.mxu0 %v1501
    %4188 = vmatprep.subr.bf16.mxu0 0
    %4189 = vmatpush1.bf16.msra.mxu0 %v1502
    %4190 = vmatprep.subr.bf16.mxu0 0
    %4191 = vmatpush1.bf16.msra.mxu0 %v1503
    %4192 = vmatprep.subr.bf16.mxu0 0
    %4193 = vmatpush1.bf16.msra.mxu0 %v1504
    %4194 = vmatprep.subr.bf16.mxu0 0
    %4195 = vmatpush1.bf16.msra.mxu0 %v1505
    %4196 = vmatprep.subr.bf16.mxu0 0
    %4197 = vmatpush1.bf16.msra.mxu0 %v1506
    %4198 = vmatprep.subr.bf16.mxu0 0
    %4199 = vmatpush1.bf16.msra.mxu0 0
    %4200 = vmatprep.subr.bf16.mxu0 0
    %4201 = vmatpush1.bf16.msra.mxu0 0
    %4202 = vmatprep.subr.bf16.mxu0 0
    %4203 = vmatpush1.bf16.msra.mxu0 0
    %4204 = vmatprep.subr.bf16.mxu0 0
    %4205 = vmatpush1.bf16.msra.mxu0 0
    %4206 = vmatprep.subr.bf16.mxu0 0
    %4207 = vmatpush1.bf16.msra.mxu0 0
    %4208 = vmatprep.subr.bf16.mxu0 0
    %4209 = vmatpush1.bf16.msra.mxu0 0
    %4210 = vmatprep.subr.bf16.mxu0 0
    %4211 = vmatpush1.bf16.msra.mxu0 0
    %4212 = vmatprep.subr.bf16.mxu0 0
    %4213 = vmatpush1.bf16.msra.mxu0 0
    %4214 = vmatprep.mubr.bf16.mxu0 0
    %4215 = vmatmul.mubr.bf16.gmra.mrb[0].mxu0 %v4181
    %v4216 = vpop.f32.mrb[0].mxu0
    %v4217 = vadd.f32 0.0, %v4216
    %v4218 = vpop.f32.mrb[0].mxu0
    %v4219 = vpop.f32.mrb[0].mxu0
    %v4220 = vpop.f32.mrb[0].mxu0
    %4221 = vdwg.mxu0
    %v4222 = vadd.f32 %v4180, %v4217
    %4223 = vst [vmem:[%s2920] sm:$0xff] %v4222
    %v4224 = vld [vmem:[%s2875] sm:$0xff]
    %v4225 = vpack.c.bf16 %v4179, %v4179
    %4226 = vmatprep.subr.bf16.mxu0 0
    %4227 = vmatpush1.bf16.msra.mxu0 %v1592
    %4228 = vmatprep.subr.bf16.mxu0 0
    %4229 = vmatpush1.bf16.msra.mxu0 %v1593
    %4230 = vmatprep.subr.bf16.mxu0 0
    %4231 = vmatpush1.bf16.msra.mxu0 %v1594
    %4232 = vmatprep.subr.bf16.mxu0 0
    %4233 = vmatpush1.bf16.msra.mxu0 %v1595
    %4234 = vmatprep.subr.bf16.mxu0 0
    %4235 = vmatpush1.bf16.msra.mxu0 %v1596
    %4236 = vmatprep.subr.bf16.mxu0 0
    %4237 = vmatpush1.bf16.msra.mxu0 %v1597
    %4238 = vmatprep.subr.bf16.mxu0 0
    %4239 = vmatpush1.bf16.msra.mxu0 %v1598
    %4240 = vmatprep.subr.bf16.mxu0 0
    %4241 = vmatpush1.bf16.msra.mxu0 %v1599
    %4242 = vmatprep.subr.bf16.mxu0 0
    %4243 = vmatpush1.bf16.msra.mxu0 0
    %4244 = vmatprep.subr.bf16.mxu0 0
    %4245 = vmatpush1.bf16.msra.mxu0 0
    %4246 = vmatprep.subr.bf16.mxu0 0
    %4247 = vmatpush1.bf16.msra.mxu0 0
    %4248 = vmatprep.subr.bf16.mxu0 0
    %4249 = vmatpush1.bf16.msra.mxu0 0
    %4250 = vmatprep.subr.bf16.mxu0 0
    %4251 = vmatpush1.bf16.msra.mxu0 0
    %4252 = vmatprep.subr.bf16.mxu0 0
    %4253 = vmatpush1.bf16.msra.mxu0 0
    %4254 = vmatprep.subr.bf16.mxu0 0
    %4255 = vmatpush1.bf16.msra.mxu0 0
    %4256 = vmatprep.subr.bf16.mxu0 0
    %4257 = vmatpush1.bf16.msra.mxu0 0
    %4258 = vmatprep.mubr.bf16.mxu0 0
    %4259 = vmatmul.mubr.bf16.gmra.mrb[0].mxu0 %v4225
    %v4260 = vpop.f32.mrb[0].mxu0
    %v4261 = vadd.f32 0.0, %v4260
    %v4262 = vpop.f32.mrb[0].mxu0
    %v4263 = vpop.f32.mrb[0].mxu0
    %v4264 = vpop.f32.mrb[0].mxu0
    %4265 = vdwg.mxu0
    %v4266 = vadd.f32 %v4224, %v4261
    %4267 = vst [vmem:[%s2875] sm:$0xff] %v4266
    %4268 = vmatprep.subr.bf16.mxu0 %v1102
    %4269 = vmatpush1.bf16.msra.mxu0 %v1101
    %4270 = vmatprep.subr.bf16.mxu0 %v1108
    %4271 = vmatpush1.bf16.msra.mxu0 %v1107
    %4272 = vmatprep.subr.bf16.mxu0 %v1114
    %4273 = vmatpush1.bf16.msra.mxu0 %v1113
    %4274 = vmatprep.subr.bf16.mxu0 %v1120
    %4275 = vmatpush1.bf16.msra.mxu0 %v1119
    %4276 = vmatprep.subr.bf16.mxu0 %v1126
    %4277 = vmatpush1.bf16.msra.mxu0 %v1125
    %4278 = vmatprep.subr.bf16.mxu0 %v1132
    %4279 = vmatpush1.bf16.msra.mxu0 %v1131
    %4280 = vmatprep.subr.bf16.mxu0 %v1138
    %4281 = vmatpush1.bf16.msra.mxu0 %v1137
    %4282 = vmatprep.subr.bf16.mxu0 %v1144
    %4283 = vmatpush1.bf16.msra.mxu0 %v1143
    %4284 = vmatprep.subr.bf16.mxu0 %v1150
    %4285 = vmatpush1.bf16.msra.mxu0 %v1149
    %4286 = vmatprep.subr.bf16.mxu0 %v1156
    %4287 = vmatpush1.bf16.msra.mxu0 %v1155
    %4288 = vmatprep.subr.bf16.mxu0 %v1162
    %4289 = vmatpush1.bf16.msra.mxu0 %v1161
    %4290 = vmatprep.subr.bf16.mxu0 %v1168
    %4291 = vmatpush1.bf16.msra.mxu0 %v1167
    %4292 = vmatprep.subr.bf16.mxu0 %v1174
    %4293 = vmatpush1.bf16.msra.mxu0 %v1173
    %4294 = vmatprep.subr.bf16.mxu0 %v1180
    %4295 = vmatpush1.bf16.msra.mxu0 %v1179
    %4296 = vmatprep.subr.bf16.mxu0 %v1186
    %4297 = vmatpush1.bf16.msra.mxu0 %v1185
    %4298 = vmatprep.subr.bf16.mxu0 %v1192
    %4299 = vmatpush1.bf16.msra.mxu0 %v1191
    %4300 = vmatprep.mubr.bf16.mxu0 %v4225
    %4301 = vmatmul.mubr.bf16.gmra.mrb[0].mxu0 %v4181
    %v4302 = vpop.f32.mrb[0].mxu0
    %v4303 = vadd.f32 %v786, %v4302
    %v4304 = vpop.f32.mrb[0].mxu0
    %v4305 = vadd.f32 %v790, %v4304
    %v4306 = vpop.f32.mrb[0].mxu0
    %v4307 = vpop.f32.mrb[0].mxu0
    %4308 = vdwg.mxu0
    %4309 = vmatprep.subr.bf16.mxu0 %v1104
    %4310 = vmatpush1.bf16.msra.mxu0 %v1103
    %4311 = vmatprep.subr.bf16.mxu0 %v1110
    %4312 = vmatpush1.bf16.msra.mxu0 %v1109
    %4313 = vmatprep.subr.bf16.mxu0 %v1116
    %4314 = vmatpush1.bf16.msra.mxu0 %v1115
    %4315 = vmatprep.subr.bf16.mxu0 %v1122
    %4316 = vmatpush1.bf16.msra.mxu0 %v1121
    %4317 = vmatprep.subr.bf16.mxu0 %v1128
    %4318 = vmatpush1.bf16.msra.mxu0 %v1127
    %4319 = vmatprep.subr.bf16.mxu0 %v1134
    %4320 = vmatpush1.bf16.msra.mxu0 %v1133
    %4321 = vmatprep.subr.bf16.mxu0 %v1140
    %4322 = vmatpush1.bf16.msra.mxu0 %v1139
    %4323 = vmatprep.subr.bf16.mxu0 %v1146
    %4324 = vmatpush1.bf16.msra.mxu0 %v1145
    %4325 = vmatprep.subr.bf16.mxu0 %v1152
    %4326 = vmatpush1.bf16.msra.mxu0 %v1151
    %4327 = vmatprep.subr.bf16.mxu0 %v1158
    %4328 = vmatpush1.bf16.msra.mxu0 %v1157
    %4329 = vmatprep.subr.bf16.mxu0 %v1164
    %4330 = vmatpush1.bf16.msra.mxu0 %v1163
    %4331 = vmatprep.subr.bf16.mxu0 %v1170
    %4332 = vmatpush1.bf16.msra.mxu0 %v1169
    %4333 = vmatprep.subr.bf16.mxu0 %v1176
    %4334 = vmatpush1.bf16.msra.mxu0 %v1175
    %4335 = vmatprep.subr.bf16.mxu0 %v1182
    %4336 = vmatpush1.bf16.msra.mxu0 %v1181
    %4337 = vmatprep.subr.bf16.mxu0 %v1188
    %4338 = vmatpush1.bf16.msra.mxu0 %v1187
    %4339 = vmatprep.subr.bf16.mxu0 %v1194
    %4340 = vmatpush1.bf16.msra.mxu0 %v1193
    %4341 = vmatprep.mubr.bf16.mxu0 %v4225
    %4342 = vmatmul.mubr.bf16.gmra.mrb[0].mxu0 %v4181
    %v4343 = vpop.f32.mrb[0].mxu0
    %v4344 = vadd.f32 %v794, %v4343
    %v4345 = vpop.f32.mrb[0].mxu0
    %v4346 = vadd.f32 %v798, %v4345
    %v4347 = vpop.f32.mrb[0].mxu0
    %v4348 = vpop.f32.mrb[0].mxu0
    %4349 = vdwg.mxu0
    %4350 = vmatprep.subr.bf16.mxu0 %v1106
    %4351 = vmatpush1.bf16.msra.mxu0 %v1105
    %4352 = vmatprep.subr.bf16.mxu0 %v1112
    %4353 = vmatpush1.bf16.msra.mxu0 %v1111
    %4354 = vmatprep.subr.bf16.mxu0 %v1118
    %4355 = vmatpush1.bf16.msra.mxu0 %v1117
    %4356 = vmatprep.subr.bf16.mxu0 %v1124
    %4357 = vmatpush1.bf16.msra.mxu0 %v1123
    %4358 = vmatprep.subr.bf16.mxu0 %v1130
    %4359 = vmatpush1.bf16.msra.mxu0 %v1129
    %4360 = vmatprep.subr.bf16.mxu0 %v1136
    %4361 = vmatpush1.bf16.msra.mxu0 %v1135
    %4362 = vmatprep.subr.bf16.mxu0 %v1142
    %4363 = vmatpush1.bf16.msra.mxu0 %v1141
    %4364 = vmatprep.subr.bf16.mxu0 %v1148
    %4365 = vmatpush1.bf16.msra.mxu0 %v1147
    %4366 = vmatprep.subr.bf16.mxu0 %v1154
    %4367 = vmatpush1.bf16.msra.mxu0 %v1153
    %4368 = vmatprep.subr.bf16.mxu0 %v1160
    %4369 = vmatpush1.bf16.msra.mxu0 %v1159
    %4370 = vmatprep.subr.bf16.mxu0 %v1166
    %4371 = vmatpush1.bf16.msra.mxu0 %v1165
    %4372 = vmatprep.subr.bf16.mxu0 %v1172
    %4373 = vmatpush1.bf16.msra.mxu0 %v1171
    %4374 = vmatprep.subr.bf16.mxu0 %v1178
    %4375 = vmatpush1.bf16.msra.mxu0 %v1177
    %4376 = vmatprep.subr.bf16.mxu0 %v1184
    %4377 = vmatpush1.bf16.msra.mxu0 %v1183
    %4378 = vmatprep.subr.bf16.mxu0 %v1190
    %4379 = vmatpush1.bf16.msra.mxu0 %v1189
    %4380 = vmatprep.subr.bf16.mxu0 %v1196
    %4381 = vmatpush1.bf16.msra.mxu0 %v1195
    %4382 = vmatprep.mubr.bf16.mxu0 %v4225
    %4383 = vmatmul.mubr.bf16.gmra.mrb[0].mxu0 %v4181
    %v4384 = vpop.f32.mrb[0].mxu0
    %v4385 = vadd.f32 %v802, %v4384
    %v4386 = vpop.f32.mrb[0].mxu0
    %v4387 = vadd.f32 %v806, %v4386
    %v4388 = vpop.f32.mrb[0].mxu0
    %v4389 = vpop.f32.mrb[0].mxu0
    %4390 = vdwg.mxu0
    %v4391 = vld [vmem:[%s2587] sm:$0xff]
    %v4392 = vld [vmem:[%s2587 + $0x8] sm:$0xff]
    %v4393 = vld [vmem:[%s2587 + $0x10] sm:$0xff]
    %v4394 = vadd.f32 %v4391, %v4303
    %v4395 = vxor.u32 %v4394, 2147483648
    %v4396 = vmul.f32 %v4395, 1.442695
    %v4397 = vpow.pop %v4396
    %v4398 = vadd.f32 %v4397, 1.0
    %v4399 = vrcp.pop %v4398
    %v4400 = vmul.f32 1.0, %v4399
    %v4401 = vadd.f32 %v4392, %v4305
    %v4402 = vxor.u32 %v4401, 2147483648
    %v4403 = vmul.f32 %v4402, 1.442695
    %v4404 = vpow.pop %v4403
    %v4405 = vadd.f32 %v4404, 1.0
    %v4406 = vrcp.pop %v4405
    %v4407 = vmul.f32 1.0, %v4406
    %v4408 = vmul.f32 %v4400, %v4344
    %v4409 = vadd.f32 %v4393, %v4408
    %v4410 = vtanh.pop %v4409
    %v4411 = vsub.f32 1.0, %v4407
    %v4412 = vmul.f32 %v4411, %v4410
    %v4413 = vmul.f32 %v4407, %v4155
    %v4414 = vadd.f32 %v4412, %v4413
    %v4415 = vld [vmem:[%s2562 + $0x18] sm:$0xff]
    %v4416 = vld [vmem:[%s2562 + $0x20] sm:$0xff]
    %v4417 = vld [vmem:[%s2562 + $0x28] sm:$0xff]
    %v4418 = vadd.f32 %v4415, %v4346
    %v4419 = vxor.u32 %v4418, 2147483648
    %v4420 = vmul.f32 %v4419, 1.442695
    %v4421 = vpow.pop %v4420
    %v4422 = vadd.f32 %v4421, 1.0
    %v4423 = vrcp.pop %v4422
    %v4424 = vmul.f32 1.0, %v4423
    %v4425 = vadd.f32 %v4416, %v4385
    %v4426 = vxor.u32 %v4425, 2147483648
    %v4427 = vmul.f32 %v4426, 1.442695
    %v4428 = vpow.pop %v4427
    %v4429 = vadd.f32 %v4428, 1.0
    %v4430 = vrcp.pop %v4429
    %v4431 = vmul.f32 1.0, %v4430
    %v4432 = vmul.f32 %v4424, %v4387
    %v4433 = vadd.f32 %v4417, %v4432
    %v4434 = vtanh.pop %v4433
    %v4435 = vsub.f32 1.0, %v4431
    %v4436 = vmul.f32 %v4435, %v4434
    %v4437 = vmul.f32 %v4431, %v4179
    %v4438 = vadd.f32 %v4436, %v4437
    %v4439 = vld [vmem:[%s2657] sm:$0xff]
    %v4440 = vpack.c.bf16 %v4414, %v4414
    %4441 = vmatprep.subr.bf16.mxu0 0
    %4442 = vmatpush1.bf16.msra.mxu0 %v1499
    %4443 = vmatprep.subr.bf16.mxu0 0
    %4444 = vmatpush1.bf16.msra.mxu0 %v1500
    %4445 = vmatprep.subr.bf16.mxu0 0
    %4446 = vmatpush1.bf16.msra.mxu0 %v1501
    %4447 = vmatprep.subr.bf16.mxu0 0
    %4448 = vmatpush1.bf16.msra.mxu0 %v1502
    %4449 = vmatprep.subr.bf16.mxu0 0
    %4450 = vmatpush1.bf16.msra.mxu0 %v1503
    %4451 = vmatprep.subr.bf16.mxu0 0
    %4452 = vmatpush1.bf16.msra.mxu0 %v1504
    %4453 = vmatprep.subr.bf16.mxu0 0
    %4454 = vmatpush1.bf16.msra.mxu0 %v1505
    %4455 = vmatprep.subr.bf16.mxu0 0
    %4456 = vmatpush1.bf16.msra.mxu0 %v1506
    %4457 = vmatprep.subr.bf16.mxu0 0
    %4458 = vmatpush1.bf16.msra.mxu0 0
    %4459 = vmatprep.subr.bf16.mxu0 0
    %4460 = vmatpush1.bf16.msra.mxu0 0
    %4461 = vmatprep.subr.bf16.mxu0 0
    %4462 = vmatpush1.bf16.msra.mxu0 0
    %4463 = vmatprep.subr.bf16.mxu0 0
    %4464 = vmatpush1.bf16.msra.mxu0 0
    %4465 = vmatprep.subr.bf16.mxu0 0
    %4466 = vmatpush1.bf16.msra.mxu0 0
    %4467 = vmatprep.subr.bf16.mxu0 0
    %4468 = vmatpush1.bf16.msra.mxu0 0
    %4469 = vmatprep.subr.bf16.mxu0 0
    %4470 = vmatpush1.bf16.msra.mxu0 0
    %4471 = vmatprep.subr.bf16.mxu0 0
    %4472 = vmatpush1.bf16.msra.mxu0 0
    %4473 = vmatprep.mubr.bf16.mxu0 0
    %4474 = vmatmul.mubr.bf16.gmra.mrb[0].mxu0 %v4440
    %v4475 = vpop.f32.mrb[0].mxu0
    %v4476 = vadd.f32 0.0, %v4475
    %v4477 = vpop.f32.mrb[0].mxu0
    %v4478 = vpop.f32.mrb[0].mxu0
    %v4479 = vpop.f32.mrb[0].mxu0
    %4480 = vdwg.mxu0
    %v4481 = vadd.f32 %v4439, %v4476
    %4482 = vst [vmem:[%s2657] sm:$0xff] %v4481
    %v4483 = vld [vmem:[%s2612] sm:$0xff]
    %v4484 = vpack.c.bf16 %v4438, %v4438
    %4485 = vmatprep.subr.bf16.mxu0 0
    %4486 = vmatpush1.bf16.msra.mxu0 %v1592
    %4487 = vmatprep.subr.bf16.mxu0 0
    %4488 = vmatpush1.bf16.msra.mxu0 %v1593
    %4489 = vmatprep.subr.bf16.mxu0 0
    %4490 = vmatpush1.bf16.msra.mxu0 %v1594
    %4491 = vmatprep.subr.bf16.mxu0 0
    %4492 = vmatpush1.bf16.msra.mxu0 %v1595
    %4493 = vmatprep.subr.bf16.mxu0 0
    %4494 = vmatpush1.bf16.msra.mxu0 %v1596
    %4495 = vmatprep.subr.bf16.mxu0 0
    %4496 = vmatpush1.bf16.msra.mxu0 %v1597
    %4497 = vmatprep.subr.bf16.mxu0 0
    %4498 = vmatpush1.bf16.msra.mxu0 %v1598
    %4499 = vmatprep.subr.bf16.mxu0 0
    %4500 = vmatpush1.bf16.msra.mxu0 %v1599
    %4501 = vmatprep.subr.bf16.mxu0 0
    %4502 = vmatpush1.bf16.msra.mxu0 0
    %4503 = vmatprep.subr.bf16.mxu0 0
    %4504 = vmatpush1.bf16.msra.mxu0 0
    %4505 = vmatprep.subr.bf16.mxu0 0
    %4506 = vmatpush1.bf16.msra.mxu0 0
    %4507 = vmatprep.subr.bf16.mxu0 0
    %4508 = vmatpush1.bf16.msra.mxu0 0
    %4509 = vmatprep.subr.bf16.mxu0 0
    %4510 = vmatpush1.bf16.msra.mxu0 0
    %4511 = vmatprep.subr.bf16.mxu0 0
    %4512 = vmatpush1.bf16.msra.mxu0 0
    %4513 = vmatprep.subr.bf16.mxu0 0
    %4514 = vmatpush1.bf16.msra.mxu0 0
    %4515 = vmatprep.subr.bf16.mxu0 0
    %4516 = vmatpush1.bf16.msra.mxu0 0
    %4517 = vmatprep.mubr.bf16.mxu0 0
    %4518 = vmatmul.mubr.bf16.gmra.mrb[0].mxu0 %v4484
    %v4519 = vpop.f32.mrb[0].mxu0
    %v4520 = vadd.f32 0.0, %v4519
    %v4521 = vpop.f32.mrb[0].mxu0
    %v4522 = vpop.f32.mrb[0].mxu0
    %v4523 = vpop.f32.mrb[0].mxu0
    %4524 = vdwg.mxu0
    %v4525 = vadd.f32 %v4483, %v4520
    %4526 = vst [vmem:[%s2612] sm:$0xff] %v4525
    %4527 = vmatprep.subr.bf16.mxu0 %v1102
    %4528 = vmatpush1.bf16.msra.mxu0 %v1101
    %4529 = vmatprep.subr.bf16.mxu0 %v1108
    %4530 = vmatpush1.bf16.msra.mxu0 %v1107
    %4531 = vmatprep.subr.bf16.mxu0 %v1114
    %4532 = vmatpush1.bf16.msra.mxu0 %v1113
    %4533 = vmatprep.subr.bf16.mxu0 %v1120
    %4534 = vmatpush1.bf16.msra.mxu0 %v1119
    %4535 = vmatprep.subr.bf16.mxu0 %v1126
    %4536 = vmatpush1.bf16.msra.mxu0 %v1125
    %4537 = vmatprep.subr.bf16.mxu0 %v1132
    %4538 = vmatpush1.bf16.msra.mxu0 %v1131
    %4539 = vmatprep.subr.bf16.mxu0 %v1138
    %4540 = vmatpush1.bf16.msra.mxu0 %v1137
    %4541 = vmatprep.subr.bf16.mxu0 %v1144
    %4542 = vmatpush1.bf16.msra.mxu0 %v1143
    %4543 = vmatprep.subr.bf16.mxu0 %v1150
    %4544 = vmatpush1.bf16.msra.mxu0 %v1149
    %4545 = vmatprep.subr.bf16.mxu0 %v1156
    %4546 = vmatpush1.bf16.msra.mxu0 %v1155
    %4547 = vmatprep.subr.bf16.mxu0 %v1162
    %4548 = vmatpush1.bf16.msra.mxu0 %v1161
    %4549 = vmatprep.subr.bf16.mxu0 %v1168
    %4550 = vmatpush1.bf16.msra.mxu0 %v1167
    %4551 = vmatprep.subr.bf16.mxu0 %v1174
    %4552 = vmatpush1.bf16.msra.mxu0 %v1173
    %4553 = vmatprep.subr.bf16.mxu0 %v1180
    %4554 = vmatpush1.bf16.msra.mxu0 %v1179
    %4555 = vmatprep.subr.bf16.mxu0 %v1186
    %4556 = vmatpush1.bf16.msra.mxu0 %v1185
    %4557 = vmatprep.subr.bf16.mxu0 %v1192
    %4558 = vmatpush1.bf16.msra.mxu0 %v1191
    %4559 = vmatprep.mubr.bf16.mxu0 %v4484
    %4560 = vmatmul.mubr.bf16.gmra.mrb[0].mxu0 %v4440
    %v4561 = vpop.f32.mrb[0].mxu0
    %v4562 = vadd.f32 %v786, %v4561
    %v4563 = vpop.f32.mrb[0].mxu0
    %v4564 = vadd.f32 %v790, %v4563
    %v4565 = vpop.f32.mrb[0].mxu0
    %v4566 = vpop.f32.mrb[0].mxu0
    %4567 = vdwg.mxu0
    %4568 = vmatprep.subr.bf16.mxu0 %v1104
    %4569 = vmatpush1.bf16.msra.mxu0 %v1103
    %4570 = vmatprep.subr.bf16.mxu0 %v1110
    %4571 = vmatpush1.bf16.msra.mxu0 %v1109
    %4572 = vmatprep.subr.bf16.mxu0 %v1116
    %4573 = vmatpush1.bf16.msra.mxu0 %v1115
    %4574 = vmatprep.subr.bf16.mxu0 %v1122
    %4575 = vmatpush1.bf16.msra.mxu0 %v1121
    %4576 = vmatprep.subr.bf16.mxu0 %v1128
    %4577 = vmatpush1.bf16.msra.mxu0 %v1127
    %4578 = vmatprep.subr.bf16.mxu0 %v1134
    %4579 = vmatpush1.bf16.msra.mxu0 %v1133
    %4580 = vmatprep.subr.bf16.mxu0 %v1140
    %4581 = vmatpush1.bf16.msra.mxu0 %v1139
    %4582 = vmatprep.subr.bf16.mxu0 %v1146
    %4583 = vmatpush1.bf16.msra.mxu0 %v1145
    %4584 = vmatprep.subr.bf16.mxu0 %v1152
    %4585 = vmatpush1.bf16.msra.mxu0 %v1151
    %4586 = vmatprep.subr.bf16.mxu0 %v1158
    %4587 = vmatpush1.bf16.msra.mxu0 %v1157
    %4588 = vmatprep.subr.bf16.mxu0 %v1164
    %4589 = vmatpush1.bf16.msra.mxu0 %v1163
    %4590 = vmatprep.subr.bf16.mxu0 %v1170
    %4591 = vmatpush1.bf16.msra.mxu0 %v1169
    %4592 = vmatprep.subr.bf16.mxu0 %v1176
    %4593 = vmatpush1.bf16.msra.mxu0 %v1175
    %4594 = vmatprep.subr.bf16.mxu0 %v1182
    %4595 = vmatpush1.bf16.msra.mxu0 %v1181
    %4596 = vmatprep.subr.bf16.mxu0 %v1188
    %4597 = vmatpush1.bf16.msra.mxu0 %v1187
    %4598 = vmatprep.subr.bf16.mxu0 %v1194
    %4599 = vmatpush1.bf16.msra.mxu0 %v1193
    %4600 = vmatprep.mubr.bf16.mxu0 %v4484
    %4601 = vmatmul.mubr.bf16.gmra.mrb[0].mxu0 %v4440
    %v4602 = vpop.f32.mrb[0].mxu0
    %v4603 = vadd.f32 %v794, %v4602
    %v4604 = vpop.f32.mrb[0].mxu0
    %v4605 = vadd.f32 %v798, %v4604
    %v4606 = vpop.f32.mrb[0].mxu0
    %v4607 = vpop.f32.mrb[0].mxu0
    %4608 = vdwg.mxu0
    %4609 = vmatprep.subr.bf16.mxu0 %v1106
    %4610 = vmatpush1.bf16.msra.mxu0 %v1105
    %4611 = vmatprep.subr.bf16.mxu0 %v1112
    %4612 = vmatpush1.bf16.msra.mxu0 %v1111
    %4613 = vmatprep.subr.bf16.mxu0 %v1118
    %4614 = vmatpush1.bf16.msra.mxu0 %v1117
    %4615 = vmatprep.subr.bf16.mxu0 %v1124
    %4616 = vmatpush1.bf16.msra.mxu0 %v1123
    %4617 = vmatprep.subr.bf16.mxu0 %v1130
    %4618 = vmatpush1.bf16.msra.mxu0 %v1129
    %4619 = vmatprep.subr.bf16.mxu0 %v1136
    %4620 = vmatpush1.bf16.msra.mxu0 %v1135
    %4621 = vmatprep.subr.bf16.mxu0 %v1142
    %4622 = vmatpush1.bf16.msra.mxu0 %v1141
    %4623 = vmatprep.subr.bf16.mxu0 %v1148
    %4624 = vmatpush1.bf16.msra.mxu0 %v1147
    %4625 = vmatprep.subr.bf16.mxu0 %v1154
    %4626 = vmatpush1.bf16.msra.mxu0 %v1153
    %4627 = vmatprep.subr.bf16.mxu0 %v1160
    %4628 = vmatpush1.bf16.msra.mxu0 %v1159
    %4629 = vmatprep.subr.bf16.mxu0 %v1166
    %4630 = vmatpush1.bf16.msra.mxu0 %v1165
    %4631 = vmatprep.subr.bf16.mxu0 %v1172
    %4632 = vmatpush1.bf16.msra.mxu0 %v1171
    %4633 = vmatprep.subr.bf16.mxu0 %v1178
    %4634 = vmatpush1.bf16.msra.mxu0 %v1177
    %4635 = vmatprep.subr.bf16.mxu0 %v1184
    %4636 = vmatpush1.bf16.msra.mxu0 %v1183
    %4637 = vmatprep.subr.bf16.mxu0 %v1190
    %4638 = vmatpush1.bf16.msra.mxu0 %v1189
    %4639 = vmatprep.subr.bf16.mxu0 %v1196
    %4640 = vmatpush1.bf16.msra.mxu0 %v1195
    %4641 = vmatprep.mubr.bf16.mxu0 %v4484
    %4642 = vmatmul.mubr.bf16.gmra.mrb[0].mxu0 %v4440
    %v4643 = vpop.f32.mrb[0].mxu0
    %v4644 = vadd.f32 %v802, %v4643
    %v4645 = vpop.f32.mrb[0].mxu0
    %v4646 = vadd.f32 %v806, %v4645
    %v4647 = vpop.f32.mrb[0].mxu0
    %v4648 = vpop.f32.mrb[0].mxu0
    %4649 = vdwg.mxu0
    %v4650 = vld [vmem:[%s2324] sm:$0xff]
    %v4651 = vld [vmem:[%s2324 + $0x8] sm:$0xff]
    %v4652 = vld [vmem:[%s2324 + $0x10] sm:$0xff]
    %v4653 = vadd.f32 %v4650, %v4562
    %v4654 = vxor.u32 %v4653, 2147483648
    %v4655 = vmul.f32 %v4654, 1.442695
    %v4656 = vpow.pop %v4655
    %v4657 = vadd.f32 %v4656, 1.0
    %v4658 = vrcp.pop %v4657
    %v4659 = vmul.f32 1.0, %v4658
    %v4660 = vadd.f32 %v4651, %v4564
    %v4661 = vxor.u32 %v4660, 2147483648
    %v4662 = vmul.f32 %v4661, 1.442695
    %v4663 = vpow.pop %v4662
    %v4664 = vadd.f32 %v4663, 1.0
    %v4665 = vrcp.pop %v4664
    %v4666 = vmul.f32 1.0, %v4665
    %v4667 = vmul.f32 %v4659, %v4603
    %v4668 = vadd.f32 %v4652, %v4667
    %v4669 = vtanh.pop %v4668
    %v4670 = vsub.f32 1.0, %v4666
    %v4671 = vmul.f32 %v4670, %v4669
    %v4672 = vmul.f32 %v4666, %v4414
    %v4673 = vadd.f32 %v4671, %v4672
    %v4674 = vld [vmem:[%s2299 + $0x18] sm:$0xff]
    %v4675 = vld [vmem:[%s2299 + $0x20] sm:$0xff]
    %v4676 = vld [vmem:[%s2299 + $0x28] sm:$0xff]
    %v4677 = vadd.f32 %v4674, %v4605
    %v4678 = vxor.u32 %v4677, 2147483648
    %v4679 = vmul.f32 %v4678, 1.442695
    %v4680 = vpow.pop %v4679
    %v4681 = vadd.f32 %v4680, 1.0
    %v4682 = vrcp.pop %v4681
    %v4683 = vmul.f32 1.0, %v4682
    %v4684 = vadd.f32 %v4675, %v4644
    %v4685 = vxor.u32 %v4684, 2147483648
    %v4686 = vmul.f32 %v4685, 1.442695
    %v4687 = vpow.pop %v4686
    %v4688 = vadd.f32 %v4687, 1.0
    %v4689 = vrcp.pop %v4688
    %v4690 = vmul.f32 1.0, %v4689
    %v4691 = vmul.f32 %v4683, %v4646
    %v4692 = vadd.f32 %v4676, %v4691
    %v4693 = vtanh.pop %v4692
    %v4694 = vsub.f32 1.0, %v4690
    %v4695 = vmul.f32 %v4694, %v4693
    %v4696 = vmul.f32 %v4690, %v4438
    %v4697 = vadd.f32 %v4695, %v4696
    %v4698 = vld [vmem:[%s2394] sm:$0xff]
    %v4699 = vpack.c.bf16 %v4673, %v4673
    %4700 = vmatprep.subr.bf16.mxu0 0
    %4701 = vmatpush1.bf16.msra.mxu0 %v1499
    %4702 = vmatprep.subr.bf16.mxu0 0
    %4703 = vmatpush1.bf16.msra.mxu0 %v1500
    %4704 = vmatprep.subr.bf16.mxu0 0
    %4705 = vmatpush1.bf16.msra.mxu0 %v1501
    %4706 = vmatprep.subr.bf16.mxu0 0
    %4707 = vmatpush1.bf16.msra.mxu0 %v1502
    %4708 = vmatprep.subr.bf16.mxu0 0
    %4709 = vmatpush1.bf16.msra.mxu0 %v1503
    %4710 = vmatprep.subr.bf16.mxu0 0
    %4711 = vmatpush1.bf16.msra.mxu0 %v1504
    %4712 = vmatprep.subr.bf16.mxu0 0
    %4713 = vmatpush1.bf16.msra.mxu0 %v1505
    %4714 = vmatprep.subr.bf16.mxu0 0
    %4715 = vmatpush1.bf16.msra.mxu0 %v1506
    %4716 = vmatprep.subr.bf16.mxu0 0
    %4717 = vmatpush1.bf16.msra.mxu0 0
    %4718 = vmatprep.subr.bf16.mxu0 0
    %4719 = vmatpush1.bf16.msra.mxu0 0
    %4720 = vmatprep.subr.bf16.mxu0 0
    %4721 = vmatpush1.bf16.msra.mxu0 0
    %4722 = vmatprep.subr.bf16.mxu0 0
    %4723 = vmatpush1.bf16.msra.mxu0 0
    %4724 = vmatprep.subr.bf16.mxu0 0
    %4725 = vmatpush1.bf16.msra.mxu0 0
    %4726 = vmatprep.subr.bf16.mxu0 0
    %4727 = vmatpush1.bf16.msra.mxu0 0
    %4728 = vmatprep.subr.bf16.mxu0 0
    %4729 = vmatpush1.bf16.msra.mxu0 0
    %4730 = vmatprep.subr.bf16.mxu0 0
    %4731 = vmatpush1.bf16.msra.mxu0 0
    %4732 = vmatprep.mubr.bf16.mxu0 0
    %4733 = vmatmul.mubr.bf16.gmra.mrb[0].mxu0 %v4699
    %v4734 = vpop.f32.mrb[0].mxu0
    %v4735 = vadd.f32 0.0, %v4734
    %v4736 = vpop.f32.mrb[0].mxu0
    %v4737 = vpop.f32.mrb[0].mxu0
    %v4738 = vpop.f32.mrb[0].mxu0
    %4739 = vdwg.mxu0
    %v4740 = vadd.f32 %v4698, %v4735
    %4741 = vst [vmem:[%s2394] sm:$0xff] %v4740
    %v4742 = vld [vmem:[%s2349] sm:$0xff]
    %v4743 = vpack.c.bf16 %v4697, %v4697
    %4744 = vmatprep.subr.bf16.mxu0 0
    %4745 = vmatpush1.bf16.msra.mxu0 %v1592
    %4746 = vmatprep.subr.bf16.mxu0 0
    %4747 = vmatpush1.bf16.msra.mxu0 %v1593
    %4748 = vmatprep.subr.bf16.mxu0 0
    %4749 = vmatpush1.bf16.msra.mxu0 %v1594
    %4750 = vmatprep.subr.bf16.mxu0 0
    %4751 = vmatpush1.bf16.msra.mxu0 %v1595
    %4752 = vmatprep.subr.bf16.mxu0 0
    %4753 = vmatpush1.bf16.msra.mxu0 %v1596
    %4754 = vmatprep.subr.bf16.mxu0 0
    %4755 = vmatpush1.bf16.msra.mxu0 %v1597
    %4756 = vmatprep.subr.bf16.mxu0 0
    %4757 = vmatpush1.bf16.msra.mxu0 %v1598
    %4758 = vmatprep.subr.bf16.mxu0 0
    %4759 = vmatpush1.bf16.msra.mxu0 %v1599
    %4760 = vmatprep.subr.bf16.mxu0 0
    %4761 = vmatpush1.bf16.msra.mxu0 0
    %4762 = vmatprep.subr.bf16.mxu0 0
    %4763 = vmatpush1.bf16.msra.mxu0 0
    %4764 = vmatprep.subr.bf16.mxu0 0
    %4765 = vmatpush1.bf16.msra.mxu0 0
    %4766 = vmatprep.subr.bf16.mxu0 0
    %4767 = vmatpush1.bf16.msra.mxu0 0
    %4768 = vmatprep.subr.bf16.mxu0 0
    %4769 = vmatpush1.bf16.msra.mxu0 0
    %4770 = vmatprep.subr.bf16.mxu0 0
    %4771 = vmatpush1.bf16.msra.mxu0 0
    %4772 = vmatprep.subr.bf16.mxu0 0
    %4773 = vmatpush1.bf16.msra.mxu0 0
    %4774 = vmatprep.subr.bf16.mxu0 0
    %4775 = vmatpush1.bf16.msra.mxu0 0
    %4776 = vmatprep.mubr.bf16.mxu0 0
    %4777 = vmatmul.mubr.bf16.gmra.mrb[0].mxu0 %v4743
    %v4778 = vpop.f32.mrb[0].mxu0
    %v4779 = vadd.f32 0.0, %v4778
    %v4780 = vpop.f32.mrb[0].mxu0
    %v4781 = vpop.f32.mrb[0].mxu0
    %v4782 = vpop.f32.mrb[0].mxu0
    %4783 = vdwg.mxu0
    %v4784 = vadd.f32 %v4742, %v4779
    %4785 = vst [vmem:[%s2349] sm:$0xff] %v4784
    %4786 = vmatprep.subr.bf16.mxu0 %v1102
    %4787 = vmatpush1.bf16.msra.mxu0 %v1101
    %4788 = vmatprep.subr.bf16.mxu0 %v1108
    %4789 = vmatpush1.bf16.msra.mxu0 %v1107
    %4790 = vmatprep.subr.bf16.mxu0 %v1114
    %4791 = vmatpush1.bf16.msra.mxu0 %v1113
    %4792 = vmatprep.subr.bf16.mxu0 %v1120
    %4793 = vmatpush1.bf16.msra.mxu0 %v1119
    %4794 = vmatprep.subr.bf16.mxu0 %v1126
    %4795 = vmatpush1.bf16.msra.mxu0 %v1125
    %4796 = vmatprep.subr.bf16.mxu0 %v1132
    %4797 = vmatpush1.bf16.msra.mxu0 %v1131
    %4798 = vmatprep.subr.bf16.mxu0 %v1138
    %4799 = vmatpush1.bf16.msra.mxu0 %v1137
    %4800 = vmatprep.subr.bf16.mxu0 %v1144
    %4801 = vmatpush1.bf16.msra.mxu0 %v1143
    %4802 = vmatprep.subr.bf16.mxu0 %v1150
    %4803 = vmatpush1.bf16.msra.mxu0 %v1149
    %4804 = vmatprep.subr.bf16.mxu0 %v1156
    %4805 = vmatpush1.bf16.msra.mxu0 %v1155
    %4806 = vmatprep.subr.bf16.mxu0 %v1162
    %4807 = vmatpush1.bf16.msra.mxu0 %v1161
    %4808 = vmatprep.subr.bf16.mxu0 %v1168
    %4809 = vmatpush1.bf16.msra.mxu0 %v1167
    %4810 = vmatprep.subr.bf16.mxu0 %v1174
    %4811 = vmatpush1.bf16.msra.mxu0 %v1173
    %4812 = vmatprep.subr.bf16.mxu0 %v1180
    %4813 = vmatpush1.bf16.msra.mxu0 %v1179
    %4814 = vmatprep.subr.bf16.mxu0 %v1186
    %4815 = vmatpush1.bf16.msra.mxu0 %v1185
    %4816 = vmatprep.subr.bf16.mxu0 %v1192
    %4817 = vmatpush1.bf16.msra.mxu0 %v1191
    %4818 = vmatprep.mubr.bf16.mxu0 %v4743
    %4819 = vmatmul.mubr.bf16.gmra.mrb[0].mxu0 %v4699
    %v4820 = vpop.f32.mrb[0].mxu0
    %v4821 = vadd.f32 %v786, %v4820
    %v4822 = vpop.f32.mrb[0].mxu0
    %v4823 = vadd.f32 %v790, %v4822
    %v4824 = vpop.f32.mrb[0].mxu0
    %v4825 = vpop.f32.mrb[0].mxu0
    %4826 = vdwg.mxu0
    %4827 = vmatprep.subr.bf16.mxu0 %v1104
    %4828 = vmatpush1.bf16.msra.mxu0 %v1103
    %4829 = vmatprep.subr.bf16.mxu0 %v1110
    %4830 = vmatpush1.bf16.msra.mxu0 %v1109
    %4831 = vmatprep.subr.bf16.mxu0 %v1116
    %4832 = vmatpush1.bf16.msra.mxu0 %v1115
    %4833 = vmatprep.subr.bf16.mxu0 %v1122
    %4834 = vmatpush1.bf16.msra.mxu0 %v1121
    %4835 = vmatprep.subr.bf16.mxu0 %v1128
    %4836 = vmatpush1.bf16.msra.mxu0 %v1127
    %4837 = vmatprep.subr.bf16.mxu0 %v1134
    %4838 = vmatpush1.bf16.msra.mxu0 %v1133
    %4839 = vmatprep.subr.bf16.mxu0 %v1140
    %4840 = vmatpush1.bf16.msra.mxu0 %v1139
    %4841 = vmatprep.subr.bf16.mxu0 %v1146
    %4842 = vmatpush1.bf16.msra.mxu0 %v1145
    %4843 = vmatprep.subr.bf16.mxu0 %v1152
    %4844 = vmatpush1.bf16.msra.mxu0 %v1151
    %4845 = vmatprep.subr.bf16.mxu0 %v1158
    %4846 = vmatpush1.bf16.msra.mxu0 %v1157
    %4847 = vmatprep.subr.bf16.mxu0 %v1164
    %4848 = vmatpush1.bf16.msra.mxu0 %v1163
    %4849 = vmatprep.subr.bf16.mxu0 %v1170
    %4850 = vmatpush1.bf16.msra.mxu0 %v1169
    %4851 = vmatprep.subr.bf16.mxu0 %v1176
    %4852 = vmatpush1.bf16.msra.mxu0 %v1175
    %4853 = vmatprep.subr.bf16.mxu0 %v1182
    %4854 = vmatpush1.bf16.msra.mxu0 %v1181
    %4855 = vmatprep.subr.bf16.mxu0 %v1188
    %4856 = vmatpush1.bf16.msra.mxu0 %v1187
    %4857 = vmatprep.subr.bf16.mxu0 %v1194
    %4858 = vmatpush1.bf16.msra.mxu0 %v1193
    %4859 = vmatprep.mubr.bf16.mxu0 %v4743
    %4860 = vmatmul.mubr.bf16.gmra.mrb[0].mxu0 %v4699
    %v4861 = vpop.f32.mrb[0].mxu0
    %v4862 = vadd.f32 %v794, %v4861
    %v4863 = vpop.f32.mrb[0].mxu0
    %v4864 = vadd.f32 %v798, %v4863
    %v4865 = vpop.f32.mrb[0].mxu0
    %v4866 = vpop.f32.mrb[0].mxu0
    %4867 = vdwg.mxu0
    %4868 = vmatprep.subr.bf16.mxu0 %v1106
    %4869 = vmatpush1.bf16.msra.mxu0 %v1105
    %4870 = vmatprep.subr.bf16.mxu0 %v1112
    %4871 = vmatpush1.bf16.msra.mxu0 %v1111
    %4872 = vmatprep.subr.bf16.mxu0 %v1118
    %4873 = vmatpush1.bf16.msra.mxu0 %v1117
    %4874 = vmatprep.subr.bf16.mxu0 %v1124
    %4875 = vmatpush1.bf16.msra.mxu0 %v1123
    %4876 = vmatprep.subr.bf16.mxu0 %v1130
    %4877 = vmatpush1.bf16.msra.mxu0 %v1129
    %4878 = vmatprep.subr.bf16.mxu0 %v1136
    %4879 = vmatpush1.bf16.msra.mxu0 %v1135
    %4880 = vmatprep.subr.bf16.mxu0 %v1142
    %4881 = vmatpush1.bf16.msra.mxu0 %v1141
    %4882 = vmatprep.subr.bf16.mxu0 %v1148
    %4883 = vmatpush1.bf16.msra.mxu0 %v1147
    %4884 = vmatprep.subr.bf16.mxu0 %v1154
    %4885 = vmatpush1.bf16.msra.mxu0 %v1153
    %4886 = vmatprep.subr.bf16.mxu0 %v1160
    %4887 = vmatpush1.bf16.msra.mxu0 %v1159
    %4888 = vmatprep.subr.bf16.mxu0 %v1166
    %4889 = vmatpush1.bf16.msra.mxu0 %v1165
    %4890 = vmatprep.subr.bf16.mxu0 %v1172
    %4891 = vmatpush1.bf16.msra.mxu0 %v1171
    %4892 = vmatprep.subr.bf16.mxu0 %v1178
    %4893 = vmatpush1.bf16.msra.mxu0 %v1177
    %4894 = vmatprep.subr.bf16.mxu0 %v1184
    %4895 = vmatpush1.bf16.msra.mxu0 %v1183
    %4896 = vmatprep.subr.bf16.mxu0 %v1190
    %4897 = vmatpush1.bf16.msra.mxu0 %v1189
    %4898 = vmatprep.subr.bf16.mxu0 %v1196
    %4899 = vmatpush1.bf16.msra.mxu0 %v1195
    %4900 = vmatprep.mubr.bf16.mxu0 %v4743
    %4901 = vmatmul.mubr.bf16.gmra.mrb[0].mxu0 %v4699
    %v4902 = vpop.f32.mrb[0].mxu0
    %v4903 = vadd.f32 %v802, %v4902
    %v4904 = vpop.f32.mrb[0].mxu0
    %v4905 = vadd.f32 %v806, %v4904
    %v4906 = vpop.f32.mrb[0].mxu0
    %v4907 = vpop.f32.mrb[0].mxu0
    %4908 = vdwg.mxu0
    %v4909 = vld [vmem:[%s2061] sm:$0xff]
    %v4910 = vld [vmem:[%s2061 + $0x8] sm:$0xff]
    %v4911 = vld [vmem:[%s2061 + $0x10] sm:$0xff]
    %v4912 = vadd.f32 %v4909, %v4821
    %v4913 = vxor.u32 %v4912, 2147483648
    %v4914 = vmul.f32 %v4913, 1.442695
    %v4915 = vpow.pop %v4914
    %v4916 = vadd.f32 %v4915, 1.0
    %v4917 = vrcp.pop %v4916
    %v4918 = vmul.f32 1.0, %v4917
    %v4919 = vadd.f32 %v4910, %v4823
    %v4920 = vxor.u32 %v4919, 2147483648
    %v4921 = vmul.f32 %v4920, 1.442695
    %v4922 = vpow.pop %v4921
    %v4923 = vadd.f32 %v4922, 1.0
    %v4924 = vrcp.pop %v4923
    %v4925 = vmul.f32 1.0, %v4924
    %v4926 = vmul.f32 %v4918, %v4862
    %v4927 = vadd.f32 %v4911, %v4926
    %v4928 = vtanh.pop %v4927
    %v4929 = vsub.f32 1.0, %v4925
    %v4930 = vmul.f32 %v4929, %v4928
    %v4931 = vmul.f32 %v4925, %v4673
    %v4932 = vadd.f32 %v4930, %v4931
    %v4933 = vld [vmem:[%s2036 + $0x18] sm:$0xff]
    %v4934 = vld [vmem:[%s2036 + $0x20] sm:$0xff]
    %v4935 = vld [vmem:[%s2036 + $0x28] sm:$0xff]
    %v4936 = vadd.f32 %v4933, %v4864
    %v4937 = vxor.u32 %v4936, 2147483648
    %v4938 = vmul.f32 %v4937, 1.442695
    %v4939 = vpow.pop %v4938
    %v4940 = vadd.f32 %v4939, 1.0
    %v4941 = vrcp.pop %v4940
    %v4942 = vmul.f32 1.0, %v4941
    %v4943 = vadd.f32 %v4934, %v4903
    %v4944 = vxor.u32 %v4943, 2147483648
    %v4945 = vmul.f32 %v4944, 1.442695
    %v4946 = vpow.pop %v4945
    %v4947 = vadd.f32 %v4946, 1.0
    %v4948 = vrcp.pop %v4947
    %v4949 = vmul.f32 1.0, %v4948
    %v4950 = vmul.f32 %v4942, %v4905
    %v4951 = vadd.f32 %v4935, %v4950
    %v4952 = vtanh.pop %v4951
    %v4953 = vsub.f32 1.0, %v4949
    %v4954 = vmul.f32 %v4953, %v4952
    %v4955 = vmul.f32 %v4949, %v4697
    %v4956 = vadd.f32 %v4954, %v4955
    %v4957 = vld [vmem:[%s2131] sm:$0xff]
    %v4958 = vpack.c.bf16 %v4932, %v4932
    %4959 = vmatprep.subr.bf16.mxu0 0
    %4960 = vmatpush1.bf16.msra.mxu0 %v1499
    %4961 = vmatprep.subr.bf16.mxu0 0
    %4962 = vmatpush1.bf16.msra.mxu0 %v1500
    %4963 = vmatprep.subr.bf16.mxu0 0
    %4964 = vmatpush1.bf16.msra.mxu0 %v1501
    %4965 = vmatprep.subr.bf16.mxu0 0
    %4966 = vmatpush1.bf16.msra.mxu0 %v1502
    %4967 = vmatprep.subr.bf16.mxu0 0
    %4968 = vmatpush1.bf16.msra.mxu0 %v1503
    %4969 = vmatprep.subr.bf16.mxu0 0
    %4970 = vmatpush1.bf16.msra.mxu0 %v1504
    %4971 = vmatprep.subr.bf16.mxu0 0
    %4972 = vmatpush1.bf16.msra.mxu0 %v1505
    %4973 = vmatprep.subr.bf16.mxu0 0
    %4974 = vmatpush1.bf16.msra.mxu0 %v1506
    %4975 = vmatprep.subr.bf16.mxu0 0
    %4976 = vmatpush1.bf16.msra.mxu0 0
    %4977 = vmatprep.subr.bf16.mxu0 0
    %4978 = vmatpush1.bf16.msra.mxu0 0
    %4979 = vmatprep.subr.bf16.mxu0 0
    %4980 = vmatpush1.bf16.msra.mxu0 0
    %4981 = vmatprep.subr.bf16.mxu0 0
    %4982 = vmatpush1.bf16.msra.mxu0 0
    %4983 = vmatprep.subr.bf16.mxu0 0
    %4984 = vmatpush1.bf16.msra.mxu0 0
    %4985 = vmatprep.subr.bf16.mxu0 0
    %4986 = vmatpush1.bf16.msra.mxu0 0
    %4987 = vmatprep.subr.bf16.mxu0 0
    %4988 = vmatpush1.bf16.msra.mxu0 0
    %4989 = vmatprep.subr.bf16.mxu0 0
    %4990 = vmatpush1.bf16.msra.mxu0 0
    %4991 = vmatprep.mubr.bf16.mxu0 0
    %4992 = vmatmul.mubr.bf16.gmra.mrb[0].mxu0 %v4958
    %v4993 = vpop.f32.mrb[0].mxu0
    %v4994 = vadd.f32 0.0, %v4993
    %v4995 = vpop.f32.mrb[0].mxu0
    %v4996 = vpop.f32.mrb[0].mxu0
    %v4997 = vpop.f32.mrb[0].mxu0
    %4998 = vdwg.mxu0
    %v4999 = vadd.f32 %v4957, %v4994
    %5000 = vst [vmem:[%s2131] sm:$0xff] %v4999
    %v5001 = vld [vmem:[%s2086] sm:$0xff]
    %v5002 = vpack.c.bf16 %v4956, %v4956
    %5003 = vmatprep.subr.bf16.mxu0 0
    %5004 = vmatpush1.bf16.msra.mxu0 %v1592
    %5005 = vmatprep.subr.bf16.mxu0 0
    %5006 = vmatpush1.bf16.msra.mxu0 %v1593
    %5007 = vmatprep.subr.bf16.mxu0 0
    %5008 = vmatpush1.bf16.msra.mxu0 %v1594
    %5009 = vmatprep.subr.bf16.mxu0 0
    %5010 = vmatpush1.bf16.msra.mxu0 %v1595
    %5011 = vmatprep.subr.bf16.mxu0 0
    %5012 = vmatpush1.bf16.msra.mxu0 %v1596
    %5013 = vmatprep.subr.bf16.mxu0 0
    %5014 = vmatpush1.bf16.msra.mxu0 %v1597
    %5015 = vmatprep.subr.bf16.mxu0 0
    %5016 = vmatpush1.bf16.msra.mxu0 %v1598
    %5017 = vmatprep.subr.bf16.mxu0 0
    %5018 = vmatpush1.bf16.msra.mxu0 %v1599
    %5019 = vmatprep.subr.bf16.mxu0 0
    %5020 = vmatpush1.bf16.msra.mxu0 0
    %5021 = vmatprep.subr.bf16.mxu0 0
    %5022 = vmatpush1.bf16.msra.mxu0 0
    %5023 = vmatprep.subr.bf16.mxu0 0
    %5024 = vmatpush1.bf16.msra.mxu0 0
    %5025 = vmatprep.subr.bf16.mxu0 0
    %5026 = vmatpush1.bf16.msra.mxu0 0
    %5027 = vmatprep.subr.bf16.mxu0 0
    %5028 = vmatpush1.bf16.msra.mxu0 0
    %5029 = vmatprep.subr.bf16.mxu0 0
    %5030 = vmatpush1.bf16.msra.mxu0 0
    %5031 = vmatprep.subr.bf16.mxu0 0
    %5032 = vmatpush1.bf16.msra.mxu0 0
    %5033 = vmatprep.subr.bf16.mxu0 0
    %5034 = vmatpush1.bf16.msra.mxu0 0
    %5035 = vmatprep.mubr.bf16.mxu0 0
    %5036 = vmatmul.mubr.bf16.gmra.mrb[0].mxu0 %v5002
    %v5037 = vpop.f32.mrb[0].mxu0
    %v5038 = vadd.f32 0.0, %v5037
    %v5039 = vpop.f32.mrb[0].mxu0
    %v5040 = vpop.f32.mrb[0].mxu0
    %v5041 = vpop.f32.mrb[0].mxu0
    %5042 = vdwg.mxu0
    %v5043 = vadd.f32 %v5001, %v5038
    %5044 = vst [vmem:[%s2086] sm:$0xff] %v5043
    %5045 = vmatprep.subr.bf16.mxu0 %v1102
    %5046 = vmatpush1.bf16.msra.mxu0 %v1101
    %5047 = vmatprep.subr.bf16.mxu0 %v1108
    %5048 = vmatpush1.bf16.msra.mxu0 %v1107
    %5049 = vmatprep.subr.bf16.mxu0 %v1114
    %5050 = vmatpush1.bf16.msra.mxu0 %v1113
    %5051 = vmatprep.subr.bf16.mxu0 %v1120
    %5052 = vmatpush1.bf16.msra.mxu0 %v1119
    %5053 = vmatprep.subr.bf16.mxu0 %v1126
    %5054 = vmatpush1.bf16.msra.mxu0 %v1125
    %5055 = vmatprep.subr.bf16.mxu0 %v1132
    %5056 = vmatpush1.bf16.msra.mxu0 %v1131
    %5057 = vmatprep.subr.bf16.mxu0 %v1138
    %5058 = vmatpush1.bf16.msra.mxu0 %v1137
    %5059 = vmatprep.subr.bf16.mxu0 %v1144
    %5060 = vmatpush1.bf16.msra.mxu0 %v1143
    %5061 = vmatprep.subr.bf16.mxu0 %v1150
    %5062 = vmatpush1.bf16.msra.mxu0 %v1149
    %5063 = vmatprep.subr.bf16.mxu0 %v1156
    %5064 = vmatpush1.bf16.msra.mxu0 %v1155
    %5065 = vmatprep.subr.bf16.mxu0 %v1162
    %5066 = vmatpush1.bf16.msra.mxu0 %v1161
    %5067 = vmatprep.subr.bf16.mxu0 %v1168
    %5068 = vmatpush1.bf16.msra.mxu0 %v1167
    %5069 = vmatprep.subr.bf16.mxu0 %v1174
    %5070 = vmatpush1.bf16.msra.mxu0 %v1173
    %5071 = vmatprep.subr.bf16.mxu0 %v1180
    %5072 = vmatpush1.bf16.msra.mxu0 %v1179
    %5073 = vmatprep.subr.bf16.mxu0 %v1186
    %5074 = vmatpush1.bf16.msra.mxu0 %v1185
    %5075 = vmatprep.subr.bf16.mxu0 %v1192
    %5076 = vmatpush1.bf16.msra.mxu0 %v1191
    %5077 = vmatprep.mubr.bf16.mxu0 %v5002
    %5078 = vmatmul.mubr.bf16.gmra.mrb[0].mxu0 %v4958
    %v5079 = vpop.f32.mrb[0].mxu0
    %v5080 = vadd.f32 %v786, %v5079
    %v5081 = vpop.f32.mrb[0].mxu0
    %v5082 = vadd.f32 %v790, %v5081
    %v5083 = vpop.f32.mrb[0].mxu0
    %v5084 = vpop.f32.mrb[0].mxu0
    %5085 = vdwg.mxu0
    %5086 = vmatprep.subr.bf16.mxu0 %v1104
    %5087 = vmatpush1.bf16.msra.mxu0 %v1103
    %5088 = vmatprep.subr.bf16.mxu0 %v1110
    %5089 = vmatpush1.bf16.msra.mxu0 %v1109
    %5090 = vmatprep.subr.bf16.mxu0 %v1116
    %5091 = vmatpush1.bf16.msra.mxu0 %v1115
    %5092 = vmatprep.subr.bf16.mxu0 %v1122
    %5093 = vmatpush1.bf16.msra.mxu0 %v1121
    %5094 = vmatprep.subr.bf16.mxu0 %v1128
    %5095 = vmatpush1.bf16.msra.mxu0 %v1127
    %5096 = vmatprep.subr.bf16.mxu0 %v1134
    %5097 = vmatpush1.bf16.msra.mxu0 %v1133
    %5098 = vmatprep.subr.bf16.mxu0 %v1140
    %5099 = vmatpush1.bf16.msra.mxu0 %v1139
    %5100 = vmatprep.subr.bf16.mxu0 %v1146
    %5101 = vmatpush1.bf16.msra.mxu0 %v1145
    %5102 = vmatprep.subr.bf16.mxu0 %v1152
    %5103 = vmatpush1.bf16.msra.mxu0 %v1151
    %5104 = vmatprep.subr.bf16.mxu0 %v1158
    %5105 = vmatpush1.bf16.msra.mxu0 %v1157
    %5106 = vmatprep.subr.bf16.mxu0 %v1164
    %5107 = vmatpush1.bf16.msra.mxu0 %v1163
    %5108 = vmatprep.subr.bf16.mxu0 %v1170
    %5109 = vmatpush1.bf16.msra.mxu0 %v1169
    %5110 = vmatprep.subr.bf16.mxu0 %v1176
    %5111 = vmatpush1.bf16.msra.mxu0 %v1175
    %5112 = vmatprep.subr.bf16.mxu0 %v1182
    %5113 = vmatpush1.bf16.msra.mxu0 %v1181
    %5114 = vmatprep.subr.bf16.mxu0 %v1188
    %5115 = vmatpush1.bf16.msra.mxu0 %v1187
    %5116 = vmatprep.subr.bf16.mxu0 %v1194
    %5117 = vmatpush1.bf16.msra.mxu0 %v1193
    %5118 = vmatprep.mubr.bf16.mxu0 %v5002
    %5119 = vmatmul.mubr.bf16.gmra.mrb[0].mxu0 %v4958
    %v5120 = vpop.f32.mrb[0].mxu0
    %v5121 = vadd.f32 %v794, %v5120
    %v5122 = vpop.f32.mrb[0].mxu0
    %v5123 = vadd.f32 %v798, %v5122
    %v5124 = vpop.f32.mrb[0].mxu0
    %v5125 = vpop.f32.mrb[0].mxu0
    %5126 = vdwg.mxu0
    %5127 = vmatprep.subr.bf16.mxu0 %v1106
    %5128 = vmatpush1.bf16.msra.mxu0 %v1105
    %5129 = vmatprep.subr.bf16.mxu0 %v1112
    %5130 = vmatpush1.bf16.msra.mxu0 %v1111
    %5131 = vmatprep.subr.bf16.mxu0 %v1118
    %5132 = vmatpush1.bf16.msra.mxu0 %v1117
    %5133 = vmatprep.subr.bf16.mxu0 %v1124
    %5134 = vmatpush1.bf16.msra.mxu0 %v1123
    %5135 = vmatprep.subr.bf16.mxu0 %v1130
    %5136 = vmatpush1.bf16.msra.mxu0 %v1129
    %5137 = vmatprep.subr.bf16.mxu0 %v1136
    %5138 = vmatpush1.bf16.msra.mxu0 %v1135
    %5139 = vmatprep.subr.bf16.mxu0 %v1142
    %5140 = vmatpush1.bf16.msra.mxu0 %v1141
    %5141 = vmatprep.subr.bf16.mxu0 %v1148
    %5142 = vmatpush1.bf16.msra.mxu0 %v1147
    %5143 = vmatprep.subr.bf16.mxu0 %v1154
    %5144 = vmatpush1.bf16.msra.mxu0 %v1153
    %5145 = vmatprep.subr.bf16.mxu0 %v1160
    %5146 = vmatpush1.bf16.msra.mxu0 %v1159
    %5147 = vmatprep.subr.bf16.mxu0 %v1166
    %5148 = vmatpush1.bf16.msra.mxu0 %v1165
    %5149 = vmatprep.subr.bf16.mxu0 %v1172
    %5150 = vmatpush1.bf16.msra.mxu0 %v1171
    %5151 = vmatprep.subr.bf16.mxu0 %v1178
    %5152 = vmatpush1.bf16.msra.mxu0 %v1177
    %5153 = vmatprep.subr.bf16.mxu0 %v1184
    %5154 = vmatpush1.bf16.msra.mxu0 %v1183
    %5155 = vmatprep.subr.bf16.mxu0 %v1190
    %5156 = vmatpush1.bf16.msra.mxu0 %v1189
    %5157 = vmatprep.subr.bf16.mxu0 %v1196
    %5158 = vmatpush1.bf16.msra.mxu0 %v1195
    %5159 = vmatprep.mubr.bf16.mxu0 %v5002
    %5160 = vmatmul.mubr.bf16.gmra.mrb[0].mxu0 %v4958
    %v5161 = vpop.f32.mrb[0].mxu0
    %v5162 = vadd.f32 %v802, %v5161
    %v5163 = vpop.f32.mrb[0].mxu0
    %v5164 = vadd.f32 %v806, %v5163
    %v5165 = vpop.f32.mrb[0].mxu0
    %v5166 = vpop.f32.mrb[0].mxu0
    %5167 = vdwg.mxu0
    %v5168 = vld [vmem:[%s1798] sm:$0xff]
    %v5169 = vld [vmem:[%s1798 + $0x8] sm:$0xff]
    %v5170 = vld [vmem:[%s1798 + $0x10] sm:$0xff]
    %v5171 = vadd.f32 %v5168, %v5080
    %v5172 = vxor.u32 %v5171, 2147483648
    %v5173 = vmul.f32 %v5172, 1.442695
    %v5174 = vpow.pop %v5173
    %v5175 = vadd.f32 %v5174, 1.0
    %v5176 = vrcp.pop %v5175
    %v5177 = vmul.f32 1.0, %v5176
    %v5178 = vadd.f32 %v5169, %v5082
    %v5179 = vxor.u32 %v5178, 2147483648
    %v5180 = vmul.f32 %v5179, 1.442695
    %v5181 = vpow.pop %v5180
    %v5182 = vadd.f32 %v5181, 1.0
    %v5183 = vrcp.pop %v5182
    %v5184 = vmul.f32 1.0, %v5183
    %v5185 = vmul.f32 %v5177, %v5121
    %v5186 = vadd.f32 %v5170, %v5185
    %v5187 = vtanh.pop %v5186
    %v5188 = vsub.f32 1.0, %v5184
    %v5189 = vmul.f32 %v5188, %v5187
    %v5190 = vmul.f32 %v5184, %v4932
    %v5191 = vadd.f32 %v5189, %v5190
    %v5192 = vld [vmem:[%s1773 + $0x18] sm:$0xff]
    %v5193 = vld [vmem:[%s1773 + $0x20] sm:$0xff]
    %v5194 = vld [vmem:[%s1773 + $0x28] sm:$0xff]
    %v5195 = vadd.f32 %v5192, %v5123
    %v5196 = vxor.u32 %v5195, 2147483648
    %v5197 = vmul.f32 %v5196, 1.442695
    %v5198 = vpow.pop %v5197
    %v5199 = vadd.f32 %v5198, 1.0
    %v5200 = vrcp.pop %v5199
    %v5201 = vmul.f32 1.0, %v5200
    %v5202 = vadd.f32 %v5193, %v5162
    %v5203 = vxor.u32 %v5202, 2147483648
    %v5204 = vmul.f32 %v5203, 1.442695
    %v5205 = vpow.pop %v5204
    %v5206 = vadd.f32 %v5205, 1.0
    %v5207 = vrcp.pop %v5206
    %v5208 = vmul.f32 1.0, %v5207
    %v5209 = vmul.f32 %v5201, %v5164
    %v5210 = vadd.f32 %v5194, %v5209
    %v5211 = vtanh.pop %v5210
    %v5212 = vsub.f32 1.0, %v5208
    %v5213 = vmul.f32 %v5212, %v5211
    %v5214 = vmul.f32 %v5208, %v4956
    %v5215 = vadd.f32 %v5213, %v5214
    %v5216 = vld [vmem:[%s1868] sm:$0xff]
    %v5217 = vpack.c.bf16 %v5191, %v5191
    %5218 = vmatprep.subr.bf16.mxu0 0
    %5219 = vmatpush1.bf16.msra.mxu0 %v1499
    %5220 = vmatprep.subr.bf16.mxu0 0
    %5221 = vmatpush1.bf16.msra.mxu0 %v1500
    %5222 = vmatprep.subr.bf16.mxu0 0
    %5223 = vmatpush1.bf16.msra.mxu0 %v1501
    %5224 = vmatprep.subr.bf16.mxu0 0
    %5225 = vmatpush1.bf16.msra.mxu0 %v1502
    %5226 = vmatprep.subr.bf16.mxu0 0
    %5227 = vmatpush1.bf16.msra.mxu0 %v1503
    %5228 = vmatprep.subr.bf16.mxu0 0
    %5229 = vmatpush1.bf16.msra.mxu0 %v1504
    %5230 = vmatprep.subr.bf16.mxu0 0
    %5231 = vmatpush1.bf16.msra.mxu0 %v1505
    %5232 = vmatprep.subr.bf16.mxu0 0
    %5233 = vmatpush1.bf16.msra.mxu0 %v1506
    %5234 = vmatprep.subr.bf16.mxu0 0
    %5235 = vmatpush1.bf16.msra.mxu0 0
    %5236 = vmatprep.subr.bf16.mxu0 0
    %5237 = vmatpush1.bf16.msra.mxu0 0
    %5238 = vmatprep.subr.bf16.mxu0 0
    %5239 = vmatpush1.bf16.msra.mxu0 0
    %5240 = vmatprep.subr.bf16.mxu0 0
    %5241 = vmatpush1.bf16.msra.mxu0 0
    %5242 = vmatprep.subr.bf16.mxu0 0
    %5243 = vmatpush1.bf16.msra.mxu0 0
    %5244 = vmatprep.subr.bf16.mxu0 0
    %5245 = vmatpush1.bf16.msra.mxu0 0
    %5246 = vmatprep.subr.bf16.mxu0 0
    %5247 = vmatpush1.bf16.msra.mxu0 0
    %5248 = vmatprep.subr.bf16.mxu0 0
    %5249 = vmatpush1.bf16.msra.mxu0 0
    %5250 = vmatprep.mubr.bf16.mxu0 0
    %5251 = vmatmul.mubr.bf16.gmra.mrb[0].mxu0 %v5217
    %v5252 = vpop.f32.mrb[0].mxu0
    %v5253 = vadd.f32 0.0, %v5252
    %v5254 = vpop.f32.mrb[0].mxu0
    %v5255 = vpop.f32.mrb[0].mxu0
    %v5256 = vpop.f32.mrb[0].mxu0
    %5257 = vdwg.mxu0
    %v5258 = vadd.f32 %v5216, %v5253
    %5259 = vst [vmem:[%s1868] sm:$0xff] %v5258
    %v5260 = vld [vmem:[%s1823] sm:$0xff]
    %v5261 = vpack.c.bf16 %v5215, %v5215
    %5262 = vmatprep.subr.bf16.mxu0 0
    %5263 = vmatpush1.bf16.msra.mxu0 %v1592
    %5264 = vmatprep.subr.bf16.mxu0 0
    %5265 = vmatpush1.bf16.msra.mxu0 %v1593
    %5266 = vmatprep.subr.bf16.mxu0 0
    %5267 = vmatpush1.bf16.msra.mxu0 %v1594
    %5268 = vmatprep.subr.bf16.mxu0 0
    %5269 = vmatpush1.bf16.msra.mxu0 %v1595
    %5270 = vmatprep.subr.bf16.mxu0 0
    %5271 = vmatpush1.bf16.msra.mxu0 %v1596
    %5272 = vmatprep.subr.bf16.mxu0 0
    %5273 = vmatpush1.bf16.msra.mxu0 %v1597
    %5274 = vmatprep.subr.bf16.mxu0 0
    %5275 = vmatpush1.bf16.msra.mxu0 %v1598
    %5276 = vmatprep.subr.bf16.mxu0 0
    %5277 = vmatpush1.bf16.msra.mxu0 %v1599
    %5278 = vmatprep.subr.bf16.mxu0 0
    %5279 = vmatpush1.bf16.msra.mxu0 0
    %5280 = vmatprep.subr.bf16.mxu0 0
    %5281 = vmatpush1.bf16.msra.mxu0 0
    %5282 = vmatprep.subr.bf16.mxu0 0
    %5283 = vmatpush1.bf16.msra.mxu0 0
    %5284 = vmatprep.subr.bf16.mxu0 0
    %5285 = vmatpush1.bf16.msra.mxu0 0
    %5286 = vmatprep.subr.bf16.mxu0 0
    %5287 = vmatpush1.bf16.msra.mxu0 0
    %5288 = vmatprep.subr.bf16.mxu0 0
    %5289 = vmatpush1.bf16.msra.mxu0 0
    %5290 = vmatprep.subr.bf16.mxu0 0
    %5291 = vmatpush1.bf16.msra.mxu0 0
    %5292 = vmatprep.subr.bf16.mxu0 0
    %5293 = vmatpush1.bf16.msra.mxu0 0
    %5294 = vmatprep.mubr.bf16.mxu0 0
    %5295 = vmatmul.mubr.bf16.gmra.mrb[0].mxu0 %v5261
    %v5296 = vpop.f32.mrb[0].mxu0
    %v5297 = vadd.f32 0.0, %v5296
    %v5298 = vpop.f32.mrb[0].mxu0
    %v5299 = vpop.f32.mrb[0].mxu0
    %v5300 = vpop.f32.mrb[0].mxu0
    %5301 = vdwg.mxu0
    %v5302 = vadd.f32 %v5260, %v5297
    %5303 = vst [vmem:[%s1823] sm:$0xff] %v5302
    %5304 = vmatprep.subr.bf16.mxu0 %v1102
    %5305 = vmatpush1.bf16.msra.mxu0 %v1101
    %5306 = vmatprep.subr.bf16.mxu0 %v1108
    %5307 = vmatpush1.bf16.msra.mxu0 %v1107
    %5308 = vmatprep.subr.bf16.mxu0 %v1114
    %5309 = vmatpush1.bf16.msra.mxu0 %v1113
    %5310 = vmatprep.subr.bf16.mxu0 %v1120
    %5311 = vmatpush1.bf16.msra.mxu0 %v1119
    %5312 = vmatprep.subr.bf16.mxu0 %v1126
    %5313 = vmatpush1.bf16.msra.mxu0 %v1125
    %5314 = vmatprep.subr.bf16.mxu0 %v1132
    %5315 = vmatpush1.bf16.msra.mxu0 %v1131
    %5316 = vmatprep.subr.bf16.mxu0 %v1138
    %5317 = vmatpush1.bf16.msra.mxu0 %v1137
    %5318 = vmatprep.subr.bf16.mxu0 %v1144
    %5319 = vmatpush1.bf16.msra.mxu0 %v1143
    %5320 = vmatprep.subr.bf16.mxu0 %v1150
    %5321 = vmatpush1.bf16.msra.mxu0 %v1149
    %5322 = vmatprep.subr.bf16.mxu0 %v1156
    %5323 = vmatpush1.bf16.msra.mxu0 %v1155
    %5324 = vmatprep.subr.bf16.mxu0 %v1162
    %5325 = vmatpush1.bf16.msra.mxu0 %v1161
    %5326 = vmatprep.subr.bf16.mxu0 %v1168
    %5327 = vmatpush1.bf16.msra.mxu0 %v1167
    %5328 = vmatprep.subr.bf16.mxu0 %v1174
    %5329 = vmatpush1.bf16.msra.mxu0 %v1173
    %5330 = vmatprep.subr.bf16.mxu0 %v1180
    %5331 = vmatpush1.bf16.msra.mxu0 %v1179
    %5332 = vmatprep.subr.bf16.mxu0 %v1186
    %5333 = vmatpush1.bf16.msra.mxu0 %v1185
    %5334 = vmatprep.subr.bf16.mxu0 %v1192
    %5335 = vmatpush1.bf16.msra.mxu0 %v1191
    %5336 = vmatprep.mubr.bf16.mxu0 %v5261
    %5337 = vmatmul.mubr.bf16.gmra.mrb[0].mxu0 %v5217
    %v5338 = vpop.f32.mrb[0].mxu0
    %v5339 = vadd.f32 %v786, %v5338
    %v5340 = vpop.f32.mrb[0].mxu0
    %v5341 = vadd.f32 %v790, %v5340
    %v5342 = vpop.f32.mrb[0].mxu0
    %v5343 = vpop.f32.mrb[0].mxu0
    %5344 = vdwg.mxu0
    %5345 = vmatprep.subr.bf16.mxu0 %v1104
    %5346 = vmatpush1.bf16.msra.mxu0 %v1103
    %5347 = vmatprep.subr.bf16.mxu0 %v1110
    %5348 = vmatpush1.bf16.msra.mxu0 %v1109
    %5349 = vmatprep.subr.bf16.mxu0 %v1116
    %5350 = vmatpush1.bf16.msra.mxu0 %v1115
    %5351 = vmatprep.subr.bf16.mxu0 %v1122
    %5352 = vmatpush1.bf16.msra.mxu0 %v1121
    %5353 = vmatprep.subr.bf16.mxu0 %v1128
    %5354 = vmatpush1.bf16.msra.mxu0 %v1127
    %5355 = vmatprep.subr.bf16.mxu0 %v1134
    %5356 = vmatpush1.bf16.msra.mxu0 %v1133
    %5357 = vmatprep.subr.bf16.mxu0 %v1140
    %5358 = vmatpush1.bf16.msra.mxu0 %v1139
    %5359 = vmatprep.subr.bf16.mxu0 %v1146
    %5360 = vmatpush1.bf16.msra.mxu0 %v1145
    %5361 = vmatprep.subr.bf16.mxu0 %v1152
    %5362 = vmatpush1.bf16.msra.mxu0 %v1151
    %5363 = vmatprep.subr.bf16.mxu0 %v1158
    %5364 = vmatpush1.bf16.msra.mxu0 %v1157
    %5365 = vmatprep.subr.bf16.mxu0 %v1164
    %5366 = vmatpush1.bf16.msra.mxu0 %v1163
    %5367 = vmatprep.subr.bf16.mxu0 %v1170
    %5368 = vmatpush1.bf16.msra.mxu0 %v1169
    %5369 = vmatprep.subr.bf16.mxu0 %v1176
    %5370 = vmatpush1.bf16.msra.mxu0 %v1175
    %5371 = vmatprep.subr.bf16.mxu0 %v1182
    %5372 = vmatpush1.bf16.msra.mxu0 %v1181
    %5373 = vmatprep.subr.bf16.mxu0 %v1188
    %5374 = vmatpush1.bf16.msra.mxu0 %v1187
    %5375 = vmatprep.subr.bf16.mxu0 %v1194
    %5376 = vmatpush1.bf16.msra.mxu0 %v1193
    %5377 = vmatprep.mubr.bf16.mxu0 %v5261
    %5378 = vmatmul.mubr.bf16.gmra.mrb[0].mxu0 %v5217
    %v5379 = vpop.f32.mrb[0].mxu0
    %v5380 = vadd.f32 %v794, %v5379
    %v5381 = vpop.f32.mrb[0].mxu0
    %v5382 = vadd.f32 %v798, %v5381
    %v5383 = vpop.f32.mrb[0].mxu0
    %v5384 = vpop.f32.mrb[0].mxu0
    %5385 = vdwg.mxu0
    %5386 = vmatprep.subr.bf16.mxu0 %v1106
    %5387 = vmatpush1.bf16.msra.mxu0 %v1105
    %5388 = vmatprep.subr.bf16.mxu0 %v1112
    %5389 = vmatpush1.bf16.msra.mxu0 %v1111
    %5390 = vmatprep.subr.bf16.mxu0 %v1118
    %5391 = vmatpush1.bf16.msra.mxu0 %v1117
    %5392 = vmatprep.subr.bf16.mxu0 %v1124
    %5393 = vmatpush1.bf16.msra.mxu0 %v1123
    %5394 = vmatprep.subr.bf16.mxu0 %v1130
    %5395 = vmatpush1.bf16.msra.mxu0 %v1129
    %5396 = vmatprep.subr.bf16.mxu0 %v1136
    %5397 = vmatpush1.bf16.msra.mxu0 %v1135
    %5398 = vmatprep.subr.bf16.mxu0 %v1142
    %5399 = vmatpush1.bf16.msra.mxu0 %v1141
    %5400 = vmatprep.subr.bf16.mxu0 %v1148
    %5401 = vmatpush1.bf16.msra.mxu0 %v1147
    %5402 = vmatprep.subr.bf16.mxu0 %v1154
    %5403 = vmatpush1.bf16.msra.mxu0 %v1153
    %5404 = vmatprep.subr.bf16.mxu0 %v1160
    %5405 = vmatpush1.bf16.msra.mxu0 %v1159
    %5406 = vmatprep.subr.bf16.mxu0 %v1166
    %5407 = vmatpush1.bf16.msra.mxu0 %v1165
    %5408 = vmatprep.subr.bf16.mxu0 %v1172
    %5409 = vmatpush1.bf16.msra.mxu0 %v1171
    %5410 = vmatprep.subr.bf16.mxu0 %v1178
    %5411 = vmatpush1.bf16.msra.mxu0 %v1177
    %5412 = vmatprep.subr.bf16.mxu0 %v1184
    %5413 = vmatpush1.bf16.msra.mxu0 %v1183
    %5414 = vmatprep.subr.bf16.mxu0 %v1190
    %5415 = vmatpush1.bf16.msra.mxu0 %v1189
    %5416 = vmatprep.subr.bf16.mxu0 %v1196
    %5417 = vmatpush1.bf16.msra.mxu0 %v1195
    %5418 = vmatprep.mubr.bf16.mxu0 %v5261
    %5419 = vmatmul.mubr.bf16.gmra.mrb[0].mxu0 %v5217
    %v5420 = vpop.f32.mrb[0].mxu0
    %v5421 = vadd.f32 %v802, %v5420
    %v5422 = vpop.f32.mrb[0].mxu0
    %v5423 = vadd.f32 %v806, %v5422
    %v5424 = vpop.f32.mrb[0].mxu0
    %v5425 = vpop.f32.mrb[0].mxu0
    %5426 = vdwg.mxu0
    %v5427 = vld [vmem:[%s1440] sm:$0xff]
    %v5428 = vld [vmem:[%s1440 + $0x8] sm:$0xff]
    %v5429 = vld [vmem:[%s1440 + $0x10] sm:$0xff]
    %v5430 = vadd.f32 %v5427, %v5339
    %v5431 = vxor.u32 %v5430, 2147483648
    %v5432 = vmul.f32 %v5431, 1.442695
    %v5433 = vpow.pop %v5432
    %v5434 = vadd.f32 %v5433, 1.0
    %v5435 = vrcp.pop %v5434
    %v5436 = vmul.f32 1.0, %v5435
    %v5437 = vadd.f32 %v5428, %v5341
    %v5438 = vxor.u32 %v5437, 2147483648
    %v5439 = vmul.f32 %v5438, 1.442695
    %v5440 = vpow.pop %v5439
    %v5441 = vadd.f32 %v5440, 1.0
    %v5442 = vrcp.pop %v5441
    %v5443 = vmul.f32 1.0, %v5442
    %v5444 = vmul.f32 %v5436, %v5380
    %v5445 = vadd.f32 %v5429, %v5444
    %v5446 = vtanh.pop %v5445
    %v5447 = vsub.f32 1.0, %v5443
    %v5448 = vmul.f32 %v5447, %v5446
    %v5449 = vmul.f32 %v5443, %v5191
    %v5450 = vadd.f32 %v5448, %v5449
    %v5451 = vld [vmem:[#allocation2 + $0x18] sm:$0xff]
    %v5452 = vld [vmem:[#allocation2 + $0x20] sm:$0xff]
    %v5453 = vld [vmem:[#allocation2 + $0x28] sm:$0xff]
    %v5454 = vadd.f32 %v5451, %v5382
    %v5455 = vxor.u32 %v5454, 2147483648
    %v5456 = vmul.f32 %v5455, 1.442695
    %v5457 = vpow.pop %v5456
    %v5458 = vadd.f32 %v5457, 1.0
    %v5459 = vrcp.pop %v5458
    %v5460 = vmul.f32 1.0, %v5459
    %v5461 = vadd.f32 %v5452, %v5421
    %v5462 = vxor.u32 %v5461, 2147483648
    %v5463 = vmul.f32 %v5462, 1.442695
    %v5464 = vpow.pop %v5463
    %v5465 = vadd.f32 %v5464, 1.0
    %v5466 = vrcp.pop %v5465
    %v5467 = vmul.f32 1.0, %v5466
    %v5468 = vmul.f32 %v5460, %v5423
    %v5469 = vadd.f32 %v5453, %v5468
    %v5470 = vtanh.pop %v5469
    %v5471 = vsub.f32 1.0, %v5467
    %v5472 = vmul.f32 %v5471, %v5470
    %v5473 = vmul.f32 %v5467, %v5215
    %v5474 = vadd.f32 %v5472, %v5473
    %v5475 = vld [vmem:[%s1557] sm:$0xff]
    %v5476 = vpack.c.bf16 %v5450, %v5450
    %5477 = vmatprep.subr.bf16.mxu0 0
    %5478 = vmatpush1.bf16.msra.mxu0 %v1499
    %5479 = vmatprep.subr.bf16.mxu0 0
    %5480 = vmatpush1.bf16.msra.mxu0 %v1500
    %5481 = vmatprep.subr.bf16.mxu0 0
    %5482 = vmatpush1.bf16.msra.mxu0 %v1501
    %5483 = vmatprep.subr.bf16.mxu0 0
    %5484 = vmatpush1.bf16.msra.mxu0 %v1502
    %5485 = vmatprep.subr.bf16.mxu0 0
    %5486 = vmatpush1.bf16.msra.mxu0 %v1503
    %5487 = vmatprep.subr.bf16.mxu0 0
    %5488 = vmatpush1.bf16.msra.mxu0 %v1504
    %5489 = vmatprep.subr.bf16.mxu0 0
    %5490 = vmatpush1.bf16.msra.mxu0 %v1505
    %5491 = vmatprep.subr.bf16.mxu0 0
    %5492 = vmatpush1.bf16.msra.mxu0 %v1506
    %5493 = vmatprep.subr.bf16.mxu0 0
    %5494 = vmatpush1.bf16.msra.mxu0 0
    %5495 = vmatprep.subr.bf16.mxu0 0
    %5496 = vmatpush1.bf16.msra.mxu0 0
    %5497 = vmatprep.subr.bf16.mxu0 0
    %5498 = vmatpush1.bf16.msra.mxu0 0
    %5499 = vmatprep.subr.bf16.mxu0 0
    %5500 = vmatpush1.bf16.msra.mxu0 0
    %5501 = vmatprep.subr.bf16.mxu0 0
    %5502 = vmatpush1.bf16.msra.mxu0 0
    %5503 = vmatprep.subr.bf16.mxu0 0
    %5504 = vmatpush1.bf16.msra.mxu0 0
    %5505 = vmatprep.subr.bf16.mxu0 0
    %5506 = vmatpush1.bf16.msra.mxu0 0
    %5507 = vmatprep.subr.bf16.mxu0 0
    %5508 = vmatpush1.bf16.msra.mxu0 0
    %5509 = vmatprep.mubr.bf16.mxu0 0
    %5510 = vmatmul.mubr.bf16.gmra.mrb[0].mxu0 %v5476
    %v5511 = vpop.f32.mrb[0].mxu0
    %v5512 = vadd.f32 0.0, %v5511
    %v5513 = vpop.f32.mrb[0].mxu0
    %v5514 = vpop.f32.mrb[0].mxu0
    %v5515 = vpop.f32.mrb[0].mxu0
    %5516 = vdwg.mxu0
    %v5517 = vadd.f32 %v5475, %v5512
    %5518 = vst [vmem:[%s1557] sm:$0xff] %v5517
    %v5519 = vld [vmem:[#allocation12] sm:$0xff]
    %v5520 = vpack.c.bf16 %v5474, %v5474
    %5521 = vmatprep.subr.bf16.mxu0 0
    %5522 = vmatpush1.bf16.msra.mxu0 %v1592
    %5523 = vmatprep.subr.bf16.mxu0 0
    %5524 = vmatpush1.bf16.msra.mxu0 %v1593
    %5525 = vmatprep.subr.bf16.mxu0 0
    %5526 = vmatpush1.bf16.msra.mxu0 %v1594
    %5527 = vmatprep.subr.bf16.mxu0 0
    %5528 = vmatpush1.bf16.msra.mxu0 %v1595
    %5529 = vmatprep.subr.bf16.mxu0 0
    %5530 = vmatpush1.bf16.msra.mxu0 %v1596
    %5531 = vmatprep.subr.bf16.mxu0 0
    %5532 = vmatpush1.bf16.msra.mxu0 %v1597
    %5533 = vmatprep.subr.bf16.mxu0 0
    %5534 = vmatpush1.bf16.msra.mxu0 %v1598
    %5535 = vmatprep.subr.bf16.mxu0 0
    %5536 = vmatpush1.bf16.msra.mxu0 %v1599
    %5537 = vmatprep.subr.bf16.mxu0 0
    %5538 = vmatpush1.bf16.msra.mxu0 0
    %5539 = vmatprep.subr.bf16.mxu0 0
    %5540 = vmatpush1.bf16.msra.mxu0 0
    %5541 = vmatprep.subr.bf16.mxu0 0
    %5542 = vmatpush1.bf16.msra.mxu0 0
    %5543 = vmatprep.subr.bf16.mxu0 0
    %5544 = vmatpush1.bf16.msra.mxu0 0
    %5545 = vmatprep.subr.bf16.mxu0 0
    %5546 = vmatpush1.bf16.msra.mxu0 0
    %5547 = vmatprep.subr.bf16.mxu0 0
    %5548 = vmatpush1.bf16.msra.mxu0 0
    %5549 = vmatprep.subr.bf16.mxu0 0
    %5550 = vmatpush1.bf16.msra.mxu0 0
    %5551 = vmatprep.subr.bf16.mxu0 0
    %5552 = vmatpush1.bf16.msra.mxu0 0
    %5553 = vmatprep.mubr.bf16.mxu0 0
    %5554 = vmatmul.mubr.bf16.gmra.mrb[0].mxu0 %v5520
    %v5555 = vpop.f32.mrb[0].mxu0
    %v5556 = vadd.f32 0.0, %v5555
    %v5557 = vpop.f32.mrb[0].mxu0
    %v5558 = vpop.f32.mrb[0].mxu0
    %v5559 = vpop.f32.mrb[0].mxu0
    %5560 = vdwg.mxu0
    %v5561 = vadd.f32 %v5519, %v5556
    %5562 = vst [vmem:[#allocation12] sm:$0xff] %v5561
    // Predicated region
    $region61: #{tpu_custom_call.1} parent=1 // pred_check
      _
    $region62: #{tpu_custom_call.1} parent=1 // pred_check_branch
      %5564 = sbr.rel (0) target = $region64
    $region63: #{tpu_custom_call.1} parent=1 // pred_region
      %s5566 = ssub.s32 2048, 2048
      %5567 = vsyncadd [#allocation5], %s5566
      %s5568 = sshll.u32 [#allocation12], 4
      %s5569 = int_to_ptr.vmem [resolvable:$true] %s5568
      %5574 = dma.vmem_to_hbm [thread:$0]  %s5569, 2048, %s8, [#allocation5], 128, 128, 8
    $region64: #{tpu_custom_call.1} parent=1 // pred_fallthru
      _
    // Predicated region
    $region65: #{tpu_custom_call.1} parent=1 // pred_check
      _
    $region66: #{tpu_custom_call.1} parent=1 // pred_check_branch
      %5576 = sbr.rel (0) target = $region68
    $region67: #{tpu_custom_call.1} parent=1 // pred_region
      %5577 = dma.done [#allocation5], 2048
    $region68: #{tpu_custom_call.1} parent=1 // pred_fallthru
      _
    %5578 = vsyncpa [#allocation4], 1
    %5579 = vsyncpa [#allocation7], 1
    %5580 = vsyncpa [#allocation10], 1
    %5581 = vsyncpa [#allocation5], 1

</llo_original>
